<compile_context>
chip_gen: v7x
topology: tpu7x:2x2x1
jax: 0.10.0
libtpu: 0.0.40
codegen_flags: <defaults>
</compile_context>

<pallas_src>
import functools

import jax
import jax.numpy as jnp
from jax.experimental import pallas as pl
from jax.experimental.pallas import tpu as pltpu


def _round_up(x, m):
    return (x + m - 1) // m * m


# -----------------------------------------------------------------------------
# Tiled matmul + bias (+ReLU) kernel: bf16 operands, fp32 accumulation
# -----------------------------------------------------------------------------
def _matmul_kernel(a_ref, b_ref, bias_ref, o_ref, acc_ref, *, activation):
    @pl.when(pl.program_id(2) == 0)
    def _():
        acc_ref[...] = jnp.zeros_like(acc_ref)

    acc_ref[...] += jnp.dot(a_ref[...], b_ref[...],
                            preferred_element_type=jnp.float32)

    @pl.when(pl.program_id(2) == pl.num_programs(2) - 1)
    def _():
        out = acc_ref[...] + bias_ref[...]
        if activation == "relu":
            out = jnp.maximum(out, 0.0)
        o_ref[...] = out.astype(o_ref.dtype)


def matmul_bias_act(a, w, b, activation=None, out_dtype=jnp.float32,
                    tm=256, tn=256, tk=512):
    """out = act(a @ w + b).  a:(M,K), w:(K,N) pre-transposed, b:(N,).

    bf16 MXU inputs, fp32 accumulator, tiled grid with double-buffered BlockSpecs.
    (tn=256 targets the v6e/v7x 256-wide MXU; use tn=128 when tuning for v5e.)
    """
    M, K = a.shape
    _, N = w.shape
    tm = min(tm, _round_up(M, 8))
    tn = min(tn, _round_up(N, 128))
    tk = min(tk, _round_up(K, 128))
    Mp, Kp, Np = _round_up(M, tm), _round_up(K, tk), _round_up(N, tn)

    a = a.astype(jnp.bfloat16)
    w = w.astype(jnp.bfloat16)
    if (Mp, Kp) != (M, K):
        a = jnp.pad(a, ((0, Mp - M), (0, Kp - K)))
    if (Kp, Np) != (K, N):
        w = jnp.pad(w, ((0, Kp - K), (0, Np - N)))
    bias = jnp.pad(b.astype(jnp.float32).reshape(1, N), ((0, 0), (0, Np - N)))

    grid = (Mp // tm, Np // tn, Kp // tk)
    kernel = functools.partial(_matmul_kernel, activation=activation)
    out = pl.pallas_call(
        kernel,
        out_shape=jax.ShapeDtypeStruct((Mp, Np), out_dtype),
        grid=grid,
        in_specs=[
            pl.BlockSpec((tm, tk), lambda i, j, k: (i, k)),
            pl.BlockSpec((tk, tn), lambda i, j, k: (k, j)),
            pl.BlockSpec((1, tn), lambda i, j, k: (0, j)),
        ],
        out_specs=pl.BlockSpec((tm, tn), lambda i, j, k: (i, j)),
        scratch_shapes=[pltpu.VMEM((tm, tn), jnp.float32)],
        compiler_params=pltpu.CompilerParams(
            dimension_semantics=("parallel", "parallel", "arbitrary")),
    )(a, w, bias)
    if (Mp, Np) != (M, N):
        out = out[:M, :N]
    return out


# -----------------------------------------------------------------------------
# Conv ('same', stride 1) via im2col + tiled matmul (bf16 activations)
# -----------------------------------------------------------------------------
def conv2d_same(x_nhwc, w_mat, b, kh, kw, pad):
    B, H, W, Cin = x_nhwc.shape
    Cout = w_mat.shape[1]
    xp = jnp.pad(x_nhwc, ((0, 0), (pad, pad), (pad, pad), (0, 0)))
    # patch column order (i, j, c) matches the prepacked weight layout.
    patches = jnp.concatenate(
        [xp[:, i:i + H, j:j + W, :] for i in range(kh) for j in range(kw)],
        axis=-1).reshape(B * H * W, kh * kw * Cin)
    out = matmul_bias_act(patches, w_mat, b, activation="relu",
                          out_dtype=jnp.bfloat16)
    return out.reshape(B, H, W, Cout)


# -----------------------------------------------------------------------------
# Fused bidirectional LSTM recurrence (both directions, one kernel, time-major)
# -----------------------------------------------------------------------------
def _bilstm_kernel(xproj_ref, whh_ref, hseq_ref):
    # xproj_ref: (S, Bp, 8H) f32  x@W_ih^T + b_ih + b_hh; [:, :, :4H]=fwd, [:, :, 4H:]=rev
    # whh_ref  : (2, H, 4H) bf16  recurrent weights (fwd, rev), gate order [i, f, o, g]
    # hseq_ref : (S, Bp, 2H) f32  output hidden states; [:, :, :H]=fwd, [:, :, H:]=rev
    S = xproj_ref.shape[0]
    Bp = xproj_ref.shape[1]
    H = whh_ref.shape[1]
    G = 4 * H
    whh_f = whh_ref[0]          # hoisted: read the recurrent weights once
    whh_r = whh_ref[1]

    def step(k, carry):
        h, c = carry                                    # (2, Bp, H) fp32 each
        gx_f = xproj_ref[k, :, :G]                      # forward input gates @ t=k
        gx_r = xproj_ref[S - 1 - k, :, G:]              # reverse input gates @ t=S-1-k
        g_f = gx_f + jnp.dot(h[0].astype(whh_f.dtype), whh_f,
                             preferred_element_type=jnp.float32)
        g_r = gx_r + jnp.dot(h[1].astype(whh_r.dtype), whh_r,
                             preferred_element_type=jnp.float32)
        gates = jnp.stack([g_f, g_r], axis=0)           # (2, Bp, 4H)
        sig = jax.nn.sigmoid(gates[..., :3 * H])        # one EUP slab: [i, f, o]
        i_g = sig[..., :H]
        f_g = sig[..., H:2 * H]
        o_g = sig[..., 2 * H:3 * H]
        g_g = jnp.tanh(gates[..., 3 * H:])
        c_new = f_g * c + i_g * g_g
        h_new = o_g * jnp.tanh(c_new)
        hseq_ref[k, :, :H] = h_new[0]
        hseq_ref[S - 1 - k, :, H:] = h_new[1]
        return (h_new, c_new)

    zeros = jnp.zeros((2, Bp, H), jnp.float32)
    jax.lax.fori_loop(0, S, step, (zeros, zeros), unroll=(S <= 16))


def bi_lstm(x_sbd, prep):
    """Fused bidirectional single-layer LSTM.  x_sbd: (S, B, D) time-major.
    Returns (S, B, 2H) time-major with features = concat(fwd, rev)."""
    S, B, D = x_sbd.shape
    H = prep["w_hh"].shape[1]
    Bp = max(8, _round_up(B, 8))    # pad batch to full sublanes (no masked stores)

    # Both directions' input projections in one tiled matmul: (S*B, D) @ (D, 8H).
    xproj = matmul_bias_act(x_sbd.reshape(S * B, D), prep["w_ih"], prep["b_ih"],
                            out_dtype=jnp.float32)
    xproj = xproj.reshape(S, B, 8 * H)
    if Bp != B:
        xproj = jnp.pad(xproj, ((0, 0), (0, Bp - B), (0, 0)))

    hseq = pl.pallas_call(
        _bilstm_kernel,
        out_shape=jax.ShapeDtypeStruct((S, Bp, 2 * H), jnp.float32),
    )(xproj, prep["w_hh"])
    return hseq[:, :B, :]


# -----------------------------------------------------------------------------
# Fused head kernels (epilogues)
# -----------------------------------------------------------------------------
def _conv_head_kernel(h_ref, fcw_ref, fcb_ref, cw_ref, cb_ref,
                      logit_ref, second_ref):
    # global avg pool over spatial + fc + second_fc, in one launch
    pooled = jnp.mean(h_ref[...].astype(jnp.float32), axis=1)            # (B, C)
    logits = jnp.dot(pooled, fcw_ref[...],
                     preferred_element_type=jnp.float32) + fcb_ref[...]  # (B, 7)
    logit_ref[...] = logits
    second_ref[...] = (jnp.sum(logits * cw_ref[...], axis=-1, keepdims=True)
                       + cb_ref[...])                                    # (B, 1)


def _lstm_head_kernel(h1_ref, h2_ref, w1_ref, b1_ref, w2_ref, b2_ref,
                      lw_ref, lb_ref, ow_ref, ob_ref, logit_ref, second_ref):
    # lin1 + lin2 + 4-way residual add + lin + lstm_out (last time step only)
    h1 = h1_ref[...]
    h2 = h2_ref[...]
    a1 = jnp.dot(h1.astype(w1_ref.dtype), w1_ref[...],
                 preferred_element_type=jnp.float32) + b1_ref[...]
    a2 = jnp.dot(h2.astype(w2_ref.dtype), w2_ref[...],
                 preferred_element_type=jnp.float32) + b2_ref[...]
    hidden = h1 + h2 + jnp.maximum(a1, 0.0) + jnp.maximum(a2, 0.0)
    logits = jnp.dot(hidden, lw_ref[...],
                     preferred_element_type=jnp.float32) + lb_ref[...]
    logit_ref[...] = logits
    second_ref[...] = (jnp.sum(logits * ow_ref[...], axis=-1, keepdims=True)
                       + ob_ref[...])


# -----------------------------------------------------------------------------
# Full forward pass (matches EmbeddingNet.forward; Dropout = identity at inference)
# -----------------------------------------------------------------------------
_CONV_CFG = (("conv1", 7, 7, 3), ("conv2", 5, 5, 2),
             ("conv3", 3, 3, 1), ("conv4", 3, 3, 1))


def embedding_net_forward(x, prep):
    # x: (B, 1, S, 7) NCHW, as in the PyTorch module
    B, _, S, W = x.shape
    x = x.astype(jnp.float32)

    # ---- conv branch (NHWC, bf16 activations) ----
    h = jnp.transpose(x, (0, 2, 3, 1)).astype(jnp.bfloat16)         # (B, S, 7, 1)
    for name, kh, kw, pad in _CONV_CFG:
        wm, bias = prep[name]
        h = conv2d_same(h, wm, bias, kh, kw, pad)                   # -> (B, S, 7, C)
    logits1, second_logits1 = pl.pallas_call(
        _conv_head_kernel,
        out_shape=(jax.ShapeDtypeStruct((B, 7), jnp.float32),
                   jax.ShapeDtypeStruct((B, 1), jnp.float32)),
    )(h.reshape(B, S * W, h.shape[-1]), prep["fc_w"], prep["fc_b"],
      prep["conv_out_w"], prep["conv_out_b"])

    # ---- LSTM branch (time-major) ----
    emb = jnp.transpose(x[:, 0, :, :], (1, 0, 2))                   # (S, B, 7)
    h1 = bi_lstm(emb, prep["lstm1"])                                # (S, B, 256)
    h2 = bi_lstm(h1, prep["lstm2"])                                 # (S, B, 256)
    # only hidden[:, -1, :] is consumed downstream, so the whole tail runs on t = S-1
    logits2, second_logits2 = pl.pallas_call(
        _lstm_head_kernel,
        out_shape=(jax.ShapeDtypeStruct((B, 7), jnp.float32),
                   jax.ShapeDtypeStruct((B, 1), jnp.float32)),
    )(h1[S - 1], h2[S - 1], prep["lin1_w"], prep["lin1_b"],
      prep["lin2_w"], prep["lin2_b"], prep["lin_w"], prep["lin_b"],
      prep["lstm_out_w"], prep["lstm_out_b"])

    return logits1, logits2, second_logits1, second_logits2


# -----------------------------------------------------------------------------
# One-time (outside jit) weight preparation: transposes, gate reorder, bf16 casts
# -----------------------------------------------------------------------------
def prepare_params(p):
    prep = {}

    def conv_prep(w, b):
        cout, cin, kh, kw = w.shape
        wm = jnp.transpose(w, (2, 3, 1, 0)).reshape(kh * kw * cin, cout)
        return (wm.astype(jnp.bfloat16), b.astype(jnp.float32))

    for name in ("conv1", "conv2", "conv3", "conv4"):
        prep[name] = conv_prep(p[name + "_w"], p[name + "_b"])

    prep["fc_w"] = p["fc_w"].T.astype(jnp.float32)                  # (256, 7)
    prep["fc_b"] = p["fc_b"].reshape(1, -1).astype(jnp.float32)
    prep["conv_out_w"] = p["conv_out_w"].astype(jnp.float32)        # (1, 7)
    prep["conv_out_b"] = p["conv_out_b"].reshape(1, 1).astype(jnp.float32)

    def reorder(w):  # PyTorch gate order [i, f, g, o] -> kernel order [i, f, o, g]
        i, f, g, o = jnp.split(w, 4, axis=0)
        return jnp.concatenate([i, f, o, g], axis=0)

    def lstm_prep(pd):
        w_ih_f, w_hh_f, b_ih_f, b_hh_f = pd["fwd"]
        w_ih_r, w_hh_r, b_ih_r, b_hh_r = pd["rev"]
        w_ih = jnp.concatenate([reorder(w_ih_f).T, reorder(w_ih_r).T], axis=1)
        bias = jnp.concatenate([reorder(b_ih_f + b_hh_f),
                                reorder(b_ih_r + b_hh_r)], axis=0)
        w_hh = jnp.stack([reorder(w_hh_f).T, reorder(w_hh_r).T], axis=0)
        return {"w_ih": w_ih.astype(jnp.bfloat16),      # (D, 8H)
                "b_ih": bias.astype(jnp.float32),       # (8H,)
                "w_hh": w_hh.astype(jnp.bfloat16)}      # (2, H, 4H)

    prep["lstm1"] = lstm_prep(p["lstm1"])
    prep["lstm2"] = lstm_prep(p["lstm2"])

    prep["lin1_w"] = p["lin1_w"].T.astype(jnp.bfloat16)
    prep["lin1_b"] = p["lin1_b"].reshape(1, -1).astype(jnp.float32)
    prep["lin2_w"] = p["lin2_w"].T.astype(jnp.bfloat16)
    prep["lin2_b"] = p["lin2_b"].reshape(1, -1).astype(jnp.float32)
    prep["lin_w"] = p["lin_w"].T.astype(jnp.float32)                # (256, 7)
    prep["lin_b"] = p["lin_b"].reshape(1, -1).astype(jnp.float32)
    prep["lstm_out_w"] = p["lstm_out_w"].astype(jnp.float32)        # (1, 7)
    prep["lstm_out_b"] = p["lstm_out_b"].reshape(1, 1).astype(jnp.float32)
    return prep


# -----------------------------------------------------------------------------
# Deterministic parameter init (PyTorch-like uniform(-1/sqrt(fan_in), +))
# -----------------------------------------------------------------------------
def init_params(key):
    keys = jax.random.split(key, 64)
    ctr = [0]

    def nxt():
        k = keys[ctr[0]]
        ctr[0] += 1
        return k

    def u(shape, fan_in):
        bound = 1.0 / (float(fan_in) ** 0.5)
        return jax.random.uniform(nxt(), shape, jnp.float32, -bound, bound)

    p = {}
    p["conv1_w"], p["conv1_b"] = u((32, 1, 7, 7), 1 * 49), u((32,), 1 * 49)
    p["conv2_w"], p["conv2_b"] = u((64, 32, 5, 5), 32 * 25), u((64,), 32 * 25)
    p["conv3_w"], p["conv3_b"] = u((128, 64, 3, 3), 64 * 9), u((128,), 64 * 9)
    p["conv4_w"], p["conv4_b"] = u((256, 128, 3, 3), 128 * 9), u((256,), 128 * 9)
    p["fc_w"], p["fc_b"] = u((7, 256), 256), u((7,), 256)
    p["conv_out_w"], p["conv_out_b"] = u((1, 7), 7), u((1,), 7)

    def lstm_params(in_dim, H=128):
        return {
            d: (u((4 * H, in_dim), H), u((4 * H, H), H), u((4 * H,), H), u((4 * H,), H))
            for d in ("fwd", "rev")
        }

    p["lstm1"] = lstm_params(7)
    p["lstm2"] = lstm_params(256)
    p["lin1_w"], p["lin1_b"] = u((256, 256), 256), u((256,), 256)
    p["lin2_w"], p["lin2_b"] = u((256, 256), 256), u((256,), 256)
    p["lin_w"], p["lin_b"] = u((7, 256), 256), u((7,), 256)
    p["lstm_out_w"], p["lstm_out_b"] = u((1, 7), 7), u((1,), 7)
    return p


if __name__ == "__main__":
    key = jax.random.PRNGKey(0)
    k_param, k_x = jax.random.split(key)
    params = init_params(k_param)
    prep = prepare_params(params)           # host-side weight prep, outside jit

    B, S = 2, 8                             # input: (B, 1, S, 7)
    x = jax.random.normal(k_x, (B, 1, S, 7), dtype=jnp.float32)

    fwd = jax.jit(embedding_net_forward)
    outs = jax.block_until_ready(fwd(x, prep))
    logits1, logits2, second_logits1, second_logits2 = outs

    assert logits1.shape == (B, 7)
    assert logits2.shape == (B, 7)
    assert second_logits1.shape == (B, 1)
    assert second_logits2.shape == (B, 1)
    assert all(bool(jnp.all(jnp.isfinite(o))) for o in outs)
    print("KERNEL_OK")
</pallas_src>

<mosaic_0001>
module attributes {stable_mosaic.version = 11 : i64} {
  func.func @_matmul_kernel(%arg0: i32, %arg1: i32, %arg2: i32, %arg3: memref<112x128xbf16, #tpu.memory_space<vmem>>, %arg4: memref<128x128xbf16, #tpu.memory_space<vmem>>, %arg5: memref<1x128xf32, #tpu.memory_space<vmem>>, %arg6: memref<112x128xbf16, #tpu.memory_space<vmem>>, %arg7: memref<112x128xf32, #tpu.memory_space<vmem>>) attributes {dimension_semantics = [#tpu.dimension_semantics<parallel>, #tpu.dimension_semantics<parallel>, #tpu.dimension_semantics<arbitrary>], iteration_bounds = array<i64: 1, 1, 1>, scalar_prefetch = 0 : i64, scratch_operands = 1 : i64, tpu.core_type = #tpu.core_type<tc>, window_params = [{transform_indices = @transform_0, window_bounds = array<i64: 112, 128>}, {transform_indices = @transform_1, window_bounds = array<i64: 128, 128>}, {transform_indices = @transform_2, window_bounds = array<i64: 1, 128>}, {transform_indices = @transform_3, window_bounds = array<i64: 112, 128>}]} {
    %c0_i32 = arith.constant 0 : i32
    %0 = arith.cmpi eq, %arg2, %c0_i32 : i32
    %1 = arith.extui %0 : i1 to i32
    %c0_i32_0 = arith.constant 0 : i32
    %2 = arith.cmpi ne, %1, %c0_i32_0 : i32
    scf.if %2 {
      %cst_10 = arith.constant 0.000000e+00 : f32
      %12 = vector.broadcast %cst_10 : f32 to vector<112x128xf32>
      %c0_11 = arith.constant 0 : index
      %c0_12 = arith.constant 0 : index
      %13 = vector.load %arg7[%c0_11, %c0_12] : memref<112x128xf32, #tpu.memory_space<vmem>>, vector<112x128xf32>
      tpu.vector_store %arg7[%c0_11, %c0_12], %12 {strides = array<i32>} : memref<112x128xf32, #tpu.memory_space<vmem>>, vector<112x128xf32>,
    } else {
    }
    %c0 = arith.constant 0 : index
    %c0_1 = arith.constant 0 : index
    %3 = vector.load %arg7[%c0, %c0_1] : memref<112x128xf32, #tpu.memory_space<vmem>>, vector<112x128xf32>
    %c0_2 = arith.constant 0 : index
    %c0_3 = arith.constant 0 : index
    %4 = vector.load %arg3[%c0_2, %c0_3] : memref<112x128xbf16, #tpu.memory_space<vmem>>, vector<112x128xbf16>
    %c0_4 = arith.constant 0 : index
    %c0_5 = arith.constant 0 : index
    %5 = vector.load %arg4[%c0_4, %c0_5] : memref<128x128xbf16, #tpu.memory_space<vmem>>, vector<128x128xbf16>
    %cst = arith.constant dense<0.000000e+00> : vector<112x128xf32>
    %6 = tpu.matmul %4, %5, %cst {dimension_numbers = #tpu.dot_dimension_numbers<[1], [0], [0], [1], [0, 0, 1, 1], [], []>} : vector<112x128xbf16>, vector<128x128xbf16>, vector<112x128xf32> -> vector<112x128xf32>
    %7 = arith.addf %3, %6 : vector<112x128xf32>
    %c0_6 = arith.constant 0 : index
    %c0_7 = arith.constant 0 : index
    %8 = vector.load %arg7[%c0_6, %c0_7] : memref<112x128xf32, #tpu.memory_space<vmem>>, vector<112x128xf32>
    tpu.vector_store %arg7[%c0_6, %c0_7], %7 {strides = array<i32>} : memref<112x128xf32, #tpu.memory_space<vmem>>, vector<112x128xf32>,
    %c0_i32_8 = arith.constant 0 : i32
    %9 = arith.cmpi eq, %arg2, %c0_i32_8 : i32
    %10 = arith.extui %9 : i1 to i32
    %c0_i32_9 = arith.constant 0 : i32
    %11 = arith.cmpi ne, %10, %c0_i32_9 : i32
    scf.if %11 {
      %c0_10 = arith.constant 0 : index
      %c0_11 = arith.constant 0 : index
      %12 = vector.load %arg7[%c0_10, %c0_11] : memref<112x128xf32, #tpu.memory_space<vmem>>, vector<112x128xf32>
      %c0_12 = arith.constant 0 : index
      %c0_13 = arith.constant 0 : index
      %13 = vector.load %arg5[%c0_12, %c0_13] : memref<1x128xf32, #tpu.memory_space<vmem>>, vector<1x128xf32>
      %14 = vector.broadcast %13 : vector<1x128xf32> to vector<112x128xf32>
      %15 = arith.addf %12, %14 : vector<112x128xf32>
      %cst_14 = arith.constant 0.000000e+00 : f32
      %16 = vector.broadcast %cst_14 : f32 to vector<112x128xf32>
      %17 = arith.maximumf %15, %16 : vector<112x128xf32>
      %18 = arith.truncf %17 : vector<112x128xf32> to vector<112x128xbf16>
      %c0_15 = arith.constant 0 : index
      %c0_16 = arith.constant 0 : index
      %19 = vector.load %arg6[%c0_15, %c0_16] : memref<112x128xbf16, #tpu.memory_space<vmem>>, vector<112x128xbf16>
      tpu.vector_store %arg6[%c0_15, %c0_16], %18 {strides = array<i32>} : memref<112x128xbf16, #tpu.memory_space<vmem>>, vector<112x128xbf16>,
    } else {
    }
    return
  }
  func.func @transform_0(%arg0: i32, %arg1: i32, %arg2: i32) -> (i32, i32) {
    %c0_i32 = arith.constant 0 : i32
    return %arg0, %arg2 : i32, i32
  }
  func.func @transform_1(%arg0: i32, %arg1: i32, %arg2: i32) -> (i32, i32) {
    %c0_i32 = arith.constant 0 : i32
    return %arg2, %arg1 : i32, i32
  }
  func.func @transform_2(%arg0: i32, %arg1: i32, %arg2: i32) -> (i32, i32) {
    %c0_i32 = arith.constant 0 : i32
    %c0_i32_0 = arith.constant 0 : i32
    return %c0_i32, %arg1 : i32, i32
  }
  func.func @transform_3(%arg0: i32, %arg1: i32, %arg2: i32) -> (i32, i32) {
    %c0_i32 = arith.constant 0 : i32
    return %arg0, %arg1 : i32, i32
  }
}

module attributes {stable_mosaic.version = 11 : i64} {
  func.func @_matmul_kernel(%arg0: i32, %arg1: i32, %arg2: i32, %arg3: memref<112x512xbf16, #tpu.memory_space<vmem>>, %arg4: memref<512x128xbf16, #tpu.memory_space<vmem>>, %arg5: memref<1x128xf32, #tpu.memory_space<vmem>>, %arg6: memref<112x128xbf16, #tpu.memory_space<vmem>>, %arg7: memref<112x128xf32, #tpu.memory_space<vmem>>) attributes {dimension_semantics = [#tpu.dimension_semantics<parallel>, #tpu.dimension_semantics<parallel>, #tpu.dimension_semantics<arbitrary>], iteration_bounds = array<i64: 1, 1, 2>, scalar_prefetch = 0 : i64, scratch_operands = 1 : i64, tpu.core_type = #tpu.core_type<tc>, window_params = [{transform_indices = @transform_0, window_bounds = array<i64: 112, 512>}, {transform_indices = @transform_1, window_bounds = array<i64: 512, 128>}, {transform_indices = @transform_2, window_bounds = array<i64: 1, 128>}, {transform_indices = @transform_3, window_bounds = array<i64: 112, 128>}]} {
    %c0_i32 = arith.constant 0 : i32
    %0 = arith.cmpi eq, %arg2, %c0_i32 : i32
    %1 = arith.extui %0 : i1 to i32
    %c0_i32_0 = arith.constant 0 : i32
    %2 = arith.cmpi ne, %1, %c0_i32_0 : i32
    scf.if %2 {
      %cst_9 = arith.constant 0.000000e+00 : f32
      %12 = vector.broadcast %cst_9 : f32 to vector<112x128xf32>
      %c0_10 = arith.constant 0 : index
      %c0_11 = arith.constant 0 : index
      %13 = vector.load %arg7[%c0_10, %c0_11] : memref<112x128xf32, #tpu.memory_space<vmem>>, vector<112x128xf32>
      tpu.vector_store %arg7[%c0_10, %c0_11], %12 {strides = array<i32>} : memref<112x128xf32, #tpu.memory_space<vmem>>, vector<112x128xf32>,
    } else {
    }
    %c0 = arith.constant 0 : index
    %c0_1 = arith.constant 0 : index
    %3 = vector.load %arg7[%c0, %c0_1] : memref<112x128xf32, #tpu.memory_space<vmem>>, vector<112x128xf32>
    %c0_2 = arith.constant 0 : index
    %c0_3 = arith.constant 0 : index
    %4 = vector.load %arg3[%c0_2, %c0_3] : memref<112x512xbf16, #tpu.memory_space<vmem>>, vector<112x512xbf16>
    %c0_4 = arith.constant 0 : index
    %c0_5 = arith.constant 0 : index
    %5 = vector.load %arg4[%c0_4, %c0_5] : memref<512x128xbf16, #tpu.memory_space<vmem>>, vector<512x128xbf16>
    %cst = arith.constant dense<0.000000e+00> : vector<112x128xf32>
    %6 = tpu.matmul %4, %5, %cst {dimension_numbers = #tpu.dot_dimension_numbers<[1], [0], [0], [1], [0, 0, 1, 1], [], []>} : vector<112x512xbf16>, vector<512x128xbf16>, vector<112x128xf32> -> vector<112x128xf32>
    %7 = arith.addf %3, %6 : vector<112x128xf32>
    %c0_6 = arith.constant 0 : index
    %c0_7 = arith.constant 0 : index
    %8 = vector.load %arg7[%c0_6, %c0_7] : memref<112x128xf32, #tpu.memory_space<vmem>>, vector<112x128xf32>
    tpu.vector_store %arg7[%c0_6, %c0_7], %7 {strides = array<i32>} : memref<112x128xf32, #tpu.memory_space<vmem>>, vector<112x128xf32>,
    %c1_i32 = arith.constant 1 : i32
    %9 = arith.cmpi eq, %arg2, %c1_i32 : i32
    %10 = arith.extui %9 : i1 to i32
    %c0_i32_8 = arith.constant 0 : i32
    %11 = arith.cmpi ne, %10, %c0_i32_8 : i32
    scf.if %11 {
      %c0_9 = arith.constant 0 : index
      %c0_10 = arith.constant 0 : index
      %12 = vector.load %arg7[%c0_9, %c0_10] : memref<112x128xf32, #tpu.memory_space<vmem>>, vector<112x128xf32>
      %c0_11 = arith.constant 0 : index
      %c0_12 = arith.constant 0 : index
      %13 = vector.load %arg5[%c0_11, %c0_12] : memref<1x128xf32, #tpu.memory_space<vmem>>, vector<1x128xf32>
      %14 = vector.broadcast %13 : vector<1x128xf32> to vector<112x128xf32>
      %15 = arith.addf %12, %14 : vector<112x128xf32>
      %cst_13 = arith.constant 0.000000e+00 : f32
      %16 = vector.broadcast %cst_13 : f32 to vector<112x128xf32>
      %17 = arith.maximumf %15, %16 : vector<112x128xf32>
      %18 = arith.truncf %17 : vector<112x128xf32> to vector<112x128xbf16>
      %c0_14 = arith.constant 0 : index
      %c0_15 = arith.constant 0 : index
      %19 = vector.load %arg6[%c0_14, %c0_15] : memref<112x128xbf16, #tpu.memory_space<vmem>>, vector<112x128xbf16>
      tpu.vector_store %arg6[%c0_14, %c0_15], %18 {strides = array<i32>} : memref<112x128xbf16, #tpu.memory_space<vmem>>, vector<112x128xbf16>,
    } else {
    }
    return
  }
  func.func @transform_0(%arg0: i32, %arg1: i32, %arg2: i32) -> (i32, i32) {
    %c0_i32 = arith.constant 0 : i32
    return %arg0, %arg2 : i32, i32
  }
  func.func @transform_1(%arg0: i32, %arg1: i32, %arg2: i32) -> (i32, i32) {
    %c0_i32 = arith.constant 0 : i32
    return %arg2, %arg1 : i32, i32
  }
  func.func @transform_2(%arg0: i32, %arg1: i32, %arg2: i32) -> (i32, i32) {
    %c0_i32 = arith.constant 0 : i32
    %c0_i32_0 = arith.constant 0 : i32
    return %c0_i32, %arg1 : i32, i32
  }
  func.func @transform_3(%arg0: i32, %arg1: i32, %arg2: i32) -> (i32, i32) {
    %c0_i32 = arith.constant 0 : i32
    return %arg0, %arg1 : i32, i32
  }
}

module attributes {stable_mosaic.version = 11 : i64} {
  func.func @_matmul_kernel(%arg0: i32, %arg1: i32, %arg2: i32, %arg3: memref<112x512xbf16, #tpu.memory_space<vmem>>, %arg4: memref<512x256xbf16, #tpu.memory_space<vmem>>, %arg5: memref<1x256xf32, #tpu.memory_space<vmem>>, %arg6: memref<112x256xbf16, #tpu.memory_space<vmem>>, %arg7: memref<112x256xf32, #tpu.memory_space<vmem>>) attributes {dimension_semantics = [#tpu.dimension_semantics<parallel>, #tpu.dimension_semantics<parallel>, #tpu.dimension_semantics<arbitrary>], iteration_bounds = array<i64: 1, 1, 3>, scalar_prefetch = 0 : i64, scratch_operands = 1 : i64, tpu.core_type = #tpu.core_type<tc>, window_params = [{transform_indices = @transform_0, window_bounds = array<i64: 112, 512>}, {transform_indices = @transform_1, window_bounds = array<i64: 512, 256>}, {transform_indices = @transform_2, window_bounds = array<i64: 1, 256>}, {transform_indices = @transform_3, window_bounds = array<i64: 112, 256>}]} {
    %c0_i32 = arith.constant 0 : i32
    %0 = arith.cmpi eq, %arg2, %c0_i32 : i32
    %1 = arith.extui %0 : i1 to i32
    %c0_i32_0 = arith.constant 0 : i32
    %2 = arith.cmpi ne, %1, %c0_i32_0 : i32
    scf.if %2 {
      %cst_9 = arith.constant 0.000000e+00 : f32
      %12 = vector.broadcast %cst_9 : f32 to vector<112x256xf32>
      %c0_10 = arith.constant 0 : index
      %c0_11 = arith.constant 0 : index
      %13 = vector.load %arg7[%c0_10, %c0_11] : memref<112x256xf32, #tpu.memory_space<vmem>>, vector<112x256xf32>
      tpu.vector_store %arg7[%c0_10, %c0_11], %12 {strides = array<i32>} : memref<112x256xf32, #tpu.memory_space<vmem>>, vector<112x256xf32>,
    } else {
    }
    %c0 = arith.constant 0 : index
    %c0_1 = arith.constant 0 : index
    %3 = vector.load %arg7[%c0, %c0_1] : memref<112x256xf32, #tpu.memory_space<vmem>>, vector<112x256xf32>
    %c0_2 = arith.constant 0 : index
    %c0_3 = arith.constant 0 : index
    %4 = vector.load %arg3[%c0_2, %c0_3] : memref<112x512xbf16, #tpu.memory_space<vmem>>, vector<112x512xbf16>
    %c0_4 = arith.constant 0 : index
    %c0_5 = arith.constant 0 : index
    %5 = vector.load %arg4[%c0_4, %c0_5] : memref<512x256xbf16, #tpu.memory_space<vmem>>, vector<512x256xbf16>
    %cst = arith.constant dense<0.000000e+00> : vector<112x256xf32>
    %6 = tpu.matmul %4, %5, %cst {dimension_numbers = #tpu.dot_dimension_numbers<[1], [0], [0], [1], [0, 0, 1, 1], [], []>} : vector<112x512xbf16>, vector<512x256xbf16>, vector<112x256xf32> -> vector<112x256xf32>
    %7 = arith.addf %3, %6 : vector<112x256xf32>
    %c0_6 = arith.constant 0 : index
    %c0_7 = arith.constant 0 : index
    %8 = vector.load %arg7[%c0_6, %c0_7] : memref<112x256xf32, #tpu.memory_space<vmem>>, vector<112x256xf32>
    tpu.vector_store %arg7[%c0_6, %c0_7], %7 {strides = array<i32>} : memref<112x256xf32, #tpu.memory_space<vmem>>, vector<112x256xf32>,
    %c2_i32 = arith.constant 2 : i32
    %9 = arith.cmpi eq, %arg2, %c2_i32 : i32
    %10 = arith.extui %9 : i1 to i32
    %c0_i32_8 = arith.constant 0 : i32
    %11 = arith.cmpi ne, %10, %c0_i32_8 : i32
    scf.if %11 {
      %c0_9 = arith.constant 0 : index
      %c0_10 = arith.constant 0 : index
      %12 = vector.load %arg7[%c0_9, %c0_10] : memref<112x256xf32, #tpu.memory_space<vmem>>, vector<112x256xf32>
      %c0_11 = arith.constant 0 : index
      %c0_12 = arith.constant 0 : index
      %13 = vector.load %arg5[%c0_11, %c0_12] : memref<1x256xf32, #tpu.memory_space<vmem>>, vector<1x256xf32>
      %14 = vector.broadcast %13 : vector<1x256xf32> to vector<112x256xf32>
      %15 = arith.addf %12, %14 : vector<112x256xf32>
      %cst_13 = arith.constant 0.000000e+00 : f32
      %16 = vector.broadcast %cst_13 : f32 to vector<112x256xf32>
      %17 = arith.maximumf %15, %16 : vector<112x256xf32>
      %18 = arith.truncf %17 : vector<112x256xf32> to vector<112x256xbf16>
      %c0_14 = arith.constant 0 : index
      %c0_15 = arith.constant 0 : index
      %19 = vector.load %arg6[%c0_14, %c0_15] : memref<112x256xbf16, #tpu.memory_space<vmem>>, vector<112x256xbf16>
      tpu.vector_store %arg6[%c0_14, %c0_15], %18 {strides = array<i32>} : memref<112x256xbf16, #tpu.memory_space<vmem>>, vector<112x256xbf16>,
    } else {
    }
    return
  }
  func.func @transform_0(%arg0: i32, %arg1: i32, %arg2: i32) -> (i32, i32) {
    %c0_i32 = arith.constant 0 : i32
    return %arg0, %arg2 : i32, i32
  }
  func.func @transform_1(%arg0: i32, %arg1: i32, %arg2: i32) -> (i32, i32) {
    %c0_i32 = arith.constant 0 : i32
    return %arg2, %arg1 : i32, i32
  }
  func.func @transform_2(%arg0: i32, %arg1: i32, %arg2: i32) -> (i32, i32) {
    %c0_i32 = arith.constant 0 : i32
    %c0_i32_0 = arith.constant 0 : i32
    return %c0_i32, %arg1 : i32, i32
  }
  func.func @transform_3(%arg0: i32, %arg1: i32, %arg2: i32) -> (i32, i32) {
    %c0_i32 = arith.constant 0 : i32
    return %arg0, %arg1 : i32, i32
  }
}

module attributes {stable_mosaic.version = 11 : i64} {
  func.func @_conv_head_kernel(%arg0: memref<2x56x256xbf16, #tpu.memory_space<vmem>>, %arg1: memref<256x7xf32, #tpu.memory_space<vmem>>, %arg2: memref<1x7xf32, #tpu.memory_space<vmem>>, %arg3: memref<1x7xf32, #tpu.memory_space<vmem>>, %arg4: memref<1x1xf32, #tpu.memory_space<vmem>>, %arg5: memref<2x7xf32, #tpu.memory_space<vmem>>, %arg6: memref<2x1xf32, #tpu.memory_space<vmem>>) attributes {dimension_semantics = [], scalar_prefetch = 0 : i64, scratch_operands = 0 : i64, tpu.core_type = #tpu.core_type<tc>} {
    %c0 = arith.constant 0 : index
    %c0_0 = arith.constant 0 : index
    %c0_1 = arith.constant 0 : index
    %0 = vector.load %arg0[%c0, %c0_0, %c0_1] : memref<2x56x256xbf16, #tpu.memory_space<vmem>>, vector<2x56x256xbf16>
    %1 = arith.extf %0 : vector<2x56x256xbf16> to vector<2x56x256xf32>
    %cst = arith.constant dense<0.000000e+00> : vector<2x256xf32>
    %2 = vector.multi_reduction <add>, %1, %cst [1] : vector<2x56x256xf32> to vector<2x256xf32>
    %cst_2 = arith.constant 5.600000e+01 : f32
    %3 = vector.broadcast %cst_2 : f32 to vector<2x256xf32>
    %4 = arith.divf %2, %3 : vector<2x256xf32>
    %c0_3 = arith.constant 0 : index
    %c0_4 = arith.constant 0 : index
    %5 = vector.load %arg1[%c0_3, %c0_4] : memref<256x7xf32, #tpu.memory_space<vmem>>, vector<256x7xf32>
    %cst_5 = arith.constant dense<0.000000e+00> : vector<2x7xf32>
    %6 = tpu.matmul %4, %5, %cst_5 {dimension_numbers = #tpu.dot_dimension_numbers<[1], [0], [0], [1], [0, 0, 1, 1], [], []>} : vector<2x256xf32>, vector<256x7xf32>, vector<2x7xf32> -> vector<2x7xf32>
    %c0_6 = arith.constant 0 : index
    %c0_7 = arith.constant 0 : index
    %7 = vector.load %arg2[%c0_6, %c0_7] : memref<1x7xf32, #tpu.memory_space<vmem>>, vector<1x7xf32>
    %8 = vector.broadcast %7 : vector<1x7xf32> to vector<2x7xf32>
    %9 = arith.addf %6, %8 : vector<2x7xf32>
    %c0_8 = arith.constant 0 : index
    %c0_9 = arith.constant 0 : index
    %10 = vector.load %arg5[%c0_8, %c0_9] : memref<2x7xf32, #tpu.memory_space<vmem>>, vector<2x7xf32>
    tpu.vector_store %arg5[%c0_8, %c0_9], %9 {strides = array<i32>} : memref<2x7xf32, #tpu.memory_space<vmem>>, vector<2x7xf32>,
    %c0_10 = arith.constant 0 : index
    %c0_11 = arith.constant 0 : index
    %11 = vector.load %arg3[%c0_10, %c0_11] : memref<1x7xf32, #tpu.memory_space<vmem>>, vector<1x7xf32>
    %12 = vector.broadcast %11 : vector<1x7xf32> to vector<2x7xf32>
    %13 = arith.mulf %9, %12 : vector<2x7xf32>
    %cst_12 = arith.constant dense<0.000000e+00> : vector<2xf32>
    %14 = vector.multi_reduction <add>, %13, %cst_12 [1] : vector<2x7xf32> to vector<2xf32>
    %15 = vector.shape_cast %14 : vector<2xf32> to vector<2x1xf32>
    %c0_13 = arith.constant 0 : index
    %c0_14 = arith.constant 0 : index
    %16 = vector.load %arg4[%c0_13, %c0_14] : memref<1x1xf32, #tpu.memory_space<vmem>>, vector<1x1xf32>
    %17 = vector.broadcast %16 : vector<1x1xf32> to vector<2x1xf32>
    %18 = arith.addf %15, %17 : vector<2x1xf32>
    %c0_15 = arith.constant 0 : index
    %c0_16 = arith.constant 0 : index
    %19 = vector.load %arg6[%c0_15, %c0_16] : memref<2x1xf32, #tpu.memory_space<vmem>>, vector<2x1xf32>
    tpu.vector_store %arg6[%c0_15, %c0_16], %18 {strides = array<i32>} : memref<2x1xf32, #tpu.memory_space<vmem>>, vector<2x1xf32>,
    return
  }
}

module attributes {stable_mosaic.version = 11 : i64} {
  func.func @_matmul_kernel(%arg0: i32, %arg1: i32, %arg2: i32, %arg3: memref<16x128xbf16, #tpu.memory_space<vmem>>, %arg4: memref<128x256xbf16, #tpu.memory_space<vmem>>, %arg5: memref<1x256xf32, #tpu.memory_space<vmem>>, %arg6: memref<16x256xf32, #tpu.memory_space<vmem>>, %arg7: memref<16x256xf32, #tpu.memory_space<vmem>>) attributes {dimension_semantics = [#tpu.dimension_semantics<parallel>, #tpu.dimension_semantics<parallel>, #tpu.dimension_semantics<arbitrary>], iteration_bounds = array<i64: 1, 4, 1>, scalar_prefetch = 0 : i64, scratch_operands = 1 : i64, tpu.core_type = #tpu.core_type<tc>, window_params = [{transform_indices = @transform_0, window_bounds = array<i64: 16, 128>}, {transform_indices = @transform_1, window_bounds = array<i64: 128, 256>}, {transform_indices = @transform_2, window_bounds = array<i64: 1, 256>}, {transform_indices = @transform_3, window_bounds = array<i64: 16, 256>}]} {
    %c0_i32 = arith.constant 0 : i32
    %0 = arith.cmpi eq, %arg2, %c0_i32 : i32
    %1 = arith.extui %0 : i1 to i32
    %c0_i32_0 = arith.constant 0 : i32
    %2 = arith.cmpi ne, %1, %c0_i32_0 : i32
    scf.if %2 {
      %cst_10 = arith.constant 0.000000e+00 : f32
      %12 = vector.broadcast %cst_10 : f32 to vector<16x256xf32>
      %c0_11 = arith.constant 0 : index
      %c0_12 = arith.constant 0 : index
      %13 = vector.load %arg7[%c0_11, %c0_12] : memref<16x256xf32, #tpu.memory_space<vmem>>, vector<16x256xf32>
      tpu.vector_store %arg7[%c0_11, %c0_12], %12 {strides = array<i32>} : memref<16x256xf32, #tpu.memory_space<vmem>>, vector<16x256xf32>,
    } else {
    }
    %c0 = arith.constant 0 : index
    %c0_1 = arith.constant 0 : index
    %3 = vector.load %arg7[%c0, %c0_1] : memref<16x256xf32, #tpu.memory_space<vmem>>, vector<16x256xf32>
    %c0_2 = arith.constant 0 : index
    %c0_3 = arith.constant 0 : index
    %4 = vector.load %arg3[%c0_2, %c0_3] : memref<16x128xbf16, #tpu.memory_space<vmem>>, vector<16x128xbf16>
    %c0_4 = arith.constant 0 : index
    %c0_5 = arith.constant 0 : index
    %5 = vector.load %arg4[%c0_4, %c0_5] : memref<128x256xbf16, #tpu.memory_space<vmem>>, vector<128x256xbf16>
    %cst = arith.constant dense<0.000000e+00> : vector<16x256xf32>
    %6 = tpu.matmul %4, %5, %cst {dimension_numbers = #tpu.dot_dimension_numbers<[1], [0], [0], [1], [0, 0, 1, 1], [], []>} : vector<16x128xbf16>, vector<128x256xbf16>, vector<16x256xf32> -> vector<16x256xf32>
    %7 = arith.addf %3, %6 : vector<16x256xf32>
    %c0_6 = arith.constant 0 : index
    %c0_7 = arith.constant 0 : index
    %8 = vector.load %arg7[%c0_6, %c0_7] : memref<16x256xf32, #tpu.memory_space<vmem>>, vector<16x256xf32>
    tpu.vector_store %arg7[%c0_6, %c0_7], %7 {strides = array<i32>} : memref<16x256xf32, #tpu.memory_space<vmem>>, vector<16x256xf32>,
    %c0_i32_8 = arith.constant 0 : i32
    %9 = arith.cmpi eq, %arg2, %c0_i32_8 : i32
    %10 = arith.extui %9 : i1 to i32
    %c0_i32_9 = arith.constant 0 : i32
    %11 = arith.cmpi ne, %10, %c0_i32_9 : i32
    scf.if %11 {
      %c0_10 = arith.constant 0 : index
      %c0_11 = arith.constant 0 : index
      %12 = vector.load %arg7[%c0_10, %c0_11] : memref<16x256xf32, #tpu.memory_space<vmem>>, vector<16x256xf32>
      %c0_12 = arith.constant 0 : index
      %c0_13 = arith.constant 0 : index
      %13 = vector.load %arg5[%c0_12, %c0_13] : memref<1x256xf32, #tpu.memory_space<vmem>>, vector<1x256xf32>
      %14 = vector.broadcast %13 : vector<1x256xf32> to vector<16x256xf32>
      %15 = arith.addf %12, %14 : vector<16x256xf32>
      %c0_14 = arith.constant 0 : index
      %c0_15 = arith.constant 0 : index
      %16 = vector.load %arg6[%c0_14, %c0_15] : memref<16x256xf32, #tpu.memory_space<vmem>>, vector<16x256xf32>
      tpu.vector_store %arg6[%c0_14, %c0_15], %15 {strides = array<i32>} : memref<16x256xf32, #tpu.memory_space<vmem>>, vector<16x256xf32>,
    } else {
    }
    return
  }
  func.func @transform_0(%arg0: i32, %arg1: i32, %arg2: i32) -> (i32, i32) {
    %c0_i32 = arith.constant 0 : i32
    return %arg0, %arg2 : i32, i32
  }
  func.func @transform_1(%arg0: i32, %arg1: i32, %arg2: i32) -> (i32, i32) {
    %c0_i32 = arith.constant 0 : i32
    return %arg2, %arg1 : i32, i32
  }
  func.func @transform_2(%arg0: i32, %arg1: i32, %arg2: i32) -> (i32, i32) {
    %c0_i32 = arith.constant 0 : i32
    %c0_i32_0 = arith.constant 0 : i32
    return %c0_i32, %arg1 : i32, i32
  }
  func.func @transform_3(%arg0: i32, %arg1: i32, %arg2: i32) -> (i32, i32) {
    %c0_i32 = arith.constant 0 : i32
    return %arg0, %arg1 : i32, i32
  }
}

module attributes {stable_mosaic.version = 11 : i64} {
  func.func @_bilstm_kernel(%arg0: memref<8x8x1024xf32, #tpu.memory_space<vmem>>, %arg1: memref<2x128x512xbf16, #tpu.memory_space<vmem>>, %arg2: memref<8x8x256xf32, #tpu.memory_space<vmem>>) attributes {dimension_semantics = [], scalar_prefetch = 0 : i64, scratch_operands = 0 : i64, tpu.core_type = #tpu.core_type<tc>} {
    %c0 = arith.constant 0 : index
    %c0_0 = arith.constant 0 : index
    %c0_1 = arith.constant 0 : index
    %0 = vector.load %arg1[%c0, %c0_0, %c0_1] : memref<2x128x512xbf16, #tpu.memory_space<vmem>>, vector<1x128x512xbf16>
    %1 = vector.shape_cast %0 : vector<1x128x512xbf16> to vector<128x512xbf16>
    %c1 = arith.constant 1 : index
    %c0_2 = arith.constant 0 : index
    %c0_3 = arith.constant 0 : index
    %2 = vector.load %arg1[%c1, %c0_2, %c0_3] : memref<2x128x512xbf16, #tpu.memory_space<vmem>>, vector<1x128x512xbf16>
    %3 = vector.shape_cast %2 : vector<1x128x512xbf16> to vector<128x512xbf16>
    %cst = arith.constant 0.000000e+00 : f32
    %4 = vector.broadcast %cst : f32 to vector<2x8x128xf32>
    %c0_i32 = arith.constant 0 : i32
    %5 = arith.index_cast %c0_i32 : i32 to index
    %c0_4 = arith.constant 0 : index
    %c0_5 = arith.constant 0 : index
    %6 = vector.load %arg0[%5, %c0_4, %c0_5] : memref<8x8x1024xf32, #tpu.memory_space<vmem>>, vector<1x8x512xf32>
    %7 = vector.shape_cast %6 : vector<1x8x512xf32> to vector<8x512xf32>
    %c7_i32 = arith.constant 7 : i32
    %8 = arith.subi %c7_i32, %c0_i32 : i32
    %9 = arith.index_cast %8 : i32 to index
    %c0_6 = arith.constant 0 : index
    %c512 = arith.constant 512 : index
    %10 = vector.load %arg0[%9, %c0_6, %c512] : memref<8x8x1024xf32, #tpu.memory_space<vmem>>, vector<1x8x512xf32>
    %11 = vector.shape_cast %10 : vector<1x8x512xf32> to vector<8x512xf32>
    %12 = vector.extract_strided_slice %4 {offsets = [0, 0, 0], sizes = [1, 8, 128], strides = [1, 1, 1]} : vector<2x8x128xf32> to vector<1x8x128xf32>
    %13 = vector.shape_cast %12 : vector<1x8x128xf32> to vector<8x128xf32>
    %14 = arith.truncf %13 : vector<8x128xf32> to vector<8x128xbf16>
    %cst_7 = arith.constant dense<0.000000e+00> : vector<8x512xf32>
    %15 = tpu.matmul %14, %1, %cst_7 {dimension_numbers = #tpu.dot_dimension_numbers<[1], [0], [0], [1], [0, 0, 1, 1], [], []>} : vector<8x128xbf16>, vector<128x512xbf16>, vector<8x512xf32> -> vector<8x512xf32>
    %16 = arith.addf %7, %15 : vector<8x512xf32>
    %17 = vector.extract_strided_slice %4 {offsets = [1, 0, 0], sizes = [1, 8, 128], strides = [1, 1, 1]} : vector<2x8x128xf32> to vector<1x8x128xf32>
    %18 = vector.shape_cast %17 : vector<1x8x128xf32> to vector<8x128xf32>
    %19 = arith.truncf %18 : vector<8x128xf32> to vector<8x128xbf16>
    %cst_8 = arith.constant dense<0.000000e+00> : vector<8x512xf32>
    %20 = tpu.matmul %19, %3, %cst_8 {dimension_numbers = #tpu.dot_dimension_numbers<[1], [0], [0], [1], [0, 0, 1, 1], [], []>} : vector<8x128xbf16>, vector<128x512xbf16>, vector<8x512xf32> -> vector<8x512xf32>
    %21 = arith.addf %11, %20 : vector<8x512xf32>
    %22 = vector.shape_cast %16 : vector<8x512xf32> to vector<1x8x512xf32>
    %23 = vector.shape_cast %21 : vector<8x512xf32> to vector<1x8x512xf32>
    %24 = tpu.concatenate %22, %23 in 0 : vector<1x8x512xf32>, vector<1x8x512xf32> -> vector<2x8x512xf32>
    %25 = vector.extract_strided_slice %24 {offsets = [0, 0, 0], sizes = [2, 8, 384], strides = [1, 1, 1]} : vector<2x8x512xf32> to vector<2x8x384xf32>
    %26 = arith.negf %25 : vector<2x8x384xf32>
    %27 = math.exp %26 : vector<2x8x384xf32>
    %cst_9 = arith.constant 1.000000e+00 : f32
    %28 = vector.broadcast %cst_9 : f32 to vector<2x8x384xf32>
    %29 = arith.addf %28, %27 : vector<2x8x384xf32>
    %30 = arith.divf %28, %29 : vector<2x8x384xf32>
    %31 = vector.extract_strided_slice %30 {offsets = [0, 0, 0], sizes = [2, 8, 128], strides = [1, 1, 1]} : vector<2x8x384xf32> to vector<2x8x128xf32>
    %32 = vector.extract_strided_slice %30 {offsets = [0, 0, 128], sizes = [2, 8, 128], strides = [1, 1, 1]} : vector<2x8x384xf32> to vector<2x8x128xf32>
    %33 = vector.extract_strided_slice %30 {offsets = [0, 0, 256], sizes = [2, 8, 128], strides = [1, 1, 1]} : vector<2x8x384xf32> to vector<2x8x128xf32>
    %34 = vector.extract_strided_slice %24 {offsets = [0, 0, 384], sizes = [2, 8, 128], strides = [1, 1, 1]} : vector<2x8x512xf32> to vector<2x8x128xf32>
    %35 = math.tanh %34 : vector<2x8x128xf32>
    %36 = arith.mulf %32, %4 : vector<2x8x128xf32>
    %37 = arith.mulf %31, %35 : vector<2x8x128xf32>
    %38 = arith.addf %36, %37 : vector<2x8x128xf32>
    %39 = math.tanh %38 : vector<2x8x128xf32>
    %40 = arith.mulf %33, %39 : vector<2x8x128xf32>
    %41 = vector.extract_strided_slice %40 {offsets = [0, 0, 0], sizes = [1, 8, 128], strides = [1, 1, 1]} : vector<2x8x128xf32> to vector<1x8x128xf32>
    %42 = vector.shape_cast %41 : vector<1x8x128xf32> to vector<8x128xf32>
    %43 = arith.index_cast %c0_i32 : i32 to index
    %c0_10 = arith.constant 0 : index
    %c0_11 = arith.constant 0 : index
    %44 = vector.load %arg2[%43, %c0_10, %c0_11] : memref<8x8x256xf32, #tpu.memory_space<vmem>>, vector<1x8x128xf32>
    %45 = vector.shape_cast %44 : vector<1x8x128xf32> to vector<8x128xf32>
    %46 = vector.shape_cast %42 : vector<8x128xf32> to vector<1x8x128xf32>
    tpu.vector_store %arg2[%43, %c0_10, %c0_11], %46 {strides = array<i32>} : memref<8x8x256xf32, #tpu.memory_space<vmem>>, vector<1x8x128xf32>,
    %47 = vector.extract_strided_slice %40 {offsets = [1, 0, 0], sizes = [1, 8, 128], strides = [1, 1, 1]} : vector<2x8x128xf32> to vector<1x8x128xf32>
    %48 = vector.shape_cast %47 : vector<1x8x128xf32> to vector<8x128xf32>
    %c7_i32_12 = arith.constant 7 : i32
    %49 = arith.subi %c7_i32_12, %c0_i32 : i32
    %50 = arith.index_cast %49 : i32 to index
    %c0_13 = arith.constant 0 : index
    %c128 = arith.constant 128 : index
    %51 = vector.load %arg2[%50, %c0_13, %c128] : memref<8x8x256xf32, #tpu.memory_space<vmem>>, vector<1x8x128xf32>
    %52 = vector.shape_cast %51 : vector<1x8x128xf32> to vector<8x128xf32>
    %53 = vector.shape_cast %48 : vector<8x128xf32> to vector<1x8x128xf32>
    tpu.vector_store %arg2[%50, %c0_13, %c128], %53 {strides = array<i32>} : memref<8x8x256xf32, #tpu.memory_space<vmem>>, vector<1x8x128xf32>,
    %c1_i32 = arith.constant 1 : i32
    %54 = arith.index_cast %c1_i32 : i32 to index
    %c0_14 = arith.constant 0 : index
    %c0_15 = arith.constant 0 : index
    %55 = vector.load %arg0[%54, %c0_14, %c0_15] : memref<8x8x1024xf32, #tpu.memory_space<vmem>>, vector<1x8x512xf32>
    %56 = vector.shape_cast %55 : vector<1x8x512xf32> to vector<8x512xf32>
    %c7_i32_16 = arith.constant 7 : i32
    %57 = arith.subi %c7_i32_16, %c1_i32 : i32
    %58 = arith.index_cast %57 : i32 to index
    %c0_17 = arith.constant 0 : index
    %c512_18 = arith.constant 512 : index
    %59 = vector.load %arg0[%58, %c0_17, %c512_18] : memref<8x8x1024xf32, #tpu.memory_space<vmem>>, vector<1x8x512xf32>
    %60 = vector.shape_cast %59 : vector<1x8x512xf32> to vector<8x512xf32>
    %61 = vector.extract_strided_slice %40 {offsets = [0, 0, 0], sizes = [1, 8, 128], strides = [1, 1, 1]} : vector<2x8x128xf32> to vector<1x8x128xf32>
    %62 = vector.shape_cast %61 : vector<1x8x128xf32> to vector<8x128xf32>
    %63 = arith.truncf %62 : vector<8x128xf32> to vector<8x128xbf16>
    %cst_19 = arith.constant dense<0.000000e+00> : vector<8x512xf32>
    %64 = tpu.matmul %63, %1, %cst_19 {dimension_numbers = #tpu.dot_dimension_numbers<[1], [0], [0], [1], [0, 0, 1, 1], [], []>} : vector<8x128xbf16>, vector<128x512xbf16>, vector<8x512xf32> -> vector<8x512xf32>
    %65 = arith.addf %56, %64 : vector<8x512xf32>
    %66 = vector.extract_strided_slice %40 {offsets = [1, 0, 0], sizes = [1, 8, 128], strides = [1, 1, 1]} : vector<2x8x128xf32> to vector<1x8x128xf32>
    %67 = vector.shape_cast %66 : vector<1x8x128xf32> to vector<8x128xf32>
    %68 = arith.truncf %67 : vector<8x128xf32> to vector<8x128xbf16>
    %cst_20 = arith.constant dense<0.000000e+00> : vector<8x512xf32>
    %69 = tpu.matmul %68, %3, %cst_20 {dimension_numbers = #tpu.dot_dimension_numbers<[1], [0], [0], [1], [0, 0, 1, 1], [], []>} : vector<8x128xbf16>, vector<128x512xbf16>, vector<8x512xf32> -> vector<8x512xf32>
    %70 = arith.addf %60, %69 : vector<8x512xf32>
    %71 = vector.shape_cast %65 : vector<8x512xf32> to vector<1x8x512xf32>
    %72 = vector.shape_cast %70 : vector<8x512xf32> to vector<1x8x512xf32>
    %73 = tpu.concatenate %71, %72 in 0 : vector<1x8x512xf32>, vector<1x8x512xf32> -> vector<2x8x512xf32>
    %74 = vector.extract_strided_slice %73 {offsets = [0, 0, 0], sizes = [2, 8, 384], strides = [1, 1, 1]} : vector<2x8x512xf32> to vector<2x8x384xf32>
    %75 = arith.negf %74 : vector<2x8x384xf32>
    %76 = math.exp %75 : vector<2x8x384xf32>
    %cst_21 = arith.constant 1.000000e+00 : f32
    %77 = vector.broadcast %cst_21 : f32 to vector<2x8x384xf32>
    %78 = arith.addf %77, %76 : vector<2x8x384xf32>
    %79 = arith.divf %77, %78 : vector<2x8x384xf32>
    %80 = vector.extract_strided_slice %79 {offsets = [0, 0, 0], sizes = [2, 8, 128], strides = [1, 1, 1]} : vector<2x8x384xf32> to vector<2x8x128xf32>
    %81 = vector.extract_strided_slice %79 {offsets = [0, 0, 128], sizes = [2, 8, 128], strides = [1, 1, 1]} : vector<2x8x384xf32> to vector<2x8x128xf32>
    %82 = vector.extract_strided_slice %79 {offsets = [0, 0, 256], sizes = [2, 8, 128], strides = [1, 1, 1]} : vector<2x8x384xf32> to vector<2x8x128xf32>
    %83 = vector.extract_strided_slice %73 {offsets = [0, 0, 384], sizes = [2, 8, 128], strides = [1, 1, 1]} : vector<2x8x512xf32> to vector<2x8x128xf32>
    %84 = math.tanh %83 : vector<2x8x128xf32>
    %85 = arith.mulf %81, %38 : vector<2x8x128xf32>
    %86 = arith.mulf %80, %84 : vector<2x8x128xf32>
    %87 = arith.addf %85, %86 : vector<2x8x128xf32>
    %88 = math.tanh %87 : vector<2x8x128xf32>
    %89 = arith.mulf %82, %88 : vector<2x8x128xf32>
    %90 = vector.extract_strided_slice %89 {offsets = [0, 0, 0], sizes = [1, 8, 128], strides = [1, 1, 1]} : vector<2x8x128xf32> to vector<1x8x128xf32>
    %91 = vector.shape_cast %90 : vector<1x8x128xf32> to vector<8x128xf32>
    %92 = arith.index_cast %c1_i32 : i32 to index
    %c0_22 = arith.constant 0 : index
    %c0_23 = arith.constant 0 : index
    %93 = vector.load %arg2[%92, %c0_22, %c0_23] : memref<8x8x256xf32, #tpu.memory_space<vmem>>, vector<1x8x128xf32>
    %94 = vector.shape_cast %93 : vector<1x8x128xf32> to vector<8x128xf32>
    %95 = vector.shape_cast %91 : vector<8x128xf32> to vector<1x8x128xf32>
    tpu.vector_store %arg2[%92, %c0_22, %c0_23], %95 {strides = array<i32>} : memref<8x8x256xf32, #tpu.memory_space<vmem>>, vector<1x8x128xf32>,
    %96 = vector.extract_strided_slice %89 {offsets = [1, 0, 0], sizes = [1, 8, 128], strides = [1, 1, 1]} : vector<2x8x128xf32> to vector<1x8x128xf32>
    %97 = vector.shape_cast %96 : vector<1x8x128xf32> to vector<8x128xf32>
    %c7_i32_24 = arith.constant 7 : i32
    %98 = arith.subi %c7_i32_24, %c1_i32 : i32
    %99 = arith.index_cast %98 : i32 to index
    %c0_25 = arith.constant 0 : index
    %c128_26 = arith.constant 128 : index
    %100 = vector.load %arg2[%99, %c0_25, %c128_26] : memref<8x8x256xf32, #tpu.memory_space<vmem>>, vector<1x8x128xf32>
    %101 = vector.shape_cast %100 : vector<1x8x128xf32> to vector<8x128xf32>
    %102 = vector.shape_cast %97 : vector<8x128xf32> to vector<1x8x128xf32>
    tpu.vector_store %arg2[%99, %c0_25, %c128_26], %102 {strides = array<i32>} : memref<8x8x256xf32, #tpu.memory_space<vmem>>, vector<1x8x128xf32>,
    %c2_i32 = arith.constant 2 : i32
    %103 = arith.index_cast %c2_i32 : i32 to index
    %c0_27 = arith.constant 0 : index
    %c0_28 = arith.constant 0 : index
    %104 = vector.load %arg0[%103, %c0_27, %c0_28] : memref<8x8x1024xf32, #tpu.memory_space<vmem>>, vector<1x8x512xf32>
    %105 = vector.shape_cast %104 : vector<1x8x512xf32> to vector<8x512xf32>
    %c7_i32_29 = arith.constant 7 : i32
    %106 = arith.subi %c7_i32_29, %c2_i32 : i32
    %107 = arith.index_cast %106 : i32 to index
    %c0_30 = arith.constant 0 : index
    %c512_31 = arith.constant 512 : index
    %108 = vector.load %arg0[%107, %c0_30, %c512_31] : memref<8x8x1024xf32, #tpu.memory_space<vmem>>, vector<1x8x512xf32>
    %109 = vector.shape_cast %108 : vector<1x8x512xf32> to vector<8x512xf32>
    %110 = vector.extract_strided_slice %89 {offsets = [0, 0, 0], sizes = [1, 8, 128], strides = [1, 1, 1]} : vector<2x8x128xf32> to vector<1x8x128xf32>
    %111 = vector.shape_cast %110 : vector<1x8x128xf32> to vector<8x128xf32>
    %112 = arith.truncf %111 : vector<8x128xf32> to vector<8x128xbf16>
    %cst_32 = arith.constant dense<0.000000e+00> : vector<8x512xf32>
    %113 = tpu.matmul %112, %1, %cst_32 {dimension_numbers = #tpu.dot_dimension_numbers<[1], [0], [0], [1], [0, 0, 1, 1], [], []>} : vector<8x128xbf16>, vector<128x512xbf16>, vector<8x512xf32> -> vector<8x512xf32>
    %114 = arith.addf %105, %113 : vector<8x512xf32>
    %115 = vector.extract_strided_slice %89 {offsets = [1, 0, 0], sizes = [1, 8, 128], strides = [1, 1, 1]} : vector<2x8x128xf32> to vector<1x8x128xf32>
    %116 = vector.shape_cast %115 : vector<1x8x128xf32> to vector<8x128xf32>
    %117 = arith.truncf %116 : vector<8x128xf32> to vector<8x128xbf16>
    %cst_33 = arith.constant dense<0.000000e+00> : vector<8x512xf32>
    %118 = tpu.matmul %117, %3, %cst_33 {dimension_numbers = #tpu.dot_dimension_numbers<[1], [0], [0], [1], [0, 0, 1, 1], [], []>} : vector<8x128xbf16>, vector<128x512xbf16>, vector<8x512xf32> -> vector<8x512xf32>
    %119 = arith.addf %109, %118 : vector<8x512xf32>
    %120 = vector.shape_cast %114 : vector<8x512xf32> to vector<1x8x512xf32>
    %121 = vector.shape_cast %119 : vector<8x512xf32> to vector<1x8x512xf32>
    %122 = tpu.concatenate %120, %121 in 0 : vector<1x8x512xf32>, vector<1x8x512xf32> -> vector<2x8x512xf32>
    %123 = vector.extract_strided_slice %122 {offsets = [0, 0, 0], sizes = [2, 8, 384], strides = [1, 1, 1]} : vector<2x8x512xf32> to vector<2x8x384xf32>
    %124 = arith.negf %123 : vector<2x8x384xf32>
    %125 = math.exp %124 : vector<2x8x384xf32>
    %cst_34 = arith.constant 1.000000e+00 : f32
    %126 = vector.broadcast %cst_34 : f32 to vector<2x8x384xf32>
    %127 = arith.addf %126, %125 : vector<2x8x384xf32>
    %128 = arith.divf %126, %127 : vector<2x8x384xf32>
    %129 = vector.extract_strided_slice %128 {offsets = [0, 0, 0], sizes = [2, 8, 128], strides = [1, 1, 1]} : vector<2x8x384xf32> to vector<2x8x128xf32>
    %130 = vector.extract_strided_slice %128 {offsets = [0, 0, 128], sizes = [2, 8, 128], strides = [1, 1, 1]} : vector<2x8x384xf32> to vector<2x8x128xf32>
    %131 = vector.extract_strided_slice %128 {offsets = [0, 0, 256], sizes = [2, 8, 128], strides = [1, 1, 1]} : vector<2x8x384xf32> to vector<2x8x128xf32>
    %132 = vector.extract_strided_slice %122 {offsets = [0, 0, 384], sizes = [2, 8, 128], strides = [1, 1, 1]} : vector<2x8x512xf32> to vector<2x8x128xf32>
    %133 = math.tanh %132 : vector<2x8x128xf32>
    %134 = arith.mulf %130, %87 : vector<2x8x128xf32>
    %135 = arith.mulf %129, %133 : vector<2x8x128xf32>
    %136 = arith.addf %134, %135 : vector<2x8x128xf32>
    %137 = math.tanh %136 : vector<2x8x128xf32>
    %138 = arith.mulf %131, %137 : vector<2x8x128xf32>
    %139 = vector.extract_strided_slice %138 {offsets = [0, 0, 0], sizes = [1, 8, 128], strides = [1, 1, 1]} : vector<2x8x128xf32> to vector<1x8x128xf32>
    %140 = vector.shape_cast %139 : vector<1x8x128xf32> to vector<8x128xf32>
    %141 = arith.index_cast %c2_i32 : i32 to index
    %c0_35 = arith.constant 0 : index
    %c0_36 = arith.constant 0 : index
    %142 = vector.load %arg2[%141, %c0_35, %c0_36] : memref<8x8x256xf32, #tpu.memory_space<vmem>>, vector<1x8x128xf32>
    %143 = vector.shape_cast %142 : vector<1x8x128xf32> to vector<8x128xf32>
    %144 = vector.shape_cast %140 : vector<8x128xf32> to vector<1x8x128xf32>
    tpu.vector_store %arg2[%141, %c0_35, %c0_36], %144 {strides = array<i32>} : memref<8x8x256xf32, #tpu.memory_space<vmem>>, vector<1x8x128xf32>,
    %145 = vector.extract_strided_slice %138 {offsets = [1, 0, 0], sizes = [1, 8, 128], strides = [1, 1, 1]} : vector<2x8x128xf32> to vector<1x8x128xf32>
    %146 = vector.shape_cast %145 : vector<1x8x128xf32> to vector<8x128xf32>
    %c7_i32_37 = arith.constant 7 : i32
    %147 = arith.subi %c7_i32_37, %c2_i32 : i32
    %148 = arith.index_cast %147 : i32 to index
    %c0_38 = arith.constant 0 : index
    %c128_39 = arith.constant 128 : index
    %149 = vector.load %arg2[%148, %c0_38, %c128_39] : memref<8x8x256xf32, #tpu.memory_space<vmem>>, vector<1x8x128xf32>
    %150 = vector.shape_cast %149 : vector<1x8x128xf32> to vector<8x128xf32>
    %151 = vector.shape_cast %146 : vector<8x128xf32> to vector<1x8x128xf32>
    tpu.vector_store %arg2[%148, %c0_38, %c128_39], %151 {strides = array<i32>} : memref<8x8x256xf32, #tpu.memory_space<vmem>>, vector<1x8x128xf32>,
    %c3_i32 = arith.constant 3 : i32
    %152 = arith.index_cast %c3_i32 : i32 to index
    %c0_40 = arith.constant 0 : index
    %c0_41 = arith.constant 0 : index
    %153 = vector.load %arg0[%152, %c0_40, %c0_41] : memref<8x8x1024xf32, #tpu.memory_space<vmem>>, vector<1x8x512xf32>
    %154 = vector.shape_cast %153 : vector<1x8x512xf32> to vector<8x512xf32>
    %c7_i32_42 = arith.constant 7 : i32
    %155 = arith.subi %c7_i32_42, %c3_i32 : i32
    %156 = arith.index_cast %155 : i32 to index
    %c0_43 = arith.constant 0 : index
    %c512_44 = arith.constant 512 : index
    %157 = vector.load %arg0[%156, %c0_43, %c512_44] : memref<8x8x1024xf32, #tpu.memory_space<vmem>>, vector<1x8x512xf32>
    %158 = vector.shape_cast %157 : vector<1x8x512xf32> to vector<8x512xf32>
    %159 = vector.extract_strided_slice %138 {offsets = [0, 0, 0], sizes = [1, 8, 128], strides = [1, 1, 1]} : vector<2x8x128xf32> to vector<1x8x128xf32>
    %160 = vector.shape_cast %159 : vector<1x8x128xf32> to vector<8x128xf32>
    %161 = arith.truncf %160 : vector<8x128xf32> to vector<8x128xbf16>
    %cst_45 = arith.constant dense<0.000000e+00> : vector<8x512xf32>
    %162 = tpu.matmul %161, %1, %cst_45 {dimension_numbers = #tpu.dot_dimension_numbers<[1], [0], [0], [1], [0, 0, 1, 1], [], []>} : vector<8x128xbf16>, vector<128x512xbf16>, vector<8x512xf32> -> vector<8x512xf32>
    %163 = arith.addf %154, %162 : vector<8x512xf32>
    %164 = vector.extract_strided_slice %138 {offsets = [1, 0, 0], sizes = [1, 8, 128], strides = [1, 1, 1]} : vector<2x8x128xf32> to vector<1x8x128xf32>
    %165 = vector.shape_cast %164 : vector<1x8x128xf32> to vector<8x128xf32>
    %166 = arith.truncf %165 : vector<8x128xf32> to vector<8x128xbf16>
    %cst_46 = arith.constant dense<0.000000e+00> : vector<8x512xf32>
    %167 = tpu.matmul %166, %3, %cst_46 {dimension_numbers = #tpu.dot_dimension_numbers<[1], [0], [0], [1], [0, 0, 1, 1], [], []>} : vector<8x128xbf16>, vector<128x512xbf16>, vector<8x512xf32> -> vector<8x512xf32>
    %168 = arith.addf %158, %167 : vector<8x512xf32>
    %169 = vector.shape_cast %163 : vector<8x512xf32> to vector<1x8x512xf32>
    %170 = vector.shape_cast %168 : vector<8x512xf32> to vector<1x8x512xf32>
    %171 = tpu.concatenate %169, %170 in 0 : vector<1x8x512xf32>, vector<1x8x512xf32> -> vector<2x8x512xf32>
    %172 = vector.extract_strided_slice %171 {offsets = [0, 0, 0], sizes = [2, 8, 384], strides = [1, 1, 1]} : vector<2x8x512xf32> to vector<2x8x384xf32>
    %173 = arith.negf %172 : vector<2x8x384xf32>
    %174 = math.exp %173 : vector<2x8x384xf32>
    %cst_47 = arith.constant 1.000000e+00 : f32
    %175 = vector.broadcast %cst_47 : f32 to vector<2x8x384xf32>
    %176 = arith.addf %175, %174 : vector<2x8x384xf32>
    %177 = arith.divf %175, %176 : vector<2x8x384xf32>
    %178 = vector.extract_strided_slice %177 {offsets = [0, 0, 0], sizes = [2, 8, 128], strides = [1, 1, 1]} : vector<2x8x384xf32> to vector<2x8x128xf32>
    %179 = vector.extract_strided_slice %177 {offsets = [0, 0, 128], sizes = [2, 8, 128], strides = [1, 1, 1]} : vector<2x8x384xf32> to vector<2x8x128xf32>
    %180 = vector.extract_strided_slice %177 {offsets = [0, 0, 256], sizes = [2, 8, 128], strides = [1, 1, 1]} : vector<2x8x384xf32> to vector<2x8x128xf32>
    %181 = vector.extract_strided_slice %171 {offsets = [0, 0, 384], sizes = [2, 8, 128], strides = [1, 1, 1]} : vector<2x8x512xf32> to vector<2x8x128xf32>
    %182 = math.tanh %181 : vector<2x8x128xf32>
    %183 = arith.mulf %179, %136 : vector<2x8x128xf32>
    %184 = arith.mulf %178, %182 : vector<2x8x128xf32>
    %185 = arith.addf %183, %184 : vector<2x8x128xf32>
    %186 = math.tanh %185 : vector<2x8x128xf32>
    %187 = arith.mulf %180, %186 : vector<2x8x128xf32>
    %188 = vector.extract_strided_slice %187 {offsets = [0, 0, 0], sizes = [1, 8, 128], strides = [1, 1, 1]} : vector<2x8x128xf32> to vector<1x8x128xf32>
    %189 = vector.shape_cast %188 : vector<1x8x128xf32> to vector<8x128xf32>
    %190 = arith.index_cast %c3_i32 : i32 to index
    %c0_48 = arith.constant 0 : index
    %c0_49 = arith.constant 0 : index
    %191 = vector.load %arg2[%190, %c0_48, %c0_49] : memref<8x8x256xf32, #tpu.memory_space<vmem>>, vector<1x8x128xf32>
    %192 = vector.shape_cast %191 : vector<1x8x128xf32> to vector<8x128xf32>
    %193 = vector.shape_cast %189 : vector<8x128xf32> to vector<1x8x128xf32>
    tpu.vector_store %arg2[%190, %c0_48, %c0_49], %193 {strides = array<i32>} : memref<8x8x256xf32, #tpu.memory_space<vmem>>, vector<1x8x128xf32>,
    %194 = vector.extract_strided_slice %187 {offsets = [1, 0, 0], sizes = [1, 8, 128], strides = [1, 1, 1]} : vector<2x8x128xf32> to vector<1x8x128xf32>
    %195 = vector.shape_cast %194 : vector<1x8x128xf32> to vector<8x128xf32>
    %c7_i32_50 = arith.constant 7 : i32
    %196 = arith.subi %c7_i32_50, %c3_i32 : i32
    %197 = arith.index_cast %196 : i32 to index
    %c0_51 = arith.constant 0 : index
    %c128_52 = arith.constant 128 : index
    %198 = vector.load %arg2[%197, %c0_51, %c128_52] : memref<8x8x256xf32, #tpu.memory_space<vmem>>, vector<1x8x128xf32>
    %199 = vector.shape_cast %198 : vector<1x8x128xf32> to vector<8x128xf32>
    %200 = vector.shape_cast %195 : vector<8x128xf32> to vector<1x8x128xf32>
    tpu.vector_store %arg2[%197, %c0_51, %c128_52], %200 {strides = array<i32>} : memref<8x8x256xf32, #tpu.memory_space<vmem>>, vector<1x8x128xf32>,
    %c4_i32 = arith.constant 4 : i32
    %201 = arith.index_cast %c4_i32 : i32 to index
    %c0_53 = arith.constant 0 : index
    %c0_54 = arith.constant 0 : index
    %202 = vector.load %arg0[%201, %c0_53, %c0_54] : memref<8x8x1024xf32, #tpu.memory_space<vmem>>, vector<1x8x512xf32>
    %203 = vector.shape_cast %202 : vector<1x8x512xf32> to vector<8x512xf32>
    %c7_i32_55 = arith.constant 7 : i32
    %204 = arith.subi %c7_i32_55, %c4_i32 : i32
    %205 = arith.index_cast %204 : i32 to index
    %c0_56 = arith.constant 0 : index
    %c512_57 = arith.constant 512 : index
    %206 = vector.load %arg0[%205, %c0_56, %c512_57] : memref<8x8x1024xf32, #tpu.memory_space<vmem>>, vector<1x8x512xf32>
    %207 = vector.shape_cast %206 : vector<1x8x512xf32> to vector<8x512xf32>
    %208 = vector.extract_strided_slice %187 {offsets = [0, 0, 0], sizes = [1, 8, 128], strides = [1, 1, 1]} : vector<2x8x128xf32> to vector<1x8x128xf32>
    %209 = vector.shape_cast %208 : vector<1x8x128xf32> to vector<8x128xf32>
    %210 = arith.truncf %209 : vector<8x128xf32> to vector<8x128xbf16>
    %cst_58 = arith.constant dense<0.000000e+00> : vector<8x512xf32>
    %211 = tpu.matmul %210, %1, %cst_58 {dimension_numbers = #tpu.dot_dimension_numbers<[1], [0], [0], [1], [0, 0, 1, 1], [], []>} : vector<8x128xbf16>, vector<128x512xbf16>, vector<8x512xf32> -> vector<8x512xf32>
    %212 = arith.addf %203, %211 : vector<8x512xf32>
    %213 = vector.extract_strided_slice %187 {offsets = [1, 0, 0], sizes = [1, 8, 128], strides = [1, 1, 1]} : vector<2x8x128xf32> to vector<1x8x128xf32>
    %214 = vector.shape_cast %213 : vector<1x8x128xf32> to vector<8x128xf32>
    %215 = arith.truncf %214 : vector<8x128xf32> to vector<8x128xbf16>
    %cst_59 = arith.constant dense<0.000000e+00> : vector<8x512xf32>
    %216 = tpu.matmul %215, %3, %cst_59 {dimension_numbers = #tpu.dot_dimension_numbers<[1], [0], [0], [1], [0, 0, 1, 1], [], []>} : vector<8x128xbf16>, vector<128x512xbf16>, vector<8x512xf32> -> vector<8x512xf32>
    %217 = arith.addf %207, %216 : vector<8x512xf32>
    %218 = vector.shape_cast %212 : vector<8x512xf32> to vector<1x8x512xf32>
    %219 = vector.shape_cast %217 : vector<8x512xf32> to vector<1x8x512xf32>
    %220 = tpu.concatenate %218, %219 in 0 : vector<1x8x512xf32>, vector<1x8x512xf32> -> vector<2x8x512xf32>
    %221 = vector.extract_strided_slice %220 {offsets = [0, 0, 0], sizes = [2, 8, 384], strides = [1, 1, 1]} : vector<2x8x512xf32> to vector<2x8x384xf32>
    %222 = arith.negf %221 : vector<2x8x384xf32>
    %223 = math.exp %222 : vector<2x8x384xf32>
    %cst_60 = arith.constant 1.000000e+00 : f32
    %224 = vector.broadcast %cst_60 : f32 to vector<2x8x384xf32>
    %225 = arith.addf %224, %223 : vector<2x8x384xf32>
    %226 = arith.divf %224, %225 : vector<2x8x384xf32>
    %227 = vector.extract_strided_slice %226 {offsets = [0, 0, 0], sizes = [2, 8, 128], strides = [1, 1, 1]} : vector<2x8x384xf32> to vector<2x8x128xf32>
    %228 = vector.extract_strided_slice %226 {offsets = [0, 0, 128], sizes = [2, 8, 128], strides = [1, 1, 1]} : vector<2x8x384xf32> to vector<2x8x128xf32>
    %229 = vector.extract_strided_slice %226 {offsets = [0, 0, 256], sizes = [2, 8, 128], strides = [1, 1, 1]} : vector<2x8x384xf32> to vector<2x8x128xf32>
    %230 = vector.extract_strided_slice %220 {offsets = [0, 0, 384], sizes = [2, 8, 128], strides = [1, 1, 1]} : vector<2x8x512xf32> to vector<2x8x128xf32>
    %231 = math.tanh %230 : vector<2x8x128xf32>
    %232 = arith.mulf %228, %185 : vector<2x8x128xf32>
    %233 = arith.mulf %227, %231 : vector<2x8x128xf32>
    %234 = arith.addf %232, %233 : vector<2x8x128xf32>
    %235 = math.tanh %234 : vector<2x8x128xf32>
    %236 = arith.mulf %229, %235 : vector<2x8x128xf32>
    %237 = vector.extract_strided_slice %236 {offsets = [0, 0, 0], sizes = [1, 8, 128], strides = [1, 1, 1]} : vector<2x8x128xf32> to vector<1x8x128xf32>
    %238 = vector.shape_cast %237 : vector<1x8x128xf32> to vector<8x128xf32>
    %239 = arith.index_cast %c4_i32 : i32 to index
    %c0_61 = arith.constant 0 : index
    %c0_62 = arith.constant 0 : index
    %240 = vector.load %arg2[%239, %c0_61, %c0_62] : memref<8x8x256xf32, #tpu.memory_space<vmem>>, vector<1x8x128xf32>
    %241 = vector.shape_cast %240 : vector<1x8x128xf32> to vector<8x128xf32>
    %242 = vector.shape_cast %238 : vector<8x128xf32> to vector<1x8x128xf32>
    tpu.vector_store %arg2[%239, %c0_61, %c0_62], %242 {strides = array<i32>} : memref<8x8x256xf32, #tpu.memory_space<vmem>>, vector<1x8x128xf32>,
    %243 = vector.extract_strided_slice %236 {offsets = [1, 0, 0], sizes = [1, 8, 128], strides = [1, 1, 1]} : vector<2x8x128xf32> to vector<1x8x128xf32>
    %244 = vector.shape_cast %243 : vector<1x8x128xf32> to vector<8x128xf32>
    %c7_i32_63 = arith.constant 7 : i32
    %245 = arith.subi %c7_i32_63, %c4_i32 : i32
    %246 = arith.index_cast %245 : i32 to index
    %c0_64 = arith.constant 0 : index
    %c128_65 = arith.constant 128 : index
    %247 = vector.load %arg2[%246, %c0_64, %c128_65] : memref<8x8x256xf32, #tpu.memory_space<vmem>>, vector<1x8x128xf32>
    %248 = vector.shape_cast %247 : vector<1x8x128xf32> to vector<8x128xf32>
    %249 = vector.shape_cast %244 : vector<8x128xf32> to vector<1x8x128xf32>
    tpu.vector_store %arg2[%246, %c0_64, %c128_65], %249 {strides = array<i32>} : memref<8x8x256xf32, #tpu.memory_space<vmem>>, vector<1x8x128xf32>,
    %c5_i32 = arith.constant 5 : i32
    %250 = arith.index_cast %c5_i32 : i32 to index
    %c0_66 = arith.constant 0 : index
    %c0_67 = arith.constant 0 : index
    %251 = vector.load %arg0[%250, %c0_66, %c0_67] : memref<8x8x1024xf32, #tpu.memory_space<vmem>>, vector<1x8x512xf32>
    %252 = vector.shape_cast %251 : vector<1x8x512xf32> to vector<8x512xf32>
    %c7_i32_68 = arith.constant 7 : i32
    %253 = arith.subi %c7_i32_68, %c5_i32 : i32
    %254 = arith.index_cast %253 : i32 to index
    %c0_69 = arith.constant 0 : index
    %c512_70 = arith.constant 512 : index
    %255 = vector.load %arg0[%254, %c0_69, %c512_70] : memref<8x8x1024xf32, #tpu.memory_space<vmem>>, vector<1x8x512xf32>
    %256 = vector.shape_cast %255 : vector<1x8x512xf32> to vector<8x512xf32>
    %257 = vector.extract_strided_slice %236 {offsets = [0, 0, 0], sizes = [1, 8, 128], strides = [1, 1, 1]} : vector<2x8x128xf32> to vector<1x8x128xf32>
    %258 = vector.shape_cast %257 : vector<1x8x128xf32> to vector<8x128xf32>
    %259 = arith.truncf %258 : vector<8x128xf32> to vector<8x128xbf16>
    %cst_71 = arith.constant dense<0.000000e+00> : vector<8x512xf32>
    %260 = tpu.matmul %259, %1, %cst_71 {dimension_numbers = #tpu.dot_dimension_numbers<[1], [0], [0], [1], [0, 0, 1, 1], [], []>} : vector<8x128xbf16>, vector<128x512xbf16>, vector<8x512xf32> -> vector<8x512xf32>
    %261 = arith.addf %252, %260 : vector<8x512xf32>
    %262 = vector.extract_strided_slice %236 {offsets = [1, 0, 0], sizes = [1, 8, 128], strides = [1, 1, 1]} : vector<2x8x128xf32> to vector<1x8x128xf32>
    %263 = vector.shape_cast %262 : vector<1x8x128xf32> to vector<8x128xf32>
    %264 = arith.truncf %263 : vector<8x128xf32> to vector<8x128xbf16>
    %cst_72 = arith.constant dense<0.000000e+00> : vector<8x512xf32>
    %265 = tpu.matmul %264, %3, %cst_72 {dimension_numbers = #tpu.dot_dimension_numbers<[1], [0], [0], [1], [0, 0, 1, 1], [], []>} : vector<8x128xbf16>, vector<128x512xbf16>, vector<8x512xf32> -> vector<8x512xf32>
    %266 = arith.addf %256, %265 : vector<8x512xf32>
    %267 = vector.shape_cast %261 : vector<8x512xf32> to vector<1x8x512xf32>
    %268 = vector.shape_cast %266 : vector<8x512xf32> to vector<1x8x512xf32>
    %269 = tpu.concatenate %267, %268 in 0 : vector<1x8x512xf32>, vector<1x8x512xf32> -> vector<2x8x512xf32>
    %270 = vector.extract_strided_slice %269 {offsets = [0, 0, 0], sizes = [2, 8, 384], strides = [1, 1, 1]} : vector<2x8x512xf32> to vector<2x8x384xf32>
    %271 = arith.negf %270 : vector<2x8x384xf32>
    %272 = math.exp %271 : vector<2x8x384xf32>
    %cst_73 = arith.constant 1.000000e+00 : f32
    %273 = vector.broadcast %cst_73 : f32 to vector<2x8x384xf32>
    %274 = arith.addf %273, %272 : vector<2x8x384xf32>
    %275 = arith.divf %273, %274 : vector<2x8x384xf32>
    %276 = vector.extract_strided_slice %275 {offsets = [0, 0, 0], sizes = [2, 8, 128], strides = [1, 1, 1]} : vector<2x8x384xf32> to vector<2x8x128xf32>
    %277 = vector.extract_strided_slice %275 {offsets = [0, 0, 128], sizes = [2, 8, 128], strides = [1, 1, 1]} : vector<2x8x384xf32> to vector<2x8x128xf32>
    %278 = vector.extract_strided_slice %275 {offsets = [0, 0, 256], sizes = [2, 8, 128], strides = [1, 1, 1]} : vector<2x8x384xf32> to vector<2x8x128xf32>
    %279 = vector.extract_strided_slice %269 {offsets = [0, 0, 384], sizes = [2, 8, 128], strides = [1, 1, 1]} : vector<2x8x512xf32> to vector<2x8x128xf32>
    %280 = math.tanh %279 : vector<2x8x128xf32>
    %281 = arith.mulf %277, %234 : vector<2x8x128xf32>
    %282 = arith.mulf %276, %280 : vector<2x8x128xf32>
    %283 = arith.addf %281, %282 : vector<2x8x128xf32>
    %284 = math.tanh %283 : vector<2x8x128xf32>
    %285 = arith.mulf %278, %284 : vector<2x8x128xf32>
    %286 = vector.extract_strided_slice %285 {offsets = [0, 0, 0], sizes = [1, 8, 128], strides = [1, 1, 1]} : vector<2x8x128xf32> to vector<1x8x128xf32>
    %287 = vector.shape_cast %286 : vector<1x8x128xf32> to vector<8x128xf32>
    %288 = arith.index_cast %c5_i32 : i32 to index
    %c0_74 = arith.constant 0 : index
    %c0_75 = arith.constant 0 : index
    %289 = vector.load %arg2[%288, %c0_74, %c0_75] : memref<8x8x256xf32, #tpu.memory_space<vmem>>, vector<1x8x128xf32>
    %290 = vector.shape_cast %289 : vector<1x8x128xf32> to vector<8x128xf32>
    %291 = vector.shape_cast %287 : vector<8x128xf32> to vector<1x8x128xf32>
    tpu.vector_store %arg2[%288, %c0_74, %c0_75], %291 {strides = array<i32>} : memref<8x8x256xf32, #tpu.memory_space<vmem>>, vector<1x8x128xf32>,
    %292 = vector.extract_strided_slice %285 {offsets = [1, 0, 0], sizes = [1, 8, 128], strides = [1, 1, 1]} : vector<2x8x128xf32> to vector<1x8x128xf32>
    %293 = vector.shape_cast %292 : vector<1x8x128xf32> to vector<8x128xf32>
    %c7_i32_76 = arith.constant 7 : i32
    %294 = arith.subi %c7_i32_76, %c5_i32 : i32
    %295 = arith.index_cast %294 : i32 to index
    %c0_77 = arith.constant 0 : index
    %c128_78 = arith.constant 128 : index
    %296 = vector.load %arg2[%295, %c0_77, %c128_78] : memref<8x8x256xf32, #tpu.memory_space<vmem>>, vector<1x8x128xf32>
    %297 = vector.shape_cast %296 : vector<1x8x128xf32> to vector<8x128xf32>
    %298 = vector.shape_cast %293 : vector<8x128xf32> to vector<1x8x128xf32>
    tpu.vector_store %arg2[%295, %c0_77, %c128_78], %298 {strides = array<i32>} : memref<8x8x256xf32, #tpu.memory_space<vmem>>, vector<1x8x128xf32>,
    %c6_i32 = arith.constant 6 : i32
    %299 = arith.index_cast %c6_i32 : i32 to index
    %c0_79 = arith.constant 0 : index
    %c0_80 = arith.constant 0 : index
    %300 = vector.load %arg0[%299, %c0_79, %c0_80] : memref<8x8x1024xf32, #tpu.memory_space<vmem>>, vector<1x8x512xf32>
    %301 = vector.shape_cast %300 : vector<1x8x512xf32> to vector<8x512xf32>
    %c7_i32_81 = arith.constant 7 : i32
    %302 = arith.subi %c7_i32_81, %c6_i32 : i32
    %303 = arith.index_cast %302 : i32 to index
    %c0_82 = arith.constant 0 : index
    %c512_83 = arith.constant 512 : index
    %304 = vector.load %arg0[%303, %c0_82, %c512_83] : memref<8x8x1024xf32, #tpu.memory_space<vmem>>, vector<1x8x512xf32>
    %305 = vector.shape_cast %304 : vector<1x8x512xf32> to vector<8x512xf32>
    %306 = vector.extract_strided_slice %285 {offsets = [0, 0, 0], sizes = [1, 8, 128], strides = [1, 1, 1]} : vector<2x8x128xf32> to vector<1x8x128xf32>
    %307 = vector.shape_cast %306 : vector<1x8x128xf32> to vector<8x128xf32>
    %308 = arith.truncf %307 : vector<8x128xf32> to vector<8x128xbf16>
    %cst_84 = arith.constant dense<0.000000e+00> : vector<8x512xf32>
    %309 = tpu.matmul %308, %1, %cst_84 {dimension_numbers = #tpu.dot_dimension_numbers<[1], [0], [0], [1], [0, 0, 1, 1], [], []>} : vector<8x128xbf16>, vector<128x512xbf16>, vector<8x512xf32> -> vector<8x512xf32>
    %310 = arith.addf %301, %309 : vector<8x512xf32>
    %311 = vector.extract_strided_slice %285 {offsets = [1, 0, 0], sizes = [1, 8, 128], strides = [1, 1, 1]} : vector<2x8x128xf32> to vector<1x8x128xf32>
    %312 = vector.shape_cast %311 : vector<1x8x128xf32> to vector<8x128xf32>
    %313 = arith.truncf %312 : vector<8x128xf32> to vector<8x128xbf16>
    %cst_85 = arith.constant dense<0.000000e+00> : vector<8x512xf32>
    %314 = tpu.matmul %313, %3, %cst_85 {dimension_numbers = #tpu.dot_dimension_numbers<[1], [0], [0], [1], [0, 0, 1, 1], [], []>} : vector<8x128xbf16>, vector<128x512xbf16>, vector<8x512xf32> -> vector<8x512xf32>
    %315 = arith.addf %305, %314 : vector<8x512xf32>
    %316 = vector.shape_cast %310 : vector<8x512xf32> to vector<1x8x512xf32>
    %317 = vector.shape_cast %315 : vector<8x512xf32> to vector<1x8x512xf32>
    %318 = tpu.concatenate %316, %317 in 0 : vector<1x8x512xf32>, vector<1x8x512xf32> -> vector<2x8x512xf32>
    %319 = vector.extract_strided_slice %318 {offsets = [0, 0, 0], sizes = [2, 8, 384], strides = [1, 1, 1]} : vector<2x8x512xf32> to vector<2x8x384xf32>
    %320 = arith.negf %319 : vector<2x8x384xf32>
    %321 = math.exp %320 : vector<2x8x384xf32>
    %cst_86 = arith.constant 1.000000e+00 : f32
    %322 = vector.broadcast %cst_86 : f32 to vector<2x8x384xf32>
    %323 = arith.addf %322, %321 : vector<2x8x384xf32>
    %324 = arith.divf %322, %323 : vector<2x8x384xf32>
    %325 = vector.extract_strided_slice %324 {offsets = [0, 0, 0], sizes = [2, 8, 128], strides = [1, 1, 1]} : vector<2x8x384xf32> to vector<2x8x128xf32>
    %326 = vector.extract_strided_slice %324 {offsets = [0, 0, 128], sizes = [2, 8, 128], strides = [1, 1, 1]} : vector<2x8x384xf32> to vector<2x8x128xf32>
    %327 = vector.extract_strided_slice %324 {offsets = [0, 0, 256], sizes = [2, 8, 128], strides = [1, 1, 1]} : vector<2x8x384xf32> to vector<2x8x128xf32>
    %328 = vector.extract_strided_slice %318 {offsets = [0, 0, 384], sizes = [2, 8, 128], strides = [1, 1, 1]} : vector<2x8x512xf32> to vector<2x8x128xf32>
    %329 = math.tanh %328 : vector<2x8x128xf32>
    %330 = arith.mulf %326, %283 : vector<2x8x128xf32>
    %331 = arith.mulf %325, %329 : vector<2x8x128xf32>
    %332 = arith.addf %330, %331 : vector<2x8x128xf32>
    %333 = math.tanh %332 : vector<2x8x128xf32>
    %334 = arith.mulf %327, %333 : vector<2x8x128xf32>
    %335 = vector.extract_strided_slice %334 {offsets = [0, 0, 0], sizes = [1, 8, 128], strides = [1, 1, 1]} : vector<2x8x128xf32> to vector<1x8x128xf32>
    %336 = vector.shape_cast %335 : vector<1x8x128xf32> to vector<8x128xf32>
    %337 = arith.index_cast %c6_i32 : i32 to index
    %c0_87 = arith.constant 0 : index
    %c0_88 = arith.constant 0 : index
    %338 = vector.load %arg2[%337, %c0_87, %c0_88] : memref<8x8x256xf32, #tpu.memory_space<vmem>>, vector<1x8x128xf32>
    %339 = vector.shape_cast %338 : vector<1x8x128xf32> to vector<8x128xf32>
    %340 = vector.shape_cast %336 : vector<8x128xf32> to vector<1x8x128xf32>
    tpu.vector_store %arg2[%337, %c0_87, %c0_88], %340 {strides = array<i32>} : memref<8x8x256xf32, #tpu.memory_space<vmem>>, vector<1x8x128xf32>,
    %341 = vector.extract_strided_slice %334 {offsets = [1, 0, 0], sizes = [1, 8, 128], strides = [1, 1, 1]} : vector<2x8x128xf32> to vector<1x8x128xf32>
    %342 = vector.shape_cast %341 : vector<1x8x128xf32> to vector<8x128xf32>
    %c7_i32_89 = arith.constant 7 : i32
    %343 = arith.subi %c7_i32_89, %c6_i32 : i32
    %344 = arith.index_cast %343 : i32 to index
    %c0_90 = arith.constant 0 : index
    %c128_91 = arith.constant 128 : index
    %345 = vector.load %arg2[%344, %c0_90, %c128_91] : memref<8x8x256xf32, #tpu.memory_space<vmem>>, vector<1x8x128xf32>
    %346 = vector.shape_cast %345 : vector<1x8x128xf32> to vector<8x128xf32>
    %347 = vector.shape_cast %342 : vector<8x128xf32> to vector<1x8x128xf32>
    tpu.vector_store %arg2[%344, %c0_90, %c128_91], %347 {strides = array<i32>} : memref<8x8x256xf32, #tpu.memory_space<vmem>>, vector<1x8x128xf32>,
    %c7_i32_92 = arith.constant 7 : i32
    %348 = arith.index_cast %c7_i32_92 : i32 to index
    %c0_93 = arith.constant 0 : index
    %c0_94 = arith.constant 0 : index
    %349 = vector.load %arg0[%348, %c0_93, %c0_94] : memref<8x8x1024xf32, #tpu.memory_space<vmem>>, vector<1x8x512xf32>
    %350 = vector.shape_cast %349 : vector<1x8x512xf32> to vector<8x512xf32>
    %c7_i32_95 = arith.constant 7 : i32
    %351 = arith.subi %c7_i32_95, %c7_i32_92 : i32
    %352 = arith.index_cast %351 : i32 to index
    %c0_96 = arith.constant 0 : index
    %c512_97 = arith.constant 512 : index
    %353 = vector.load %arg0[%352, %c0_96, %c512_97] : memref<8x8x1024xf32, #tpu.memory_space<vmem>>, vector<1x8x512xf32>
    %354 = vector.shape_cast %353 : vector<1x8x512xf32> to vector<8x512xf32>
    %355 = vector.extract_strided_slice %334 {offsets = [0, 0, 0], sizes = [1, 8, 128], strides = [1, 1, 1]} : vector<2x8x128xf32> to vector<1x8x128xf32>
    %356 = vector.shape_cast %355 : vector<1x8x128xf32> to vector<8x128xf32>
    %357 = arith.truncf %356 : vector<8x128xf32> to vector<8x128xbf16>
    %cst_98 = arith.constant dense<0.000000e+00> : vector<8x512xf32>
    %358 = tpu.matmul %357, %1, %cst_98 {dimension_numbers = #tpu.dot_dimension_numbers<[1], [0], [0], [1], [0, 0, 1, 1], [], []>} : vector<8x128xbf16>, vector<128x512xbf16>, vector<8x512xf32> -> vector<8x512xf32>
    %359 = arith.addf %350, %358 : vector<8x512xf32>
    %360 = vector.extract_strided_slice %334 {offsets = [1, 0, 0], sizes = [1, 8, 128], strides = [1, 1, 1]} : vector<2x8x128xf32> to vector<1x8x128xf32>
    %361 = vector.shape_cast %360 : vector<1x8x128xf32> to vector<8x128xf32>
    %362 = arith.truncf %361 : vector<8x128xf32> to vector<8x128xbf16>
    %cst_99 = arith.constant dense<0.000000e+00> : vector<8x512xf32>
    %363 = tpu.matmul %362, %3, %cst_99 {dimension_numbers = #tpu.dot_dimension_numbers<[1], [0], [0], [1], [0, 0, 1, 1], [], []>} : vector<8x128xbf16>, vector<128x512xbf16>, vector<8x512xf32> -> vector<8x512xf32>
    %364 = arith.addf %354, %363 : vector<8x512xf32>
    %365 = vector.shape_cast %359 : vector<8x512xf32> to vector<1x8x512xf32>
    %366 = vector.shape_cast %364 : vector<8x512xf32> to vector<1x8x512xf32>
    %367 = tpu.concatenate %365, %366 in 0 : vector<1x8x512xf32>, vector<1x8x512xf32> -> vector<2x8x512xf32>
    %368 = vector.extract_strided_slice %367 {offsets = [0, 0, 0], sizes = [2, 8, 384], strides = [1, 1, 1]} : vector<2x8x512xf32> to vector<2x8x384xf32>
    %369 = arith.negf %368 : vector<2x8x384xf32>
    %370 = math.exp %369 : vector<2x8x384xf32>
    %cst_100 = arith.constant 1.000000e+00 : f32
    %371 = vector.broadcast %cst_100 : f32 to vector<2x8x384xf32>
    %372 = arith.addf %371, %370 : vector<2x8x384xf32>
    %373 = arith.divf %371, %372 : vector<2x8x384xf32>
    %374 = vector.extract_strided_slice %373 {offsets = [0, 0, 0], sizes = [2, 8, 128], strides = [1, 1, 1]} : vector<2x8x384xf32> to vector<2x8x128xf32>
    %375 = vector.extract_strided_slice %373 {offsets = [0, 0, 128], sizes = [2, 8, 128], strides = [1, 1, 1]} : vector<2x8x384xf32> to vector<2x8x128xf32>
    %376 = vector.extract_strided_slice %373 {offsets = [0, 0, 256], sizes = [2, 8, 128], strides = [1, 1, 1]} : vector<2x8x384xf32> to vector<2x8x128xf32>
    %377 = vector.extract_strided_slice %367 {offsets = [0, 0, 384], sizes = [2, 8, 128], strides = [1, 1, 1]} : vector<2x8x512xf32> to vector<2x8x128xf32>
    %378 = math.tanh %377 : vector<2x8x128xf32>
    %379 = arith.mulf %375, %332 : vector<2x8x128xf32>
    %380 = arith.mulf %374, %378 : vector<2x8x128xf32>
    %381 = arith.addf %379, %380 : vector<2x8x128xf32>
    %382 = math.tanh %381 : vector<2x8x128xf32>
    %383 = arith.mulf %376, %382 : vector<2x8x128xf32>
    %384 = vector.extract_strided_slice %383 {offsets = [0, 0, 0], sizes = [1, 8, 128], strides = [1, 1, 1]} : vector<2x8x128xf32> to vector<1x8x128xf32>
    %385 = vector.shape_cast %384 : vector<1x8x128xf32> to vector<8x128xf32>
    %386 = arith.index_cast %c7_i32_92 : i32 to index
    %c0_101 = arith.constant 0 : index
    %c0_102 = arith.constant 0 : index
    %387 = vector.load %arg2[%386, %c0_101, %c0_102] : memref<8x8x256xf32, #tpu.memory_space<vmem>>, vector<1x8x128xf32>
    %388 = vector.shape_cast %387 : vector<1x8x128xf32> to vector<8x128xf32>
    %389 = vector.shape_cast %385 : vector<8x128xf32> to vector<1x8x128xf32>
    tpu.vector_store %arg2[%386, %c0_101, %c0_102], %389 {strides = array<i32>} : memref<8x8x256xf32, #tpu.memory_space<vmem>>, vector<1x8x128xf32>,
    %390 = vector.extract_strided_slice %383 {offsets = [1, 0, 0], sizes = [1, 8, 128], strides = [1, 1, 1]} : vector<2x8x128xf32> to vector<1x8x128xf32>
    %391 = vector.shape_cast %390 : vector<1x8x128xf32> to vector<8x128xf32>
    %c7_i32_103 = arith.constant 7 : i32
    %392 = arith.subi %c7_i32_103, %c7_i32_92 : i32
    %393 = arith.index_cast %392 : i32 to index
    %c0_104 = arith.constant 0 : index
    %c128_105 = arith.constant 128 : index
    %394 = vector.load %arg2[%393, %c0_104, %c128_105] : memref<8x8x256xf32, #tpu.memory_space<vmem>>, vector<1x8x128xf32>
    %395 = vector.shape_cast %394 : vector<1x8x128xf32> to vector<8x128xf32>
    %396 = vector.shape_cast %391 : vector<8x128xf32> to vector<1x8x128xf32>
    tpu.vector_store %arg2[%393, %c0_104, %c128_105], %396 {strides = array<i32>} : memref<8x8x256xf32, #tpu.memory_space<vmem>>, vector<1x8x128xf32>,
    %c8_i32 = arith.constant 8 : i32
    return
  }
}

module attributes {stable_mosaic.version = 11 : i64} {
  func.func @_matmul_kernel(%arg0: i32, %arg1: i32, %arg2: i32, %arg3: memref<16x256xbf16, #tpu.memory_space<vmem>>, %arg4: memref<256x256xbf16, #tpu.memory_space<vmem>>, %arg5: memref<1x256xf32, #tpu.memory_space<vmem>>, %arg6: memref<16x256xf32, #tpu.memory_space<vmem>>, %arg7: memref<16x256xf32, #tpu.memory_space<vmem>>) attributes {dimension_semantics = [#tpu.dimension_semantics<parallel>, #tpu.dimension_semantics<parallel>, #tpu.dimension_semantics<arbitrary>], iteration_bounds = array<i64: 1, 4, 1>, scalar_prefetch = 0 : i64, scratch_operands = 1 : i64, tpu.core_type = #tpu.core_type<tc>, window_params = [{transform_indices = @transform_0, window_bounds = array<i64: 16, 256>}, {transform_indices = @transform_1, window_bounds = array<i64: 256, 256>}, {transform_indices = @transform_2, window_bounds = array<i64: 1, 256>}, {transform_indices = @transform_3, window_bounds = array<i64: 16, 256>}]} {
    %c0_i32 = arith.constant 0 : i32
    %0 = arith.cmpi eq, %arg2, %c0_i32 : i32
    %1 = arith.extui %0 : i1 to i32
    %c0_i32_0 = arith.constant 0 : i32
    %2 = arith.cmpi ne, %1, %c0_i32_0 : i32
    scf.if %2 {
      %cst_10 = arith.constant 0.000000e+00 : f32
      %12 = vector.broadcast %cst_10 : f32 to vector<16x256xf32>
      %c0_11 = arith.constant 0 : index
      %c0_12 = arith.constant 0 : index
      %13 = vector.load %arg7[%c0_11, %c0_12] : memref<16x256xf32, #tpu.memory_space<vmem>>, vector<16x256xf32>
      tpu.vector_store %arg7[%c0_11, %c0_12], %12 {strides = array<i32>} : memref<16x256xf32, #tpu.memory_space<vmem>>, vector<16x256xf32>,
    } else {
    }
    %c0 = arith.constant 0 : index
    %c0_1 = arith.constant 0 : index
    %3 = vector.load %arg7[%c0, %c0_1] : memref<16x256xf32, #tpu.memory_space<vmem>>, vector<16x256xf32>
    %c0_2 = arith.constant 0 : index
    %c0_3 = arith.constant 0 : index
    %4 = vector.load %arg3[%c0_2, %c0_3] : memref<16x256xbf16, #tpu.memory_space<vmem>>, vector<16x256xbf16>
    %c0_4 = arith.constant 0 : index
    %c0_5 = arith.constant 0 : index
    %5 = vector.load %arg4[%c0_4, %c0_5] : memref<256x256xbf16, #tpu.memory_space<vmem>>, vector<256x256xbf16>
    %cst = arith.constant dense<0.000000e+00> : vector<16x256xf32>
    %6 = tpu.matmul %4, %5, %cst {dimension_numbers = #tpu.dot_dimension_numbers<[1], [0], [0], [1], [0, 0, 1, 1], [], []>} : vector<16x256xbf16>, vector<256x256xbf16>, vector<16x256xf32> -> vector<16x256xf32>
    %7 = arith.addf %3, %6 : vector<16x256xf32>
    %c0_6 = arith.constant 0 : index
    %c0_7 = arith.constant 0 : index
    %8 = vector.load %arg7[%c0_6, %c0_7] : memref<16x256xf32, #tpu.memory_space<vmem>>, vector<16x256xf32>
    tpu.vector_store %arg7[%c0_6, %c0_7], %7 {strides = array<i32>} : memref<16x256xf32, #tpu.memory_space<vmem>>, vector<16x256xf32>,
    %c0_i32_8 = arith.constant 0 : i32
    %9 = arith.cmpi eq, %arg2, %c0_i32_8 : i32
    %10 = arith.extui %9 : i1 to i32
    %c0_i32_9 = arith.constant 0 : i32
    %11 = arith.cmpi ne, %10, %c0_i32_9 : i32
    scf.if %11 {
      %c0_10 = arith.constant 0 : index
      %c0_11 = arith.constant 0 : index
      %12 = vector.load %arg7[%c0_10, %c0_11] : memref<16x256xf32, #tpu.memory_space<vmem>>, vector<16x256xf32>
      %c0_12 = arith.constant 0 : index
      %c0_13 = arith.constant 0 : index
      %13 = vector.load %arg5[%c0_12, %c0_13] : memref<1x256xf32, #tpu.memory_space<vmem>>, vector<1x256xf32>
      %14 = vector.broadcast %13 : vector<1x256xf32> to vector<16x256xf32>
      %15 = arith.addf %12, %14 : vector<16x256xf32>
      %c0_14 = arith.constant 0 : index
      %c0_15 = arith.constant 0 : index
      %16 = vector.load %arg6[%c0_14, %c0_15] : memref<16x256xf32, #tpu.memory_space<vmem>>, vector<16x256xf32>
      tpu.vector_store %arg6[%c0_14, %c0_15], %15 {strides = array<i32>} : memref<16x256xf32, #tpu.memory_space<vmem>>, vector<16x256xf32>,
    } else {
    }
    return
  }
  func.func @transform_0(%arg0: i32, %arg1: i32, %arg2: i32) -> (i32, i32) {
    %c0_i32 = arith.constant 0 : i32
    return %arg0, %arg2 : i32, i32
  }
  func.func @transform_1(%arg0: i32, %arg1: i32, %arg2: i32) -> (i32, i32) {
    %c0_i32 = arith.constant 0 : i32
    return %arg2, %arg1 : i32, i32
  }
  func.func @transform_2(%arg0: i32, %arg1: i32, %arg2: i32) -> (i32, i32) {
    %c0_i32 = arith.constant 0 : i32
    %c0_i32_0 = arith.constant 0 : i32
    return %c0_i32, %arg1 : i32, i32
  }
  func.func @transform_3(%arg0: i32, %arg1: i32, %arg2: i32) -> (i32, i32) {
    %c0_i32 = arith.constant 0 : i32
    return %arg0, %arg1 : i32, i32
  }
}

module attributes {stable_mosaic.version = 11 : i64} {
  func.func @_lstm_head_kernel(%arg0: memref<2x256xf32, #tpu.memory_space<vmem>>, %arg1: memref<2x256xf32, #tpu.memory_space<vmem>>, %arg2: memref<256x256xbf16, #tpu.memory_space<vmem>>, %arg3: memref<1x256xf32, #tpu.memory_space<vmem>>, %arg4: memref<256x256xbf16, #tpu.memory_space<vmem>>, %arg5: memref<1x256xf32, #tpu.memory_space<vmem>>, %arg6: memref<256x7xf32, #tpu.memory_space<vmem>>, %arg7: memref<1x7xf32, #tpu.memory_space<vmem>>, %arg8: memref<1x7xf32, #tpu.memory_space<vmem>>, %arg9: memref<1x1xf32, #tpu.memory_space<vmem>>, %arg10: memref<2x7xf32, #tpu.memory_space<vmem>>, %arg11: memref<2x1xf32, #tpu.memory_space<vmem>>) attributes {dimension_semantics = [], scalar_prefetch = 0 : i64, scratch_operands = 0 : i64, tpu.core_type = #tpu.core_type<tc>} {
    %c0 = arith.constant 0 : index
    %c0_0 = arith.constant 0 : index
    %0 = vector.load %arg0[%c0, %c0_0] : memref<2x256xf32, #tpu.memory_space<vmem>>, vector<2x256xf32>
    %c0_1 = arith.constant 0 : index
    %c0_2 = arith.constant 0 : index
    %1 = vector.load %arg1[%c0_1, %c0_2] : memref<2x256xf32, #tpu.memory_space<vmem>>, vector<2x256xf32>
    %2 = arith.truncf %0 : vector<2x256xf32> to vector<2x256xbf16>
    %c0_3 = arith.constant 0 : index
    %c0_4 = arith.constant 0 : index
    %3 = vector.load %arg2[%c0_3, %c0_4] : memref<256x256xbf16, #tpu.memory_space<vmem>>, vector<256x256xbf16>
    %cst = arith.constant dense<0.000000e+00> : vector<2x256xf32>
    %4 = tpu.matmul %2, %3, %cst {dimension_numbers = #tpu.dot_dimension_numbers<[1], [0], [0], [1], [0, 0, 1, 1], [], []>} : vector<2x256xbf16>, vector<256x256xbf16>, vector<2x256xf32> -> vector<2x256xf32>
    %c0_5 = arith.constant 0 : index
    %c0_6 = arith.constant 0 : index
    %5 = vector.load %arg3[%c0_5, %c0_6] : memref<1x256xf32, #tpu.memory_space<vmem>>, vector<1x256xf32>
    %6 = vector.broadcast %5 : vector<1x256xf32> to vector<2x256xf32>
    %7 = arith.addf %4, %6 : vector<2x256xf32>
    %8 = arith.truncf %1 : vector<2x256xf32> to vector<2x256xbf16>
    %c0_7 = arith.constant 0 : index
    %c0_8 = arith.constant 0 : index
    %9 = vector.load %arg4[%c0_7, %c0_8] : memref<256x256xbf16, #tpu.memory_space<vmem>>, vector<256x256xbf16>
    %cst_9 = arith.constant dense<0.000000e+00> : vector<2x256xf32>
    %10 = tpu.matmul %8, %9, %cst_9 {dimension_numbers = #tpu.dot_dimension_numbers<[1], [0], [0], [1], [0, 0, 1, 1], [], []>} : vector<2x256xbf16>, vector<256x256xbf16>, vector<2x256xf32> -> vector<2x256xf32>
    %c0_10 = arith.constant 0 : index
    %c0_11 = arith.constant 0 : index
    %11 = vector.load %arg5[%c0_10, %c0_11] : memref<1x256xf32, #tpu.memory_space<vmem>>, vector<1x256xf32>
    %12 = vector.broadcast %11 : vector<1x256xf32> to vector<2x256xf32>
    %13 = arith.addf %10, %12 : vector<2x256xf32>
    %14 = arith.addf %0, %1 : vector<2x256xf32>
    %cst_12 = arith.constant 0.000000e+00 : f32
    %15 = vector.broadcast %cst_12 : f32 to vector<2x256xf32>
    %16 = arith.maximumf %7, %15 : vector<2x256xf32>
    %17 = arith.addf %14, %16 : vector<2x256xf32>
    %cst_13 = arith.constant 0.000000e+00 : f32
    %18 = vector.broadcast %cst_13 : f32 to vector<2x256xf32>
    %19 = arith.maximumf %13, %18 : vector<2x256xf32>
    %20 = arith.addf %17, %19 : vector<2x256xf32>
    %c0_14 = arith.constant 0 : index
    %c0_15 = arith.constant 0 : index
    %21 = vector.load %arg6[%c0_14, %c0_15] : memref<256x7xf32, #tpu.memory_space<vmem>>, vector<256x7xf32>
    %cst_16 = arith.constant dense<0.000000e+00> : vector<2x7xf32>
    %22 = tpu.matmul %20, %21, %cst_16 {dimension_numbers = #tpu.dot_dimension_numbers<[1], [0], [0], [1], [0, 0, 1, 1], [], []>} : vector<2x256xf32>, vector<256x7xf32>, vector<2x7xf32> -> vector<2x7xf32>
    %c0_17 = arith.constant 0 : index
    %c0_18 = arith.constant 0 : index
    %23 = vector.load %arg7[%c0_17, %c0_18] : memref<1x7xf32, #tpu.memory_space<vmem>>, vector<1x7xf32>
    %24 = vector.broadcast %23 : vector<1x7xf32> to vector<2x7xf32>
    %25 = arith.addf %22, %24 : vector<2x7xf32>
    %c0_19 = arith.constant 0 : index
    %c0_20 = arith.constant 0 : index
    %26 = vector.load %arg10[%c0_19, %c0_20] : memref<2x7xf32, #tpu.memory_space<vmem>>, vector<2x7xf32>
    tpu.vector_store %arg10[%c0_19, %c0_20], %25 {strides = array<i32>} : memref<2x7xf32, #tpu.memory_space<vmem>>, vector<2x7xf32>,
    %c0_21 = arith.constant 0 : index
    %c0_22 = arith.constant 0 : index
    %27 = vector.load %arg8[%c0_21, %c0_22] : memref<1x7xf32, #tpu.memory_space<vmem>>, vector<1x7xf32>
    %28 = vector.broadcast %27 : vector<1x7xf32> to vector<2x7xf32>
    %29 = arith.mulf %25, %28 : vector<2x7xf32>
    %cst_23 = arith.constant dense<0.000000e+00> : vector<2xf32>
    %30 = vector.multi_reduction <add>, %29, %cst_23 [1] : vector<2x7xf32> to vector<2xf32>
    %31 = vector.shape_cast %30 : vector<2xf32> to vector<2x1xf32>
    %c0_24 = arith.constant 0 : index
    %c0_25 = arith.constant 0 : index
    %32 = vector.load %arg9[%c0_24, %c0_25] : memref<1x1xf32, #tpu.memory_space<vmem>>, vector<1x1xf32>
    %33 = vector.broadcast %32 : vector<1x1xf32> to vector<2x1xf32>
    %34 = arith.addf %31, %33 : vector<2x1xf32>
    %c0_26 = arith.constant 0 : index
    %c0_27 = arith.constant 0 : index
    %35 = vector.load %arg11[%c0_26, %c0_27] : memref<2x1xf32, #tpu.memory_space<vmem>>, vector<2x1xf32>
    tpu.vector_store %arg11[%c0_26, %c0_27], %34 {strides = array<i32>} : memref<2x1xf32, #tpu.memory_space<vmem>>, vector<2x1xf32>,
    return
  }
}

</mosaic_0001>

<llo_original>
// kernel: embedding_net_forward.10
$region0: #{embedding_net_forward.10}
  #allocation0 [shape = 'u32[]', space=smem, size = 0x4, offset = 0x4, fixed_abs, tag = 'smem constant byte address 0x4 - core index']
  #allocation1 [shape = 'u32[144,128]{1,0:T(1,128)}', space=vmem, size = 0x12000, scoped, tag = 'internal scratch']
  #allocation2 [shape = 'f32[112,128]{1,0:T(8,128)}', space=vmem, size = 0xe000, scoped, tag = 'scratch operand']
  %s0 = inlined_call_operand.vmem [shape: bf16[112,128], index: 0, kind: input, shape index: {}]
  %s1 = inlined_call_operand.vmem [shape: bf16[128,128], index: 1, kind: input, shape index: {}]
  %s2 = inlined_call_operand.vmem [shape: f32[1,128], index: 2, kind: input, shape index: {}]
  %s3 = inlined_call_operand.vmem [shape: bf16[112,128], index: 3, kind: output, shape index: {}]
  %s4 = sld [smem:[#allocation0]]
  $region30: #{embedding_net_forward.10} parent=0
    _
  %s6 = ssub.s32 1, %s4
  %s7 = scalar_select 0, %s6, %s4
  // Predicated region
  $region2: #{embedding_net_forward.10} parent=0 // pred_check
    _
  $region3: #{embedding_net_forward.10} parent=0 // pred_check_branch
    %9 = sbr.rel (0) target = $region5
  $region4: #{embedding_net_forward.10} parent=0 // pred_region
    _
  $region5: #{embedding_net_forward.10} parent=0 // pred_fallthru
    _
  // Predicated region
  $region6: #{embedding_net_forward.10} parent=0 // pred_check
    _
  $region7: #{embedding_net_forward.10} parent=0 // pred_check_branch
    %11 = sbr.rel (0) target = $region9
  $region8: #{embedding_net_forward.10} parent=0 // pred_region
    _
  $region9: #{embedding_net_forward.10} parent=0 // pred_fallthru
    _
  // Predicated region
  $region10: #{embedding_net_forward.10} parent=0 // pred_check
    _
  $region11: #{embedding_net_forward.10} parent=0 // pred_check_branch
    %13 = sbr.rel (0) target = $region13
  $region12: #{embedding_net_forward.10} parent=0 // pred_region
    _
  $region13: #{embedding_net_forward.10} parent=0 // pred_fallthru
    _
  %p15 = scmp.eq.s32.totalorder 0, 0
  // Predicated region
  $region14: #{embedding_net_forward.10} parent=0 // pred_check
    %p16 = pneg %p15
  $region15: #{embedding_net_forward.10} parent=0 // pred_check_branch
    %18 = sbr.rel (%p16) target = $region17
  $region16: #{embedding_net_forward.10} parent=0 // pred_region
    %19 = vst [vmem:[#allocation2] sm:$0xff] 0.0
    %20 = vst [vmem:[#allocation2 + $0x8] sm:$0xff] 0.0
    %21 = vst [vmem:[#allocation2 + $0x10] sm:$0xff] 0.0
    %22 = vst [vmem:[#allocation2 + $0x18] sm:$0xff] 0.0
    %23 = vst [vmem:[#allocation2 + $0x20] sm:$0xff] 0.0
    %24 = vst [vmem:[#allocation2 + $0x28] sm:$0xff] 0.0
    %25 = vst [vmem:[#allocation2 + $0x30] sm:$0xff] 0.0
    %26 = vst [vmem:[#allocation2 + $0x38] sm:$0xff] 0.0
    %27 = vst [vmem:[#allocation2 + $0x40] sm:$0xff] 0.0
    %28 = vst [vmem:[#allocation2 + $0x48] sm:$0xff] 0.0
    %29 = vst [vmem:[#allocation2 + $0x50] sm:$0xff] 0.0
    %30 = vst [vmem:[#allocation2 + $0x58] sm:$0xff] 0.0
    %31 = vst [vmem:[#allocation2 + $0x60] sm:$0xff] 0.0
    %32 = vst [vmem:[#allocation2 + $0x68] sm:$0xff] 0.0
  $region17: #{embedding_net_forward.10} parent=0 // pred_fallthru
    _
  %v33 = vld [vmem:[#allocation2] sm:$0xff]
  %v34 = vld [vmem:[#allocation2 + $0x8] sm:$0xff]
  %v35 = vld [vmem:[#allocation2 + $0x10] sm:$0xff]
  %v36 = vld [vmem:[#allocation2 + $0x18] sm:$0xff]
  %v37 = vld [vmem:[#allocation2 + $0x20] sm:$0xff]
  %v38 = vld [vmem:[#allocation2 + $0x28] sm:$0xff]
  %v39 = vld [vmem:[#allocation2 + $0x30] sm:$0xff]
  %v40 = vld [vmem:[#allocation2 + $0x38] sm:$0xff]
  %v41 = vld [vmem:[#allocation2 + $0x40] sm:$0xff]
  %v42 = vld [vmem:[#allocation2 + $0x48] sm:$0xff]
  %v43 = vld [vmem:[#allocation2 + $0x50] sm:$0xff]
  %v44 = vld [vmem:[#allocation2 + $0x58] sm:$0xff]
  %v45 = vld [vmem:[#allocation2 + $0x60] sm:$0xff]
  %v46 = vld [vmem:[#allocation2 + $0x68] sm:$0xff]
  %v47 = vld [vmem:[%s0] sm:$0xf]
  %v48 = vld [vmem:[%s0 + $0x4] sm:$0xf]
  %v49 = vld [vmem:[%s0 + $0x8] sm:$0xf]
  %v50 = vld [vmem:[%s0 + $0xc] sm:$0xf]
  %v51 = vld [vmem:[%s0 + $0x10] sm:$0xf]
  %v52 = vld [vmem:[%s0 + $0x14] sm:$0xf]
  %v53 = vld [vmem:[%s0 + $0x18] sm:$0xf]
  %v54 = vld [vmem:[%s0 + $0x1c] sm:$0xf]
  %v55 = vld [vmem:[%s0 + $0x20] sm:$0xf]
  %v56 = vld [vmem:[%s0 + $0x24] sm:$0xf]
  %v57 = vld [vmem:[%s0 + $0x28] sm:$0xf]
  %v58 = vld [vmem:[%s0 + $0x2c] sm:$0xf]
  %v59 = vld [vmem:[%s0 + $0x30] sm:$0xf]
  %v60 = vld [vmem:[%s0 + $0x34] sm:$0xf]
  %v61 = vld [vmem:[%s1] sm:$0xf]
  %v62 = vld [vmem:[%s1 + $0x4] sm:$0xf]
  %v63 = vld [vmem:[%s1 + $0x8] sm:$0xf]
  %v64 = vld [vmem:[%s1 + $0xc] sm:$0xf]
  %v65 = vld [vmem:[%s1 + $0x10] sm:$0xf]
  %v66 = vld [vmem:[%s1 + $0x14] sm:$0xf]
  %v67 = vld [vmem:[%s1 + $0x18] sm:$0xf]
  %v68 = vld [vmem:[%s1 + $0x1c] sm:$0xf]
  %v69 = vld [vmem:[%s1 + $0x20] sm:$0xf]
  %v70 = vld [vmem:[%s1 + $0x24] sm:$0xf]
  %v71 = vld [vmem:[%s1 + $0x28] sm:$0xf]
  %v72 = vld [vmem:[%s1 + $0x2c] sm:$0xf]
  %v73 = vld [vmem:[%s1 + $0x30] sm:$0xf]
  %v74 = vld [vmem:[%s1 + $0x34] sm:$0xf]
  %v75 = vld [vmem:[%s1 + $0x38] sm:$0xf]
  %v76 = vld [vmem:[%s1 + $0x3c] sm:$0xf]
  %v91 = vunpack.c.l.b16 %v47
  %v92 = vunpack.c.l.b16 %v48
  %v93 = vunpack.c.l.b16 %v49
  %v94 = vunpack.c.l.b16 %v50
  %v95 = vunpack.c.l.b16 %v51
  %v96 = vunpack.c.l.b16 %v52
  %v97 = vunpack.c.l.b16 %v53
  %v98 = vunpack.c.l.b16 %v54
  %v99 = vunpack.c.l.b16 %v55
  %v100 = vunpack.c.l.b16 %v56
  %v101 = vunpack.c.l.b16 %v57
  %v102 = vunpack.c.l.b16 %v58
  %v103 = vunpack.c.l.b16 %v59
  %v104 = vunpack.c.l.b16 %v60
  %v105 = vpack.c.b16 %v92, %v91
  %v106 = vpack.c.b16 %v94, %v93
  %v107 = vpack.c.b16 %v96, %v95
  %v108 = vpack.c.b16 %v98, %v97
  %v109 = vpack.c.b16 %v100, %v99
  %v110 = vpack.c.b16 %v102, %v101
  %v111 = vpack.c.b16 %v104, %v103
  %v135 = vunpack.c.l.b16 %v61
  %v136 = vunpack.c.l.b16 %v62
  %v137 = vunpack.c.l.b16 %v63
  %v138 = vunpack.c.l.b16 %v64
  %v139 = vunpack.c.l.b16 %v65
  %v140 = vunpack.c.l.b16 %v66
  %v141 = vunpack.c.l.b16 %v67
  %v142 = vunpack.c.l.b16 %v68
  %v143 = vunpack.c.l.b16 %v69
  %v144 = vunpack.c.l.b16 %v70
  %v145 = vunpack.c.l.b16 %v71
  %v146 = vunpack.c.l.b16 %v72
  %v147 = vunpack.c.l.b16 %v73
  %v148 = vunpack.c.l.b16 %v74
  %v149 = vunpack.c.l.b16 %v75
  %v150 = vunpack.c.l.b16 %v76
  %v151 = vpack.c.b16 %v136, %v135
  %v152 = vpack.c.b16 %v138, %v137
  %v153 = vpack.c.b16 %v140, %v139
  %v154 = vpack.c.b16 %v142, %v141
  %v155 = vpack.c.b16 %v144, %v143
  %v156 = vpack.c.b16 %v146, %v145
  %v157 = vpack.c.b16 %v148, %v147
  %v158 = vpack.c.b16 %v150, %v149
  %167 = vmatprep.subr.bf16.mxu0 0
  %168 = vmatpush1.bf16.msra.mxu0 %v151
  %169 = vmatprep.subr.bf16.mxu0 0
  %170 = vmatpush1.bf16.msra.mxu0 %v152
  %171 = vmatprep.subr.bf16.mxu0 0
  %172 = vmatpush1.bf16.msra.mxu0 %v153
  %173 = vmatprep.subr.bf16.mxu0 0
  %174 = vmatpush1.bf16.msra.mxu0 %v154
  %175 = vmatprep.subr.bf16.mxu0 0
  %176 = vmatpush1.bf16.msra.mxu0 %v155
  %177 = vmatprep.subr.bf16.mxu0 0
  %178 = vmatpush1.bf16.msra.mxu0 %v156
  %179 = vmatprep.subr.bf16.mxu0 0
  %180 = vmatpush1.bf16.msra.mxu0 %v157
  %181 = vmatprep.subr.bf16.mxu0 0
  %182 = vmatpush1.bf16.msra.mxu0 %v158
  %183 = vmatprep.subr.bf16.mxu0 0
  %184 = vmatpush1.bf16.msra.mxu0 0
  %185 = vmatprep.subr.bf16.mxu0 0
  %186 = vmatpush1.bf16.msra.mxu0 0
  %187 = vmatprep.subr.bf16.mxu0 0
  %188 = vmatpush1.bf16.msra.mxu0 0
  %189 = vmatprep.subr.bf16.mxu0 0
  %190 = vmatpush1.bf16.msra.mxu0 0
  %191 = vmatprep.subr.bf16.mxu0 0
  %192 = vmatpush1.bf16.msra.mxu0 0
  %193 = vmatprep.subr.bf16.mxu0 0
  %194 = vmatpush1.bf16.msra.mxu0 0
  %195 = vmatprep.subr.bf16.mxu0 0
  %196 = vmatpush1.bf16.msra.mxu0 0
  %197 = vmatprep.subr.bf16.mxu0 0
  %198 = vmatpush1.bf16.msra.mxu0 0
  %199 = vmatprep.mubr.bf16.mxu0 0
  %200 = vmatmul.mubr.bf16.gmra.mrb[0].mxu0 %v105
  %v201 = vpop.f32.mrb[0].mxu0
  %v202 = vadd.f32 0.0, %v201
  %v203 = vpop.f32.mrb[0].mxu0
  %v204 = vpop.f32.mrb[0].mxu0
  %v205 = vadd.f32 0.0, %v204
  %v206 = vpop.f32.mrb[0].mxu0
  %207 = vmatprep.mubr.bf16.mxu0 0
  %208 = vmatmul.mubr.bf16.gmra.mrb[0].mxu0 %v106
  %v209 = vpop.f32.mrb[0].mxu0
  %v210 = vadd.f32 0.0, %v209
  %v211 = vpop.f32.mrb[0].mxu0
  %v212 = vpop.f32.mrb[0].mxu0
  %v213 = vadd.f32 0.0, %v212
  %v214 = vpop.f32.mrb[0].mxu0
  %215 = vmatprep.mubr.bf16.mxu0 0
  %216 = vmatmul.mubr.bf16.gmra.mrb[0].mxu0 %v107
  %v217 = vpop.f32.mrb[0].mxu0
  %v218 = vadd.f32 0.0, %v217
  %v219 = vpop.f32.mrb[0].mxu0
  %v220 = vpop.f32.mrb[0].mxu0
  %v221 = vadd.f32 0.0, %v220
  %v222 = vpop.f32.mrb[0].mxu0
  %223 = vmatprep.mubr.bf16.mxu0 0
  %224 = vmatmul.mubr.bf16.gmra.mrb[0].mxu0 %v108
  %v225 = vpop.f32.mrb[0].mxu0
  %v226 = vadd.f32 0.0, %v225
  %v227 = vpop.f32.mrb[0].mxu0
  %v228 = vpop.f32.mrb[0].mxu0
  %v229 = vadd.f32 0.0, %v228
  %v230 = vpop.f32.mrb[0].mxu0
  %231 = vmatprep.mubr.bf16.mxu0 0
  %232 = vmatmul.mubr.bf16.gmra.mrb[0].mxu0 %v109
  %v233 = vpop.f32.mrb[0].mxu0
  %v234 = vadd.f32 0.0, %v233
  %v235 = vpop.f32.mrb[0].mxu0
  %v236 = vpop.f32.mrb[0].mxu0
  %v237 = vadd.f32 0.0, %v236
  %v238 = vpop.f32.mrb[0].mxu0
  %239 = vmatprep.mubr.bf16.mxu0 0
  %240 = vmatmul.mubr.bf16.gmra.mrb[0].mxu0 %v110
  %v241 = vpop.f32.mrb[0].mxu0
  %v242 = vadd.f32 0.0, %v241
  %v243 = vpop.f32.mrb[0].mxu0
  %v244 = vpop.f32.mrb[0].mxu0
  %v245 = vadd.f32 0.0, %v244
  %v246 = vpop.f32.mrb[0].mxu0
  %247 = vmatprep.mubr.bf16.mxu0 0
  %248 = vmatmul.mubr.bf16.gmra.mrb[0].mxu0 %v111
  %v249 = vpop.f32.mrb[0].mxu0
  %v250 = vadd.f32 0.0, %v249
  %v251 = vpop.f32.mrb[0].mxu0
  %v252 = vpop.f32.mrb[0].mxu0
  %v253 = vadd.f32 0.0, %v252
  %v254 = vpop.f32.mrb[0].mxu0
  %255 = vdwg.mxu0
  %v256 = vadd.f32 %v33, %v202
  %v257 = vadd.f32 %v34, %v205
  %v258 = vadd.f32 %v35, %v210
  %v259 = vadd.f32 %v36, %v213
  %v260 = vadd.f32 %v37, %v218
  %v261 = vadd.f32 %v38, %v221
  %v262 = vadd.f32 %v39, %v226
  %v263 = vadd.f32 %v40, %v229
  %v264 = vadd.f32 %v41, %v234
  %v265 = vadd.f32 %v42, %v237
  %v266 = vadd.f32 %v43, %v242
  %v267 = vadd.f32 %v44, %v245
  %v268 = vadd.f32 %v45, %v250
  %v269 = vadd.f32 %v46, %v253
  %270 = vst [vmem:[#allocation2] sm:$0xff] %v256
  %271 = vst [vmem:[#allocation2 + $0x8] sm:$0xff] %v257
  %272 = vst [vmem:[#allocation2 + $0x10] sm:$0xff] %v258
  %273 = vst [vmem:[#allocation2 + $0x18] sm:$0xff] %v259
  %274 = vst [vmem:[#allocation2 + $0x20] sm:$0xff] %v260
  %275 = vst [vmem:[#allocation2 + $0x28] sm:$0xff] %v261
  %276 = vst [vmem:[#allocation2 + $0x30] sm:$0xff] %v262
  %277 = vst [vmem:[#allocation2 + $0x38] sm:$0xff] %v263
  %278 = vst [vmem:[#allocation2 + $0x40] sm:$0xff] %v264
  %279 = vst [vmem:[#allocation2 + $0x48] sm:$0xff] %v265
  %280 = vst [vmem:[#allocation2 + $0x50] sm:$0xff] %v266
  %281 = vst [vmem:[#allocation2 + $0x58] sm:$0xff] %v267
  %282 = vst [vmem:[#allocation2 + $0x60] sm:$0xff] %v268
  %283 = vst [vmem:[#allocation2 + $0x68] sm:$0xff] %v269
  // Predicated region
  $region18: #{embedding_net_forward.10} parent=0 // pred_check
    %p284 = pneg %p15
  $region19: #{embedding_net_forward.10} parent=0 // pred_check_branch
    %286 = sbr.rel (%p284) target = $region21
  $region20: #{embedding_net_forward.10} parent=0 // pred_region
    %v287 = vld [vmem:[#allocation2] sm:$0xff]
    %v288 = vld [vmem:[#allocation2 + $0x8] sm:$0xff]
    %v289 = vld [vmem:[#allocation2 + $0x10] sm:$0xff]
    %v290 = vld [vmem:[#allocation2 + $0x18] sm:$0xff]
    %v291 = vld [vmem:[#allocation2 + $0x20] sm:$0xff]
    %v292 = vld [vmem:[#allocation2 + $0x28] sm:$0xff]
    %v293 = vld [vmem:[#allocation2 + $0x30] sm:$0xff]
    %v294 = vld [vmem:[#allocation2 + $0x38] sm:$0xff]
    %v295 = vld [vmem:[#allocation2 + $0x40] sm:$0xff]
    %v296 = vld [vmem:[#allocation2 + $0x48] sm:$0xff]
    %v297 = vld [vmem:[#allocation2 + $0x50] sm:$0xff]
    %v298 = vld [vmem:[#allocation2 + $0x58] sm:$0xff]
    %v299 = vld [vmem:[#allocation2 + $0x60] sm:$0xff]
    %v300 = vld [vmem:[#allocation2 + $0x68] sm:$0xff]
    %v301 = vld [vmem:[%s2] sm:$0x1]
    %v303 = vlaneseq
    %v304 = vshrl.u32 %v303, 7
    %v305 = vsub.s32 0, %v304
    %v306 = vrot.slane %v301, %v305
    %v308 = vadd.f32 %v287, %v306
    %v309 = vadd.f32 %v288, %v306
    %v310 = vadd.f32 %v289, %v306
    %v311 = vadd.f32 %v290, %v306
    %v312 = vadd.f32 %v291, %v306
    %v313 = vadd.f32 %v292, %v306
    %v314 = vadd.f32 %v293, %v306
    %v315 = vadd.f32 %v294, %v306
    %v316 = vadd.f32 %v295, %v306
    %v317 = vadd.f32 %v296, %v306
    %v318 = vadd.f32 %v297, %v306
    %v319 = vadd.f32 %v298, %v306
    %v320 = vadd.f32 %v299, %v306
    %v321 = vadd.f32 %v300, %v306
    %v322 = vmax.f32 %v308, 0.0
    %v323 = vmax.f32 %v309, 0.0
    %v324 = vmax.f32 %v310, 0.0
    %v325 = vmax.f32 %v311, 0.0
    %v326 = vmax.f32 %v312, 0.0
    %v327 = vmax.f32 %v313, 0.0
    %v328 = vmax.f32 %v314, 0.0
    %v329 = vmax.f32 %v315, 0.0
    %v330 = vmax.f32 %v316, 0.0
    %v331 = vmax.f32 %v317, 0.0
    %v332 = vmax.f32 %v318, 0.0
    %v333 = vmax.f32 %v319, 0.0
    %v334 = vmax.f32 %v320, 0.0
    %v335 = vmax.f32 %v321, 0.0
    %v336 = vpack.c.bf16 %v323, %v322
    %v337 = vpack.c.bf16 %v325, %v324
    %v338 = vpack.c.bf16 %v327, %v326
    %v339 = vpack.c.bf16 %v329, %v328
    %v340 = vpack.c.bf16 %v331, %v330
    %v341 = vpack.c.bf16 %v333, %v332
    %v342 = vpack.c.bf16 %v335, %v334
    %v350 = vunpack.c.l.b16 %v336
    %v351 = vunpack.c.h.b16 %v336
    %v352 = vunpack.c.l.b16 %v337
    %v353 = vunpack.c.h.b16 %v337
    %v354 = vunpack.c.l.b16 %v338
    %v355 = vunpack.c.h.b16 %v338
    %v356 = vunpack.c.l.b16 %v339
    %v357 = vunpack.c.h.b16 %v339
    %v358 = vunpack.c.l.b16 %v340
    %v359 = vunpack.c.h.b16 %v340
    %v360 = vunpack.c.l.b16 %v341
    %v361 = vunpack.c.h.b16 %v341
    %v362 = vunpack.c.l.b16 %v342
    %v363 = vunpack.c.h.b16 %v342
    %v364 = vpack.c.b16 %v350, %v350
    %v365 = vpack.c.b16 %v351, %v351
    %v366 = vpack.c.b16 %v352, %v352
    %v367 = vpack.c.b16 %v353, %v353
    %v368 = vpack.c.b16 %v354, %v354
    %v369 = vpack.c.b16 %v355, %v355
    %v370 = vpack.c.b16 %v356, %v356
    %v371 = vpack.c.b16 %v357, %v357
    %v372 = vpack.c.b16 %v358, %v358
    %v373 = vpack.c.b16 %v359, %v359
    %v374 = vpack.c.b16 %v360, %v360
    %v375 = vpack.c.b16 %v361, %v361
    %v376 = vpack.c.b16 %v362, %v362
    %v377 = vpack.c.b16 %v363, %v363
    %392 = vst [vmem:[%s3] sm:$0xf] %v364
    %393 = vst [vmem:[%s3 + $0x4] sm:$0xf] %v365
    %394 = vst [vmem:[%s3 + $0x8] sm:$0xf] %v366
    %395 = vst [vmem:[%s3 + $0xc] sm:$0xf] %v367
    %396 = vst [vmem:[%s3 + $0x10] sm:$0xf] %v368
    %397 = vst [vmem:[%s3 + $0x14] sm:$0xf] %v369
    %398 = vst [vmem:[%s3 + $0x18] sm:$0xf] %v370
    %399 = vst [vmem:[%s3 + $0x1c] sm:$0xf] %v371
    %400 = vst [vmem:[%s3 + $0x20] sm:$0xf] %v372
    %401 = vst [vmem:[%s3 + $0x24] sm:$0xf] %v373
    %402 = vst [vmem:[%s3 + $0x28] sm:$0xf] %v374
    %403 = vst [vmem:[%s3 + $0x2c] sm:$0xf] %v375
    %404 = vst [vmem:[%s3 + $0x30] sm:$0xf] %v376
    %405 = vst [vmem:[%s3 + $0x34] sm:$0xf] %v377
  $region21: #{embedding_net_forward.10} parent=0 // pred_fallthru
    _
  // Predicated region
  $region22: #{embedding_net_forward.10} parent=0 // pred_check
    _
  $region23: #{embedding_net_forward.10} parent=0 // pred_check_branch
    %407 = sbr.rel (0) target = $region25
  $region24: #{embedding_net_forward.10} parent=0 // pred_region
    _
  $region25: #{embedding_net_forward.10} parent=0 // pred_fallthru
    _
  // Predicated region
  $region26: #{embedding_net_forward.10} parent=0 // pred_check
    _
  $region27: #{embedding_net_forward.10} parent=0 // pred_check_branch
    %409 = sbr.rel (0) target = $region29
  $region28: #{embedding_net_forward.10} parent=0 // pred_region
    _
  $region29: #{embedding_net_forward.10} parent=0 // pred_fallthru
    _

// kernel: embedding_net_forward.11
$region0: #{embedding_net_forward.11}
  #allocation0 [shape = 'u32[]', space=smem, size = 0x4, offset = 0x4, fixed_abs, tag = 'smem constant byte address 0x4 - core index']
  #allocation1 [shape = 'u32[144,128]{1,0:T(1,128)}', space=vmem, size = 0x12000, scoped, tag = 'internal scratch']
  #allocation2 [shape = 'f32[112,128]{1,0:T(8,128)}', space=vmem, size = 0xe000, scoped, tag = 'scratch operand']
  %s0 = inlined_call_operand.vmem [shape: bf16[112,1024], index: 0, kind: input, shape index: {}]
  %s1 = inlined_call_operand.vmem [shape: bf16[1024,128], index: 1, kind: input, shape index: {}]
  %s2 = inlined_call_operand.vmem [shape: f32[1,128], index: 2, kind: input, shape index: {}]
  %s3 = inlined_call_operand.vmem [shape: bf16[112,128], index: 3, kind: output, shape index: {}]
  %s4 = sld [smem:[#allocation0]]
  $region76: #{embedding_net_forward.11} parent=0
    _
  %s6 = ssub.s32 1, %s4
  %s7 = scalar_select 0, %s6, %s4
  $region1: #{embedding_net_forward.11} parent=0
    #allocation3 [shape = 'u8[229376]{0}', space=vmem, size = 0x38000, scoped, tag = 'input window, operand 0']
    loop: start=0, step=1, limit=4
    $region2: #{embedding_net_forward.11} parent=1 // loop_pre_header
      _
    $region3: #{embedding_net_forward.11} parent=1 // loop_header
      %s9 = sphi 0, %s13
      %p10 = scmp.ge.s32.totalorder %s9, 4
      %s16 = sphi 0, %s35
      %s17 = sphi 0, %s31
      %s18 = sphi 0, %s27
      %s19 = sphi 0, %s16
      %s20 = sphi 0, %s17
      %s21 = sphi 0, %s18
      %s22 = sphi 0, %s19
      %s23 = sphi 0, %s20
      %s24 = sphi 0, %s21
      %s40 = sphi 0, %s42
      %s43 = sphi 0, %s40
      %s44 = sphi 0, %s43
      %s60 = sphi 0, %s44
      %s68 = sphi 0, %s70
      %s71 = sphi 0, %s68
      %s72 = sphi 0, %s71
      %s88 = sphi 0, %s72
      %s94 = sphi 0, %s96
      %s97 = sphi 0, %s94
      %s98 = sphi 0, %s97
      %s114 = sphi 0, %s98
      %s122 = sphi 0, %s124
      %s125 = sphi 0, %s122
      %s126 = sphi 0, %s125
      %s142 = sphi 0, %s126
    $region4: #{embedding_net_forward.11} parent=1 // loop_header_branch
      %12 = sbr.rel (%p10) target = $region8
    $region5: #{embedding_net_forward.11} parent=1 // loop_body
      %s14 = ssub.s32 %s9, 1
      %s15 = ssub.s32 %s9, 2
      %s25 = sadd.s32 1, %s18
      %p26 = scmp.ge.s32.totalorder %s25, 2
      %s27 = scalar_select %p26, 0, %s25
      %s28 = sadd.s32 1, %s17
      %s29 = scalar_select %p26, %s28, %s17
      %p30 = scmp.ge.s32.totalorder %s29, 1
      %s31 = scalar_select %p30, 0, %s29
      %s32 = sadd.s32 1, %s16
      %s33 = scalar_select %p30, %s32, %s16
      %p34 = scmp.ge.s32.totalorder %s33, 1
      %s35 = scalar_select %p34, 0, %s33
      %s36 = ssub.s32 %s16, %s35
      %s37 = ssub.s32 %s18, %s27
      %s38 = sor.u32 %s36, %s37
      %p39 = scmp.eq.s32.totalorder %s38, 0
      %s41 = sadd.s32 %s40, 1
      %s42 = scalar_select %p39, %s40, %s41
      %p45 = pneg %p39
      %p46 = scmp.eq.s32.totalorder %s9, 1
      %p47 = por %p45, %p46
      %p48 = scmp.ne.s32.totalorder %s40, %s43
      %p49 = scmp.eq.s32.totalorder %s9, 0
      %p50 = por %p48, %p49
      %p51 = scmp.ne.s32.totalorder %s40, %s43
      %p52 = scmp.eq.s32.totalorder %s14, 1
      %p53 = por %p51, %p52
      %p54 = scmp.ne.s32.totalorder %s43, %s44
      %p55 = scmp.eq.s32.totalorder %s14, 0
      %p56 = por %p54, %p55
      %p57 = scmp.ne.s32.totalorder %s43, %s44
      %p58 = scmp.eq.s32.totalorder %s15, 1
      %p59 = por %p57, %p58
      %p61 = scmp.ne.s32.totalorder %s44, %s60
      %p62 = scmp.eq.s32.totalorder %s15, 0
      %p63 = por %p61, %p62
      %s64 = ssub.s32 %s18, %s27
      %s65 = ssub.s32 %s17, %s31
      %s66 = sor.u32 %s64, %s65
      %p67 = scmp.eq.s32.totalorder %s66, 0
      %s69 = sadd.s32 %s68, 1
      %s70 = scalar_select %p67, %s68, %s69
      %p73 = pneg %p67
      %p74 = scmp.eq.s32.totalorder %s9, 1
      %p75 = por %p73, %p74
      %p76 = scmp.ne.s32.totalorder %s68, %s71
      %p77 = scmp.eq.s32.totalorder %s9, 0
      %p78 = por %p76, %p77
      %p79 = scmp.ne.s32.totalorder %s68, %s71
      %p80 = scmp.eq.s32.totalorder %s14, 1
      %p81 = por %p79, %p80
      %p82 = scmp.ne.s32.totalorder %s71, %s72
      %p83 = scmp.eq.s32.totalorder %s14, 0
      %p84 = por %p82, %p83
      %p85 = scmp.ne.s32.totalorder %s71, %s72
      %p86 = scmp.eq.s32.totalorder %s15, 1
      %p87 = por %p85, %p86
      %p89 = scmp.ne.s32.totalorder %s72, %s88
      %p90 = scmp.eq.s32.totalorder %s15, 0
      %p91 = por %p89, %p90
      %s92 = ssub.s32 %s17, %s31
      %p93 = scmp.eq.s32.totalorder %s92, 0
      %s95 = sadd.s32 %s94, 1
      %s96 = scalar_select %p93, %s94, %s95
      %p99 = pneg %p93
      %p100 = scmp.eq.s32.totalorder %s9, 1
      %p101 = por %p99, %p100
      %p102 = scmp.ne.s32.totalorder %s94, %s97
      %p103 = scmp.eq.s32.totalorder %s9, 0
      %p104 = por %p102, %p103
      %p105 = scmp.ne.s32.totalorder %s94, %s97
      %p106 = scmp.eq.s32.totalorder %s14, 1
      %p107 = por %p105, %p106
      %p108 = scmp.ne.s32.totalorder %s97, %s98
      %p109 = scmp.eq.s32.totalorder %s14, 0
      %p110 = por %p108, %p109
      %p111 = scmp.ne.s32.totalorder %s97, %s98
      %p112 = scmp.eq.s32.totalorder %s15, 1
      %p113 = por %p111, %p112
      %p115 = scmp.ne.s32.totalorder %s98, %s114
      %p116 = scmp.eq.s32.totalorder %s15, 0
      %p117 = por %p115, %p116
      %s118 = ssub.s32 %s16, %s35
      %s119 = ssub.s32 %s17, %s31
      %s120 = sor.u32 %s118, %s119
      %p121 = scmp.eq.s32.totalorder %s120, 0
      %s123 = sadd.s32 %s122, 1
      %s124 = scalar_select %p121, %s122, %s123
      %p127 = pneg %p121
      %p128 = scmp.eq.s32.totalorder %s9, 1
      %p129 = por %p127, %p128
      %p130 = scmp.ne.s32.totalorder %s122, %s125
      %p131 = scmp.eq.s32.totalorder %s9, 0
      %p132 = por %p130, %p131
      %p133 = scmp.ne.s32.totalorder %s122, %s125
      %p134 = scmp.eq.s32.totalorder %s14, 1
      %p135 = por %p133, %p134
      %p136 = scmp.ne.s32.totalorder %s125, %s126
      %p137 = scmp.eq.s32.totalorder %s14, 0
      %p138 = por %p136, %p137
      %p139 = scmp.ne.s32.totalorder %s125, %s126
      %p140 = scmp.eq.s32.totalorder %s15, 1
      %p141 = por %p139, %p140
      %p143 = scmp.ne.s32.totalorder %s126, %s142
      %p144 = scmp.eq.s32.totalorder %s15, 0
      %p145 = por %p143, %p144
      %p146 = scmp.le.s32.totalorder 1, %s9
      %p147 = scmp.lt.s32.totalorder %s9, 3
      %p148 = pnand %p146, %p147
      %p149 = pneg %p148
      // Predicated region
      $region9: #{embedding_net_forward.11} parent=5 // pred_check
        _
      $region10: #{embedding_net_forward.11} parent=5 // pred_check_branch
        %151 = sbr.rel (%p148) target = $region12
      $region11: #{embedding_net_forward.11} parent=5 // pred_region
        %s152 = ssub.s32 %s9, 1
        // Predicated region
        $region13: #{embedding_net_forward.11} parent=11 // pred_check
          %p153 = pneg %p110
        $region14: #{embedding_net_forward.11} parent=11 // pred_check_branch
          %155 = sbr.rel (%p153) target = $region16
        $region15: #{embedding_net_forward.11} parent=11 // pred_region
          %p156 = scmp.lt.s32.totalorder %s20, 0
          %s157 = scalar_select %p156, %s20, 0
          %s158 = scalar_lea.vmem %s2, %s157
        $region16: #{embedding_net_forward.11} parent=11 // pred_fallthru
          _
      $region12: #{embedding_net_forward.11} parent=5 // pred_fallthru
        _
      %p159 = scmp.lt.s32.totalorder %s9, 2
      // Predicated region
      $region17: #{embedding_net_forward.11} parent=5 // pred_check
        %p160 = pneg %p159
      $region18: #{embedding_net_forward.11} parent=5 // pred_check_branch
        %162 = sbr.rel (%p160) target = $region20
      $region19: #{embedding_net_forward.11} parent=5 // pred_region
        // Predicated region
        $region21: #{embedding_net_forward.11} parent=19 // pred_check
          %p163 = pneg %p50
        $region22: #{embedding_net_forward.11} parent=19 // pred_check_branch
          %165 = sbr.rel (%p163) target = $region24
        $region23: #{embedding_net_forward.11} parent=19 // pred_region
          %s166 = sand.u32 %s40, 1
          %s167 = sand.u32 %s40, 1
          %s168 = smul.addr %s167, 224
          %s169 = scalar_lea.vmem [#allocation3], %s168
          %s170 = smul.u32 14, %s16
          %s171 = smul.u32 4, %s18
          %s172 = smul.addr %s170, 8
          %s173 = sadd.s32 %s171, %s172
          %s174 = smul.addr %s173, 4
          %s175 = scalar_lea.vmem %s0, %s174
          // Predicated region
          $region25: #{embedding_net_forward.11} parent=23 // pred_check
            _
          $region26: #{embedding_net_forward.11} parent=23 // pred_check_branch
            %177 = sbr.rel (0) target = $region28
          $region27: #{embedding_net_forward.11} parent=23 // pred_region
            // Predicated region
            $region29: #{embedding_net_forward.11} parent=27 // pred_check
              _
            $region30: #{embedding_net_forward.11} parent=27 // pred_check_branch
              %179 = sbr.rel (0) target = $region32
            $region31: #{embedding_net_forward.11} parent=27 // pred_region
              loop: start=0, step=1, limit=1
              $region33: #{embedding_net_forward.11} parent=31 // loop_pre_header
                _
              $region34: #{embedding_net_forward.11} parent=31 // loop_header
                %s181 = sphi 0, %s185
                %p182 = scmp.ge.s32.totalorder %s181, 1
                %s186 = sphi %s175, %s175
                %s187 = sphi %s169, %s169
              $region35: #{embedding_net_forward.11} parent=31 // loop_header_branch
                %184 = sbr.rel (%p182) target = $region39
              $region36: #{embedding_net_forward.11} parent=31 // loop_body
                %v188 = vld [vmem:[%s186] sm:$0xff]
                %189 = vst [vmem:[%s187] sm:$0xff] %v188
                %v190 = vld [vmem:[%s186 + $0x8] sm:$0xff]
                %191 = vst [vmem:[%s187 + $0x8] sm:$0xff] %v190
                %v192 = vld [vmem:[%s186 + $0x20] sm:$0xff]
                %193 = vst [vmem:[%s187 + $0x10] sm:$0xff] %v192
                %v194 = vld [vmem:[%s186 + $0x28] sm:$0xff]
                %195 = vst [vmem:[%s187 + $0x18] sm:$0xff] %v194
                %v196 = vld [vmem:[%s186 + $0x40] sm:$0xff]
                %197 = vst [vmem:[%s187 + $0x20] sm:$0xff] %v196
                %v198 = vld [vmem:[%s186 + $0x48] sm:$0xff]
                %199 = vst [vmem:[%s187 + $0x28] sm:$0xff] %v198
                %v200 = vld [vmem:[%s186 + $0x60] sm:$0xff]
                %201 = vst [vmem:[%s187 + $0x30] sm:$0xff] %v200
                %v202 = vld [vmem:[%s186 + $0x68] sm:$0xff]
                %203 = vst [vmem:[%s187 + $0x38] sm:$0xff] %v202
                %v204 = vld [vmem:[%s186 + $0x80] sm:$0xff]
                %205 = vst [vmem:[%s187 + $0x40] sm:$0xff] %v204
                %v206 = vld [vmem:[%s186 + $0x88] sm:$0xff]
                %207 = vst [vmem:[%s187 + $0x48] sm:$0xff] %v206
                %v208 = vld [vmem:[%s186 + $0xa0] sm:$0xff]
                %209 = vst [vmem:[%s187 + $0x50] sm:$0xff] %v208
                %v210 = vld [vmem:[%s186 + $0xa8] sm:$0xff]
                %211 = vst [vmem:[%s187 + $0x58] sm:$0xff] %v210
                %v212 = vld [vmem:[%s186 + $0xc0] sm:$0xff]
                %213 = vst [vmem:[%s187 + $0x60] sm:$0xff] %v212
                %v214 = vld [vmem:[%s186 + $0xc8] sm:$0xff]
                %215 = vst [vmem:[%s187 + $0x68] sm:$0xff] %v214
                %v216 = vld [vmem:[%s186 + $0xe0] sm:$0xff]
                %217 = vst [vmem:[%s187 + $0x70] sm:$0xff] %v216
                %v218 = vld [vmem:[%s186 + $0xe8] sm:$0xff]
                %219 = vst [vmem:[%s187 + $0x78] sm:$0xff] %v218
                %v220 = vld [vmem:[%s186 + $0x100] sm:$0xff]
                %221 = vst [vmem:[%s187 + $0x80] sm:$0xff] %v220
                %v222 = vld [vmem:[%s186 + $0x108] sm:$0xff]
                %223 = vst [vmem:[%s187 + $0x88] sm:$0xff] %v222
                %v224 = vld [vmem:[%s186 + $0x120] sm:$0xff]
                %225 = vst [vmem:[%s187 + $0x90] sm:$0xff] %v224
                %v226 = vld [vmem:[%s186 + $0x128] sm:$0xff]
                %227 = vst [vmem:[%s187 + $0x98] sm:$0xff] %v226
                %v228 = vld [vmem:[%s186 + $0x140] sm:$0xff]
                %229 = vst [vmem:[%s187 + $0xa0] sm:$0xff] %v228
                %v230 = vld [vmem:[%s186 + $0x148] sm:$0xff]
                %231 = vst [vmem:[%s187 + $0xa8] sm:$0xff] %v230
                %v232 = vld [vmem:[%s186 + $0x160] sm:$0xff]
                %233 = vst [vmem:[%s187 + $0xb0] sm:$0xff] %v232
                %v234 = vld [vmem:[%s186 + $0x168] sm:$0xff]
                %235 = vst [vmem:[%s187 + $0xb8] sm:$0xff] %v234
                %v236 = vld [vmem:[%s186 + $0x180] sm:$0xff]
                %237 = vst [vmem:[%s187 + $0xc0] sm:$0xff] %v236
                %v238 = vld [vmem:[%s186 + $0x188] sm:$0xff]
                %239 = vst [vmem:[%s187 + $0xc8] sm:$0xff] %v238
                %v240 = vld [vmem:[%s186 + $0x1a0] sm:$0xff]
                %241 = vst [vmem:[%s187 + $0xd0] sm:$0xff] %v240
                %v242 = vld [vmem:[%s186 + $0x1a8] sm:$0xff]
                %243 = vst [vmem:[%s187 + $0xd8] sm:$0xff] %v242
              $region37: #{embedding_net_forward.11} parent=31 // loop_footer
                %s185 = sadd.s32 1, %s181
              $region38: #{embedding_net_forward.11} parent=31 // loop_footer_branch
                %180 = sbr.rel target = $region34
              $region39: #{embedding_net_forward.11} parent=31 // loop_exit
                _
            $region32: #{embedding_net_forward.11} parent=27 // pred_fallthru
              _
            // Predicated region
            $region40: #{embedding_net_forward.11} parent=27 // pred_check
              _
            $region41: #{embedding_net_forward.11} parent=27 // pred_check_branch
              %245 = sbr.rel target = $region43
            $region42: #{embedding_net_forward.11} parent=27 // pred_region
              _
            $region43: #{embedding_net_forward.11} parent=27 // pred_fallthru
              _
          $region28: #{embedding_net_forward.11} parent=23 // pred_fallthru
            _
          %246 = vnop
        $region24: #{embedding_net_forward.11} parent=19 // pred_fallthru
          _
        // Predicated region
        $region44: #{embedding_net_forward.11} parent=19 // pred_check
          %p247 = pneg %p78
        $region45: #{embedding_net_forward.11} parent=19 // pred_check_branch
          %249 = sbr.rel (%p247) target = $region47
        $region46: #{embedding_net_forward.11} parent=19 // pred_region
          %s250 = smul.u32 64, %s18
          %p251 = scmp.lt.s32.totalorder %s250, 127
          %s252 = scalar_select %p251, %s250, 127
          %p253 = scmp.lt.s32.totalorder %s17, 0
          %s254 = scalar_select %p253, %s17, 0
          %s255 = sadd.s32 %s254, %s252
          %s256 = smul.addr %s255, 4
          %s257 = scalar_lea.vmem %s1, %s256
          %s258 = smul.u32 64, %s18
        $region47: #{embedding_net_forward.11} parent=19 // pred_fallthru
          _
      $region20: #{embedding_net_forward.11} parent=5 // pred_fallthru
        _
      %p259 = scmp.le.s32.totalorder 1, %s9
      %p260 = scmp.lt.s32.totalorder %s9, 3
      %p261 = pnand %p259, %p260
      %p262 = pneg %p261
      // Predicated region
      $region48: #{embedding_net_forward.11} parent=5 // pred_check
        _
      $region49: #{embedding_net_forward.11} parent=5 // pred_check_branch
        %264 = sbr.rel (%p261) target = $region51
      $region50: #{embedding_net_forward.11} parent=5 // pred_region
        %s265 = ssub.s32 %s9, 1
        %s266 = sand.u32 %s43, 1
        %s267 = sand.u32 %s43, 1
        %s268 = smul.addr %s267, 224
        %s269 = scalar_lea.vmem [#allocation3], %s268
        // Predicated region
        $region52: #{embedding_net_forward.11} parent=50 // pred_check
          %p270 = pneg %p56
        $region53: #{embedding_net_forward.11} parent=50 // pred_check_branch
          %272 = sbr.rel (%p270) target = $region55
        $region54: #{embedding_net_forward.11} parent=50 // pred_region
          _
        $region55: #{embedding_net_forward.11} parent=50 // pred_fallthru
          _
        %s273 = sand.u32 %s43, 1
        %s274 = sand.u32 %s43, 1
        %s275 = smul.addr %s274, 224
        %s276 = scalar_lea.vmem [#allocation3], %s275
        %p277 = pneg %p56
        %p278 = pneg %p53
        %s279 = smul.u32 64, %s21
        %p280 = scmp.lt.s32.totalorder %s279, 127
        %s281 = scalar_select %p280, %s279, 127
        %p282 = scmp.lt.s32.totalorder %s20, 0
        %s283 = scalar_select %p282, %s20, 0
        %s284 = sadd.s32 %s283, %s281
        %s285 = smul.addr %s284, 4
        %s286 = scalar_lea.vmem %s1, %s285
        %p287 = pneg %p84
        %p288 = pneg %p81
        %p289 = scmp.lt.s32.totalorder %s20, 0
        %s290 = scalar_select %p289, %s20, 0
        %s291 = scalar_lea.vmem %s2, %s290
        %p292 = pneg %p110
        %p293 = pneg %p107
        %p294 = pneg %p138
        %p295 = pneg %p135
        %s296 = smul.u32 14, %s19
        %p297 = scmp.lt.s32.totalorder %s296, 13
        %s298 = scalar_select %p297, %s296, 13
        %p299 = scmp.lt.s32.totalorder %s20, 0
        %s300 = scalar_select %p299, %s20, 0
        %s301 = sadd.s32 %s300, %s298
        %s302 = smul.addr %s301, 4
        %s303 = scalar_lea.vmem %s3, %s302
        %s304 = smul.u32 14, %s19
        %s305 = smul.u32 4, %s21
        %s306 = smul.u32 64, %s21
        %p307 = scmp.lt.s32.totalorder %s306, 127
        %s308 = scalar_select %p307, %s306, 127
        %p309 = scmp.lt.s32.totalorder %s20, 0
        %s310 = scalar_select %p309, %s20, 0
        %s311 = sadd.s32 %s310, %s308
        %s312 = smul.addr %s311, 4
        %s313 = scalar_lea.vmem %s1, %s312
        %s314 = smul.u32 64, %s21
        %p315 = scmp.lt.s32.totalorder %s20, 0
        %s316 = scalar_select %p315, %s20, 0
        %s317 = scalar_lea.vmem %s2, %s316
        %s318 = smul.u32 14, %s19
        %p319 = scmp.lt.s32.totalorder %s318, 13
        %s320 = scalar_select %p319, %s318, 13
        %p321 = scmp.lt.s32.totalorder %s20, 0
        %s322 = scalar_select %p321, %s20, 0
        %s323 = sadd.s32 %s322, %s320
        %s324 = smul.addr %s323, 4
        %s325 = scalar_lea.vmem %s3, %s324
        %s326 = smul.u32 14, %s19
        %p328 = scmp.eq.s32.totalorder %s21, 0
        // Predicated region
        $region56: #{embedding_net_forward.11} parent=50 // pred_check
          %p329 = pneg %p328
        $region57: #{embedding_net_forward.11} parent=50 // pred_check_branch
          %331 = sbr.rel (%p329) target = $region59
        $region58: #{embedding_net_forward.11} parent=50 // pred_region
          %332 = vst [vmem:[#allocation2] sm:$0xff] 0.0
          %333 = vst [vmem:[#allocation2 + $0x8] sm:$0xff] 0.0
          %334 = vst [vmem:[#allocation2 + $0x10] sm:$0xff] 0.0
          %335 = vst [vmem:[#allocation2 + $0x18] sm:$0xff] 0.0
          %336 = vst [vmem:[#allocation2 + $0x20] sm:$0xff] 0.0
          %337 = vst [vmem:[#allocation2 + $0x28] sm:$0xff] 0.0
          %338 = vst [vmem:[#allocation2 + $0x30] sm:$0xff] 0.0
          %339 = vst [vmem:[#allocation2 + $0x38] sm:$0xff] 0.0
          %340 = vst [vmem:[#allocation2 + $0x40] sm:$0xff] 0.0
          %341 = vst [vmem:[#allocation2 + $0x48] sm:$0xff] 0.0
          %342 = vst [vmem:[#allocation2 + $0x50] sm:$0xff] 0.0
          %343 = vst [vmem:[#allocation2 + $0x58] sm:$0xff] 0.0
          %344 = vst [vmem:[#allocation2 + $0x60] sm:$0xff] 0.0
          %345 = vst [vmem:[#allocation2 + $0x68] sm:$0xff] 0.0
        $region59: #{embedding_net_forward.11} parent=50 // pred_fallthru
          _
        %v346 = vld [vmem:[#allocation2] sm:$0xff]
        %v347 = vld [vmem:[#allocation2 + $0x8] sm:$0xff]
        %v348 = vld [vmem:[#allocation2 + $0x10] sm:$0xff]
        %v349 = vld [vmem:[#allocation2 + $0x18] sm:$0xff]
        %v350 = vld [vmem:[#allocation2 + $0x20] sm:$0xff]
        %v351 = vld [vmem:[#allocation2 + $0x28] sm:$0xff]
        %v352 = vld [vmem:[#allocation2 + $0x30] sm:$0xff]
        %v353 = vld [vmem:[#allocation2 + $0x38] sm:$0xff]
        %v354 = vld [vmem:[#allocation2 + $0x40] sm:$0xff]
        %v355 = vld [vmem:[#allocation2 + $0x48] sm:$0xff]
        %v356 = vld [vmem:[#allocation2 + $0x50] sm:$0xff]
        %v357 = vld [vmem:[#allocation2 + $0x58] sm:$0xff]
        %v358 = vld [vmem:[#allocation2 + $0x60] sm:$0xff]
        %v359 = vld [vmem:[#allocation2 + $0x68] sm:$0xff]
        %v360 = vld [vmem:[%s269] sm:$0xff]
        %v361 = vld [vmem:[%s269 + $0x8] sm:$0xff]
        %v362 = vld [vmem:[%s269 + $0x10] sm:$0xff]
        %v363 = vld [vmem:[%s269 + $0x18] sm:$0xff]
        %v364 = vld [vmem:[%s269 + $0x20] sm:$0xff]
        %v365 = vld [vmem:[%s269 + $0x28] sm:$0xff]
        %v366 = vld [vmem:[%s269 + $0x30] sm:$0xff]
        %v367 = vld [vmem:[%s269 + $0x38] sm:$0xff]
        %v368 = vld [vmem:[%s269 + $0x40] sm:$0xff]
        %v369 = vld [vmem:[%s269 + $0x48] sm:$0xff]
        %v370 = vld [vmem:[%s269 + $0x50] sm:$0xff]
        %v371 = vld [vmem:[%s269 + $0x58] sm:$0xff]
        %v372 = vld [vmem:[%s269 + $0x60] sm:$0xff]
        %v373 = vld [vmem:[%s269 + $0x68] sm:$0xff]
        %v374 = vld [vmem:[%s269 + $0x70] sm:$0xff]
        %v375 = vld [vmem:[%s269 + $0x78] sm:$0xff]
        %v376 = vld [vmem:[%s269 + $0x80] sm:$0xff]
        %v377 = vld [vmem:[%s269 + $0x88] sm:$0xff]
        %v378 = vld [vmem:[%s269 + $0x90] sm:$0xff]
        %v379 = vld [vmem:[%s269 + $0x98] sm:$0xff]
        %v380 = vld [vmem:[%s269 + $0xa0] sm:$0xff]
        %v381 = vld [vmem:[%s269 + $0xa8] sm:$0xff]
        %v382 = vld [vmem:[%s269 + $0xb0] sm:$0xff]
        %v383 = vld [vmem:[%s269 + $0xb8] sm:$0xff]
        %v384 = vld [vmem:[%s269 + $0xc0] sm:$0xff]
        %v385 = vld [vmem:[%s269 + $0xc8] sm:$0xff]
        %v386 = vld [vmem:[%s269 + $0xd0] sm:$0xff]
        %v387 = vld [vmem:[%s269 + $0xd8] sm:$0xff]
        %v388 = vld [vmem:[%s313] sm:$0xf]
        %v389 = vld [vmem:[%s313 + $0x4] sm:$0xf]
        %v390 = vld [vmem:[%s313 + $0x8] sm:$0xf]
        %v391 = vld [vmem:[%s313 + $0xc] sm:$0xf]
        %v392 = vld [vmem:[%s313 + $0x10] sm:$0xf]
        %v393 = vld [vmem:[%s313 + $0x14] sm:$0xf]
        %v394 = vld [vmem:[%s313 + $0x18] sm:$0xf]
        %v395 = vld [vmem:[%s313 + $0x1c] sm:$0xf]
        %v396 = vld [vmem:[%s313 + $0x20] sm:$0xf]
        %v397 = vld [vmem:[%s313 + $0x24] sm:$0xf]
        %v398 = vld [vmem:[%s313 + $0x28] sm:$0xf]
        %v399 = vld [vmem:[%s313 + $0x2c] sm:$0xf]
        %v400 = vld [vmem:[%s313 + $0x30] sm:$0xf]
        %v401 = vld [vmem:[%s313 + $0x34] sm:$0xf]
        %v402 = vld [vmem:[%s313 + $0x38] sm:$0xf]
        %v403 = vld [vmem:[%s313 + $0x3c] sm:$0xf]
        %v404 = vld [vmem:[%s313 + $0x40] sm:$0xf]
        %v405 = vld [vmem:[%s313 + $0x44] sm:$0xf]
        %v406 = vld [vmem:[%s313 + $0x48] sm:$0xf]
        %v407 = vld [vmem:[%s313 + $0x4c] sm:$0xf]
        %v408 = vld [vmem:[%s313 + $0x50] sm:$0xf]
        %v409 = vld [vmem:[%s313 + $0x54] sm:$0xf]
        %v410 = vld [vmem:[%s313 + $0x58] sm:$0xf]
        %v411 = vld [vmem:[%s313 + $0x5c] sm:$0xf]
        %v412 = vld [vmem:[%s313 + $0x60] sm:$0xf]
        %v413 = vld [vmem:[%s313 + $0x64] sm:$0xf]
        %v414 = vld [vmem:[%s313 + $0x68] sm:$0xf]
        %v415 = vld [vmem:[%s313 + $0x6c] sm:$0xf]
        %v416 = vld [vmem:[%s313 + $0x70] sm:$0xf]
        %v417 = vld [vmem:[%s313 + $0x74] sm:$0xf]
        %v418 = vld [vmem:[%s313 + $0x78] sm:$0xf]
        %v419 = vld [vmem:[%s313 + $0x7c] sm:$0xf]
        %v420 = vld [vmem:[%s313 + $0x80] sm:$0xf]
        %v421 = vld [vmem:[%s313 + $0x84] sm:$0xf]
        %v422 = vld [vmem:[%s313 + $0x88] sm:$0xf]
        %v423 = vld [vmem:[%s313 + $0x8c] sm:$0xf]
        %v424 = vld [vmem:[%s313 + $0x90] sm:$0xf]
        %v425 = vld [vmem:[%s313 + $0x94] sm:$0xf]
        %v426 = vld [vmem:[%s313 + $0x98] sm:$0xf]
        %v427 = vld [vmem:[%s313 + $0x9c] sm:$0xf]
        %v428 = vld [vmem:[%s313 + $0xa0] sm:$0xf]
        %v429 = vld [vmem:[%s313 + $0xa4] sm:$0xf]
        %v430 = vld [vmem:[%s313 + $0xa8] sm:$0xf]
        %v431 = vld [vmem:[%s313 + $0xac] sm:$0xf]
        %v432 = vld [vmem:[%s313 + $0xb0] sm:$0xf]
        %v433 = vld [vmem:[%s313 + $0xb4] sm:$0xf]
        %v434 = vld [vmem:[%s313 + $0xb8] sm:$0xf]
        %v435 = vld [vmem:[%s313 + $0xbc] sm:$0xf]
        %v436 = vld [vmem:[%s313 + $0xc0] sm:$0xf]
        %v437 = vld [vmem:[%s313 + $0xc4] sm:$0xf]
        %v438 = vld [vmem:[%s313 + $0xc8] sm:$0xf]
        %v439 = vld [vmem:[%s313 + $0xcc] sm:$0xf]
        %v440 = vld [vmem:[%s313 + $0xd0] sm:$0xf]
        %v441 = vld [vmem:[%s313 + $0xd4] sm:$0xf]
        %v442 = vld [vmem:[%s313 + $0xd8] sm:$0xf]
        %v443 = vld [vmem:[%s313 + $0xdc] sm:$0xf]
        %v444 = vld [vmem:[%s313 + $0xe0] sm:$0xf]
        %v445 = vld [vmem:[%s313 + $0xe4] sm:$0xf]
        %v446 = vld [vmem:[%s313 + $0xe8] sm:$0xf]
        %v447 = vld [vmem:[%s313 + $0xec] sm:$0xf]
        %v448 = vld [vmem:[%s313 + $0xf0] sm:$0xf]
        %v449 = vld [vmem:[%s313 + $0xf4] sm:$0xf]
        %v450 = vld [vmem:[%s313 + $0xf8] sm:$0xf]
        %v451 = vld [vmem:[%s313 + $0xfc] sm:$0xf]
        %v480 = vunpack.c.l.b16 %v360
        %v481 = vunpack.c.h.b16 %v360
        %v482 = vunpack.c.l.b16 %v361
        %v483 = vunpack.c.h.b16 %v361
        %v484 = vunpack.c.l.b16 %v362
        %v485 = vunpack.c.h.b16 %v362
        %v486 = vunpack.c.l.b16 %v363
        %v487 = vunpack.c.h.b16 %v363
        %v488 = vunpack.c.l.b16 %v364
        %v489 = vunpack.c.h.b16 %v364
        %v490 = vunpack.c.l.b16 %v365
        %v491 = vunpack.c.h.b16 %v365
        %v492 = vunpack.c.l.b16 %v366
        %v493 = vunpack.c.h.b16 %v366
        %v494 = vunpack.c.l.b16 %v367
        %v495 = vunpack.c.h.b16 %v367
        %v496 = vunpack.c.l.b16 %v368
        %v497 = vunpack.c.h.b16 %v368
        %v498 = vunpack.c.l.b16 %v369
        %v499 = vunpack.c.h.b16 %v369
        %v500 = vunpack.c.l.b16 %v370
        %v501 = vunpack.c.h.b16 %v370
        %v502 = vunpack.c.l.b16 %v371
        %v503 = vunpack.c.h.b16 %v371
        %v504 = vunpack.c.l.b16 %v372
        %v505 = vunpack.c.h.b16 %v372
        %v506 = vunpack.c.l.b16 %v373
        %v507 = vunpack.c.h.b16 %v373
        %v508 = vunpack.c.l.b16 %v374
        %v509 = vunpack.c.h.b16 %v374
        %v510 = vunpack.c.l.b16 %v375
        %v511 = vunpack.c.h.b16 %v375
        %v512 = vunpack.c.l.b16 %v376
        %v513 = vunpack.c.h.b16 %v376
        %v514 = vunpack.c.l.b16 %v377
        %v515 = vunpack.c.h.b16 %v377
        %v516 = vunpack.c.l.b16 %v378
        %v517 = vunpack.c.h.b16 %v378
        %v518 = vunpack.c.l.b16 %v379
        %v519 = vunpack.c.h.b16 %v379
        %v520 = vunpack.c.l.b16 %v380
        %v521 = vunpack.c.h.b16 %v380
        %v522 = vunpack.c.l.b16 %v381
        %v523 = vunpack.c.h.b16 %v381
        %v524 = vunpack.c.l.b16 %v382
        %v525 = vunpack.c.h.b16 %v382
        %v526 = vunpack.c.l.b16 %v383
        %v527 = vunpack.c.h.b16 %v383
        %v528 = vunpack.c.l.b16 %v384
        %v529 = vunpack.c.h.b16 %v384
        %v530 = vunpack.c.l.b16 %v385
        %v531 = vunpack.c.h.b16 %v385
        %v532 = vunpack.c.l.b16 %v386
        %v533 = vunpack.c.h.b16 %v386
        %v534 = vunpack.c.l.b16 %v387
        %v535 = vunpack.c.h.b16 %v387
        %v536 = vpack.c.b16 %v484, %v480
        %v537 = vpack.c.b16 %v485, %v481
        %v538 = vpack.c.b16 %v486, %v482
        %v539 = vpack.c.b16 %v487, %v483
        %v540 = vpack.c.b16 %v492, %v488
        %v541 = vpack.c.b16 %v493, %v489
        %v542 = vpack.c.b16 %v494, %v490
        %v543 = vpack.c.b16 %v495, %v491
        %v544 = vpack.c.b16 %v500, %v496
        %v545 = vpack.c.b16 %v501, %v497
        %v546 = vpack.c.b16 %v502, %v498
        %v547 = vpack.c.b16 %v503, %v499
        %v548 = vpack.c.b16 %v508, %v504
        %v549 = vpack.c.b16 %v509, %v505
        %v550 = vpack.c.b16 %v510, %v506
        %v551 = vpack.c.b16 %v511, %v507
        %v552 = vpack.c.b16 %v516, %v512
        %v553 = vpack.c.b16 %v517, %v513
        %v554 = vpack.c.b16 %v518, %v514
        %v555 = vpack.c.b16 %v519, %v515
        %v556 = vpack.c.b16 %v524, %v520
        %v557 = vpack.c.b16 %v525, %v521
        %v558 = vpack.c.b16 %v526, %v522
        %v559 = vpack.c.b16 %v527, %v523
        %v560 = vpack.c.b16 %v532, %v528
        %v561 = vpack.c.b16 %v533, %v529
        %v562 = vpack.c.b16 %v534, %v530
        %v563 = vpack.c.b16 %v535, %v531
        %v656 = vunpack.c.l.b16 %v388
        %v657 = vunpack.c.l.b16 %v389
        %v658 = vunpack.c.l.b16 %v390
        %v659 = vunpack.c.l.b16 %v391
        %v660 = vunpack.c.l.b16 %v392
        %v661 = vunpack.c.l.b16 %v393
        %v662 = vunpack.c.l.b16 %v394
        %v663 = vunpack.c.l.b16 %v395
        %v664 = vunpack.c.l.b16 %v396
        %v665 = vunpack.c.l.b16 %v397
        %v666 = vunpack.c.l.b16 %v398
        %v667 = vunpack.c.l.b16 %v399
        %v668 = vunpack.c.l.b16 %v400
        %v669 = vunpack.c.l.b16 %v401
        %v670 = vunpack.c.l.b16 %v402
        %v671 = vunpack.c.l.b16 %v403
        %v672 = vunpack.c.l.b16 %v404
        %v673 = vunpack.c.l.b16 %v405
        %v674 = vunpack.c.l.b16 %v406
        %v675 = vunpack.c.l.b16 %v407
        %v676 = vunpack.c.l.b16 %v408
        %v677 = vunpack.c.l.b16 %v409
        %v678 = vunpack.c.l.b16 %v410
        %v679 = vunpack.c.l.b16 %v411
        %v680 = vunpack.c.l.b16 %v412
        %v681 = vunpack.c.l.b16 %v413
        %v682 = vunpack.c.l.b16 %v414
        %v683 = vunpack.c.l.b16 %v415
        %v684 = vunpack.c.l.b16 %v416
        %v685 = vunpack.c.l.b16 %v417
        %v686 = vunpack.c.l.b16 %v418
        %v687 = vunpack.c.l.b16 %v419
        %v688 = vunpack.c.l.b16 %v420
        %v689 = vunpack.c.l.b16 %v421
        %v690 = vunpack.c.l.b16 %v422
        %v691 = vunpack.c.l.b16 %v423
        %v692 = vunpack.c.l.b16 %v424
        %v693 = vunpack.c.l.b16 %v425
        %v694 = vunpack.c.l.b16 %v426
        %v695 = vunpack.c.l.b16 %v427
        %v696 = vunpack.c.l.b16 %v428
        %v697 = vunpack.c.l.b16 %v429
        %v698 = vunpack.c.l.b16 %v430
        %v699 = vunpack.c.l.b16 %v431
        %v700 = vunpack.c.l.b16 %v432
        %v701 = vunpack.c.l.b16 %v433
        %v702 = vunpack.c.l.b16 %v434
        %v703 = vunpack.c.l.b16 %v435
        %v704 = vunpack.c.l.b16 %v436
        %v705 = vunpack.c.l.b16 %v437
        %v706 = vunpack.c.l.b16 %v438
        %v707 = vunpack.c.l.b16 %v439
        %v708 = vunpack.c.l.b16 %v440
        %v709 = vunpack.c.l.b16 %v441
        %v710 = vunpack.c.l.b16 %v442
        %v711 = vunpack.c.l.b16 %v443
        %v712 = vunpack.c.l.b16 %v444
        %v713 = vunpack.c.l.b16 %v445
        %v714 = vunpack.c.l.b16 %v446
        %v715 = vunpack.c.l.b16 %v447
        %v716 = vunpack.c.l.b16 %v448
        %v717 = vunpack.c.l.b16 %v449
        %v718 = vunpack.c.l.b16 %v450
        %v719 = vunpack.c.l.b16 %v451
        %v720 = vpack.c.b16 %v657, %v656
        %v721 = vpack.c.b16 %v659, %v658
        %v722 = vpack.c.b16 %v661, %v660
        %v723 = vpack.c.b16 %v663, %v662
        %v724 = vpack.c.b16 %v665, %v664
        %v725 = vpack.c.b16 %v667, %v666
        %v726 = vpack.c.b16 %v669, %v668
        %v727 = vpack.c.b16 %v671, %v670
        %v728 = vpack.c.b16 %v673, %v672
        %v729 = vpack.c.b16 %v675, %v674
        %v730 = vpack.c.b16 %v677, %v676
        %v731 = vpack.c.b16 %v679, %v678
        %v732 = vpack.c.b16 %v681, %v680
        %v733 = vpack.c.b16 %v683, %v682
        %v734 = vpack.c.b16 %v685, %v684
        %v735 = vpack.c.b16 %v687, %v686
        %v736 = vpack.c.b16 %v689, %v688
        %v737 = vpack.c.b16 %v691, %v690
        %v738 = vpack.c.b16 %v693, %v692
        %v739 = vpack.c.b16 %v695, %v694
        %v740 = vpack.c.b16 %v697, %v696
        %v741 = vpack.c.b16 %v699, %v698
        %v742 = vpack.c.b16 %v701, %v700
        %v743 = vpack.c.b16 %v703, %v702
        %v744 = vpack.c.b16 %v705, %v704
        %v745 = vpack.c.b16 %v707, %v706
        %v746 = vpack.c.b16 %v709, %v708
        %v747 = vpack.c.b16 %v711, %v710
        %v748 = vpack.c.b16 %v713, %v712
        %v749 = vpack.c.b16 %v715, %v714
        %v750 = vpack.c.b16 %v717, %v716
        %v751 = vpack.c.b16 %v719, %v718
        %784 = vmatprep.subr.bf16.mxu0 0
        %785 = vmatpush1.bf16.msra.mxu0 %v720
        %786 = vmatprep.subr.bf16.mxu0 0
        %787 = vmatpush1.bf16.msra.mxu0 %v721
        %788 = vmatprep.subr.bf16.mxu0 0
        %789 = vmatpush1.bf16.msra.mxu0 %v722
        %790 = vmatprep.subr.bf16.mxu0 0
        %791 = vmatpush1.bf16.msra.mxu0 %v723
        %792 = vmatprep.subr.bf16.mxu0 0
        %793 = vmatpush1.bf16.msra.mxu0 %v724
        %794 = vmatprep.subr.bf16.mxu0 0
        %795 = vmatpush1.bf16.msra.mxu0 %v725
        %796 = vmatprep.subr.bf16.mxu0 0
        %797 = vmatpush1.bf16.msra.mxu0 %v726
        %798 = vmatprep.subr.bf16.mxu0 0
        %799 = vmatpush1.bf16.msra.mxu0 %v727
        %800 = vmatprep.subr.bf16.mxu0 0
        %801 = vmatpush1.bf16.msra.mxu0 %v728
        %802 = vmatprep.subr.bf16.mxu0 0
        %803 = vmatpush1.bf16.msra.mxu0 %v729
        %804 = vmatprep.subr.bf16.mxu0 0
        %805 = vmatpush1.bf16.msra.mxu0 %v730
        %806 = vmatprep.subr.bf16.mxu0 0
        %807 = vmatpush1.bf16.msra.mxu0 %v731
        %808 = vmatprep.subr.bf16.mxu0 0
        %809 = vmatpush1.bf16.msra.mxu0 %v732
        %810 = vmatprep.subr.bf16.mxu0 0
        %811 = vmatpush1.bf16.msra.mxu0 %v733
        %812 = vmatprep.subr.bf16.mxu0 0
        %813 = vmatpush1.bf16.msra.mxu0 %v734
        %814 = vmatprep.subr.bf16.mxu0 0
        %815 = vmatpush1.bf16.msra.mxu0 %v735
        %816 = vmatprep.mubr.bf16.mxu0 %v537
        %817 = vmatmul.mubr.bf16.gmra.mrb[0].mxu0 %v536
        %v818 = vpop.f32.mrb[0].mxu0
        %v819 = vadd.f32 0.0, %v818
        %v820 = vpop.f32.mrb[0].mxu0
        %v821 = vpop.f32.mrb[0].mxu0
        %v822 = vadd.f32 0.0, %v821
        %v823 = vpop.f32.mrb[0].mxu0
        %824 = vmatprep.mubr.bf16.mxu0 %v541
        %825 = vmatmul.mubr.bf16.gmra.mrb[0].mxu0 %v540
        %v826 = vpop.f32.mrb[0].mxu0
        %v827 = vadd.f32 0.0, %v826
        %v828 = vpop.f32.mrb[0].mxu0
        %v829 = vpop.f32.mrb[0].mxu0
        %v830 = vadd.f32 0.0, %v829
        %v831 = vpop.f32.mrb[0].mxu0
        %832 = vmatprep.mubr.bf16.mxu0 %v545
        %833 = vmatmul.mubr.bf16.gmra.mrb[0].mxu0 %v544
        %v834 = vpop.f32.mrb[0].mxu0
        %v835 = vadd.f32 0.0, %v834
        %v836 = vpop.f32.mrb[0].mxu0
        %v837 = vpop.f32.mrb[0].mxu0
        %v838 = vadd.f32 0.0, %v837
        %v839 = vpop.f32.mrb[0].mxu0
        %840 = vmatprep.mubr.bf16.mxu0 %v549
        %841 = vmatmul.mubr.bf16.gmra.mrb[0].mxu0 %v548
        %v842 = vpop.f32.mrb[0].mxu0
        %v843 = vadd.f32 0.0, %v842
        %v844 = vpop.f32.mrb[0].mxu0
        %v845 = vpop.f32.mrb[0].mxu0
        %v846 = vadd.f32 0.0, %v845
        %v847 = vpop.f32.mrb[0].mxu0
        %848 = vmatprep.mubr.bf16.mxu0 %v553
        %849 = vmatmul.mubr.bf16.gmra.mrb[0].mxu0 %v552
        %v850 = vpop.f32.mrb[0].mxu0
        %v851 = vadd.f32 0.0, %v850
        %v852 = vpop.f32.mrb[0].mxu0
        %v853 = vpop.f32.mrb[0].mxu0
        %v854 = vadd.f32 0.0, %v853
        %v855 = vpop.f32.mrb[0].mxu0
        %856 = vmatprep.mubr.bf16.mxu0 %v557
        %857 = vmatmul.mubr.bf16.gmra.mrb[0].mxu0 %v556
        %v858 = vpop.f32.mrb[0].mxu0
        %v859 = vadd.f32 0.0, %v858
        %v860 = vpop.f32.mrb[0].mxu0
        %v861 = vpop.f32.mrb[0].mxu0
        %v862 = vadd.f32 0.0, %v861
        %v863 = vpop.f32.mrb[0].mxu0
        %864 = vmatprep.mubr.bf16.mxu0 %v561
        %865 = vmatmul.mubr.bf16.gmra.mrb[0].mxu0 %v560
        %v866 = vpop.f32.mrb[0].mxu0
        %v867 = vadd.f32 0.0, %v866
        %v868 = vpop.f32.mrb[0].mxu0
        %v869 = vpop.f32.mrb[0].mxu0
        %v870 = vadd.f32 0.0, %v869
        %v871 = vpop.f32.mrb[0].mxu0
        %872 = vdwg.mxu0
        %873 = vmatprep.subr.bf16.mxu0 0
        %874 = vmatpush1.bf16.msra.mxu0 %v736
        %875 = vmatprep.subr.bf16.mxu0 0
        %876 = vmatpush1.bf16.msra.mxu0 %v737
        %877 = vmatprep.subr.bf16.mxu0 0
        %878 = vmatpush1.bf16.msra.mxu0 %v738
        %879 = vmatprep.subr.bf16.mxu0 0
        %880 = vmatpush1.bf16.msra.mxu0 %v739
        %881 = vmatprep.subr.bf16.mxu0 0
        %882 = vmatpush1.bf16.msra.mxu0 %v740
        %883 = vmatprep.subr.bf16.mxu0 0
        %884 = vmatpush1.bf16.msra.mxu0 %v741
        %885 = vmatprep.subr.bf16.mxu0 0
        %886 = vmatpush1.bf16.msra.mxu0 %v742
        %887 = vmatprep.subr.bf16.mxu0 0
        %888 = vmatpush1.bf16.msra.mxu0 %v743
        %889 = vmatprep.subr.bf16.mxu0 0
        %890 = vmatpush1.bf16.msra.mxu0 %v744
        %891 = vmatprep.subr.bf16.mxu0 0
        %892 = vmatpush1.bf16.msra.mxu0 %v745
        %893 = vmatprep.subr.bf16.mxu0 0
        %894 = vmatpush1.bf16.msra.mxu0 %v746
        %895 = vmatprep.subr.bf16.mxu0 0
        %896 = vmatpush1.bf16.msra.mxu0 %v747
        %897 = vmatprep.subr.bf16.mxu0 0
        %898 = vmatpush1.bf16.msra.mxu0 %v748
        %899 = vmatprep.subr.bf16.mxu0 0
        %900 = vmatpush1.bf16.msra.mxu0 %v749
        %901 = vmatprep.subr.bf16.mxu0 0
        %902 = vmatpush1.bf16.msra.mxu0 %v750
        %903 = vmatprep.subr.bf16.mxu0 0
        %904 = vmatpush1.bf16.msra.mxu0 %v751
        %905 = vmatprep.mubr.bf16.mxu0 %v539
        %906 = vmatmul.mubr.bf16.gmra.mrb[0].mxu0 %v538
        %v907 = vpop.f32.mrb[0].mxu0
        %v908 = vadd.f32 %v819, %v907
        %v909 = vpop.f32.mrb[0].mxu0
        %v910 = vpop.f32.mrb[0].mxu0
        %v911 = vadd.f32 %v822, %v910
        %v912 = vpop.f32.mrb[0].mxu0
        %913 = vmatprep.mubr.bf16.mxu0 %v543
        %914 = vmatmul.mubr.bf16.gmra.mrb[0].mxu0 %v542
        %v915 = vpop.f32.mrb[0].mxu0
        %v916 = vadd.f32 %v827, %v915
        %v917 = vpop.f32.mrb[0].mxu0
        %v918 = vpop.f32.mrb[0].mxu0
        %v919 = vadd.f32 %v830, %v918
        %v920 = vpop.f32.mrb[0].mxu0
        %921 = vmatprep.mubr.bf16.mxu0 %v547
        %922 = vmatmul.mubr.bf16.gmra.mrb[0].mxu0 %v546
        %v923 = vpop.f32.mrb[0].mxu0
        %v924 = vadd.f32 %v835, %v923
        %v925 = vpop.f32.mrb[0].mxu0
        %v926 = vpop.f32.mrb[0].mxu0
        %v927 = vadd.f32 %v838, %v926
        %v928 = vpop.f32.mrb[0].mxu0
        %929 = vmatprep.mubr.bf16.mxu0 %v551
        %930 = vmatmul.mubr.bf16.gmra.mrb[0].mxu0 %v550
        %v931 = vpop.f32.mrb[0].mxu0
        %v932 = vadd.f32 %v843, %v931
        %v933 = vpop.f32.mrb[0].mxu0
        %v934 = vpop.f32.mrb[0].mxu0
        %v935 = vadd.f32 %v846, %v934
        %v936 = vpop.f32.mrb[0].mxu0
        %937 = vmatprep.mubr.bf16.mxu0 %v555
        %938 = vmatmul.mubr.bf16.gmra.mrb[0].mxu0 %v554
        %v939 = vpop.f32.mrb[0].mxu0
        %v940 = vadd.f32 %v851, %v939
        %v941 = vpop.f32.mrb[0].mxu0
        %v942 = vpop.f32.mrb[0].mxu0
        %v943 = vadd.f32 %v854, %v942
        %v944 = vpop.f32.mrb[0].mxu0
        %945 = vmatprep.mubr.bf16.mxu0 %v559
        %946 = vmatmul.mubr.bf16.gmra.mrb[0].mxu0 %v558
        %v947 = vpop.f32.mrb[0].mxu0
        %v948 = vadd.f32 %v859, %v947
        %v949 = vpop.f32.mrb[0].mxu0
        %v950 = vpop.f32.mrb[0].mxu0
        %v951 = vadd.f32 %v862, %v950
        %v952 = vpop.f32.mrb[0].mxu0
        %953 = vmatprep.mubr.bf16.mxu0 %v563
        %954 = vmatmul.mubr.bf16.gmra.mrb[0].mxu0 %v562
        %v955 = vpop.f32.mrb[0].mxu0
        %v956 = vadd.f32 %v867, %v955
        %v957 = vpop.f32.mrb[0].mxu0
        %v958 = vpop.f32.mrb[0].mxu0
        %v959 = vadd.f32 %v870, %v958
        %v960 = vpop.f32.mrb[0].mxu0
        %961 = vdwg.mxu0
        %v962 = vadd.f32 %v346, %v908
        %v963 = vadd.f32 %v347, %v911
        %v964 = vadd.f32 %v348, %v916
        %v965 = vadd.f32 %v349, %v919
        %v966 = vadd.f32 %v350, %v924
        %v967 = vadd.f32 %v351, %v927
        %v968 = vadd.f32 %v352, %v932
        %v969 = vadd.f32 %v353, %v935
        %v970 = vadd.f32 %v354, %v940
        %v971 = vadd.f32 %v355, %v943
        %v972 = vadd.f32 %v356, %v948
        %v973 = vadd.f32 %v357, %v951
        %v974 = vadd.f32 %v358, %v956
        %v975 = vadd.f32 %v359, %v959
        %976 = vst [vmem:[#allocation2] sm:$0xff] %v962
        %977 = vst [vmem:[#allocation2 + $0x8] sm:$0xff] %v963
        %978 = vst [vmem:[#allocation2 + $0x10] sm:$0xff] %v964
        %979 = vst [vmem:[#allocation2 + $0x18] sm:$0xff] %v965
        %980 = vst [vmem:[#allocation2 + $0x20] sm:$0xff] %v966
        %981 = vst [vmem:[#allocation2 + $0x28] sm:$0xff] %v967
        %982 = vst [vmem:[#allocation2 + $0x30] sm:$0xff] %v968
        %983 = vst [vmem:[#allocation2 + $0x38] sm:$0xff] %v969
        %984 = vst [vmem:[#allocation2 + $0x40] sm:$0xff] %v970
        %985 = vst [vmem:[#allocation2 + $0x48] sm:$0xff] %v971
        %986 = vst [vmem:[#allocation2 + $0x50] sm:$0xff] %v972
        %987 = vst [vmem:[#allocation2 + $0x58] sm:$0xff] %v973
        %988 = vst [vmem:[#allocation2 + $0x60] sm:$0xff] %v974
        %989 = vst [vmem:[#allocation2 + $0x68] sm:$0xff] %v975
        %p990 = scmp.eq.s32.totalorder %s21, 1
        // Predicated region
        $region60: #{embedding_net_forward.11} parent=50 // pred_check
          %p991 = pneg %p990
        $region61: #{embedding_net_forward.11} parent=50 // pred_check_branch
          %993 = sbr.rel (%p991) target = $region63
        $region62: #{embedding_net_forward.11} parent=50 // pred_region
          %v994 = vld [vmem:[#allocation2] sm:$0xff]
          %v995 = vld [vmem:[#allocation2 + $0x8] sm:$0xff]
          %v996 = vld [vmem:[#allocation2 + $0x10] sm:$0xff]
          %v997 = vld [vmem:[#allocation2 + $0x18] sm:$0xff]
          %v998 = vld [vmem:[#allocation2 + $0x20] sm:$0xff]
          %v999 = vld [vmem:[#allocation2 + $0x28] sm:$0xff]
          %v1000 = vld [vmem:[#allocation2 + $0x30] sm:$0xff]
          %v1001 = vld [vmem:[#allocation2 + $0x38] sm:$0xff]
          %v1002 = vld [vmem:[#allocation2 + $0x40] sm:$0xff]
          %v1003 = vld [vmem:[#allocation2 + $0x48] sm:$0xff]
          %v1004 = vld [vmem:[#allocation2 + $0x50] sm:$0xff]
          %v1005 = vld [vmem:[#allocation2 + $0x58] sm:$0xff]
          %v1006 = vld [vmem:[#allocation2 + $0x60] sm:$0xff]
          %v1007 = vld [vmem:[#allocation2 + $0x68] sm:$0xff]
          %v1008 = vld [vmem:[%s317] sm:$0x1]
          %v1010 = vlaneseq
          %v1011 = vshrl.u32 %v1010, 7
          %v1012 = vsub.s32 0, %v1011
          %v1013 = vrot.slane %v1008, %v1012
          %v1015 = vadd.f32 %v994, %v1013
          %v1016 = vadd.f32 %v995, %v1013
          %v1017 = vadd.f32 %v996, %v1013
          %v1018 = vadd.f32 %v997, %v1013
          %v1019 = vadd.f32 %v998, %v1013
          %v1020 = vadd.f32 %v999, %v1013
          %v1021 = vadd.f32 %v1000, %v1013
          %v1022 = vadd.f32 %v1001, %v1013
          %v1023 = vadd.f32 %v1002, %v1013
          %v1024 = vadd.f32 %v1003, %v1013
          %v1025 = vadd.f32 %v1004, %v1013
          %v1026 = vadd.f32 %v1005, %v1013
          %v1027 = vadd.f32 %v1006, %v1013
          %v1028 = vadd.f32 %v1007, %v1013
          %v1029 = vmax.f32 %v1015, 0.0
          %v1030 = vmax.f32 %v1016, 0.0
          %v1031 = vmax.f32 %v1017, 0.0
          %v1032 = vmax.f32 %v1018, 0.0
          %v1033 = vmax.f32 %v1019, 0.0
          %v1034 = vmax.f32 %v1020, 0.0
          %v1035 = vmax.f32 %v1021, 0.0
          %v1036 = vmax.f32 %v1022, 0.0
          %v1037 = vmax.f32 %v1023, 0.0
          %v1038 = vmax.f32 %v1024, 0.0
          %v1039 = vmax.f32 %v1025, 0.0
          %v1040 = vmax.f32 %v1026, 0.0
          %v1041 = vmax.f32 %v1027, 0.0
          %v1042 = vmax.f32 %v1028, 0.0
          %v1043 = vpack.c.bf16 %v1030, %v1029
          %v1044 = vpack.c.bf16 %v1032, %v1031
          %v1045 = vpack.c.bf16 %v1034, %v1033
          %v1046 = vpack.c.bf16 %v1036, %v1035
          %v1047 = vpack.c.bf16 %v1038, %v1037
          %v1048 = vpack.c.bf16 %v1040, %v1039
          %v1049 = vpack.c.bf16 %v1042, %v1041
          %v1057 = vunpack.c.l.b16 %v1043
          %v1058 = vunpack.c.h.b16 %v1043
          %v1059 = vunpack.c.l.b16 %v1044
          %v1060 = vunpack.c.h.b16 %v1044
          %v1061 = vunpack.c.l.b16 %v1045
          %v1062 = vunpack.c.h.b16 %v1045
          %v1063 = vunpack.c.l.b16 %v1046
          %v1064 = vunpack.c.h.b16 %v1046
          %v1065 = vunpack.c.l.b16 %v1047
          %v1066 = vunpack.c.h.b16 %v1047
          %v1067 = vunpack.c.l.b16 %v1048
          %v1068 = vunpack.c.h.b16 %v1048
          %v1069 = vunpack.c.l.b16 %v1049
          %v1070 = vunpack.c.h.b16 %v1049
          %v1071 = vpack.c.b16 %v1057, %v1057
          %v1072 = vpack.c.b16 %v1058, %v1058
          %v1073 = vpack.c.b16 %v1059, %v1059
          %v1074 = vpack.c.b16 %v1060, %v1060
          %v1075 = vpack.c.b16 %v1061, %v1061
          %v1076 = vpack.c.b16 %v1062, %v1062
          %v1077 = vpack.c.b16 %v1063, %v1063
          %v1078 = vpack.c.b16 %v1064, %v1064
          %v1079 = vpack.c.b16 %v1065, %v1065
          %v1080 = vpack.c.b16 %v1066, %v1066
          %v1081 = vpack.c.b16 %v1067, %v1067
          %v1082 = vpack.c.b16 %v1068, %v1068
          %v1083 = vpack.c.b16 %v1069, %v1069
          %v1084 = vpack.c.b16 %v1070, %v1070
          %1099 = vst [vmem:[%s325] sm:$0xf] %v1071
          %1100 = vst [vmem:[%s325 + $0x4] sm:$0xf] %v1072
          %1101 = vst [vmem:[%s325 + $0x8] sm:$0xf] %v1073
          %1102 = vst [vmem:[%s325 + $0xc] sm:$0xf] %v1074
          %1103 = vst [vmem:[%s325 + $0x10] sm:$0xf] %v1075
          %1104 = vst [vmem:[%s325 + $0x14] sm:$0xf] %v1076
          %1105 = vst [vmem:[%s325 + $0x18] sm:$0xf] %v1077
          %1106 = vst [vmem:[%s325 + $0x1c] sm:$0xf] %v1078
          %1107 = vst [vmem:[%s325 + $0x20] sm:$0xf] %v1079
          %1108 = vst [vmem:[%s325 + $0x24] sm:$0xf] %v1080
          %1109 = vst [vmem:[%s325 + $0x28] sm:$0xf] %v1081
          %1110 = vst [vmem:[%s325 + $0x2c] sm:$0xf] %v1082
          %1111 = vst [vmem:[%s325 + $0x30] sm:$0xf] %v1083
          %1112 = vst [vmem:[%s325 + $0x34] sm:$0xf] %v1084
        $region63: #{embedding_net_forward.11} parent=50 // pred_fallthru
          _
        %s1113 = smul.u32 14, %s19
        %p1114 = scmp.lt.s32.totalorder %s1113, 13
        %s1115 = scalar_select %p1114, %s1113, 13
        %p1116 = scmp.lt.s32.totalorder %s20, 0
        %s1117 = scalar_select %p1116, %s20, 0
        %s1118 = sadd.s32 %s1117, %s1115
        %s1119 = smul.addr %s1118, 4
        %s1120 = scalar_lea.vmem %s3, %s1119
        // Predicated region
        $region64: #{embedding_net_forward.11} parent=50 // pred_check
          %p1121 = pneg %p135
        $region65: #{embedding_net_forward.11} parent=50 // pred_check_branch
          %1123 = sbr.rel (%p1121) target = $region67
        $region66: #{embedding_net_forward.11} parent=50 // pred_region
          %s1124 = smul.u32 14, %s19
        $region67: #{embedding_net_forward.11} parent=50 // pred_fallthru
          _
        // Predicated region
        $region68: #{embedding_net_forward.11} parent=50 // pred_check
          %p1125 = pneg %p135
        $region69: #{embedding_net_forward.11} parent=50 // pred_check_branch
          %1127 = sbr.rel (%p1125) target = $region71
        $region70: #{embedding_net_forward.11} parent=50 // pred_region
          %s1128 = smul.u32 14, %s19
          %p1129 = scmp.lt.s32.totalorder %s1128, 13
          %s1130 = scalar_select %p1129, %s1128, 13
          %p1131 = scmp.lt.s32.totalorder %s20, 0
          %s1132 = scalar_select %p1131, %s20, 0
          %s1133 = sadd.s32 %s1132, %s1130
          %s1134 = smul.addr %s1133, 4
          %s1135 = scalar_lea.vmem %s3, %s1134
        $region71: #{embedding_net_forward.11} parent=50 // pred_fallthru
          _
      $region51: #{embedding_net_forward.11} parent=5 // pred_fallthru
        _
      %p1136 = scmp.le.s32.totalorder 2, %s9
      // Predicated region
      $region72: #{embedding_net_forward.11} parent=5 // pred_check
        %p1137 = pneg %p1136
      $region73: #{embedding_net_forward.11} parent=5 // pred_check_branch
        %1139 = sbr.rel (%p1137) target = $region75
      $region74: #{embedding_net_forward.11} parent=5 // pred_region
        %s1140 = ssub.s32 %s9, 2
      $region75: #{embedding_net_forward.11} parent=5 // pred_fallthru
        _
    $region6: #{embedding_net_forward.11} parent=1 // loop_footer
      %s13 = sadd.s32 1, %s9
    $region7: #{embedding_net_forward.11} parent=1 // loop_footer_branch
      %8 = sbr.rel target = $region3
    $region8: #{embedding_net_forward.11} parent=1 // loop_exit
      _

// kernel: embedding_net_forward.14
$region0: #{embedding_net_forward.14}
  #allocation0 [shape = 'u32[]', space=smem, size = 0x4, offset = 0x4, fixed_abs, tag = 'smem constant byte address 0x4 - core index']
  #allocation1 [shape = 'u32[144,128]{1,0:T(1,128)}', space=vmem, size = 0x12000, scoped, tag = 'internal scratch']
  #allocation2 [shape = 'f32[1,1]{1,0:T(1,128)S(1)}', space=vmem, size = 0x200, scoped, tag = 'scoped memory for embedding_net_forward.14']
  %s0 = inlined_call_operand.vmem [shape: bf16[2,56,256], index: 0, kind: input, shape index: {}]
  %s1 = inlined_call_operand.vmem [shape: f32[256,7], index: 1, kind: input, shape index: {}]
  %s2 = inlined_call_operand.vmem [shape: f32[1,7], index: 2, kind: input, shape index: {}]
  %s3 = inlined_call_operand.vmem [shape: f32[1,7], index: 3, kind: input, shape index: {}]
  %s4 = inlined_call_operand.<no memory space> [shape: f32[1,1], index: 4, kind: input, shape index: {}]
  %s5 = inlined_call_operand.hbm [shape: f32[2,7], index: 5, kind: output, shape index: {0}]
  %s6 = inlined_call_operand.vmem [shape: f32[2,1], index: 6, kind: output, shape index: {1}]
  %7 = xla_tuple %s5, %s6
  %s8 = sld [smem:[#allocation0]]
  $region38: #{embedding_net_forward.14} parent=0
    _
  %s10 = ssub.s32 1, %s8
  %s11 = scalar_select 0, %s10, %s8
  %v12 = vstv %s4
  %13 = vst [vmem:[#allocation2] sm:$0x1] %v12
  $region1: #{embedding_net_forward.14} parent=0
    #allocation3 [shape = 'u8[1024]{0}', space=vmem, size = 0x400, scoped, tag = 'output window, operand 0, single buffered']
    #allocation4 [shape = 's32[1]{0}', space=sflag, size = 0x4, scoped, tag = 'scoped memory for embedding_net_forward.14']
    %14 = vsyncpa [#allocation4], 0
    // Predicated region
    $region2: #{embedding_net_forward.14} parent=1 // pred_check
      _
    $region3: #{embedding_net_forward.14} parent=1 // pred_check_branch
      %16 = sbr.rel (0) target = $region5
    $region4: #{embedding_net_forward.14} parent=1 // pred_region
      _
    $region5: #{embedding_net_forward.14} parent=1 // pred_fallthru
      _
    // Predicated region
    $region6: #{embedding_net_forward.14} parent=1 // pred_check
      _
    $region7: #{embedding_net_forward.14} parent=1 // pred_check_branch
      %18 = sbr.rel (0) target = $region9
    $region8: #{embedding_net_forward.14} parent=1 // pred_region
      _
    $region9: #{embedding_net_forward.14} parent=1 // pred_fallthru
      _
    // Predicated region
    $region10: #{embedding_net_forward.14} parent=1 // pred_check
      _
    $region11: #{embedding_net_forward.14} parent=1 // pred_check_branch
      %20 = sbr.rel (0) target = $region13
    $region12: #{embedding_net_forward.14} parent=1 // pred_region
      _
    $region13: #{embedding_net_forward.14} parent=1 // pred_fallthru
      _
    // Predicated region
    $region14: #{embedding_net_forward.14} parent=1 // pred_check
      _
    $region15: #{embedding_net_forward.14} parent=1 // pred_check_branch
      %22 = sbr.rel (0) target = $region17
    $region16: #{embedding_net_forward.14} parent=1 // pred_region
      _
    $region17: #{embedding_net_forward.14} parent=1 // pred_fallthru
      _
    // Predicated region
    $region18: #{embedding_net_forward.14} parent=1 // pred_check
      _
    $region19: #{embedding_net_forward.14} parent=1 // pred_check_branch
      %24 = sbr.rel (0) target = $region21
    $region20: #{embedding_net_forward.14} parent=1 // pred_region
      _
    $region21: #{embedding_net_forward.14} parent=1 // pred_fallthru
      _
    %v25 = vld [vmem:[%s0] sm:$0xff]
    %v26 = vld [vmem:[%s0 + $0x8] sm:$0xff]
    %v27 = vld [vmem:[%s0 + $0x10] sm:$0xff]
    %v28 = vld [vmem:[%s0 + $0x18] sm:$0xff]
    %v29 = vld [vmem:[%s0 + $0x20] sm:$0xff]
    %v30 = vld [vmem:[%s0 + $0x28] sm:$0xff]
    %v31 = vld [vmem:[%s0 + $0x30] sm:$0xff]
    %v32 = vld [vmem:[%s0 + $0x38] sm:$0xff]
    %v33 = vld [vmem:[%s0 + $0x40] sm:$0xff]
    %v34 = vld [vmem:[%s0 + $0x48] sm:$0xff]
    %v35 = vld [vmem:[%s0 + $0x50] sm:$0xff]
    %v36 = vld [vmem:[%s0 + $0x58] sm:$0xff]
    %v37 = vld [vmem:[%s0 + $0x60] sm:$0xff]
    %v38 = vld [vmem:[%s0 + $0x68] sm:$0xff]
    %v39 = vunpack.c.l.bf16 %v25
    %v40 = vunpack.c.h.bf16 %v25
    %v41 = vunpack.c.l.bf16 %v26
    %v42 = vunpack.c.h.bf16 %v26
    %v43 = vunpack.c.l.bf16 %v27
    %v44 = vunpack.c.h.bf16 %v27
    %v45 = vunpack.c.l.bf16 %v28
    %v46 = vunpack.c.h.bf16 %v28
    %v47 = vunpack.c.l.bf16 %v29
    %v48 = vunpack.c.h.bf16 %v29
    %v49 = vunpack.c.l.bf16 %v30
    %v50 = vunpack.c.h.bf16 %v30
    %v51 = vunpack.c.l.bf16 %v31
    %v52 = vunpack.c.h.bf16 %v31
    %v53 = vunpack.c.l.bf16 %v32
    %v54 = vunpack.c.h.bf16 %v32
    %v55 = vunpack.c.l.bf16 %v33
    %v56 = vunpack.c.h.bf16 %v33
    %v57 = vunpack.c.l.bf16 %v34
    %v58 = vunpack.c.h.bf16 %v34
    %v59 = vunpack.c.l.bf16 %v35
    %v60 = vunpack.c.h.bf16 %v35
    %v61 = vunpack.c.l.bf16 %v36
    %v62 = vunpack.c.h.bf16 %v36
    %v63 = vunpack.c.l.bf16 %v37
    %v64 = vunpack.c.h.bf16 %v37
    %v65 = vunpack.c.l.bf16 %v38
    %v66 = vunpack.c.h.bf16 %v38
    %v67 = vadd.f32 %v39, %v41
    %v68 = vadd.f32 %v67, %v43
    %v69 = vadd.f32 %v68, %v45
    %v70 = vadd.f32 %v69, %v47
    %v71 = vadd.f32 %v70, %v49
    %v72 = vadd.f32 %v71, %v51
    %v73 = vrot.slane %v72, 4
    %v74 = vadd.f32 %v72, %v73
    %v75 = vrot.slane %v74, 2
    %v76 = vadd.f32 %v74, %v75
    %v77 = vrot.slane %v76, 1
    %v78 = vadd.f32 %v76, %v77
    %v79 = vadd.f32 %v40, %v42
    %v80 = vadd.f32 %v79, %v44
    %v81 = vadd.f32 %v80, %v46
    %v82 = vadd.f32 %v81, %v48
    %v83 = vadd.f32 %v82, %v50
    %v84 = vadd.f32 %v83, %v52
    %v85 = vrot.slane %v84, 4
    %v86 = vadd.f32 %v84, %v85
    %v87 = vrot.slane %v86, 2
    %v88 = vadd.f32 %v86, %v87
    %v89 = vrot.slane %v88, 1
    %v90 = vadd.f32 %v88, %v89
    %v91 = vadd.f32 %v53, %v55
    %v92 = vadd.f32 %v91, %v57
    %v93 = vadd.f32 %v92, %v59
    %v94 = vadd.f32 %v93, %v61
    %v95 = vadd.f32 %v94, %v63
    %v96 = vadd.f32 %v95, %v65
    %v97 = vrot.slane %v96, 4
    %v98 = vadd.f32 %v96, %v97
    %v99 = vrot.slane %v98, 2
    %v100 = vadd.f32 %v98, %v99
    %v101 = vrot.slane %v100, 1
    %v102 = vadd.f32 %v100, %v101
    %v103 = vadd.f32 %v54, %v56
    %v104 = vadd.f32 %v103, %v58
    %v105 = vadd.f32 %v104, %v60
    %v106 = vadd.f32 %v105, %v62
    %v107 = vadd.f32 %v106, %v64
    %v108 = vadd.f32 %v107, %v66
    %v109 = vrot.slane %v108, 4
    %v110 = vadd.f32 %v108, %v109
    %v111 = vrot.slane %v110, 2
    %v112 = vadd.f32 %v110, %v111
    %v113 = vrot.slane %v112, 1
    %v114 = vadd.f32 %v112, %v113
    %v115 = vrcp.pop 56.0
    %v116 = vmul.f32 %v78, %v115
    %v117 = vmul.f32 %v90, %v115
    %v118 = vmul.f32 %v102, %v115
    %v119 = vmul.f32 %v114, %v115
    %v120 = vld [vmem:[%s1] sm:$0xff]
    %v121 = vld [vmem:[%s1 + $0x8] sm:$0xff]
    %v122 = vld [vmem:[%s1 + $0x10] sm:$0xff]
    %v123 = vld [vmem:[%s1 + $0x18] sm:$0xff]
    %v124 = vld [vmem:[%s1 + $0x20] sm:$0xff]
    %v125 = vld [vmem:[%s1 + $0x28] sm:$0xff]
    %v126 = vld [vmem:[%s1 + $0x30] sm:$0xff]
    %v127 = vld [vmem:[%s1 + $0x38] sm:$0xff]
    %v128 = vld [vmem:[%s1 + $0x40] sm:$0xff]
    %v129 = vld [vmem:[%s1 + $0x48] sm:$0xff]
    %v130 = vld [vmem:[%s1 + $0x50] sm:$0xff]
    %v131 = vld [vmem:[%s1 + $0x58] sm:$0xff]
    %v132 = vld [vmem:[%s1 + $0x60] sm:$0xff]
    %v133 = vld [vmem:[%s1 + $0x68] sm:$0xff]
    %v134 = vld [vmem:[%s1 + $0x70] sm:$0xff]
    %v135 = vld [vmem:[%s1 + $0x78] sm:$0xff]
    %v136 = vld [vmem:[%s1 + $0x80] sm:$0xff]
    %v137 = vld [vmem:[%s1 + $0x88] sm:$0xff]
    %v138 = vld [vmem:[%s1 + $0x90] sm:$0xff]
    %v139 = vld [vmem:[%s1 + $0x98] sm:$0xff]
    %v140 = vld [vmem:[%s1 + $0xa0] sm:$0xff]
    %v141 = vld [vmem:[%s1 + $0xa8] sm:$0xff]
    %v142 = vld [vmem:[%s1 + $0xb0] sm:$0xff]
    %v143 = vld [vmem:[%s1 + $0xb8] sm:$0xff]
    %v144 = vld [vmem:[%s1 + $0xc0] sm:$0xff]
    %v145 = vld [vmem:[%s1 + $0xc8] sm:$0xff]
    %v146 = vld [vmem:[%s1 + $0xd0] sm:$0xff]
    %v147 = vld [vmem:[%s1 + $0xd8] sm:$0xff]
    %v148 = vld [vmem:[%s1 + $0xe0] sm:$0xff]
    %v149 = vld [vmem:[%s1 + $0xe8] sm:$0xff]
    %v150 = vld [vmem:[%s1 + $0xf0] sm:$0xff]
    %v151 = vld [vmem:[%s1 + $0xf8] sm:$0xff]
    %v152 = vld [vmem:[%s2] sm:$0x1]
    %v154 = vlaneseq
    %v155 = vshrl.u32 %v154, 7
    %v156 = vsub.s32 0, %v155
    %v157 = vrot.slane %v152, %v156
    %vm163 = vcmask 1041409
    %v164 = vsel %vm163, %v118, %v116
    %v165 = vsel %vm163, %v119, %v117
    %168 = vmatprep.subr.mxu0 0.0
    %169 = vmatpush1.msra.mxu0 %v120
    %170 = vmatprep.subr.mxu0 0.0
    %171 = vmatpush1.msra.mxu0 %v121
    %172 = vmatprep.subr.mxu0 0.0
    %173 = vmatpush1.msra.mxu0 %v122
    %174 = vmatprep.subr.mxu0 0.0
    %175 = vmatpush1.msra.mxu0 %v123
    %176 = vmatprep.subr.mxu0 0.0
    %177 = vmatpush1.msra.mxu0 %v124
    %178 = vmatprep.subr.mxu0 0.0
    %179 = vmatpush1.msra.mxu0 %v125
    %180 = vmatprep.subr.mxu0 0.0
    %181 = vmatpush1.msra.mxu0 %v126
    %182 = vmatprep.subr.mxu0 0.0
    %183 = vmatpush1.msra.mxu0 %v127
    %184 = vmatprep.subr.mxu0 0.0
    %185 = vmatpush1.msra.mxu0 %v128
    %186 = vmatprep.subr.mxu0 0.0
    %187 = vmatpush1.msra.mxu0 %v129
    %188 = vmatprep.subr.mxu0 0.0
    %189 = vmatpush1.msra.mxu0 %v130
    %190 = vmatprep.subr.mxu0 0.0
    %191 = vmatpush1.msra.mxu0 %v131
    %192 = vmatprep.subr.mxu0 0.0
    %193 = vmatpush1.msra.mxu0 %v132
    %194 = vmatprep.subr.mxu0 0.0
    %195 = vmatpush1.msra.mxu0 %v133
    %196 = vmatprep.subr.mxu0 0.0
    %197 = vmatpush1.msra.mxu0 %v134
    %198 = vmatprep.subr.mxu0 0.0
    %199 = vmatpush1.msra.mxu0 %v135
    %200 = vmatprep.subr.mxu0 0.0
    %201 = vmatpush1.msra.mxu0 %v136
    %202 = vmatprep.subr.mxu0 0.0
    %203 = vmatpush1.msra.mxu0 %v137
    %204 = vmatprep.subr.mxu0 0.0
    %205 = vmatpush1.msra.mxu0 %v138
    %206 = vmatprep.subr.mxu0 0.0
    %207 = vmatpush1.msra.mxu0 %v139
    %208 = vmatprep.subr.mxu0 0.0
    %209 = vmatpush1.msra.mxu0 %v140
    %210 = vmatprep.subr.mxu0 0.0
    %211 = vmatpush1.msra.mxu0 %v141
    %212 = vmatprep.subr.mxu0 0.0
    %213 = vmatpush1.msra.mxu0 %v142
    %214 = vmatprep.subr.mxu0 0.0
    %215 = vmatpush1.msra.mxu0 %v143
    %216 = vmatprep.subr.mxu0 0.0
    %217 = vmatpush1.msra.mxu0 %v144
    %218 = vmatprep.subr.mxu0 0.0
    %219 = vmatpush1.msra.mxu0 %v145
    %220 = vmatprep.subr.mxu0 0.0
    %221 = vmatpush1.msra.mxu0 %v146
    %222 = vmatprep.subr.mxu0 0.0
    %223 = vmatpush1.msra.mxu0 %v147
    %224 = vmatprep.subr.mxu0 0.0
    %225 = vmatpush1.msra.mxu0 %v148
    %226 = vmatprep.subr.mxu0 0.0
    %227 = vmatpush1.msra.mxu0 %v149
    %228 = vmatprep.subr.mxu0 0.0
    %229 = vmatpush1.msra.mxu0 %v150
    %230 = vmatprep.subr.mxu0 0.0
    %231 = vmatpush1.msra.mxu0 %v151
    %232 = vmatprep.mubr.f32.mxu0 %v165
    %233 = vmatmul.mubr.f32.gmra.mrb[0].mxu0 %v164
    %v234 = vpop.f32.mrb[0].mxu0
    %v235 = vadd.f32 %v157, %v234
    %v236 = vpop.f32.mrb[0].mxu0
    %237 = vdwg.mxu0
    %vm238 = vcmask 50176
    %239 = vst.msk [vmem:[#allocation3] sm:$0x3] %vm238, %v235
    %v240 = vld [vmem:[%s3] sm:$0x1]
    %v242 = vlaneseq
    %v243 = vshrl.u32 %v242, 7
    %v244 = vsub.s32 0, %v243
    %v245 = vrot.slane %v240, %v244
    %v247 = vmul.f32 %v235, %v245
    %v248 = vsel %vm238, %v247, 0.0
    %249 = vadd.xlane.f32.xlu0 %v248
    %v250 = vpop.xlane.xlu0 %249
    %v251 = vld [vmem:[#allocation2] sm:$0x1]
    %v253 = vlaneseq
    %v254 = vshrl.u32 %v253, 7
    %v255 = vsub.s32 0, %v254
    %v256 = vrot.slane %v251, %v255
    %v258 = vadd.f32 %v250, %v256
    %vm259 = vcmask 1024
    %260 = vst.msk [vmem:[%s6] sm:$0x3] %vm259, %v258
    // Predicated region
    $region22: #{embedding_net_forward.14} parent=1 // pred_check
      _
    $region23: #{embedding_net_forward.14} parent=1 // pred_check_branch
      %262 = sbr.rel (0) target = $region25
    $region24: #{embedding_net_forward.14} parent=1 // pred_region
      %s264 = ssub.s32 32, 32
      %265 = vsyncadd [#allocation4], %s264
      %s267 = sshll.u32 [#allocation3], 4
      %s268 = int_to_ptr.vmem [resolvable:$true] %s267
      %270 = dma.vmem_to_hbm [thread:$0]  %s268, 32, %s5, [#allocation4]
    $region25: #{embedding_net_forward.14} parent=1 // pred_fallthru
      _
    // Predicated region
    $region26: #{embedding_net_forward.14} parent=1 // pred_check
      _
    $region27: #{embedding_net_forward.14} parent=1 // pred_check_branch
      %272 = sbr.rel (0) target = $region29
    $region28: #{embedding_net_forward.14} parent=1 // pred_region
      _
    $region29: #{embedding_net_forward.14} parent=1 // pred_fallthru
      _
    // Predicated region
    $region30: #{embedding_net_forward.14} parent=1 // pred_check
      _
    $region31: #{embedding_net_forward.14} parent=1 // pred_check_branch
      %274 = sbr.rel (0) target = $region33
    $region32: #{embedding_net_forward.14} parent=1 // pred_region
      %275 = dma.done [#allocation4], 32
    $region33: #{embedding_net_forward.14} parent=1 // pred_fallthru
      _
    // Predicated region
    $region34: #{embedding_net_forward.14} parent=1 // pred_check
      _
    $region35: #{embedding_net_forward.14} parent=1 // pred_check_branch
      %277 = sbr.rel (0) target = $region37
    $region36: #{embedding_net_forward.14} parent=1 // pred_region
      _
    $region37: #{embedding_net_forward.14} parent=1 // pred_fallthru
      _
    %278 = vsyncpa [#allocation4], 1

// kernel: embedding_net_forward.13
$region0: #{embedding_net_forward.13}
  #allocation0 [shape = 'u32[]', space=smem, size = 0x4, offset = 0x4, fixed_abs, tag = 'smem constant byte address 0x4 - core index']
  #allocation1 [shape = 'u32[144,128]{1,0:T(1,128)}', space=vmem, size = 0x12000, scoped, tag = 'internal scratch']
  #allocation2 [shape = 'f32[112,256]{1,0:T(8,128)}', space=vmem, size = 0x1c000, scoped, tag = 'scratch operand']
  %s0 = inlined_call_operand.vmem [shape: bf16[112,1536], index: 0, kind: input, shape index: {}]
  %s1 = inlined_call_operand.vmem [shape: bf16[1536,256], index: 1, kind: input, shape index: {}]
  %s2 = inlined_call_operand.vmem [shape: f32[1,256], index: 2, kind: input, shape index: {}]
  %s3 = inlined_call_operand.vmem [shape: bf16[112,256], index: 3, kind: output, shape index: {}]
  %s4 = sld [smem:[#allocation0]]
  $region76: #{embedding_net_forward.13} parent=0
    _
  %s6 = ssub.s32 1, %s4
  %s7 = scalar_select 0, %s6, %s4
  $region1: #{embedding_net_forward.13} parent=0
    #allocation3 [shape = 'u8[229376]{0}', space=vmem, size = 0x38000, scoped, tag = 'input window, operand 0']
    loop: start=0, step=1, limit=5
    $region2: #{embedding_net_forward.13} parent=1 // loop_pre_header
      _
    $region3: #{embedding_net_forward.13} parent=1 // loop_header
      %s9 = sphi 0, %s13
      %p10 = scmp.ge.s32.totalorder %s9, 5
      %s16 = sphi 0, %s35
      %s17 = sphi 0, %s31
      %s18 = sphi 0, %s27
      %s19 = sphi 0, %s16
      %s20 = sphi 0, %s17
      %s21 = sphi 0, %s18
      %s22 = sphi 0, %s19
      %s23 = sphi 0, %s20
      %s24 = sphi 0, %s21
      %s40 = sphi 0, %s42
      %s43 = sphi 0, %s40
      %s44 = sphi 0, %s43
      %s60 = sphi 0, %s44
      %s68 = sphi 0, %s70
      %s71 = sphi 0, %s68
      %s72 = sphi 0, %s71
      %s88 = sphi 0, %s72
      %s94 = sphi 0, %s96
      %s97 = sphi 0, %s94
      %s98 = sphi 0, %s97
      %s114 = sphi 0, %s98
      %s122 = sphi 0, %s124
      %s125 = sphi 0, %s122
      %s126 = sphi 0, %s125
      %s142 = sphi 0, %s126
    $region4: #{embedding_net_forward.13} parent=1 // loop_header_branch
      %12 = sbr.rel (%p10) target = $region8
    $region5: #{embedding_net_forward.13} parent=1 // loop_body
      %s14 = ssub.s32 %s9, 1
      %s15 = ssub.s32 %s9, 2
      %s25 = sadd.s32 1, %s18
      %p26 = scmp.ge.s32.totalorder %s25, 3
      %s27 = scalar_select %p26, 0, %s25
      %s28 = sadd.s32 1, %s17
      %s29 = scalar_select %p26, %s28, %s17
      %p30 = scmp.ge.s32.totalorder %s29, 1
      %s31 = scalar_select %p30, 0, %s29
      %s32 = sadd.s32 1, %s16
      %s33 = scalar_select %p30, %s32, %s16
      %p34 = scmp.ge.s32.totalorder %s33, 1
      %s35 = scalar_select %p34, 0, %s33
      %s36 = ssub.s32 %s16, %s35
      %s37 = ssub.s32 %s18, %s27
      %s38 = sor.u32 %s36, %s37
      %p39 = scmp.eq.s32.totalorder %s38, 0
      %s41 = sadd.s32 %s40, 1
      %s42 = scalar_select %p39, %s40, %s41
      %p45 = pneg %p39
      %p46 = scmp.eq.s32.totalorder %s9, 2
      %p47 = por %p45, %p46
      %p48 = scmp.ne.s32.totalorder %s40, %s43
      %p49 = scmp.eq.s32.totalorder %s9, 0
      %p50 = por %p48, %p49
      %p51 = scmp.ne.s32.totalorder %s40, %s43
      %p52 = scmp.eq.s32.totalorder %s14, 2
      %p53 = por %p51, %p52
      %p54 = scmp.ne.s32.totalorder %s43, %s44
      %p55 = scmp.eq.s32.totalorder %s14, 0
      %p56 = por %p54, %p55
      %p57 = scmp.ne.s32.totalorder %s43, %s44
      %p58 = scmp.eq.s32.totalorder %s15, 2
      %p59 = por %p57, %p58
      %p61 = scmp.ne.s32.totalorder %s44, %s60
      %p62 = scmp.eq.s32.totalorder %s15, 0
      %p63 = por %p61, %p62
      %s64 = ssub.s32 %s18, %s27
      %s65 = ssub.s32 %s17, %s31
      %s66 = sor.u32 %s64, %s65
      %p67 = scmp.eq.s32.totalorder %s66, 0
      %s69 = sadd.s32 %s68, 1
      %s70 = scalar_select %p67, %s68, %s69
      %p73 = pneg %p67
      %p74 = scmp.eq.s32.totalorder %s9, 2
      %p75 = por %p73, %p74
      %p76 = scmp.ne.s32.totalorder %s68, %s71
      %p77 = scmp.eq.s32.totalorder %s9, 0
      %p78 = por %p76, %p77
      %p79 = scmp.ne.s32.totalorder %s68, %s71
      %p80 = scmp.eq.s32.totalorder %s14, 2
      %p81 = por %p79, %p80
      %p82 = scmp.ne.s32.totalorder %s71, %s72
      %p83 = scmp.eq.s32.totalorder %s14, 0
      %p84 = por %p82, %p83
      %p85 = scmp.ne.s32.totalorder %s71, %s72
      %p86 = scmp.eq.s32.totalorder %s15, 2
      %p87 = por %p85, %p86
      %p89 = scmp.ne.s32.totalorder %s72, %s88
      %p90 = scmp.eq.s32.totalorder %s15, 0
      %p91 = por %p89, %p90
      %s92 = ssub.s32 %s17, %s31
      %p93 = scmp.eq.s32.totalorder %s92, 0
      %s95 = sadd.s32 %s94, 1
      %s96 = scalar_select %p93, %s94, %s95
      %p99 = pneg %p93
      %p100 = scmp.eq.s32.totalorder %s9, 2
      %p101 = por %p99, %p100
      %p102 = scmp.ne.s32.totalorder %s94, %s97
      %p103 = scmp.eq.s32.totalorder %s9, 0
      %p104 = por %p102, %p103
      %p105 = scmp.ne.s32.totalorder %s94, %s97
      %p106 = scmp.eq.s32.totalorder %s14, 2
      %p107 = por %p105, %p106
      %p108 = scmp.ne.s32.totalorder %s97, %s98
      %p109 = scmp.eq.s32.totalorder %s14, 0
      %p110 = por %p108, %p109
      %p111 = scmp.ne.s32.totalorder %s97, %s98
      %p112 = scmp.eq.s32.totalorder %s15, 2
      %p113 = por %p111, %p112
      %p115 = scmp.ne.s32.totalorder %s98, %s114
      %p116 = scmp.eq.s32.totalorder %s15, 0
      %p117 = por %p115, %p116
      %s118 = ssub.s32 %s16, %s35
      %s119 = ssub.s32 %s17, %s31
      %s120 = sor.u32 %s118, %s119
      %p121 = scmp.eq.s32.totalorder %s120, 0
      %s123 = sadd.s32 %s122, 1
      %s124 = scalar_select %p121, %s122, %s123
      %p127 = pneg %p121
      %p128 = scmp.eq.s32.totalorder %s9, 2
      %p129 = por %p127, %p128
      %p130 = scmp.ne.s32.totalorder %s122, %s125
      %p131 = scmp.eq.s32.totalorder %s9, 0
      %p132 = por %p130, %p131
      %p133 = scmp.ne.s32.totalorder %s122, %s125
      %p134 = scmp.eq.s32.totalorder %s14, 2
      %p135 = por %p133, %p134
      %p136 = scmp.ne.s32.totalorder %s125, %s126
      %p137 = scmp.eq.s32.totalorder %s14, 0
      %p138 = por %p136, %p137
      %p139 = scmp.ne.s32.totalorder %s125, %s126
      %p140 = scmp.eq.s32.totalorder %s15, 2
      %p141 = por %p139, %p140
      %p143 = scmp.ne.s32.totalorder %s126, %s142
      %p144 = scmp.eq.s32.totalorder %s15, 0
      %p145 = por %p143, %p144
      %p146 = scmp.le.s32.totalorder 1, %s9
      %p147 = scmp.lt.s32.totalorder %s9, 4
      %p148 = pnand %p146, %p147
      %p149 = pneg %p148
      // Predicated region
      $region9: #{embedding_net_forward.13} parent=5 // pred_check
        _
      $region10: #{embedding_net_forward.13} parent=5 // pred_check_branch
        %151 = sbr.rel (%p148) target = $region12
      $region11: #{embedding_net_forward.13} parent=5 // pred_region
        %s152 = ssub.s32 %s9, 1
        // Predicated region
        $region13: #{embedding_net_forward.13} parent=11 // pred_check
          %p153 = pneg %p110
        $region14: #{embedding_net_forward.13} parent=11 // pred_check_branch
          %155 = sbr.rel (%p153) target = $region16
        $region15: #{embedding_net_forward.13} parent=11 // pred_region
          %s156 = smul.u32 2, %s20
          %p157 = scmp.lt.s32.totalorder %s156, 1
          %s158 = scalar_select %p157, %s156, 1
          %s159 = scalar_lea.vmem %s2, %s158
          %s160 = smul.u32 2, %s20
        $region16: #{embedding_net_forward.13} parent=11 // pred_fallthru
          _
      $region12: #{embedding_net_forward.13} parent=5 // pred_fallthru
        _
      %p161 = scmp.lt.s32.totalorder %s9, 3
      // Predicated region
      $region17: #{embedding_net_forward.13} parent=5 // pred_check
        %p162 = pneg %p161
      $region18: #{embedding_net_forward.13} parent=5 // pred_check_branch
        %164 = sbr.rel (%p162) target = $region20
      $region19: #{embedding_net_forward.13} parent=5 // pred_region
        // Predicated region
        $region21: #{embedding_net_forward.13} parent=19 // pred_check
          %p165 = pneg %p50
        $region22: #{embedding_net_forward.13} parent=19 // pred_check_branch
          %167 = sbr.rel (%p165) target = $region24
        $region23: #{embedding_net_forward.13} parent=19 // pred_region
          %s168 = sand.u32 %s40, 1
          %s169 = sand.u32 %s40, 1
          %s170 = smul.addr %s169, 224
          %s171 = scalar_lea.vmem [#allocation3], %s170
          %s172 = smul.u32 14, %s16
          %s173 = smul.u32 4, %s18
          %s174 = smul.addr %s172, 12
          %s175 = sadd.s32 %s173, %s174
          %s176 = smul.addr %s175, 4
          %s177 = scalar_lea.vmem %s0, %s176
          // Predicated region
          $region25: #{embedding_net_forward.13} parent=23 // pred_check
            _
          $region26: #{embedding_net_forward.13} parent=23 // pred_check_branch
            %179 = sbr.rel (0) target = $region28
          $region27: #{embedding_net_forward.13} parent=23 // pred_region
            // Predicated region
            $region29: #{embedding_net_forward.13} parent=27 // pred_check
              _
            $region30: #{embedding_net_forward.13} parent=27 // pred_check_branch
              %181 = sbr.rel (0) target = $region32
            $region31: #{embedding_net_forward.13} parent=27 // pred_region
              loop: start=0, step=1, limit=1
              $region33: #{embedding_net_forward.13} parent=31 // loop_pre_header
                _
              $region34: #{embedding_net_forward.13} parent=31 // loop_header
                %s183 = sphi 0, %s187
                %p184 = scmp.ge.s32.totalorder %s183, 1
                %s188 = sphi %s177, %s177
                %s189 = sphi %s171, %s171
              $region35: #{embedding_net_forward.13} parent=31 // loop_header_branch
                %186 = sbr.rel (%p184) target = $region39
              $region36: #{embedding_net_forward.13} parent=31 // loop_body
                %v190 = vld [vmem:[%s188] sm:$0xff]
                %191 = vst [vmem:[%s189] sm:$0xff] %v190
                %v192 = vld [vmem:[%s188 + $0x8] sm:$0xff]
                %193 = vst [vmem:[%s189 + $0x8] sm:$0xff] %v192
                %v194 = vld [vmem:[%s188 + $0x30] sm:$0xff]
                %195 = vst [vmem:[%s189 + $0x10] sm:$0xff] %v194
                %v196 = vld [vmem:[%s188 + $0x38] sm:$0xff]
                %197 = vst [vmem:[%s189 + $0x18] sm:$0xff] %v196
                %v198 = vld [vmem:[%s188 + $0x60] sm:$0xff]
                %199 = vst [vmem:[%s189 + $0x20] sm:$0xff] %v198
                %v200 = vld [vmem:[%s188 + $0x68] sm:$0xff]
                %201 = vst [vmem:[%s189 + $0x28] sm:$0xff] %v200
                %v202 = vld [vmem:[%s188 + $0x90] sm:$0xff]
                %203 = vst [vmem:[%s189 + $0x30] sm:$0xff] %v202
                %v204 = vld [vmem:[%s188 + $0x98] sm:$0xff]
                %205 = vst [vmem:[%s189 + $0x38] sm:$0xff] %v204
                %v206 = vld [vmem:[%s188 + $0xc0] sm:$0xff]
                %207 = vst [vmem:[%s189 + $0x40] sm:$0xff] %v206
                %v208 = vld [vmem:[%s188 + $0xc8] sm:$0xff]
                %209 = vst [vmem:[%s189 + $0x48] sm:$0xff] %v208
                %v210 = vld [vmem:[%s188 + $0xf0] sm:$0xff]
                %211 = vst [vmem:[%s189 + $0x50] sm:$0xff] %v210
                %v212 = vld [vmem:[%s188 + $0xf8] sm:$0xff]
                %213 = vst [vmem:[%s189 + $0x58] sm:$0xff] %v212
                %v214 = vld [vmem:[%s188 + $0x120] sm:$0xff]
                %215 = vst [vmem:[%s189 + $0x60] sm:$0xff] %v214
                %v216 = vld [vmem:[%s188 + $0x128] sm:$0xff]
                %217 = vst [vmem:[%s189 + $0x68] sm:$0xff] %v216
                %v218 = vld [vmem:[%s188 + $0x150] sm:$0xff]
                %219 = vst [vmem:[%s189 + $0x70] sm:$0xff] %v218
                %v220 = vld [vmem:[%s188 + $0x158] sm:$0xff]
                %221 = vst [vmem:[%s189 + $0x78] sm:$0xff] %v220
                %v222 = vld [vmem:[%s188 + $0x180] sm:$0xff]
                %223 = vst [vmem:[%s189 + $0x80] sm:$0xff] %v222
                %v224 = vld [vmem:[%s188 + $0x188] sm:$0xff]
                %225 = vst [vmem:[%s189 + $0x88] sm:$0xff] %v224
                %v226 = vld [vmem:[%s188 + $0x1b0] sm:$0xff]
                %227 = vst [vmem:[%s189 + $0x90] sm:$0xff] %v226
                %v228 = vld [vmem:[%s188 + $0x1b8] sm:$0xff]
                %229 = vst [vmem:[%s189 + $0x98] sm:$0xff] %v228
                %v230 = vld [vmem:[%s188 + $0x1e0] sm:$0xff]
                %231 = vst [vmem:[%s189 + $0xa0] sm:$0xff] %v230
                %v232 = vld [vmem:[%s188 + $0x1e8] sm:$0xff]
                %233 = vst [vmem:[%s189 + $0xa8] sm:$0xff] %v232
                %v234 = vld [vmem:[%s188 + $0x210] sm:$0xff]
                %235 = vst [vmem:[%s189 + $0xb0] sm:$0xff] %v234
                %v236 = vld [vmem:[%s188 + $0x218] sm:$0xff]
                %237 = vst [vmem:[%s189 + $0xb8] sm:$0xff] %v236
                %v238 = vld [vmem:[%s188 + $0x240] sm:$0xff]
                %239 = vst [vmem:[%s189 + $0xc0] sm:$0xff] %v238
                %v240 = vld [vmem:[%s188 + $0x248] sm:$0xff]
                %241 = vst [vmem:[%s189 + $0xc8] sm:$0xff] %v240
                %v242 = vld [vmem:[%s188 + $0x270] sm:$0xff]
                %243 = vst [vmem:[%s189 + $0xd0] sm:$0xff] %v242
                %v244 = vld [vmem:[%s188 + $0x278] sm:$0xff]
                %245 = vst [vmem:[%s189 + $0xd8] sm:$0xff] %v244
              $region37: #{embedding_net_forward.13} parent=31 // loop_footer
                %s187 = sadd.s32 1, %s183
              $region38: #{embedding_net_forward.13} parent=31 // loop_footer_branch
                %182 = sbr.rel target = $region34
              $region39: #{embedding_net_forward.13} parent=31 // loop_exit
                _
            $region32: #{embedding_net_forward.13} parent=27 // pred_fallthru
              _
            // Predicated region
            $region40: #{embedding_net_forward.13} parent=27 // pred_check
              _
            $region41: #{embedding_net_forward.13} parent=27 // pred_check_branch
              %247 = sbr.rel target = $region43
            $region42: #{embedding_net_forward.13} parent=27 // pred_region
              _
            $region43: #{embedding_net_forward.13} parent=27 // pred_fallthru
              _
          $region28: #{embedding_net_forward.13} parent=23 // pred_fallthru
            _
          %248 = vnop
        $region24: #{embedding_net_forward.13} parent=19 // pred_fallthru
          _
        // Predicated region
        $region44: #{embedding_net_forward.13} parent=19 // pred_check
          %p249 = pneg %p78
        $region45: #{embedding_net_forward.13} parent=19 // pred_check_branch
          %251 = sbr.rel (%p249) target = $region47
        $region46: #{embedding_net_forward.13} parent=19 // pred_region
          %s252 = smul.u32 64, %s18
          %s253 = smul.u32 2, %s17
          %p254 = scmp.lt.s32.totalorder %s252, 191
          %s255 = scalar_select %p254, %s252, 191
          %p256 = scmp.lt.s32.totalorder %s253, 1
          %s257 = scalar_select %p256, %s253, 1
          %s258 = smul.addr %s255, 2
          %s259 = sadd.s32 %s257, %s258
          %s260 = smul.addr %s259, 4
          %s261 = scalar_lea.vmem %s1, %s260
          %s262 = smul.u32 64, %s18
          %s263 = smul.u32 2, %s17
        $region47: #{embedding_net_forward.13} parent=19 // pred_fallthru
          _
      $region20: #{embedding_net_forward.13} parent=5 // pred_fallthru
        _
      %p264 = scmp.le.s32.totalorder 1, %s9
      %p265 = scmp.lt.s32.totalorder %s9, 4
      %p266 = pnand %p264, %p265
      %p267 = pneg %p266
      // Predicated region
      $region48: #{embedding_net_forward.13} parent=5 // pred_check
        _
      $region49: #{embedding_net_forward.13} parent=5 // pred_check_branch
        %269 = sbr.rel (%p266) target = $region51
      $region50: #{embedding_net_forward.13} parent=5 // pred_region
        %s270 = ssub.s32 %s9, 1
        %s271 = sand.u32 %s43, 1
        %s272 = sand.u32 %s43, 1
        %s273 = smul.addr %s272, 224
        %s274 = scalar_lea.vmem [#allocation3], %s273
        // Predicated region
        $region52: #{embedding_net_forward.13} parent=50 // pred_check
          %p275 = pneg %p56
        $region53: #{embedding_net_forward.13} parent=50 // pred_check_branch
          %277 = sbr.rel (%p275) target = $region55
        $region54: #{embedding_net_forward.13} parent=50 // pred_region
          _
        $region55: #{embedding_net_forward.13} parent=50 // pred_fallthru
          _
        %s278 = sand.u32 %s43, 1
        %s279 = sand.u32 %s43, 1
        %s280 = smul.addr %s279, 224
        %s281 = scalar_lea.vmem [#allocation3], %s280
        %p282 = pneg %p56
        %p283 = pneg %p53
        %s284 = smul.u32 64, %s21
        %s285 = smul.u32 2, %s20
        %p286 = scmp.lt.s32.totalorder %s284, 191
        %s287 = scalar_select %p286, %s284, 191
        %p288 = scmp.lt.s32.totalorder %s285, 1
        %s289 = scalar_select %p288, %s285, 1
        %s290 = smul.addr %s287, 2
        %s291 = sadd.s32 %s289, %s290
        %s292 = smul.addr %s291, 4
        %s293 = scalar_lea.vmem %s1, %s292
        %p294 = pneg %p84
        %p295 = pneg %p81
        %s296 = smul.u32 2, %s20
        %p297 = scmp.lt.s32.totalorder %s296, 1
        %s298 = scalar_select %p297, %s296, 1
        %s299 = scalar_lea.vmem %s2, %s298
        %p300 = pneg %p110
        %p301 = pneg %p107
        %p302 = pneg %p138
        %p303 = pneg %p135
        %s304 = smul.u32 14, %s19
        %s305 = smul.u32 2, %s20
        %p306 = scmp.lt.s32.totalorder %s304, 13
        %s307 = scalar_select %p306, %s304, 13
        %p308 = scmp.lt.s32.totalorder %s305, 1
        %s309 = scalar_select %p308, %s305, 1
        %s310 = smul.addr %s307, 2
        %s311 = sadd.s32 %s309, %s310
        %s312 = smul.addr %s311, 4
        %s313 = scalar_lea.vmem %s3, %s312
        %s314 = smul.u32 14, %s19
        %s315 = smul.u32 4, %s21
        %s316 = smul.u32 64, %s21
        %s317 = smul.u32 2, %s20
        %p318 = scmp.lt.s32.totalorder %s316, 191
        %s319 = scalar_select %p318, %s316, 191
        %p320 = scmp.lt.s32.totalorder %s317, 1
        %s321 = scalar_select %p320, %s317, 1
        %s322 = smul.addr %s319, 2
        %s323 = sadd.s32 %s321, %s322
        %s324 = smul.addr %s323, 4
        %s325 = scalar_lea.vmem %s1, %s324
        %s326 = smul.u32 64, %s21
        %s327 = smul.u32 2, %s20
        %s328 = smul.u32 2, %s20
        %p329 = scmp.lt.s32.totalorder %s328, 1
        %s330 = scalar_select %p329, %s328, 1
        %s331 = scalar_lea.vmem %s2, %s330
        %s332 = smul.u32 2, %s20
        %s333 = smul.u32 14, %s19
        %s334 = smul.u32 2, %s20
        %p335 = scmp.lt.s32.totalorder %s333, 13
        %s336 = scalar_select %p335, %s333, 13
        %p337 = scmp.lt.s32.totalorder %s334, 1
        %s338 = scalar_select %p337, %s334, 1
        %s339 = smul.addr %s336, 2
        %s340 = sadd.s32 %s338, %s339
        %s341 = smul.addr %s340, 4
        %s342 = scalar_lea.vmem %s3, %s341
        %s343 = smul.u32 14, %s19
        %s344 = smul.u32 2, %s20
        %p345 = scmp.eq.s32.totalorder %s21, 0
        // Predicated region
        $region56: #{embedding_net_forward.13} parent=50 // pred_check
          %p346 = pneg %p345
        $region57: #{embedding_net_forward.13} parent=50 // pred_check_branch
          %348 = sbr.rel (%p346) target = $region59
        $region58: #{embedding_net_forward.13} parent=50 // pred_region
          %349 = vst [vmem:[#allocation2] sm:$0xff] 0.0
          %350 = vst [vmem:[#allocation2 + $0x8] sm:$0xff] 0.0
          %351 = vst [vmem:[#allocation2 + $0x10] sm:$0xff] 0.0
          %352 = vst [vmem:[#allocation2 + $0x18] sm:$0xff] 0.0
          %353 = vst [vmem:[#allocation2 + $0x20] sm:$0xff] 0.0
          %354 = vst [vmem:[#allocation2 + $0x28] sm:$0xff] 0.0
          %355 = vst [vmem:[#allocation2 + $0x30] sm:$0xff] 0.0
          %356 = vst [vmem:[#allocation2 + $0x38] sm:$0xff] 0.0
          %357 = vst [vmem:[#allocation2 + $0x40] sm:$0xff] 0.0
          %358 = vst [vmem:[#allocation2 + $0x48] sm:$0xff] 0.0
          %359 = vst [vmem:[#allocation2 + $0x50] sm:$0xff] 0.0
          %360 = vst [vmem:[#allocation2 + $0x58] sm:$0xff] 0.0
          %361 = vst [vmem:[#allocation2 + $0x60] sm:$0xff] 0.0
          %362 = vst [vmem:[#allocation2 + $0x68] sm:$0xff] 0.0
          %363 = vst [vmem:[#allocation2 + $0x70] sm:$0xff] 0.0
          %364 = vst [vmem:[#allocation2 + $0x78] sm:$0xff] 0.0
          %365 = vst [vmem:[#allocation2 + $0x80] sm:$0xff] 0.0
          %366 = vst [vmem:[#allocation2 + $0x88] sm:$0xff] 0.0
          %367 = vst [vmem:[#allocation2 + $0x90] sm:$0xff] 0.0
          %368 = vst [vmem:[#allocation2 + $0x98] sm:$0xff] 0.0
          %369 = vst [vmem:[#allocation2 + $0xa0] sm:$0xff] 0.0
          %370 = vst [vmem:[#allocation2 + $0xa8] sm:$0xff] 0.0
          %371 = vst [vmem:[#allocation2 + $0xb0] sm:$0xff] 0.0
          %372 = vst [vmem:[#allocation2 + $0xb8] sm:$0xff] 0.0
          %373 = vst [vmem:[#allocation2 + $0xc0] sm:$0xff] 0.0
          %374 = vst [vmem:[#allocation2 + $0xc8] sm:$0xff] 0.0
          %375 = vst [vmem:[#allocation2 + $0xd0] sm:$0xff] 0.0
          %376 = vst [vmem:[#allocation2 + $0xd8] sm:$0xff] 0.0
        $region59: #{embedding_net_forward.13} parent=50 // pred_fallthru
          _
        %v377 = vld [vmem:[#allocation2] sm:$0xff]
        %v378 = vld [vmem:[#allocation2 + $0x8] sm:$0xff]
        %v379 = vld [vmem:[#allocation2 + $0x10] sm:$0xff]
        %v380 = vld [vmem:[#allocation2 + $0x18] sm:$0xff]
        %v381 = vld [vmem:[#allocation2 + $0x20] sm:$0xff]
        %v382 = vld [vmem:[#allocation2 + $0x28] sm:$0xff]
        %v383 = vld [vmem:[#allocation2 + $0x30] sm:$0xff]
        %v384 = vld [vmem:[#allocation2 + $0x38] sm:$0xff]
        %v385 = vld [vmem:[#allocation2 + $0x40] sm:$0xff]
        %v386 = vld [vmem:[#allocation2 + $0x48] sm:$0xff]
        %v387 = vld [vmem:[#allocation2 + $0x50] sm:$0xff]
        %v388 = vld [vmem:[#allocation2 + $0x58] sm:$0xff]
        %v389 = vld [vmem:[#allocation2 + $0x60] sm:$0xff]
        %v390 = vld [vmem:[#allocation2 + $0x68] sm:$0xff]
        %v391 = vld [vmem:[#allocation2 + $0x70] sm:$0xff]
        %v392 = vld [vmem:[#allocation2 + $0x78] sm:$0xff]
        %v393 = vld [vmem:[#allocation2 + $0x80] sm:$0xff]
        %v394 = vld [vmem:[#allocation2 + $0x88] sm:$0xff]
        %v395 = vld [vmem:[#allocation2 + $0x90] sm:$0xff]
        %v396 = vld [vmem:[#allocation2 + $0x98] sm:$0xff]
        %v397 = vld [vmem:[#allocation2 + $0xa0] sm:$0xff]
        %v398 = vld [vmem:[#allocation2 + $0xa8] sm:$0xff]
        %v399 = vld [vmem:[#allocation2 + $0xb0] sm:$0xff]
        %v400 = vld [vmem:[#allocation2 + $0xb8] sm:$0xff]
        %v401 = vld [vmem:[#allocation2 + $0xc0] sm:$0xff]
        %v402 = vld [vmem:[#allocation2 + $0xc8] sm:$0xff]
        %v403 = vld [vmem:[#allocation2 + $0xd0] sm:$0xff]
        %v404 = vld [vmem:[#allocation2 + $0xd8] sm:$0xff]
        %v405 = vld [vmem:[%s274] sm:$0xff]
        %v406 = vld [vmem:[%s274 + $0x8] sm:$0xff]
        %v407 = vld [vmem:[%s274 + $0x10] sm:$0xff]
        %v408 = vld [vmem:[%s274 + $0x18] sm:$0xff]
        %v409 = vld [vmem:[%s274 + $0x20] sm:$0xff]
        %v410 = vld [vmem:[%s274 + $0x28] sm:$0xff]
        %v411 = vld [vmem:[%s274 + $0x30] sm:$0xff]
        %v412 = vld [vmem:[%s274 + $0x38] sm:$0xff]
        %v413 = vld [vmem:[%s274 + $0x40] sm:$0xff]
        %v414 = vld [vmem:[%s274 + $0x48] sm:$0xff]
        %v415 = vld [vmem:[%s274 + $0x50] sm:$0xff]
        %v416 = vld [vmem:[%s274 + $0x58] sm:$0xff]
        %v417 = vld [vmem:[%s274 + $0x60] sm:$0xff]
        %v418 = vld [vmem:[%s274 + $0x68] sm:$0xff]
        %v419 = vld [vmem:[%s274 + $0x70] sm:$0xff]
        %v420 = vld [vmem:[%s274 + $0x78] sm:$0xff]
        %v421 = vld [vmem:[%s274 + $0x80] sm:$0xff]
        %v422 = vld [vmem:[%s274 + $0x88] sm:$0xff]
        %v423 = vld [vmem:[%s274 + $0x90] sm:$0xff]
        %v424 = vld [vmem:[%s274 + $0x98] sm:$0xff]
        %v425 = vld [vmem:[%s274 + $0xa0] sm:$0xff]
        %v426 = vld [vmem:[%s274 + $0xa8] sm:$0xff]
        %v427 = vld [vmem:[%s274 + $0xb0] sm:$0xff]
        %v428 = vld [vmem:[%s274 + $0xb8] sm:$0xff]
        %v429 = vld [vmem:[%s274 + $0xc0] sm:$0xff]
        %v430 = vld [vmem:[%s274 + $0xc8] sm:$0xff]
        %v431 = vld [vmem:[%s274 + $0xd0] sm:$0xff]
        %v432 = vld [vmem:[%s274 + $0xd8] sm:$0xff]
        %v433 = vld [vmem:[%s325] sm:$0xff]
        %v434 = vld [vmem:[%s325 + $0x8] sm:$0xff]
        %v435 = vld [vmem:[%s325 + $0x10] sm:$0xff]
        %v436 = vld [vmem:[%s325 + $0x18] sm:$0xff]
        %v437 = vld [vmem:[%s325 + $0x20] sm:$0xff]
        %v438 = vld [vmem:[%s325 + $0x28] sm:$0xff]
        %v439 = vld [vmem:[%s325 + $0x30] sm:$0xff]
        %v440 = vld [vmem:[%s325 + $0x38] sm:$0xff]
        %v441 = vld [vmem:[%s325 + $0x40] sm:$0xff]
        %v442 = vld [vmem:[%s325 + $0x48] sm:$0xff]
        %v443 = vld [vmem:[%s325 + $0x50] sm:$0xff]
        %v444 = vld [vmem:[%s325 + $0x58] sm:$0xff]
        %v445 = vld [vmem:[%s325 + $0x60] sm:$0xff]
        %v446 = vld [vmem:[%s325 + $0x68] sm:$0xff]
        %v447 = vld [vmem:[%s325 + $0x70] sm:$0xff]
        %v448 = vld [vmem:[%s325 + $0x78] sm:$0xff]
        %v449 = vld [vmem:[%s325 + $0x80] sm:$0xff]
        %v450 = vld [vmem:[%s325 + $0x88] sm:$0xff]
        %v451 = vld [vmem:[%s325 + $0x90] sm:$0xff]
        %v452 = vld [vmem:[%s325 + $0x98] sm:$0xff]
        %v453 = vld [vmem:[%s325 + $0xa0] sm:$0xff]
        %v454 = vld [vmem:[%s325 + $0xa8] sm:$0xff]
        %v455 = vld [vmem:[%s325 + $0xb0] sm:$0xff]
        %v456 = vld [vmem:[%s325 + $0xb8] sm:$0xff]
        %v457 = vld [vmem:[%s325 + $0xc0] sm:$0xff]
        %v458 = vld [vmem:[%s325 + $0xc8] sm:$0xff]
        %v459 = vld [vmem:[%s325 + $0xd0] sm:$0xff]
        %v460 = vld [vmem:[%s325 + $0xd8] sm:$0xff]
        %v461 = vld [vmem:[%s325 + $0xe0] sm:$0xff]
        %v462 = vld [vmem:[%s325 + $0xe8] sm:$0xff]
        %v463 = vld [vmem:[%s325 + $0xf0] sm:$0xff]
        %v464 = vld [vmem:[%s325 + $0xf8] sm:$0xff]
        %v465 = vld [vmem:[%s325 + $0x100] sm:$0xff]
        %v466 = vld [vmem:[%s325 + $0x108] sm:$0xff]
        %v467 = vld [vmem:[%s325 + $0x110] sm:$0xff]
        %v468 = vld [vmem:[%s325 + $0x118] sm:$0xff]
        %v469 = vld [vmem:[%s325 + $0x120] sm:$0xff]
        %v470 = vld [vmem:[%s325 + $0x128] sm:$0xff]
        %v471 = vld [vmem:[%s325 + $0x130] sm:$0xff]
        %v472 = vld [vmem:[%s325 + $0x138] sm:$0xff]
        %v473 = vld [vmem:[%s325 + $0x140] sm:$0xff]
        %v474 = vld [vmem:[%s325 + $0x148] sm:$0xff]
        %v475 = vld [vmem:[%s325 + $0x150] sm:$0xff]
        %v476 = vld [vmem:[%s325 + $0x158] sm:$0xff]
        %v477 = vld [vmem:[%s325 + $0x160] sm:$0xff]
        %v478 = vld [vmem:[%s325 + $0x168] sm:$0xff]
        %v479 = vld [vmem:[%s325 + $0x170] sm:$0xff]
        %v480 = vld [vmem:[%s325 + $0x178] sm:$0xff]
        %v481 = vld [vmem:[%s325 + $0x180] sm:$0xff]
        %v482 = vld [vmem:[%s325 + $0x188] sm:$0xff]
        %v483 = vld [vmem:[%s325 + $0x190] sm:$0xff]
        %v484 = vld [vmem:[%s325 + $0x198] sm:$0xff]
        %v485 = vld [vmem:[%s325 + $0x1a0] sm:$0xff]
        %v486 = vld [vmem:[%s325 + $0x1a8] sm:$0xff]
        %v487 = vld [vmem:[%s325 + $0x1b0] sm:$0xff]
        %v488 = vld [vmem:[%s325 + $0x1b8] sm:$0xff]
        %v489 = vld [vmem:[%s325 + $0x1c0] sm:$0xff]
        %v490 = vld [vmem:[%s325 + $0x1c8] sm:$0xff]
        %v491 = vld [vmem:[%s325 + $0x1d0] sm:$0xff]
        %v492 = vld [vmem:[%s325 + $0x1d8] sm:$0xff]
        %v493 = vld [vmem:[%s325 + $0x1e0] sm:$0xff]
        %v494 = vld [vmem:[%s325 + $0x1e8] sm:$0xff]
        %v495 = vld [vmem:[%s325 + $0x1f0] sm:$0xff]
        %v496 = vld [vmem:[%s325 + $0x1f8] sm:$0xff]
        %v525 = vunpack.c.l.b16 %v405
        %v526 = vunpack.c.h.b16 %v405
        %v527 = vunpack.c.l.b16 %v406
        %v528 = vunpack.c.h.b16 %v406
        %v529 = vunpack.c.l.b16 %v407
        %v530 = vunpack.c.h.b16 %v407
        %v531 = vunpack.c.l.b16 %v408
        %v532 = vunpack.c.h.b16 %v408
        %v533 = vunpack.c.l.b16 %v409
        %v534 = vunpack.c.h.b16 %v409
        %v535 = vunpack.c.l.b16 %v410
        %v536 = vunpack.c.h.b16 %v410
        %v537 = vunpack.c.l.b16 %v411
        %v538 = vunpack.c.h.b16 %v411
        %v539 = vunpack.c.l.b16 %v412
        %v540 = vunpack.c.h.b16 %v412
        %v541 = vunpack.c.l.b16 %v413
        %v542 = vunpack.c.h.b16 %v413
        %v543 = vunpack.c.l.b16 %v414
        %v544 = vunpack.c.h.b16 %v414
        %v545 = vunpack.c.l.b16 %v415
        %v546 = vunpack.c.h.b16 %v415
        %v547 = vunpack.c.l.b16 %v416
        %v548 = vunpack.c.h.b16 %v416
        %v549 = vunpack.c.l.b16 %v417
        %v550 = vunpack.c.h.b16 %v417
        %v551 = vunpack.c.l.b16 %v418
        %v552 = vunpack.c.h.b16 %v418
        %v553 = vunpack.c.l.b16 %v419
        %v554 = vunpack.c.h.b16 %v419
        %v555 = vunpack.c.l.b16 %v420
        %v556 = vunpack.c.h.b16 %v420
        %v557 = vunpack.c.l.b16 %v421
        %v558 = vunpack.c.h.b16 %v421
        %v559 = vunpack.c.l.b16 %v422
        %v560 = vunpack.c.h.b16 %v422
        %v561 = vunpack.c.l.b16 %v423
        %v562 = vunpack.c.h.b16 %v423
        %v563 = vunpack.c.l.b16 %v424
        %v564 = vunpack.c.h.b16 %v424
        %v565 = vunpack.c.l.b16 %v425
        %v566 = vunpack.c.h.b16 %v425
        %v567 = vunpack.c.l.b16 %v426
        %v568 = vunpack.c.h.b16 %v426
        %v569 = vunpack.c.l.b16 %v427
        %v570 = vunpack.c.h.b16 %v427
        %v571 = vunpack.c.l.b16 %v428
        %v572 = vunpack.c.h.b16 %v428
        %v573 = vunpack.c.l.b16 %v429
        %v574 = vunpack.c.h.b16 %v429
        %v575 = vunpack.c.l.b16 %v430
        %v576 = vunpack.c.h.b16 %v430
        %v577 = vunpack.c.l.b16 %v431
        %v578 = vunpack.c.h.b16 %v431
        %v579 = vunpack.c.l.b16 %v432
        %v580 = vunpack.c.h.b16 %v432
        %v581 = vpack.c.b16 %v529, %v525
        %v582 = vpack.c.b16 %v530, %v526
        %v583 = vpack.c.b16 %v531, %v527
        %v584 = vpack.c.b16 %v532, %v528
        %v585 = vpack.c.b16 %v537, %v533
        %v586 = vpack.c.b16 %v538, %v534
        %v587 = vpack.c.b16 %v539, %v535
        %v588 = vpack.c.b16 %v540, %v536
        %v589 = vpack.c.b16 %v545, %v541
        %v590 = vpack.c.b16 %v546, %v542
        %v591 = vpack.c.b16 %v547, %v543
        %v592 = vpack.c.b16 %v548, %v544
        %v593 = vpack.c.b16 %v553, %v549
        %v594 = vpack.c.b16 %v554, %v550
        %v595 = vpack.c.b16 %v555, %v551
        %v596 = vpack.c.b16 %v556, %v552
        %v597 = vpack.c.b16 %v561, %v557
        %v598 = vpack.c.b16 %v562, %v558
        %v599 = vpack.c.b16 %v563, %v559
        %v600 = vpack.c.b16 %v564, %v560
        %v601 = vpack.c.b16 %v569, %v565
        %v602 = vpack.c.b16 %v570, %v566
        %v603 = vpack.c.b16 %v571, %v567
        %v604 = vpack.c.b16 %v572, %v568
        %v605 = vpack.c.b16 %v577, %v573
        %v606 = vpack.c.b16 %v578, %v574
        %v607 = vpack.c.b16 %v579, %v575
        %v608 = vpack.c.b16 %v580, %v576
        %v701 = vunpack.c.l.b16 %v433
        %v702 = vunpack.c.h.b16 %v433
        %v703 = vunpack.c.l.b16 %v434
        %v704 = vunpack.c.h.b16 %v434
        %v705 = vunpack.c.l.b16 %v435
        %v706 = vunpack.c.h.b16 %v435
        %v707 = vunpack.c.l.b16 %v436
        %v708 = vunpack.c.h.b16 %v436
        %v709 = vunpack.c.l.b16 %v437
        %v710 = vunpack.c.h.b16 %v437
        %v711 = vunpack.c.l.b16 %v438
        %v712 = vunpack.c.h.b16 %v438
        %v713 = vunpack.c.l.b16 %v439
        %v714 = vunpack.c.h.b16 %v439
        %v715 = vunpack.c.l.b16 %v440
        %v716 = vunpack.c.h.b16 %v440
        %v717 = vunpack.c.l.b16 %v441
        %v718 = vunpack.c.h.b16 %v441
        %v719 = vunpack.c.l.b16 %v442
        %v720 = vunpack.c.h.b16 %v442
        %v721 = vunpack.c.l.b16 %v443
        %v722 = vunpack.c.h.b16 %v443
        %v723 = vunpack.c.l.b16 %v444
        %v724 = vunpack.c.h.b16 %v444
        %v725 = vunpack.c.l.b16 %v445
        %v726 = vunpack.c.h.b16 %v445
        %v727 = vunpack.c.l.b16 %v446
        %v728 = vunpack.c.h.b16 %v446
        %v729 = vunpack.c.l.b16 %v447
        %v730 = vunpack.c.h.b16 %v447
        %v731 = vunpack.c.l.b16 %v448
        %v732 = vunpack.c.h.b16 %v448
        %v733 = vunpack.c.l.b16 %v449
        %v734 = vunpack.c.h.b16 %v449
        %v735 = vunpack.c.l.b16 %v450
        %v736 = vunpack.c.h.b16 %v450
        %v737 = vunpack.c.l.b16 %v451
        %v738 = vunpack.c.h.b16 %v451
        %v739 = vunpack.c.l.b16 %v452
        %v740 = vunpack.c.h.b16 %v452
        %v741 = vunpack.c.l.b16 %v453
        %v742 = vunpack.c.h.b16 %v453
        %v743 = vunpack.c.l.b16 %v454
        %v744 = vunpack.c.h.b16 %v454
        %v745 = vunpack.c.l.b16 %v455
        %v746 = vunpack.c.h.b16 %v455
        %v747 = vunpack.c.l.b16 %v456
        %v748 = vunpack.c.h.b16 %v456
        %v749 = vunpack.c.l.b16 %v457
        %v750 = vunpack.c.h.b16 %v457
        %v751 = vunpack.c.l.b16 %v458
        %v752 = vunpack.c.h.b16 %v458
        %v753 = vunpack.c.l.b16 %v459
        %v754 = vunpack.c.h.b16 %v459
        %v755 = vunpack.c.l.b16 %v460
        %v756 = vunpack.c.h.b16 %v460
        %v757 = vunpack.c.l.b16 %v461
        %v758 = vunpack.c.h.b16 %v461
        %v759 = vunpack.c.l.b16 %v462
        %v760 = vunpack.c.h.b16 %v462
        %v761 = vunpack.c.l.b16 %v463
        %v762 = vunpack.c.h.b16 %v463
        %v763 = vunpack.c.l.b16 %v464
        %v764 = vunpack.c.h.b16 %v464
        %v765 = vunpack.c.l.b16 %v465
        %v766 = vunpack.c.h.b16 %v465
        %v767 = vunpack.c.l.b16 %v466
        %v768 = vunpack.c.h.b16 %v466
        %v769 = vunpack.c.l.b16 %v467
        %v770 = vunpack.c.h.b16 %v467
        %v771 = vunpack.c.l.b16 %v468
        %v772 = vunpack.c.h.b16 %v468
        %v773 = vunpack.c.l.b16 %v469
        %v774 = vunpack.c.h.b16 %v469
        %v775 = vunpack.c.l.b16 %v470
        %v776 = vunpack.c.h.b16 %v470
        %v777 = vunpack.c.l.b16 %v471
        %v778 = vunpack.c.h.b16 %v471
        %v779 = vunpack.c.l.b16 %v472
        %v780 = vunpack.c.h.b16 %v472
        %v781 = vunpack.c.l.b16 %v473
        %v782 = vunpack.c.h.b16 %v473
        %v783 = vunpack.c.l.b16 %v474
        %v784 = vunpack.c.h.b16 %v474
        %v785 = vunpack.c.l.b16 %v475
        %v786 = vunpack.c.h.b16 %v475
        %v787 = vunpack.c.l.b16 %v476
        %v788 = vunpack.c.h.b16 %v476
        %v789 = vunpack.c.l.b16 %v477
        %v790 = vunpack.c.h.b16 %v477
        %v791 = vunpack.c.l.b16 %v478
        %v792 = vunpack.c.h.b16 %v478
        %v793 = vunpack.c.l.b16 %v479
        %v794 = vunpack.c.h.b16 %v479
        %v795 = vunpack.c.l.b16 %v480
        %v796 = vunpack.c.h.b16 %v480
        %v797 = vunpack.c.l.b16 %v481
        %v798 = vunpack.c.h.b16 %v481
        %v799 = vunpack.c.l.b16 %v482
        %v800 = vunpack.c.h.b16 %v482
        %v801 = vunpack.c.l.b16 %v483
        %v802 = vunpack.c.h.b16 %v483
        %v803 = vunpack.c.l.b16 %v484
        %v804 = vunpack.c.h.b16 %v484
        %v805 = vunpack.c.l.b16 %v485
        %v806 = vunpack.c.h.b16 %v485
        %v807 = vunpack.c.l.b16 %v486
        %v808 = vunpack.c.h.b16 %v486
        %v809 = vunpack.c.l.b16 %v487
        %v810 = vunpack.c.h.b16 %v487
        %v811 = vunpack.c.l.b16 %v488
        %v812 = vunpack.c.h.b16 %v488
        %v813 = vunpack.c.l.b16 %v489
        %v814 = vunpack.c.h.b16 %v489
        %v815 = vunpack.c.l.b16 %v490
        %v816 = vunpack.c.h.b16 %v490
        %v817 = vunpack.c.l.b16 %v491
        %v818 = vunpack.c.h.b16 %v491
        %v819 = vunpack.c.l.b16 %v492
        %v820 = vunpack.c.h.b16 %v492
        %v821 = vunpack.c.l.b16 %v493
        %v822 = vunpack.c.h.b16 %v493
        %v823 = vunpack.c.l.b16 %v494
        %v824 = vunpack.c.h.b16 %v494
        %v825 = vunpack.c.l.b16 %v495
        %v826 = vunpack.c.h.b16 %v495
        %v827 = vunpack.c.l.b16 %v496
        %v828 = vunpack.c.h.b16 %v496
        %v829 = vpack.c.b16 %v703, %v701
        %v830 = vpack.c.b16 %v704, %v702
        %v831 = vpack.c.b16 %v707, %v705
        %v832 = vpack.c.b16 %v708, %v706
        %v833 = vpack.c.b16 %v711, %v709
        %v834 = vpack.c.b16 %v712, %v710
        %v835 = vpack.c.b16 %v715, %v713
        %v836 = vpack.c.b16 %v716, %v714
        %v837 = vpack.c.b16 %v719, %v717
        %v838 = vpack.c.b16 %v720, %v718
        %v839 = vpack.c.b16 %v723, %v721
        %v840 = vpack.c.b16 %v724, %v722
        %v841 = vpack.c.b16 %v727, %v725
        %v842 = vpack.c.b16 %v728, %v726
        %v843 = vpack.c.b16 %v731, %v729
        %v844 = vpack.c.b16 %v732, %v730
        %v845 = vpack.c.b16 %v735, %v733
        %v846 = vpack.c.b16 %v736, %v734
        %v847 = vpack.c.b16 %v739, %v737
        %v848 = vpack.c.b16 %v740, %v738
        %v849 = vpack.c.b16 %v743, %v741
        %v850 = vpack.c.b16 %v744, %v742
        %v851 = vpack.c.b16 %v747, %v745
        %v852 = vpack.c.b16 %v748, %v746
        %v853 = vpack.c.b16 %v751, %v749
        %v854 = vpack.c.b16 %v752, %v750
        %v855 = vpack.c.b16 %v755, %v753
        %v856 = vpack.c.b16 %v756, %v754
        %v857 = vpack.c.b16 %v759, %v757
        %v858 = vpack.c.b16 %v760, %v758
        %v859 = vpack.c.b16 %v763, %v761
        %v860 = vpack.c.b16 %v764, %v762
        %v861 = vpack.c.b16 %v767, %v765
        %v862 = vpack.c.b16 %v768, %v766
        %v863 = vpack.c.b16 %v771, %v769
        %v864 = vpack.c.b16 %v772, %v770
        %v865 = vpack.c.b16 %v775, %v773
        %v866 = vpack.c.b16 %v776, %v774
        %v867 = vpack.c.b16 %v779, %v777
        %v868 = vpack.c.b16 %v780, %v778
        %v869 = vpack.c.b16 %v783, %v781
        %v870 = vpack.c.b16 %v784, %v782
        %v871 = vpack.c.b16 %v787, %v785
        %v872 = vpack.c.b16 %v788, %v786
        %v873 = vpack.c.b16 %v791, %v789
        %v874 = vpack.c.b16 %v792, %v790
        %v875 = vpack.c.b16 %v795, %v793
        %v876 = vpack.c.b16 %v796, %v794
        %v877 = vpack.c.b16 %v799, %v797
        %v878 = vpack.c.b16 %v800, %v798
        %v879 = vpack.c.b16 %v803, %v801
        %v880 = vpack.c.b16 %v804, %v802
        %v881 = vpack.c.b16 %v807, %v805
        %v882 = vpack.c.b16 %v808, %v806
        %v883 = vpack.c.b16 %v811, %v809
        %v884 = vpack.c.b16 %v812, %v810
        %v885 = vpack.c.b16 %v815, %v813
        %v886 = vpack.c.b16 %v816, %v814
        %v887 = vpack.c.b16 %v819, %v817
        %v888 = vpack.c.b16 %v820, %v818
        %v889 = vpack.c.b16 %v823, %v821
        %v890 = vpack.c.b16 %v824, %v822
        %v891 = vpack.c.b16 %v827, %v825
        %v892 = vpack.c.b16 %v828, %v826
        %957 = vmatprep.subr.bf16.mxu0 %v830
        %958 = vmatpush1.bf16.msra.mxu0 %v829
        %959 = vmatprep.subr.bf16.mxu0 %v832
        %960 = vmatpush1.bf16.msra.mxu0 %v831
        %961 = vmatprep.subr.bf16.mxu0 %v834
        %962 = vmatpush1.bf16.msra.mxu0 %v833
        %963 = vmatprep.subr.bf16.mxu0 %v836
        %964 = vmatpush1.bf16.msra.mxu0 %v835
        %965 = vmatprep.subr.bf16.mxu0 %v838
        %966 = vmatpush1.bf16.msra.mxu0 %v837
        %967 = vmatprep.subr.bf16.mxu0 %v840
        %968 = vmatpush1.bf16.msra.mxu0 %v839
        %969 = vmatprep.subr.bf16.mxu0 %v842
        %970 = vmatpush1.bf16.msra.mxu0 %v841
        %971 = vmatprep.subr.bf16.mxu0 %v844
        %972 = vmatpush1.bf16.msra.mxu0 %v843
        %973 = vmatprep.subr.bf16.mxu0 %v846
        %974 = vmatpush1.bf16.msra.mxu0 %v845
        %975 = vmatprep.subr.bf16.mxu0 %v848
        %976 = vmatpush1.bf16.msra.mxu0 %v847
        %977 = vmatprep.subr.bf16.mxu0 %v850
        %978 = vmatpush1.bf16.msra.mxu0 %v849
        %979 = vmatprep.subr.bf16.mxu0 %v852
        %980 = vmatpush1.bf16.msra.mxu0 %v851
        %981 = vmatprep.subr.bf16.mxu0 %v854
        %982 = vmatpush1.bf16.msra.mxu0 %v853
        %983 = vmatprep.subr.bf16.mxu0 %v856
        %984 = vmatpush1.bf16.msra.mxu0 %v855
        %985 = vmatprep.subr.bf16.mxu0 %v858
        %986 = vmatpush1.bf16.msra.mxu0 %v857
        %987 = vmatprep.subr.bf16.mxu0 %v860
        %988 = vmatpush1.bf16.msra.mxu0 %v859
        %989 = vmatprep.mubr.bf16.mxu0 %v582
        %990 = vmatmul.mubr.bf16.gmra.mrb[0].mxu0 %v581
        %v991 = vpop.f32.mrb[0].mxu0
        %v992 = vadd.f32 0.0, %v991
        %v993 = vpop.f32.mrb[0].mxu0
        %v994 = vadd.f32 0.0, %v993
        %v995 = vpop.f32.mrb[0].mxu0
        %v996 = vadd.f32 0.0, %v995
        %v997 = vpop.f32.mrb[0].mxu0
        %v998 = vadd.f32 0.0, %v997
        %999 = vmatprep.mubr.bf16.mxu0 %v586
        %1000 = vmatmul.mubr.bf16.gmra.mrb[0].mxu0 %v585
        %v1001 = vpop.f32.mrb[0].mxu0
        %v1002 = vadd.f32 0.0, %v1001
        %v1003 = vpop.f32.mrb[0].mxu0
        %v1004 = vadd.f32 0.0, %v1003
        %v1005 = vpop.f32.mrb[0].mxu0
        %v1006 = vadd.f32 0.0, %v1005
        %v1007 = vpop.f32.mrb[0].mxu0
        %v1008 = vadd.f32 0.0, %v1007
        %1009 = vmatprep.mubr.bf16.mxu0 %v590
        %1010 = vmatmul.mubr.bf16.gmra.mrb[0].mxu0 %v589
        %v1011 = vpop.f32.mrb[0].mxu0
        %v1012 = vadd.f32 0.0, %v1011
        %v1013 = vpop.f32.mrb[0].mxu0
        %v1014 = vadd.f32 0.0, %v1013
        %v1015 = vpop.f32.mrb[0].mxu0
        %v1016 = vadd.f32 0.0, %v1015
        %v1017 = vpop.f32.mrb[0].mxu0
        %v1018 = vadd.f32 0.0, %v1017
        %1019 = vmatprep.mubr.bf16.mxu0 %v594
        %1020 = vmatmul.mubr.bf16.gmra.mrb[0].mxu0 %v593
        %v1021 = vpop.f32.mrb[0].mxu0
        %v1022 = vadd.f32 0.0, %v1021
        %v1023 = vpop.f32.mrb[0].mxu0
        %v1024 = vadd.f32 0.0, %v1023
        %v1025 = vpop.f32.mrb[0].mxu0
        %v1026 = vadd.f32 0.0, %v1025
        %v1027 = vpop.f32.mrb[0].mxu0
        %v1028 = vadd.f32 0.0, %v1027
        %1029 = vmatprep.mubr.bf16.mxu0 %v598
        %1030 = vmatmul.mubr.bf16.gmra.mrb[0].mxu0 %v597
        %v1031 = vpop.f32.mrb[0].mxu0
        %v1032 = vadd.f32 0.0, %v1031
        %v1033 = vpop.f32.mrb[0].mxu0
        %v1034 = vadd.f32 0.0, %v1033
        %v1035 = vpop.f32.mrb[0].mxu0
        %v1036 = vadd.f32 0.0, %v1035
        %v1037 = vpop.f32.mrb[0].mxu0
        %v1038 = vadd.f32 0.0, %v1037
        %1039 = vmatprep.mubr.bf16.mxu0 %v602
        %1040 = vmatmul.mubr.bf16.gmra.mrb[0].mxu0 %v601
        %v1041 = vpop.f32.mrb[0].mxu0
        %v1042 = vadd.f32 0.0, %v1041
        %v1043 = vpop.f32.mrb[0].mxu0
        %v1044 = vadd.f32 0.0, %v1043
        %v1045 = vpop.f32.mrb[0].mxu0
        %v1046 = vadd.f32 0.0, %v1045
        %v1047 = vpop.f32.mrb[0].mxu0
        %v1048 = vadd.f32 0.0, %v1047
        %1049 = vmatprep.mubr.bf16.mxu0 %v606
        %1050 = vmatmul.mubr.bf16.gmra.mrb[0].mxu0 %v605
        %v1051 = vpop.f32.mrb[0].mxu0
        %v1052 = vadd.f32 0.0, %v1051
        %v1053 = vpop.f32.mrb[0].mxu0
        %v1054 = vadd.f32 0.0, %v1053
        %v1055 = vpop.f32.mrb[0].mxu0
        %v1056 = vadd.f32 0.0, %v1055
        %v1057 = vpop.f32.mrb[0].mxu0
        %v1058 = vadd.f32 0.0, %v1057
        %1059 = vdwg.mxu0
        %1060 = vmatprep.subr.bf16.mxu0 %v862
        %1061 = vmatpush1.bf16.msra.mxu0 %v861
        %1062 = vmatprep.subr.bf16.mxu0 %v864
        %1063 = vmatpush1.bf16.msra.mxu0 %v863
        %1064 = vmatprep.subr.bf16.mxu0 %v866
        %1065 = vmatpush1.bf16.msra.mxu0 %v865
        %1066 = vmatprep.subr.bf16.mxu0 %v868
        %1067 = vmatpush1.bf16.msra.mxu0 %v867
        %1068 = vmatprep.subr.bf16.mxu0 %v870
        %1069 = vmatpush1.bf16.msra.mxu0 %v869
        %1070 = vmatprep.subr.bf16.mxu0 %v872
        %1071 = vmatpush1.bf16.msra.mxu0 %v871
        %1072 = vmatprep.subr.bf16.mxu0 %v874
        %1073 = vmatpush1.bf16.msra.mxu0 %v873
        %1074 = vmatprep.subr.bf16.mxu0 %v876
        %1075 = vmatpush1.bf16.msra.mxu0 %v875
        %1076 = vmatprep.subr.bf16.mxu0 %v878
        %1077 = vmatpush1.bf16.msra.mxu0 %v877
        %1078 = vmatprep.subr.bf16.mxu0 %v880
        %1079 = vmatpush1.bf16.msra.mxu0 %v879
        %1080 = vmatprep.subr.bf16.mxu0 %v882
        %1081 = vmatpush1.bf16.msra.mxu0 %v881
        %1082 = vmatprep.subr.bf16.mxu0 %v884
        %1083 = vmatpush1.bf16.msra.mxu0 %v883
        %1084 = vmatprep.subr.bf16.mxu0 %v886
        %1085 = vmatpush1.bf16.msra.mxu0 %v885
        %1086 = vmatprep.subr.bf16.mxu0 %v888
        %1087 = vmatpush1.bf16.msra.mxu0 %v887
        %1088 = vmatprep.subr.bf16.mxu0 %v890
        %1089 = vmatpush1.bf16.msra.mxu0 %v889
        %1090 = vmatprep.subr.bf16.mxu0 %v892
        %1091 = vmatpush1.bf16.msra.mxu0 %v891
        %1092 = vmatprep.mubr.bf16.mxu0 %v584
        %1093 = vmatmul.mubr.bf16.gmra.mrb[0].mxu0 %v583
        %v1094 = vpop.f32.mrb[0].mxu0
        %v1095 = vadd.f32 %v992, %v1094
        %v1096 = vpop.f32.mrb[0].mxu0
        %v1097 = vadd.f32 %v994, %v1096
        %v1098 = vpop.f32.mrb[0].mxu0
        %v1099 = vadd.f32 %v996, %v1098
        %v1100 = vpop.f32.mrb[0].mxu0
        %v1101 = vadd.f32 %v998, %v1100
        %1102 = vmatprep.mubr.bf16.mxu0 %v588
        %1103 = vmatmul.mubr.bf16.gmra.mrb[0].mxu0 %v587
        %v1104 = vpop.f32.mrb[0].mxu0
        %v1105 = vadd.f32 %v1002, %v1104
        %v1106 = vpop.f32.mrb[0].mxu0
        %v1107 = vadd.f32 %v1004, %v1106
        %v1108 = vpop.f32.mrb[0].mxu0
        %v1109 = vadd.f32 %v1006, %v1108
        %v1110 = vpop.f32.mrb[0].mxu0
        %v1111 = vadd.f32 %v1008, %v1110
        %1112 = vmatprep.mubr.bf16.mxu0 %v592
        %1113 = vmatmul.mubr.bf16.gmra.mrb[0].mxu0 %v591
        %v1114 = vpop.f32.mrb[0].mxu0
        %v1115 = vadd.f32 %v1012, %v1114
        %v1116 = vpop.f32.mrb[0].mxu0
        %v1117 = vadd.f32 %v1014, %v1116
        %v1118 = vpop.f32.mrb[0].mxu0
        %v1119 = vadd.f32 %v1016, %v1118
        %v1120 = vpop.f32.mrb[0].mxu0
        %v1121 = vadd.f32 %v1018, %v1120
        %1122 = vmatprep.mubr.bf16.mxu0 %v596
        %1123 = vmatmul.mubr.bf16.gmra.mrb[0].mxu0 %v595
        %v1124 = vpop.f32.mrb[0].mxu0
        %v1125 = vadd.f32 %v1022, %v1124
        %v1126 = vpop.f32.mrb[0].mxu0
        %v1127 = vadd.f32 %v1024, %v1126
        %v1128 = vpop.f32.mrb[0].mxu0
        %v1129 = vadd.f32 %v1026, %v1128
        %v1130 = vpop.f32.mrb[0].mxu0
        %v1131 = vadd.f32 %v1028, %v1130
        %1132 = vmatprep.mubr.bf16.mxu0 %v600
        %1133 = vmatmul.mubr.bf16.gmra.mrb[0].mxu0 %v599
        %v1134 = vpop.f32.mrb[0].mxu0
        %v1135 = vadd.f32 %v1032, %v1134
        %v1136 = vpop.f32.mrb[0].mxu0
        %v1137 = vadd.f32 %v1034, %v1136
        %v1138 = vpop.f32.mrb[0].mxu0
        %v1139 = vadd.f32 %v1036, %v1138
        %v1140 = vpop.f32.mrb[0].mxu0
        %v1141 = vadd.f32 %v1038, %v1140
        %1142 = vmatprep.mubr.bf16.mxu0 %v604
        %1143 = vmatmul.mubr.bf16.gmra.mrb[0].mxu0 %v603
        %v1144 = vpop.f32.mrb[0].mxu0
        %v1145 = vadd.f32 %v1042, %v1144
        %v1146 = vpop.f32.mrb[0].mxu0
        %v1147 = vadd.f32 %v1044, %v1146
        %v1148 = vpop.f32.mrb[0].mxu0
        %v1149 = vadd.f32 %v1046, %v1148
        %v1150 = vpop.f32.mrb[0].mxu0
        %v1151 = vadd.f32 %v1048, %v1150
        %1152 = vmatprep.mubr.bf16.mxu0 %v608
        %1153 = vmatmul.mubr.bf16.gmra.mrb[0].mxu0 %v607
        %v1154 = vpop.f32.mrb[0].mxu0
        %v1155 = vadd.f32 %v1052, %v1154
        %v1156 = vpop.f32.mrb[0].mxu0
        %v1157 = vadd.f32 %v1054, %v1156
        %v1158 = vpop.f32.mrb[0].mxu0
        %v1159 = vadd.f32 %v1056, %v1158
        %v1160 = vpop.f32.mrb[0].mxu0
        %v1161 = vadd.f32 %v1058, %v1160
        %1162 = vdwg.mxu0
        %v1163 = vadd.f32 %v377, %v1095
        %v1164 = vadd.f32 %v378, %v1097
        %v1165 = vadd.f32 %v379, %v1099
        %v1166 = vadd.f32 %v380, %v1101
        %v1167 = vadd.f32 %v381, %v1105
        %v1168 = vadd.f32 %v382, %v1107
        %v1169 = vadd.f32 %v383, %v1109
        %v1170 = vadd.f32 %v384, %v1111
        %v1171 = vadd.f32 %v385, %v1115
        %v1172 = vadd.f32 %v386, %v1117
        %v1173 = vadd.f32 %v387, %v1119
        %v1174 = vadd.f32 %v388, %v1121
        %v1175 = vadd.f32 %v389, %v1125
        %v1176 = vadd.f32 %v390, %v1127
        %v1177 = vadd.f32 %v391, %v1129
        %v1178 = vadd.f32 %v392, %v1131
        %v1179 = vadd.f32 %v393, %v1135
        %v1180 = vadd.f32 %v394, %v1137
        %v1181 = vadd.f32 %v395, %v1139
        %v1182 = vadd.f32 %v396, %v1141
        %v1183 = vadd.f32 %v397, %v1145
        %v1184 = vadd.f32 %v398, %v1147
        %v1185 = vadd.f32 %v399, %v1149
        %v1186 = vadd.f32 %v400, %v1151
        %v1187 = vadd.f32 %v401, %v1155
        %v1188 = vadd.f32 %v402, %v1157
        %v1189 = vadd.f32 %v403, %v1159
        %v1190 = vadd.f32 %v404, %v1161
        %1191 = vst [vmem:[#allocation2] sm:$0xff] %v1163
        %1192 = vst [vmem:[#allocation2 + $0x8] sm:$0xff] %v1164
        %1193 = vst [vmem:[#allocation2 + $0x10] sm:$0xff] %v1165
        %1194 = vst [vmem:[#allocation2 + $0x18] sm:$0xff] %v1166
        %1195 = vst [vmem:[#allocation2 + $0x20] sm:$0xff] %v1167
        %1196 = vst [vmem:[#allocation2 + $0x28] sm:$0xff] %v1168
        %1197 = vst [vmem:[#allocation2 + $0x30] sm:$0xff] %v1169
        %1198 = vst [vmem:[#allocation2 + $0x38] sm:$0xff] %v1170
        %1199 = vst [vmem:[#allocation2 + $0x40] sm:$0xff] %v1171
        %1200 = vst [vmem:[#allocation2 + $0x48] sm:$0xff] %v1172
        %1201 = vst [vmem:[#allocation2 + $0x50] sm:$0xff] %v1173
        %1202 = vst [vmem:[#allocation2 + $0x58] sm:$0xff] %v1174
        %1203 = vst [vmem:[#allocation2 + $0x60] sm:$0xff] %v1175
        %1204 = vst [vmem:[#allocation2 + $0x68] sm:$0xff] %v1176
        %1205 = vst [vmem:[#allocation2 + $0x70] sm:$0xff] %v1177
        %1206 = vst [vmem:[#allocation2 + $0x78] sm:$0xff] %v1178
        %1207 = vst [vmem:[#allocation2 + $0x80] sm:$0xff] %v1179
        %1208 = vst [vmem:[#allocation2 + $0x88] sm:$0xff] %v1180
        %1209 = vst [vmem:[#allocation2 + $0x90] sm:$0xff] %v1181
        %1210 = vst [vmem:[#allocation2 + $0x98] sm:$0xff] %v1182
        %1211 = vst [vmem:[#allocation2 + $0xa0] sm:$0xff] %v1183
        %1212 = vst [vmem:[#allocation2 + $0xa8] sm:$0xff] %v1184
        %1213 = vst [vmem:[#allocation2 + $0xb0] sm:$0xff] %v1185
        %1214 = vst [vmem:[#allocation2 + $0xb8] sm:$0xff] %v1186
        %1215 = vst [vmem:[#allocation2 + $0xc0] sm:$0xff] %v1187
        %1216 = vst [vmem:[#allocation2 + $0xc8] sm:$0xff] %v1188
        %1217 = vst [vmem:[#allocation2 + $0xd0] sm:$0xff] %v1189
        %1218 = vst [vmem:[#allocation2 + $0xd8] sm:$0xff] %v1190
        %p1219 = scmp.eq.s32.totalorder %s21, 2
        // Predicated region
        $region60: #{embedding_net_forward.13} parent=50 // pred_check
          %p1220 = pneg %p1219
        $region61: #{embedding_net_forward.13} parent=50 // pred_check_branch
          %1222 = sbr.rel (%p1220) target = $region63
        $region62: #{embedding_net_forward.13} parent=50 // pred_region
          %v1223 = vld [vmem:[#allocation2] sm:$0xff]
          %v1224 = vld [vmem:[#allocation2 + $0x8] sm:$0xff]
          %v1225 = vld [vmem:[#allocation2 + $0x10] sm:$0xff]
          %v1226 = vld [vmem:[#allocation2 + $0x18] sm:$0xff]
          %v1227 = vld [vmem:[#allocation2 + $0x20] sm:$0xff]
          %v1228 = vld [vmem:[#allocation2 + $0x28] sm:$0xff]
          %v1229 = vld [vmem:[#allocation2 + $0x30] sm:$0xff]
          %v1230 = vld [vmem:[#allocation2 + $0x38] sm:$0xff]
          %v1231 = vld [vmem:[#allocation2 + $0x40] sm:$0xff]
          %v1232 = vld [vmem:[#allocation2 + $0x48] sm:$0xff]
          %v1233 = vld [vmem:[#allocation2 + $0x50] sm:$0xff]
          %v1234 = vld [vmem:[#allocation2 + $0x58] sm:$0xff]
          %v1235 = vld [vmem:[#allocation2 + $0x60] sm:$0xff]
          %v1236 = vld [vmem:[#allocation2 + $0x68] sm:$0xff]
          %v1237 = vld [vmem:[#allocation2 + $0x70] sm:$0xff]
          %v1238 = vld [vmem:[#allocation2 + $0x78] sm:$0xff]
          %v1239 = vld [vmem:[#allocation2 + $0x80] sm:$0xff]
          %v1240 = vld [vmem:[#allocation2 + $0x88] sm:$0xff]
          %v1241 = vld [vmem:[#allocation2 + $0x90] sm:$0xff]
          %v1242 = vld [vmem:[#allocation2 + $0x98] sm:$0xff]
          %v1243 = vld [vmem:[#allocation2 + $0xa0] sm:$0xff]
          %v1244 = vld [vmem:[#allocation2 + $0xa8] sm:$0xff]
          %v1245 = vld [vmem:[#allocation2 + $0xb0] sm:$0xff]
          %v1246 = vld [vmem:[#allocation2 + $0xb8] sm:$0xff]
          %v1247 = vld [vmem:[#allocation2 + $0xc0] sm:$0xff]
          %v1248 = vld [vmem:[#allocation2 + $0xc8] sm:$0xff]
          %v1249 = vld [vmem:[#allocation2 + $0xd0] sm:$0xff]
          %v1250 = vld [vmem:[#allocation2 + $0xd8] sm:$0xff]
          %v1251 = vld [vmem:[%s331] sm:$0x3]
          %v1253 = vlaneseq
          %v1254 = vshrl.u32 %v1253, 7
          %v1255 = vsub.s32 0, %v1254
          %v1256 = vrot.slane %v1251, %v1255
          %v1257 = vlaneseq
          %v1258 = vshrl.u32 %v1257, 7
          %v1259 = vsub.s32 1, %v1258
          %v1260 = vrot.slane %v1251, %v1259
          %v1263 = vadd.f32 %v1223, %v1256
          %v1264 = vadd.f32 %v1224, %v1260
          %v1265 = vadd.f32 %v1225, %v1256
          %v1266 = vadd.f32 %v1226, %v1260
          %v1267 = vadd.f32 %v1227, %v1256
          %v1268 = vadd.f32 %v1228, %v1260
          %v1269 = vadd.f32 %v1229, %v1256
          %v1270 = vadd.f32 %v1230, %v1260
          %v1271 = vadd.f32 %v1231, %v1256
          %v1272 = vadd.f32 %v1232, %v1260
          %v1273 = vadd.f32 %v1233, %v1256
          %v1274 = vadd.f32 %v1234, %v1260
          %v1275 = vadd.f32 %v1235, %v1256
          %v1276 = vadd.f32 %v1236, %v1260
          %v1277 = vadd.f32 %v1237, %v1256
          %v1278 = vadd.f32 %v1238, %v1260
          %v1279 = vadd.f32 %v1239, %v1256
          %v1280 = vadd.f32 %v1240, %v1260
          %v1281 = vadd.f32 %v1241, %v1256
          %v1282 = vadd.f32 %v1242, %v1260
          %v1283 = vadd.f32 %v1243, %v1256
          %v1284 = vadd.f32 %v1244, %v1260
          %v1285 = vadd.f32 %v1245, %v1256
          %v1286 = vadd.f32 %v1246, %v1260
          %v1287 = vadd.f32 %v1247, %v1256
          %v1288 = vadd.f32 %v1248, %v1260
          %v1289 = vadd.f32 %v1249, %v1256
          %v1290 = vadd.f32 %v1250, %v1260
          %v1291 = vmax.f32 %v1263, 0.0
          %v1292 = vmax.f32 %v1264, 0.0
          %v1293 = vmax.f32 %v1265, 0.0
          %v1294 = vmax.f32 %v1266, 0.0
          %v1295 = vmax.f32 %v1267, 0.0
          %v1296 = vmax.f32 %v1268, 0.0
          %v1297 = vmax.f32 %v1269, 0.0
          %v1298 = vmax.f32 %v1270, 0.0
          %v1299 = vmax.f32 %v1271, 0.0
          %v1300 = vmax.f32 %v1272, 0.0
          %v1301 = vmax.f32 %v1273, 0.0
          %v1302 = vmax.f32 %v1274, 0.0
          %v1303 = vmax.f32 %v1275, 0.0
          %v1304 = vmax.f32 %v1276, 0.0
          %v1305 = vmax.f32 %v1277, 0.0
          %v1306 = vmax.f32 %v1278, 0.0
          %v1307 = vmax.f32 %v1279, 0.0
          %v1308 = vmax.f32 %v1280, 0.0
          %v1309 = vmax.f32 %v1281, 0.0
          %v1310 = vmax.f32 %v1282, 0.0
          %v1311 = vmax.f32 %v1283, 0.0
          %v1312 = vmax.f32 %v1284, 0.0
          %v1313 = vmax.f32 %v1285, 0.0
          %v1314 = vmax.f32 %v1286, 0.0
          %v1315 = vmax.f32 %v1287, 0.0
          %v1316 = vmax.f32 %v1288, 0.0
          %v1317 = vmax.f32 %v1289, 0.0
          %v1318 = vmax.f32 %v1290, 0.0
          %v1319 = vpack.c.bf16 %v1293, %v1291
          %v1320 = vpack.c.bf16 %v1294, %v1292
          %v1321 = vpack.c.bf16 %v1297, %v1295
          %v1322 = vpack.c.bf16 %v1298, %v1296
          %v1323 = vpack.c.bf16 %v1301, %v1299
          %v1324 = vpack.c.bf16 %v1302, %v1300
          %v1325 = vpack.c.bf16 %v1305, %v1303
          %v1326 = vpack.c.bf16 %v1306, %v1304
          %v1327 = vpack.c.bf16 %v1309, %v1307
          %v1328 = vpack.c.bf16 %v1310, %v1308
          %v1329 = vpack.c.bf16 %v1313, %v1311
          %v1330 = vpack.c.bf16 %v1314, %v1312
          %v1331 = vpack.c.bf16 %v1317, %v1315
          %v1332 = vpack.c.bf16 %v1318, %v1316
          %v1347 = vunpack.c.l.b16 %v1319
          %v1348 = vunpack.c.l.b16 %v1320
          %v1349 = vunpack.c.h.b16 %v1319
          %v1350 = vunpack.c.h.b16 %v1320
          %v1351 = vunpack.c.l.b16 %v1321
          %v1352 = vunpack.c.l.b16 %v1322
          %v1353 = vunpack.c.h.b16 %v1321
          %v1354 = vunpack.c.h.b16 %v1322
          %v1355 = vunpack.c.l.b16 %v1323
          %v1356 = vunpack.c.l.b16 %v1324
          %v1357 = vunpack.c.h.b16 %v1323
          %v1358 = vunpack.c.h.b16 %v1324
          %v1359 = vunpack.c.l.b16 %v1325
          %v1360 = vunpack.c.l.b16 %v1326
          %v1361 = vunpack.c.h.b16 %v1325
          %v1362 = vunpack.c.h.b16 %v1326
          %v1363 = vunpack.c.l.b16 %v1327
          %v1364 = vunpack.c.l.b16 %v1328
          %v1365 = vunpack.c.h.b16 %v1327
          %v1366 = vunpack.c.h.b16 %v1328
          %v1367 = vunpack.c.l.b16 %v1329
          %v1368 = vunpack.c.l.b16 %v1330
          %v1369 = vunpack.c.h.b16 %v1329
          %v1370 = vunpack.c.h.b16 %v1330
          %v1371 = vunpack.c.l.b16 %v1331
          %v1372 = vunpack.c.l.b16 %v1332
          %v1373 = vunpack.c.h.b16 %v1331
          %v1374 = vunpack.c.h.b16 %v1332
          %v1375 = vpack.c.b16 %v1348, %v1347
          %v1376 = vpack.c.b16 %v1350, %v1349
          %v1377 = vpack.c.b16 %v1352, %v1351
          %v1378 = vpack.c.b16 %v1354, %v1353
          %v1379 = vpack.c.b16 %v1356, %v1355
          %v1380 = vpack.c.b16 %v1358, %v1357
          %v1381 = vpack.c.b16 %v1360, %v1359
          %v1382 = vpack.c.b16 %v1362, %v1361
          %v1383 = vpack.c.b16 %v1364, %v1363
          %v1384 = vpack.c.b16 %v1366, %v1365
          %v1385 = vpack.c.b16 %v1368, %v1367
          %v1386 = vpack.c.b16 %v1370, %v1369
          %v1387 = vpack.c.b16 %v1372, %v1371
          %v1388 = vpack.c.b16 %v1374, %v1373
          %1403 = vst [vmem:[%s342] sm:$0xff] %v1375
          %1404 = vst [vmem:[%s342 + $0x8] sm:$0xff] %v1376
          %1405 = vst [vmem:[%s342 + $0x10] sm:$0xff] %v1377
          %1406 = vst [vmem:[%s342 + $0x18] sm:$0xff] %v1378
          %1407 = vst [vmem:[%s342 + $0x20] sm:$0xff] %v1379
          %1408 = vst [vmem:[%s342 + $0x28] sm:$0xff] %v1380
          %1409 = vst [vmem:[%s342 + $0x30] sm:$0xff] %v1381
          %1410 = vst [vmem:[%s342 + $0x38] sm:$0xff] %v1382
          %1411 = vst [vmem:[%s342 + $0x40] sm:$0xff] %v1383
          %1412 = vst [vmem:[%s342 + $0x48] sm:$0xff] %v1384
          %1413 = vst [vmem:[%s342 + $0x50] sm:$0xff] %v1385
          %1414 = vst [vmem:[%s342 + $0x58] sm:$0xff] %v1386
          %1415 = vst [vmem:[%s342 + $0x60] sm:$0xff] %v1387
          %1416 = vst [vmem:[%s342 + $0x68] sm:$0xff] %v1388
        $region63: #{embedding_net_forward.13} parent=50 // pred_fallthru
          _
        %s1417 = smul.u32 14, %s19
        %s1418 = smul.u32 2, %s20
        %p1419 = scmp.lt.s32.totalorder %s1417, 13
        %s1420 = scalar_select %p1419, %s1417, 13
        %p1421 = scmp.lt.s32.totalorder %s1418, 1
        %s1422 = scalar_select %p1421, %s1418, 1
        %s1423 = smul.addr %s1420, 2
        %s1424 = sadd.s32 %s1422, %s1423
        %s1425 = smul.addr %s1424, 4
        %s1426 = scalar_lea.vmem %s3, %s1425
        // Predicated region
        $region64: #{embedding_net_forward.13} parent=50 // pred_check
          %p1427 = pneg %p135
        $region65: #{embedding_net_forward.13} parent=50 // pred_check_branch
          %1429 = sbr.rel (%p1427) target = $region67
        $region66: #{embedding_net_forward.13} parent=50 // pred_region
          %s1430 = smul.u32 14, %s19
          %s1431 = smul.u32 2, %s20
        $region67: #{embedding_net_forward.13} parent=50 // pred_fallthru
          _
        // Predicated region
        $region68: #{embedding_net_forward.13} parent=50 // pred_check
          %p1432 = pneg %p135
        $region69: #{embedding_net_forward.13} parent=50 // pred_check_branch
          %1434 = sbr.rel (%p1432) target = $region71
        $region70: #{embedding_net_forward.13} parent=50 // pred_region
          %s1435 = smul.u32 14, %s19
          %s1436 = smul.u32 2, %s20
          %p1437 = scmp.lt.s32.totalorder %s1435, 13
          %s1438 = scalar_select %p1437, %s1435, 13
          %p1439 = scmp.lt.s32.totalorder %s1436, 1
          %s1440 = scalar_select %p1439, %s1436, 1
          %s1441 = smul.addr %s1438, 2
          %s1442 = sadd.s32 %s1440, %s1441
          %s1443 = smul.addr %s1442, 4
          %s1444 = scalar_lea.vmem %s3, %s1443
        $region71: #{embedding_net_forward.13} parent=50 // pred_fallthru
          _
      $region51: #{embedding_net_forward.13} parent=5 // pred_fallthru
        _
      %p1445 = scmp.le.s32.totalorder 2, %s9
      // Predicated region
      $region72: #{embedding_net_forward.13} parent=5 // pred_check
        %p1446 = pneg %p1445
      $region73: #{embedding_net_forward.13} parent=5 // pred_check_branch
        %1448 = sbr.rel (%p1446) target = $region75
      $region74: #{embedding_net_forward.13} parent=5 // pred_region
        %s1449 = ssub.s32 %s9, 2
      $region75: #{embedding_net_forward.13} parent=5 // pred_fallthru
        _
    $region6: #{embedding_net_forward.13} parent=1 // loop_footer
      %s13 = sadd.s32 1, %s9
    $region7: #{embedding_net_forward.13} parent=1 // loop_footer_branch
      %8 = sbr.rel target = $region3
    $region8: #{embedding_net_forward.13} parent=1 // loop_exit
      _

// kernel: embedding_net_forward.15
$region0: #{embedding_net_forward.15}
  #allocation0 [shape = 'u32[]', space=smem, size = 0x4, offset = 0x4, fixed_abs, tag = 'smem constant byte address 0x4 - core index']
  #allocation1 [shape = 'u32[144,128]{1,0:T(1,128)}', space=vmem, size = 0x12000, scoped, tag = 'internal scratch']
  #allocation2 [shape = 'f32[16,256]{1,0:T(8,128)}', space=vmem, size = 0x4000, scoped, tag = 'scratch operand']
  %s0 = inlined_call_operand.vmem [shape: bf16[16,128], index: 0, kind: input, shape index: {}]
  %s1 = inlined_call_operand.vmem [shape: bf16[128,1024], index: 1, kind: input, shape index: {}]
  %s2 = inlined_call_operand.vmem [shape: f32[1,1024], index: 2, kind: input, shape index: {}]
  %s3 = inlined_call_operand.vmem [shape: f32[16,1024], index: 3, kind: output, shape index: {}]
  %s4 = sld [smem:[#allocation0]]
  $region110: #{embedding_net_forward.15} parent=0
    _
  %s6 = ssub.s32 1, %s4
  %s7 = scalar_select 0, %s6, %s4
  $region1: #{embedding_net_forward.15} parent=0
    #allocation3 [shape = 'u8[131072]{0}', space=vmem, size = 0x20000, scoped, tag = 'input window, operand 1']
    #allocation4 [shape = 'u8[32768]{0}', space=vmem, size = 0x8000, scoped, tag = 'output window, operand 0']
    loop: start=0, step=1, limit=6
    $region2: #{embedding_net_forward.15} parent=1 // loop_pre_header
      _
    $region3: #{embedding_net_forward.15} parent=1 // loop_header
      %s9 = sphi 0, %s13
      %p10 = scmp.ge.s32.totalorder %s9, 6
      %s16 = sphi 0, %s35
      %s17 = sphi 0, %s31
      %s18 = sphi 0, %s27
      %s19 = sphi 0, %s16
      %s20 = sphi 0, %s17
      %s21 = sphi 0, %s18
      %s22 = sphi 0, %s19
      %s23 = sphi 0, %s20
      %s24 = sphi 0, %s21
      %s40 = sphi 0, %s42
      %s43 = sphi 0, %s40
      %s44 = sphi 0, %s43
      %s60 = sphi 0, %s44
      %s68 = sphi 0, %s70
      %s71 = sphi 0, %s68
      %s72 = sphi 0, %s71
      %s88 = sphi 0, %s72
      %s94 = sphi 0, %s96
      %s97 = sphi 0, %s94
      %s98 = sphi 0, %s97
      %s114 = sphi 0, %s98
      %s122 = sphi 0, %s124
      %s125 = sphi 0, %s122
      %s126 = sphi 0, %s125
      %s142 = sphi 0, %s126
    $region4: #{embedding_net_forward.15} parent=1 // loop_header_branch
      %12 = sbr.rel (%p10) target = $region8
    $region5: #{embedding_net_forward.15} parent=1 // loop_body
      %s14 = ssub.s32 %s9, 1
      %s15 = ssub.s32 %s9, 2
      %s25 = sadd.s32 1, %s18
      %p26 = scmp.ge.s32.totalorder %s25, 1
      %s27 = scalar_select %p26, 0, %s25
      %s28 = sadd.s32 1, %s17
      %s29 = scalar_select %p26, %s28, %s17
      %p30 = scmp.ge.s32.totalorder %s29, 4
      %s31 = scalar_select %p30, 0, %s29
      %s32 = sadd.s32 1, %s16
      %s33 = scalar_select %p30, %s32, %s16
      %p34 = scmp.ge.s32.totalorder %s33, 1
      %s35 = scalar_select %p34, 0, %s33
      %s36 = ssub.s32 %s16, %s35
      %s37 = ssub.s32 %s18, %s27
      %s38 = sor.u32 %s36, %s37
      %p39 = scmp.eq.s32.totalorder %s38, 0
      %s41 = sadd.s32 %s40, 1
      %s42 = scalar_select %p39, %s40, %s41
      %p45 = pneg %p39
      %p46 = scmp.eq.s32.totalorder %s9, 3
      %p47 = por %p45, %p46
      %p48 = scmp.ne.s32.totalorder %s40, %s43
      %p49 = scmp.eq.s32.totalorder %s9, 0
      %p50 = por %p48, %p49
      %p51 = scmp.ne.s32.totalorder %s40, %s43
      %p52 = scmp.eq.s32.totalorder %s14, 3
      %p53 = por %p51, %p52
      %p54 = scmp.ne.s32.totalorder %s43, %s44
      %p55 = scmp.eq.s32.totalorder %s14, 0
      %p56 = por %p54, %p55
      %p57 = scmp.ne.s32.totalorder %s43, %s44
      %p58 = scmp.eq.s32.totalorder %s15, 3
      %p59 = por %p57, %p58
      %p61 = scmp.ne.s32.totalorder %s44, %s60
      %p62 = scmp.eq.s32.totalorder %s15, 0
      %p63 = por %p61, %p62
      %s64 = ssub.s32 %s18, %s27
      %s65 = ssub.s32 %s17, %s31
      %s66 = sor.u32 %s64, %s65
      %p67 = scmp.eq.s32.totalorder %s66, 0
      %s69 = sadd.s32 %s68, 1
      %s70 = scalar_select %p67, %s68, %s69
      %p73 = pneg %p67
      %p74 = scmp.eq.s32.totalorder %s9, 3
      %p75 = por %p73, %p74
      %p76 = scmp.ne.s32.totalorder %s68, %s71
      %p77 = scmp.eq.s32.totalorder %s9, 0
      %p78 = por %p76, %p77
      %p79 = scmp.ne.s32.totalorder %s68, %s71
      %p80 = scmp.eq.s32.totalorder %s14, 3
      %p81 = por %p79, %p80
      %p82 = scmp.ne.s32.totalorder %s71, %s72
      %p83 = scmp.eq.s32.totalorder %s14, 0
      %p84 = por %p82, %p83
      %p85 = scmp.ne.s32.totalorder %s71, %s72
      %p86 = scmp.eq.s32.totalorder %s15, 3
      %p87 = por %p85, %p86
      %p89 = scmp.ne.s32.totalorder %s72, %s88
      %p90 = scmp.eq.s32.totalorder %s15, 0
      %p91 = por %p89, %p90
      %s92 = ssub.s32 %s17, %s31
      %p93 = scmp.eq.s32.totalorder %s92, 0
      %s95 = sadd.s32 %s94, 1
      %s96 = scalar_select %p93, %s94, %s95
      %p99 = pneg %p93
      %p100 = scmp.eq.s32.totalorder %s9, 3
      %p101 = por %p99, %p100
      %p102 = scmp.ne.s32.totalorder %s94, %s97
      %p103 = scmp.eq.s32.totalorder %s9, 0
      %p104 = por %p102, %p103
      %p105 = scmp.ne.s32.totalorder %s94, %s97
      %p106 = scmp.eq.s32.totalorder %s14, 3
      %p107 = por %p105, %p106
      %p108 = scmp.ne.s32.totalorder %s97, %s98
      %p109 = scmp.eq.s32.totalorder %s14, 0
      %p110 = por %p108, %p109
      %p111 = scmp.ne.s32.totalorder %s97, %s98
      %p112 = scmp.eq.s32.totalorder %s15, 3
      %p113 = por %p111, %p112
      %p115 = scmp.ne.s32.totalorder %s98, %s114
      %p116 = scmp.eq.s32.totalorder %s15, 0
      %p117 = por %p115, %p116
      %s118 = ssub.s32 %s16, %s35
      %s119 = ssub.s32 %s17, %s31
      %s120 = sor.u32 %s118, %s119
      %p121 = scmp.eq.s32.totalorder %s120, 0
      %s123 = sadd.s32 %s122, 1
      %s124 = scalar_select %p121, %s122, %s123
      %p127 = pneg %p121
      %p128 = scmp.eq.s32.totalorder %s9, 3
      %p129 = por %p127, %p128
      %p130 = scmp.ne.s32.totalorder %s122, %s125
      %p131 = scmp.eq.s32.totalorder %s9, 0
      %p132 = por %p130, %p131
      %p133 = scmp.ne.s32.totalorder %s122, %s125
      %p134 = scmp.eq.s32.totalorder %s14, 3
      %p135 = por %p133, %p134
      %p136 = scmp.ne.s32.totalorder %s125, %s126
      %p137 = scmp.eq.s32.totalorder %s14, 0
      %p138 = por %p136, %p137
      %p139 = scmp.ne.s32.totalorder %s125, %s126
      %p140 = scmp.eq.s32.totalorder %s15, 3
      %p141 = por %p139, %p140
      %p143 = scmp.ne.s32.totalorder %s126, %s142
      %p144 = scmp.eq.s32.totalorder %s15, 0
      %p145 = por %p143, %p144
      %p146 = scmp.le.s32.totalorder 1, %s9
      %p147 = scmp.lt.s32.totalorder %s9, 5
      %p148 = pnand %p146, %p147
      %p149 = pneg %p148
      // Predicated region
      $region9: #{embedding_net_forward.15} parent=5 // pred_check
        _
      $region10: #{embedding_net_forward.15} parent=5 // pred_check_branch
        %151 = sbr.rel (%p148) target = $region12
      $region11: #{embedding_net_forward.15} parent=5 // pred_region
        %s152 = ssub.s32 %s9, 1
        // Predicated region
        $region13: #{embedding_net_forward.15} parent=11 // pred_check
          %p153 = pneg %p56
        $region14: #{embedding_net_forward.15} parent=11 // pred_check_branch
          %155 = sbr.rel (%p153) target = $region16
        $region15: #{embedding_net_forward.15} parent=11 // pred_region
          %s156 = smul.u32 2, %s19
          %p157 = scmp.lt.s32.totalorder %s156, 1
          %s158 = scalar_select %p157, %s156, 1
          %p159 = scmp.lt.s32.totalorder %s21, 0
          %s160 = scalar_select %p159, %s21, 0
          %s161 = sadd.s32 %s160, %s158
          %s162 = smul.addr %s161, 4
          %s163 = scalar_lea.vmem %s0, %s162
          %s164 = smul.u32 2, %s19
        $region16: #{embedding_net_forward.15} parent=11 // pred_fallthru
          _
      $region12: #{embedding_net_forward.15} parent=5 // pred_fallthru
        _
      %p165 = scmp.lt.s32.totalorder %s9, 4
      // Predicated region
      $region17: #{embedding_net_forward.15} parent=5 // pred_check
        %p166 = pneg %p165
      $region18: #{embedding_net_forward.15} parent=5 // pred_check_branch
        %168 = sbr.rel (%p166) target = $region20
      $region19: #{embedding_net_forward.15} parent=5 // pred_region
        // Predicated region
        $region21: #{embedding_net_forward.15} parent=19 // pred_check
          %p169 = pneg %p78
        $region22: #{embedding_net_forward.15} parent=19 // pred_check_branch
          %171 = sbr.rel (%p169) target = $region24
        $region23: #{embedding_net_forward.15} parent=19 // pred_region
          %s172 = sand.u32 %s68, 1
          %s173 = sand.u32 %s68, 1
          %s174 = smul.addr %s173, 128
          %s175 = scalar_lea.vmem [#allocation3], %s174
          %s176 = smul.u32 16, %s18
          %s177 = smul.u32 2, %s17
          %s178 = smul.addr %s176, 8
          %s179 = sadd.s32 %s177, %s178
          %s180 = smul.addr %s179, 4
          %s181 = scalar_lea.vmem %s1, %s180
          // Predicated region
          $region25: #{embedding_net_forward.15} parent=23 // pred_check
            _
          $region26: #{embedding_net_forward.15} parent=23 // pred_check_branch
            %183 = sbr.rel (0) target = $region28
          $region27: #{embedding_net_forward.15} parent=23 // pred_region
            // Predicated region
            $region29: #{embedding_net_forward.15} parent=27 // pred_check
              _
            $region30: #{embedding_net_forward.15} parent=27 // pred_check_branch
              %185 = sbr.rel (0) target = $region32
            $region31: #{embedding_net_forward.15} parent=27 // pred_region
              // Predicated region
              $region44: #{embedding_net_forward.15} parent=31 // pred_check
                _
              $region45: #{embedding_net_forward.15} parent=31 // pred_check_branch
                %230 = sbr.rel (0) target = $region47
              $region46: #{embedding_net_forward.15} parent=31 // pred_region
                loop: start=0, step=1, limit=1
                $region48: #{embedding_net_forward.15} parent=46 // loop_pre_header
                  _
                $region49: #{embedding_net_forward.15} parent=46 // loop_header
                  %s232 = sphi 0, %s236
                  %p233 = scmp.ge.s32.totalorder %s232, 1
                  %s237 = sphi %s181, %s181
                  %s238 = sphi %s175, %s175
                $region50: #{embedding_net_forward.15} parent=46 // loop_header_branch
                  %235 = sbr.rel (%p233) target = $region54
                $region51: #{embedding_net_forward.15} parent=46 // loop_body
                  %v239 = vld [vmem:[%s237] sm:$0xff]
                  %240 = vst [vmem:[%s238] sm:$0xff] %v239
                  %v241 = vld [vmem:[%s237 + $0x20] sm:$0xff]
                  %242 = vst [vmem:[%s238 + $0x8] sm:$0xff] %v241
                  %v243 = vld [vmem:[%s237 + $0x40] sm:$0xff]
                  %244 = vst [vmem:[%s238 + $0x10] sm:$0xff] %v243
                  %v245 = vld [vmem:[%s237 + $0x60] sm:$0xff]
                  %246 = vst [vmem:[%s238 + $0x18] sm:$0xff] %v245
                  %v247 = vld [vmem:[%s237 + $0x80] sm:$0xff]
                  %248 = vst [vmem:[%s238 + $0x20] sm:$0xff] %v247
                  %v249 = vld [vmem:[%s237 + $0xa0] sm:$0xff]
                  %250 = vst [vmem:[%s238 + $0x28] sm:$0xff] %v249
                  %v251 = vld [vmem:[%s237 + $0xc0] sm:$0xff]
                  %252 = vst [vmem:[%s238 + $0x30] sm:$0xff] %v251
                  %v253 = vld [vmem:[%s237 + $0xe0] sm:$0xff]
                  %254 = vst [vmem:[%s238 + $0x38] sm:$0xff] %v253
                  %v255 = vld [vmem:[%s237 + $0x100] sm:$0xff]
                  %256 = vst [vmem:[%s238 + $0x40] sm:$0xff] %v255
                  %v257 = vld [vmem:[%s237 + $0x120] sm:$0xff]
                  %258 = vst [vmem:[%s238 + $0x48] sm:$0xff] %v257
                  %v259 = vld [vmem:[%s237 + $0x140] sm:$0xff]
                  %260 = vst [vmem:[%s238 + $0x50] sm:$0xff] %v259
                  %v261 = vld [vmem:[%s237 + $0x160] sm:$0xff]
                  %262 = vst [vmem:[%s238 + $0x58] sm:$0xff] %v261
                  %v263 = vld [vmem:[%s237 + $0x180] sm:$0xff]
                  %264 = vst [vmem:[%s238 + $0x60] sm:$0xff] %v263
                  %v265 = vld [vmem:[%s237 + $0x1a0] sm:$0xff]
                  %266 = vst [vmem:[%s238 + $0x68] sm:$0xff] %v265
                  %v267 = vld [vmem:[%s237 + $0x1c0] sm:$0xff]
                  %268 = vst [vmem:[%s238 + $0x70] sm:$0xff] %v267
                  %v269 = vld [vmem:[%s237 + $0x1e0] sm:$0xff]
                  %270 = vst [vmem:[%s238 + $0x78] sm:$0xff] %v269
                $region52: #{embedding_net_forward.15} parent=46 // loop_footer
                  %s236 = sadd.s32 1, %s232
                $region53: #{embedding_net_forward.15} parent=46 // loop_footer_branch
                  %231 = sbr.rel target = $region49
                $region54: #{embedding_net_forward.15} parent=46 // loop_exit
                  _
              $region47: #{embedding_net_forward.15} parent=31 // pred_fallthru
                _
              // Predicated region
              $region55: #{embedding_net_forward.15} parent=31 // pred_check
                _
              $region56: #{embedding_net_forward.15} parent=31 // pred_check_branch
                %272 = sbr.rel target = $region58
              $region57: #{embedding_net_forward.15} parent=31 // pred_region
                _
              $region58: #{embedding_net_forward.15} parent=31 // pred_fallthru
                _
            $region32: #{embedding_net_forward.15} parent=27 // pred_fallthru
              _
            // Predicated region
            $region33: #{embedding_net_forward.15} parent=27 // pred_check
              _
            $region34: #{embedding_net_forward.15} parent=27 // pred_check_branch
              %187 = sbr.rel target = $region36
            $region35: #{embedding_net_forward.15} parent=27 // pred_region
              loop: start=0, step=1, limit=1
              $region37: #{embedding_net_forward.15} parent=35 // loop_pre_header
                _
              $region38: #{embedding_net_forward.15} parent=35 // loop_header
                %s190 = sphi 0, %s194
                %p191 = scmp.ge.s32.totalorder %s190, 1
                %s195 = sphi %s181, %s181
                %s196 = sphi %s175, %s175
              $region39: #{embedding_net_forward.15} parent=35 // loop_header_branch
                %193 = sbr.rel (%p191) target = $region43
              $region40: #{embedding_net_forward.15} parent=35 // loop_body
                %v197 = vld [vmem:[%s195] sm:$0xff]
                %198 = vst [vmem:[%s196] sm:$0xff] %v197
                %v199 = vld [vmem:[%s195 + $0x20] sm:$0xff]
                %200 = vst [vmem:[%s196 + $0x8] sm:$0xff] %v199
                %v201 = vld [vmem:[%s195 + $0x40] sm:$0xff]
                %202 = vst [vmem:[%s196 + $0x10] sm:$0xff] %v201
                %v203 = vld [vmem:[%s195 + $0x60] sm:$0xff]
                %204 = vst [vmem:[%s196 + $0x18] sm:$0xff] %v203
                %v205 = vld [vmem:[%s195 + $0x80] sm:$0xff]
                %206 = vst [vmem:[%s196 + $0x20] sm:$0xff] %v205
                %v207 = vld [vmem:[%s195 + $0xa0] sm:$0xff]
                %208 = vst [vmem:[%s196 + $0x28] sm:$0xff] %v207
                %v209 = vld [vmem:[%s195 + $0xc0] sm:$0xff]
                %210 = vst [vmem:[%s196 + $0x30] sm:$0xff] %v209
                %v211 = vld [vmem:[%s195 + $0xe0] sm:$0xff]
                %212 = vst [vmem:[%s196 + $0x38] sm:$0xff] %v211
                %v213 = vld [vmem:[%s195 + $0x100] sm:$0xff]
                %214 = vst [vmem:[%s196 + $0x40] sm:$0xff] %v213
                %v215 = vld [vmem:[%s195 + $0x120] sm:$0xff]
                %216 = vst [vmem:[%s196 + $0x48] sm:$0xff] %v215
                %v217 = vld [vmem:[%s195 + $0x140] sm:$0xff]
                %218 = vst [vmem:[%s196 + $0x50] sm:$0xff] %v217
                %v219 = vld [vmem:[%s195 + $0x160] sm:$0xff]
                %220 = vst [vmem:[%s196 + $0x58] sm:$0xff] %v219
                %v221 = vld [vmem:[%s195 + $0x180] sm:$0xff]
                %222 = vst [vmem:[%s196 + $0x60] sm:$0xff] %v221
                %v223 = vld [vmem:[%s195 + $0x1a0] sm:$0xff]
                %224 = vst [vmem:[%s196 + $0x68] sm:$0xff] %v223
                %v225 = vld [vmem:[%s195 + $0x1c0] sm:$0xff]
                %226 = vst [vmem:[%s196 + $0x70] sm:$0xff] %v225
                %v227 = vld [vmem:[%s195 + $0x1e0] sm:$0xff]
                %228 = vst [vmem:[%s196 + $0x78] sm:$0xff] %v227
              $region41: #{embedding_net_forward.15} parent=35 // loop_footer
                %s194 = sadd.s32 1, %s190
              $region42: #{embedding_net_forward.15} parent=35 // loop_footer_branch
                %189 = sbr.rel target = $region38
              $region43: #{embedding_net_forward.15} parent=35 // loop_exit
                _
            $region36: #{embedding_net_forward.15} parent=27 // pred_fallthru
              _
          $region28: #{embedding_net_forward.15} parent=23 // pred_fallthru
            _
          %273 = vnop
        $region24: #{embedding_net_forward.15} parent=19 // pred_fallthru
          _
        // Predicated region
        $region59: #{embedding_net_forward.15} parent=19 // pred_check
          %p274 = pneg %p104
        $region60: #{embedding_net_forward.15} parent=19 // pred_check_branch
          %276 = sbr.rel (%p274) target = $region62
        $region61: #{embedding_net_forward.15} parent=19 // pred_region
          %s277 = smul.u32 2, %s17
          %p278 = scmp.lt.s32.totalorder %s277, 7
          %s279 = scalar_select %p278, %s277, 7
          %s280 = scalar_lea.vmem %s2, %s279
          %s281 = smul.u32 2, %s17
        $region62: #{embedding_net_forward.15} parent=19 // pred_fallthru
          _
      $region20: #{embedding_net_forward.15} parent=5 // pred_fallthru
        _
      %p282 = scmp.le.s32.totalorder 1, %s9
      %p283 = scmp.lt.s32.totalorder %s9, 5
      %p284 = pnand %p282, %p283
      %p285 = pneg %p284
      // Predicated region
      $region63: #{embedding_net_forward.15} parent=5 // pred_check
        _
      $region64: #{embedding_net_forward.15} parent=5 // pred_check_branch
        %287 = sbr.rel (%p284) target = $region66
      $region65: #{embedding_net_forward.15} parent=5 // pred_region
        %s288 = ssub.s32 %s9, 1
        %s289 = sand.u32 %s71, 1
        %s290 = sand.u32 %s71, 1
        %s291 = smul.addr %s290, 128
        %s292 = scalar_lea.vmem [#allocation3], %s291
        // Predicated region
        $region67: #{embedding_net_forward.15} parent=65 // pred_check
          %p293 = pneg %p84
        $region68: #{embedding_net_forward.15} parent=65 // pred_check_branch
          %295 = sbr.rel (%p293) target = $region70
        $region69: #{embedding_net_forward.15} parent=65 // pred_region
          _
        $region70: #{embedding_net_forward.15} parent=65 // pred_fallthru
          _
        %s296 = smul.u32 2, %s19
        %p297 = scmp.lt.s32.totalorder %s296, 1
        %s298 = scalar_select %p297, %s296, 1
        %p299 = scmp.lt.s32.totalorder %s21, 0
        %s300 = scalar_select %p299, %s21, 0
        %s301 = sadd.s32 %s300, %s298
        %s302 = smul.addr %s301, 4
        %s303 = scalar_lea.vmem %s0, %s302
        %p304 = pneg %p56
        %p305 = pneg %p53
        %s306 = sand.u32 %s71, 1
        %s307 = sand.u32 %s71, 1
        %s308 = smul.addr %s307, 128
        %s309 = scalar_lea.vmem [#allocation3], %s308
        %p310 = pneg %p84
        %p311 = pneg %p81
        %s312 = smul.u32 2, %s20
        %p313 = scmp.lt.s32.totalorder %s312, 7
        %s314 = scalar_select %p313, %s312, 7
        %s315 = scalar_lea.vmem %s2, %s314
        %p316 = pneg %p110
        %p317 = pneg %p107
        %p318 = pneg %p138
        %p319 = pneg %p135
        %s320 = sand.u32 %s125, 1
        %s321 = sand.u32 %s125, 1
        %s322 = smul.addr %s321, 32
        %s323 = scalar_lea.vmem [#allocation4], %s322
        %s324 = smul.u32 2, %s19
        %p325 = scmp.lt.s32.totalorder %s324, 1
        %s326 = scalar_select %p325, %s324, 1
        %p327 = scmp.lt.s32.totalorder %s21, 0
        %s328 = scalar_select %p327, %s21, 0
        %s329 = sadd.s32 %s328, %s326
        %s330 = smul.addr %s329, 4
        %s331 = scalar_lea.vmem %s0, %s330
        %s332 = smul.u32 2, %s19
        %s333 = smul.u32 16, %s21
        %s334 = smul.u32 2, %s20
        %s335 = smul.u32 2, %s20
        %p336 = scmp.lt.s32.totalorder %s335, 7
        %s337 = scalar_select %p336, %s335, 7
        %s338 = scalar_lea.vmem %s2, %s337
        %s339 = smul.u32 2, %s20
        %s340 = smul.u32 2, %s19
        %s341 = smul.u32 2, %s20
        %p343 = scmp.eq.s32.totalorder %s21, 0
        // Predicated region
        $region71: #{embedding_net_forward.15} parent=65 // pred_check
          %p344 = pneg %p343
        $region72: #{embedding_net_forward.15} parent=65 // pred_check_branch
          %346 = sbr.rel (%p344) target = $region74
        $region73: #{embedding_net_forward.15} parent=65 // pred_region
          %347 = vst [vmem:[#allocation2] sm:$0xff] 0.0
          %348 = vst [vmem:[#allocation2 + $0x8] sm:$0xff] 0.0
          %349 = vst [vmem:[#allocation2 + $0x10] sm:$0xff] 0.0
          %350 = vst [vmem:[#allocation2 + $0x18] sm:$0xff] 0.0
        $region74: #{embedding_net_forward.15} parent=65 // pred_fallthru
          _
        %v351 = vld [vmem:[#allocation2] sm:$0xff]
        %v352 = vld [vmem:[#allocation2 + $0x8] sm:$0xff]
        %v353 = vld [vmem:[#allocation2 + $0x10] sm:$0xff]
        %v354 = vld [vmem:[#allocation2 + $0x18] sm:$0xff]
        %v355 = vld [vmem:[%s331] sm:$0xf]
        %v356 = vld [vmem:[%s331 + $0x4] sm:$0xf]
        %v357 = vld [vmem:[%s292] sm:$0xff]
        %v358 = vld [vmem:[%s292 + $0x8] sm:$0xff]
        %v359 = vld [vmem:[%s292 + $0x10] sm:$0xff]
        %v360 = vld [vmem:[%s292 + $0x18] sm:$0xff]
        %v361 = vld [vmem:[%s292 + $0x20] sm:$0xff]
        %v362 = vld [vmem:[%s292 + $0x28] sm:$0xff]
        %v363 = vld [vmem:[%s292 + $0x30] sm:$0xff]
        %v364 = vld [vmem:[%s292 + $0x38] sm:$0xff]
        %v365 = vld [vmem:[%s292 + $0x40] sm:$0xff]
        %v366 = vld [vmem:[%s292 + $0x48] sm:$0xff]
        %v367 = vld [vmem:[%s292 + $0x50] sm:$0xff]
        %v368 = vld [vmem:[%s292 + $0x58] sm:$0xff]
        %v369 = vld [vmem:[%s292 + $0x60] sm:$0xff]
        %v370 = vld [vmem:[%s292 + $0x68] sm:$0xff]
        %v371 = vld [vmem:[%s292 + $0x70] sm:$0xff]
        %v372 = vld [vmem:[%s292 + $0x78] sm:$0xff]
        %v375 = vunpack.c.l.b16 %v355
        %v376 = vunpack.c.l.b16 %v356
        %v377 = vpack.c.b16 %v376, %v375
        %v395 = vunpack.c.l.b16 %v357
        %v396 = vunpack.c.h.b16 %v357
        %v397 = vunpack.c.l.b16 %v358
        %v398 = vunpack.c.h.b16 %v358
        %v399 = vunpack.c.l.b16 %v359
        %v400 = vunpack.c.h.b16 %v359
        %v401 = vunpack.c.l.b16 %v360
        %v402 = vunpack.c.h.b16 %v360
        %v403 = vunpack.c.l.b16 %v361
        %v404 = vunpack.c.h.b16 %v361
        %v405 = vunpack.c.l.b16 %v362
        %v406 = vunpack.c.h.b16 %v362
        %v407 = vunpack.c.l.b16 %v363
        %v408 = vunpack.c.h.b16 %v363
        %v409 = vunpack.c.l.b16 %v364
        %v410 = vunpack.c.h.b16 %v364
        %v411 = vunpack.c.l.b16 %v365
        %v412 = vunpack.c.h.b16 %v365
        %v413 = vunpack.c.l.b16 %v366
        %v414 = vunpack.c.h.b16 %v366
        %v415 = vunpack.c.l.b16 %v367
        %v416 = vunpack.c.h.b16 %v367
        %v417 = vunpack.c.l.b16 %v368
        %v418 = vunpack.c.h.b16 %v368
        %v419 = vunpack.c.l.b16 %v369
        %v420 = vunpack.c.h.b16 %v369
        %v421 = vunpack.c.l.b16 %v370
        %v422 = vunpack.c.h.b16 %v370
        %v423 = vunpack.c.l.b16 %v371
        %v424 = vunpack.c.h.b16 %v371
        %v425 = vunpack.c.l.b16 %v372
        %v426 = vunpack.c.h.b16 %v372
        %v427 = vpack.c.b16 %v397, %v395
        %v428 = vpack.c.b16 %v398, %v396
        %v429 = vpack.c.b16 %v401, %v399
        %v430 = vpack.c.b16 %v402, %v400
        %v431 = vpack.c.b16 %v405, %v403
        %v432 = vpack.c.b16 %v406, %v404
        %v433 = vpack.c.b16 %v409, %v407
        %v434 = vpack.c.b16 %v410, %v408
        %v435 = vpack.c.b16 %v413, %v411
        %v436 = vpack.c.b16 %v414, %v412
        %v437 = vpack.c.b16 %v417, %v415
        %v438 = vpack.c.b16 %v418, %v416
        %v439 = vpack.c.b16 %v421, %v419
        %v440 = vpack.c.b16 %v422, %v420
        %v441 = vpack.c.b16 %v425, %v423
        %v442 = vpack.c.b16 %v426, %v424
        %459 = vmatprep.subr.bf16.mxu0 %v428
        %460 = vmatpush1.bf16.msra.mxu0 %v427
        %461 = vmatprep.subr.bf16.mxu0 %v430
        %462 = vmatpush1.bf16.msra.mxu0 %v429
        %463 = vmatprep.subr.bf16.mxu0 %v432
        %464 = vmatpush1.bf16.msra.mxu0 %v431
        %465 = vmatprep.subr.bf16.mxu0 %v434
        %466 = vmatpush1.bf16.msra.mxu0 %v433
        %467 = vmatprep.subr.bf16.mxu0 %v436
        %468 = vmatpush1.bf16.msra.mxu0 %v435
        %469 = vmatprep.subr.bf16.mxu0 %v438
        %470 = vmatpush1.bf16.msra.mxu0 %v437
        %471 = vmatprep.subr.bf16.mxu0 %v440
        %472 = vmatpush1.bf16.msra.mxu0 %v439
        %473 = vmatprep.subr.bf16.mxu0 %v442
        %474 = vmatpush1.bf16.msra.mxu0 %v441
        %475 = vmatprep.subr.bf16.mxu0 0
        %476 = vmatpush1.bf16.msra.mxu0 0
        %477 = vmatprep.subr.bf16.mxu0 0
        %478 = vmatpush1.bf16.msra.mxu0 0
        %479 = vmatprep.subr.bf16.mxu0 0
        %480 = vmatpush1.bf16.msra.mxu0 0
        %481 = vmatprep.subr.bf16.mxu0 0
        %482 = vmatpush1.bf16.msra.mxu0 0
        %483 = vmatprep.subr.bf16.mxu0 0
        %484 = vmatpush1.bf16.msra.mxu0 0
        %485 = vmatprep.subr.bf16.mxu0 0
        %486 = vmatpush1.bf16.msra.mxu0 0
        %487 = vmatprep.subr.bf16.mxu0 0
        %488 = vmatpush1.bf16.msra.mxu0 0
        %489 = vmatprep.subr.bf16.mxu0 0
        %490 = vmatpush1.bf16.msra.mxu0 0
        %491 = vmatprep.mubr.bf16.mxu0 0
        %492 = vmatmul.mubr.bf16.gmra.mrb[0].mxu0 %v377
        %v493 = vpop.f32.mrb[0].mxu0
        %v494 = vadd.f32 0.0, %v493
        %v495 = vpop.f32.mrb[0].mxu0
        %v496 = vadd.f32 0.0, %v495
        %v497 = vpop.f32.mrb[0].mxu0
        %v498 = vadd.f32 0.0, %v497
        %v499 = vpop.f32.mrb[0].mxu0
        %v500 = vadd.f32 0.0, %v499
        %501 = vdwg.mxu0
        %v502 = vadd.f32 %v351, %v494
        %v503 = vadd.f32 %v352, %v496
        %v504 = vadd.f32 %v353, %v498
        %v505 = vadd.f32 %v354, %v500
        %506 = vst [vmem:[#allocation2] sm:$0xff] %v502
        %507 = vst [vmem:[#allocation2 + $0x8] sm:$0xff] %v503
        %508 = vst [vmem:[#allocation2 + $0x10] sm:$0xff] %v504
        %509 = vst [vmem:[#allocation2 + $0x18] sm:$0xff] %v505
        // Predicated region
        $region75: #{embedding_net_forward.15} parent=65 // pred_check
          %p510 = pneg %p343
        $region76: #{embedding_net_forward.15} parent=65 // pred_check_branch
          %512 = sbr.rel (%p510) target = $region78
        $region77: #{embedding_net_forward.15} parent=65 // pred_region
          %v513 = vld [vmem:[#allocation2] sm:$0xff]
          %v514 = vld [vmem:[#allocation2 + $0x8] sm:$0xff]
          %v515 = vld [vmem:[#allocation2 + $0x10] sm:$0xff]
          %v516 = vld [vmem:[#allocation2 + $0x18] sm:$0xff]
          %v517 = vld [vmem:[%s338] sm:$0x3]
          %v519 = vlaneseq
          %v520 = vshrl.u32 %v519, 7
          %v521 = vsub.s32 0, %v520
          %v522 = vrot.slane %v517, %v521
          %v523 = vlaneseq
          %v524 = vshrl.u32 %v523, 7
          %v525 = vsub.s32 1, %v524
          %v526 = vrot.slane %v517, %v525
          %v529 = vadd.f32 %v513, %v522
          %v530 = vadd.f32 %v514, %v526
          %v531 = vadd.f32 %v515, %v522
          %v532 = vadd.f32 %v516, %v526
          %533 = vst [vmem:[%s323] sm:$0xff] %v529
          %534 = vst [vmem:[%s323 + $0x8] sm:$0xff] %v530
          %535 = vst [vmem:[%s323 + $0x10] sm:$0xff] %v531
          %536 = vst [vmem:[%s323 + $0x18] sm:$0xff] %v532
        $region78: #{embedding_net_forward.15} parent=65 // pred_fallthru
          _
        %s537 = sand.u32 %s125, 1
        %s538 = sand.u32 %s125, 1
        %s539 = smul.addr %s538, 32
        %s540 = scalar_lea.vmem [#allocation4], %s539
        // Predicated region
        $region79: #{embedding_net_forward.15} parent=65 // pred_check
          %p541 = pneg %p135
        $region80: #{embedding_net_forward.15} parent=65 // pred_check_branch
          %543 = sbr.rel (%p541) target = $region82
        $region81: #{embedding_net_forward.15} parent=65 // pred_region
          %s544 = smul.u32 2, %s19
          %s545 = smul.u32 2, %s20
          %s546 = smul.addr %s544, 8
          %s547 = sadd.s32 %s545, %s546
          %s548 = smul.addr %s547, 8
          %s549 = scalar_lea.vmem %s3, %s548
          // Predicated region
          $region83: #{embedding_net_forward.15} parent=81 // pred_check
            _
          $region84: #{embedding_net_forward.15} parent=81 // pred_check_branch
            %551 = sbr.rel (0) target = $region86
          $region85: #{embedding_net_forward.15} parent=81 // pred_region
            // Predicated region
            $region87: #{embedding_net_forward.15} parent=85 // pred_check
              _
            $region88: #{embedding_net_forward.15} parent=85 // pred_check_branch
              %553 = sbr.rel (0) target = $region90
            $region89: #{embedding_net_forward.15} parent=85 // pred_region
              loop: start=0, step=1, limit=1
              $region91: #{embedding_net_forward.15} parent=89 // loop_pre_header
                _
              $region92: #{embedding_net_forward.15} parent=89 // loop_header
                %s555 = sphi 0, %s559
                %p556 = scmp.ge.s32.totalorder %s555, 1
                %s560 = sphi %s540, %s540
                %s561 = sphi %s549, %s549
              $region93: #{embedding_net_forward.15} parent=89 // loop_header_branch
                %558 = sbr.rel (%p556) target = $region97
              $region94: #{embedding_net_forward.15} parent=89 // loop_body
                %v562 = vld [vmem:[%s560] sm:$0xff]
                %563 = vst [vmem:[%s561] sm:$0xff] %v562
                %v564 = vld [vmem:[%s560 + $0x8] sm:$0xff]
                %565 = vst [vmem:[%s561 + $0x8] sm:$0xff] %v564
                %v566 = vld [vmem:[%s560 + $0x10] sm:$0xff]
                %567 = vst [vmem:[%s561 + $0x40] sm:$0xff] %v566
                %v568 = vld [vmem:[%s560 + $0x18] sm:$0xff]
                %569 = vst [vmem:[%s561 + $0x48] sm:$0xff] %v568
              $region95: #{embedding_net_forward.15} parent=89 // loop_footer
                %s559 = sadd.s32 1, %s555
              $region96: #{embedding_net_forward.15} parent=89 // loop_footer_branch
                %554 = sbr.rel target = $region92
              $region97: #{embedding_net_forward.15} parent=89 // loop_exit
                _
            $region90: #{embedding_net_forward.15} parent=85 // pred_fallthru
              _
            // Predicated region
            $region98: #{embedding_net_forward.15} parent=85 // pred_check
              _
            $region99: #{embedding_net_forward.15} parent=85 // pred_check_branch
              %571 = sbr.rel target = $region101
            $region100: #{embedding_net_forward.15} parent=85 // pred_region
              _
            $region101: #{embedding_net_forward.15} parent=85 // pred_fallthru
              _
          $region86: #{embedding_net_forward.15} parent=81 // pred_fallthru
            _
          %572 = vnop
        $region82: #{embedding_net_forward.15} parent=65 // pred_fallthru
          _
      $region66: #{embedding_net_forward.15} parent=5 // pred_fallthru
        _
      %p573 = scmp.le.s32.totalorder 2, %s9
      // Predicated region
      $region102: #{embedding_net_forward.15} parent=5 // pred_check
        %p574 = pneg %p573
      $region103: #{embedding_net_forward.15} parent=5 // pred_check_branch
        %576 = sbr.rel (%p574) target = $region105
      $region104: #{embedding_net_forward.15} parent=5 // pred_region
        %s577 = ssub.s32 %s9, 2
        // Predicated region
        $region106: #{embedding_net_forward.15} parent=104 // pred_check
          %p578 = pneg %p141
        $region107: #{embedding_net_forward.15} parent=104 // pred_check_branch
          %580 = sbr.rel (%p578) target = $region109
        $region108: #{embedding_net_forward.15} parent=104 // pred_region
          %s581 = sand.u32 %s126, 1
          %s582 = sand.u32 %s126, 1
          %s583 = smul.addr %s582, 32
          %s584 = scalar_lea.vmem [#allocation4], %s583
        $region109: #{embedding_net_forward.15} parent=104 // pred_fallthru
          _
      $region105: #{embedding_net_forward.15} parent=5 // pred_fallthru
        _
    $region6: #{embedding_net_forward.15} parent=1 // loop_footer
      %s13 = sadd.s32 1, %s9
    $region7: #{embedding_net_forward.15} parent=1 // loop_footer_branch
      %8 = sbr.rel target = $region3
    $region8: #{embedding_net_forward.15} parent=1 // loop_exit
      _

// kernel: embedding_net_forward.17
$region0: #{embedding_net_forward.17}
  #allocation0 [shape = 'u32[]', space=smem, size = 0x4, offset = 0x4, fixed_abs, tag = 'smem constant byte address 0x4 - core index']
  #allocation1 [shape = 'u32[144,128]{1,0:T(1,128)}', space=vmem, size = 0x12000, scoped, tag = 'internal scratch']
  #allocation2 [shape = 'f32[16,256]{1,0:T(8,128)}', space=vmem, size = 0x4000, scoped, tag = 'scratch operand']
  %s0 = inlined_call_operand.vmem [shape: bf16[16,256], index: 0, kind: input, shape index: {}]
  %s1 = inlined_call_operand.vmem [shape: bf16[256,1024], index: 1, kind: input, shape index: {}]
  %s2 = inlined_call_operand.vmem [shape: f32[1,1024], index: 2, kind: input, shape index: {}]
  %s3 = inlined_call_operand.vmem [shape: f32[16,1024], index: 3, kind: output, shape index: {}]
  %s4 = sld [smem:[#allocation0]]
  $region110: #{embedding_net_forward.17} parent=0
    _
  %s6 = ssub.s32 1, %s4
  %s7 = scalar_select 0, %s6, %s4
  $region1: #{embedding_net_forward.17} parent=0
    #allocation3 [shape = 'u8[262144]{0}', space=vmem, size = 0x40000, scoped, tag = 'input window, operand 1']
    #allocation4 [shape = 'u8[32768]{0}', space=vmem, size = 0x8000, scoped, tag = 'output window, operand 0']
    loop: start=0, step=1, limit=6
    $region2: #{embedding_net_forward.17} parent=1 // loop_pre_header
      _
    $region3: #{embedding_net_forward.17} parent=1 // loop_header
      %s9 = sphi 0, %s13
      %p10 = scmp.ge.s32.totalorder %s9, 6
      %s16 = sphi 0, %s35
      %s17 = sphi 0, %s31
      %s18 = sphi 0, %s27
      %s19 = sphi 0, %s16
      %s20 = sphi 0, %s17
      %s21 = sphi 0, %s18
      %s22 = sphi 0, %s19
      %s23 = sphi 0, %s20
      %s24 = sphi 0, %s21
      %s40 = sphi 0, %s42
      %s43 = sphi 0, %s40
      %s44 = sphi 0, %s43
      %s60 = sphi 0, %s44
      %s68 = sphi 0, %s70
      %s71 = sphi 0, %s68
      %s72 = sphi 0, %s71
      %s88 = sphi 0, %s72
      %s94 = sphi 0, %s96
      %s97 = sphi 0, %s94
      %s98 = sphi 0, %s97
      %s114 = sphi 0, %s98
      %s122 = sphi 0, %s124
      %s125 = sphi 0, %s122
      %s126 = sphi 0, %s125
      %s142 = sphi 0, %s126
    $region4: #{embedding_net_forward.17} parent=1 // loop_header_branch
      %12 = sbr.rel (%p10) target = $region8
    $region5: #{embedding_net_forward.17} parent=1 // loop_body
      %s14 = ssub.s32 %s9, 1
      %s15 = ssub.s32 %s9, 2
      %s25 = sadd.s32 1, %s18
      %p26 = scmp.ge.s32.totalorder %s25, 1
      %s27 = scalar_select %p26, 0, %s25
      %s28 = sadd.s32 1, %s17
      %s29 = scalar_select %p26, %s28, %s17
      %p30 = scmp.ge.s32.totalorder %s29, 4
      %s31 = scalar_select %p30, 0, %s29
      %s32 = sadd.s32 1, %s16
      %s33 = scalar_select %p30, %s32, %s16
      %p34 = scmp.ge.s32.totalorder %s33, 1
      %s35 = scalar_select %p34, 0, %s33
      %s36 = ssub.s32 %s16, %s35
      %s37 = ssub.s32 %s18, %s27
      %s38 = sor.u32 %s36, %s37
      %p39 = scmp.eq.s32.totalorder %s38, 0
      %s41 = sadd.s32 %s40, 1
      %s42 = scalar_select %p39, %s40, %s41
      %p45 = pneg %p39
      %p46 = scmp.eq.s32.totalorder %s9, 3
      %p47 = por %p45, %p46
      %p48 = scmp.ne.s32.totalorder %s40, %s43
      %p49 = scmp.eq.s32.totalorder %s9, 0
      %p50 = por %p48, %p49
      %p51 = scmp.ne.s32.totalorder %s40, %s43
      %p52 = scmp.eq.s32.totalorder %s14, 3
      %p53 = por %p51, %p52
      %p54 = scmp.ne.s32.totalorder %s43, %s44
      %p55 = scmp.eq.s32.totalorder %s14, 0
      %p56 = por %p54, %p55
      %p57 = scmp.ne.s32.totalorder %s43, %s44
      %p58 = scmp.eq.s32.totalorder %s15, 3
      %p59 = por %p57, %p58
      %p61 = scmp.ne.s32.totalorder %s44, %s60
      %p62 = scmp.eq.s32.totalorder %s15, 0
      %p63 = por %p61, %p62
      %s64 = ssub.s32 %s18, %s27
      %s65 = ssub.s32 %s17, %s31
      %s66 = sor.u32 %s64, %s65
      %p67 = scmp.eq.s32.totalorder %s66, 0
      %s69 = sadd.s32 %s68, 1
      %s70 = scalar_select %p67, %s68, %s69
      %p73 = pneg %p67
      %p74 = scmp.eq.s32.totalorder %s9, 3
      %p75 = por %p73, %p74
      %p76 = scmp.ne.s32.totalorder %s68, %s71
      %p77 = scmp.eq.s32.totalorder %s9, 0
      %p78 = por %p76, %p77
      %p79 = scmp.ne.s32.totalorder %s68, %s71
      %p80 = scmp.eq.s32.totalorder %s14, 3
      %p81 = por %p79, %p80
      %p82 = scmp.ne.s32.totalorder %s71, %s72
      %p83 = scmp.eq.s32.totalorder %s14, 0
      %p84 = por %p82, %p83
      %p85 = scmp.ne.s32.totalorder %s71, %s72
      %p86 = scmp.eq.s32.totalorder %s15, 3
      %p87 = por %p85, %p86
      %p89 = scmp.ne.s32.totalorder %s72, %s88
      %p90 = scmp.eq.s32.totalorder %s15, 0
      %p91 = por %p89, %p90
      %s92 = ssub.s32 %s17, %s31
      %p93 = scmp.eq.s32.totalorder %s92, 0
      %s95 = sadd.s32 %s94, 1
      %s96 = scalar_select %p93, %s94, %s95
      %p99 = pneg %p93
      %p100 = scmp.eq.s32.totalorder %s9, 3
      %p101 = por %p99, %p100
      %p102 = scmp.ne.s32.totalorder %s94, %s97
      %p103 = scmp.eq.s32.totalorder %s9, 0
      %p104 = por %p102, %p103
      %p105 = scmp.ne.s32.totalorder %s94, %s97
      %p106 = scmp.eq.s32.totalorder %s14, 3
      %p107 = por %p105, %p106
      %p108 = scmp.ne.s32.totalorder %s97, %s98
      %p109 = scmp.eq.s32.totalorder %s14, 0
      %p110 = por %p108, %p109
      %p111 = scmp.ne.s32.totalorder %s97, %s98
      %p112 = scmp.eq.s32.totalorder %s15, 3
      %p113 = por %p111, %p112
      %p115 = scmp.ne.s32.totalorder %s98, %s114
      %p116 = scmp.eq.s32.totalorder %s15, 0
      %p117 = por %p115, %p116
      %s118 = ssub.s32 %s16, %s35
      %s119 = ssub.s32 %s17, %s31
      %s120 = sor.u32 %s118, %s119
      %p121 = scmp.eq.s32.totalorder %s120, 0
      %s123 = sadd.s32 %s122, 1
      %s124 = scalar_select %p121, %s122, %s123
      %p127 = pneg %p121
      %p128 = scmp.eq.s32.totalorder %s9, 3
      %p129 = por %p127, %p128
      %p130 = scmp.ne.s32.totalorder %s122, %s125
      %p131 = scmp.eq.s32.totalorder %s9, 0
      %p132 = por %p130, %p131
      %p133 = scmp.ne.s32.totalorder %s122, %s125
      %p134 = scmp.eq.s32.totalorder %s14, 3
      %p135 = por %p133, %p134
      %p136 = scmp.ne.s32.totalorder %s125, %s126
      %p137 = scmp.eq.s32.totalorder %s14, 0
      %p138 = por %p136, %p137
      %p139 = scmp.ne.s32.totalorder %s125, %s126
      %p140 = scmp.eq.s32.totalorder %s15, 3
      %p141 = por %p139, %p140
      %p143 = scmp.ne.s32.totalorder %s126, %s142
      %p144 = scmp.eq.s32.totalorder %s15, 0
      %p145 = por %p143, %p144
      %p146 = scmp.le.s32.totalorder 1, %s9
      %p147 = scmp.lt.s32.totalorder %s9, 5
      %p148 = pnand %p146, %p147
      %p149 = pneg %p148
      // Predicated region
      $region9: #{embedding_net_forward.17} parent=5 // pred_check
        _
      $region10: #{embedding_net_forward.17} parent=5 // pred_check_branch
        %151 = sbr.rel (%p148) target = $region12
      $region11: #{embedding_net_forward.17} parent=5 // pred_region
        %s152 = ssub.s32 %s9, 1
        // Predicated region
        $region13: #{embedding_net_forward.17} parent=11 // pred_check
          %p153 = pneg %p56
        $region14: #{embedding_net_forward.17} parent=11 // pred_check_branch
          %155 = sbr.rel (%p153) target = $region16
        $region15: #{embedding_net_forward.17} parent=11 // pred_region
          %s156 = smul.u32 2, %s19
          %s157 = smul.u32 2, %s21
          %p158 = scmp.lt.s32.totalorder %s156, 1
          %s159 = scalar_select %p158, %s156, 1
          %p160 = scmp.lt.s32.totalorder %s157, 1
          %s161 = scalar_select %p160, %s157, 1
          %s162 = smul.addr %s159, 2
          %s163 = sadd.s32 %s161, %s162
          %s164 = smul.addr %s163, 4
          %s165 = scalar_lea.vmem %s0, %s164
          %s166 = smul.u32 2, %s19
          %s167 = smul.u32 2, %s21
        $region16: #{embedding_net_forward.17} parent=11 // pred_fallthru
          _
      $region12: #{embedding_net_forward.17} parent=5 // pred_fallthru
        _
      %p168 = scmp.lt.s32.totalorder %s9, 4
      // Predicated region
      $region17: #{embedding_net_forward.17} parent=5 // pred_check
        %p169 = pneg %p168
      $region18: #{embedding_net_forward.17} parent=5 // pred_check_branch
        %171 = sbr.rel (%p169) target = $region20
      $region19: #{embedding_net_forward.17} parent=5 // pred_region
        // Predicated region
        $region21: #{embedding_net_forward.17} parent=19 // pred_check
          %p172 = pneg %p78
        $region22: #{embedding_net_forward.17} parent=19 // pred_check_branch
          %174 = sbr.rel (%p172) target = $region24
        $region23: #{embedding_net_forward.17} parent=19 // pred_region
          %s175 = sand.u32 %s68, 1
          %s176 = sand.u32 %s68, 1
          %s177 = smul.addr %s176, 256
          %s178 = scalar_lea.vmem [#allocation3], %s177
          %s179 = smul.u32 32, %s18
          %s180 = smul.u32 2, %s17
          %s181 = smul.addr %s179, 8
          %s182 = sadd.s32 %s180, %s181
          %s183 = smul.addr %s182, 4
          %s184 = scalar_lea.vmem %s1, %s183
          // Predicated region
          $region25: #{embedding_net_forward.17} parent=23 // pred_check
            _
          $region26: #{embedding_net_forward.17} parent=23 // pred_check_branch
            %186 = sbr.rel (0) target = $region28
          $region27: #{embedding_net_forward.17} parent=23 // pred_region
            // Predicated region
            $region29: #{embedding_net_forward.17} parent=27 // pred_check
              _
            $region30: #{embedding_net_forward.17} parent=27 // pred_check_branch
              %188 = sbr.rel (0) target = $region32
            $region31: #{embedding_net_forward.17} parent=27 // pred_region
              // Predicated region
              $region44: #{embedding_net_forward.17} parent=31 // pred_check
                _
              $region45: #{embedding_net_forward.17} parent=31 // pred_check_branch
                %265 = sbr.rel (0) target = $region47
              $region46: #{embedding_net_forward.17} parent=31 // pred_region
                loop: start=0, step=1, limit=1
                $region48: #{embedding_net_forward.17} parent=46 // loop_pre_header
                  _
                $region49: #{embedding_net_forward.17} parent=46 // loop_header
                  %s267 = sphi 0, %s271
                  %p268 = scmp.ge.s32.totalorder %s267, 1
                  %s272 = sphi %s184, %s184
                  %s273 = sphi %s178, %s178
                $region50: #{embedding_net_forward.17} parent=46 // loop_header_branch
                  %270 = sbr.rel (%p268) target = $region54
                $region51: #{embedding_net_forward.17} parent=46 // loop_body
                  %v274 = vld [vmem:[%s272] sm:$0xff]
                  %275 = vst [vmem:[%s273] sm:$0xff] %v274
                  %v276 = vld [vmem:[%s272 + $0x20] sm:$0xff]
                  %277 = vst [vmem:[%s273 + $0x8] sm:$0xff] %v276
                  %v278 = vld [vmem:[%s272 + $0x40] sm:$0xff]
                  %279 = vst [vmem:[%s273 + $0x10] sm:$0xff] %v278
                  %v280 = vld [vmem:[%s272 + $0x60] sm:$0xff]
                  %281 = vst [vmem:[%s273 + $0x18] sm:$0xff] %v280
                  %v282 = vld [vmem:[%s272 + $0x80] sm:$0xff]
                  %283 = vst [vmem:[%s273 + $0x20] sm:$0xff] %v282
                  %v284 = vld [vmem:[%s272 + $0xa0] sm:$0xff]
                  %285 = vst [vmem:[%s273 + $0x28] sm:$0xff] %v284
                  %v286 = vld [vmem:[%s272 + $0xc0] sm:$0xff]
                  %287 = vst [vmem:[%s273 + $0x30] sm:$0xff] %v286
                  %v288 = vld [vmem:[%s272 + $0xe0] sm:$0xff]
                  %289 = vst [vmem:[%s273 + $0x38] sm:$0xff] %v288
                  %v290 = vld [vmem:[%s272 + $0x100] sm:$0xff]
                  %291 = vst [vmem:[%s273 + $0x40] sm:$0xff] %v290
                  %v292 = vld [vmem:[%s272 + $0x120] sm:$0xff]
                  %293 = vst [vmem:[%s273 + $0x48] sm:$0xff] %v292
                  %v294 = vld [vmem:[%s272 + $0x140] sm:$0xff]
                  %295 = vst [vmem:[%s273 + $0x50] sm:$0xff] %v294
                  %v296 = vld [vmem:[%s272 + $0x160] sm:$0xff]
                  %297 = vst [vmem:[%s273 + $0x58] sm:$0xff] %v296
                  %v298 = vld [vmem:[%s272 + $0x180] sm:$0xff]
                  %299 = vst [vmem:[%s273 + $0x60] sm:$0xff] %v298
                  %v300 = vld [vmem:[%s272 + $0x1a0] sm:$0xff]
                  %301 = vst [vmem:[%s273 + $0x68] sm:$0xff] %v300
                  %v302 = vld [vmem:[%s272 + $0x1c0] sm:$0xff]
                  %303 = vst [vmem:[%s273 + $0x70] sm:$0xff] %v302
                  %v304 = vld [vmem:[%s272 + $0x1e0] sm:$0xff]
                  %305 = vst [vmem:[%s273 + $0x78] sm:$0xff] %v304
                  %v306 = vld [vmem:[%s272 + $0x200] sm:$0xff]
                  %307 = vst [vmem:[%s273 + $0x80] sm:$0xff] %v306
                  %v308 = vld [vmem:[%s272 + $0x220] sm:$0xff]
                  %309 = vst [vmem:[%s273 + $0x88] sm:$0xff] %v308
                  %v310 = vld [vmem:[%s272 + $0x240] sm:$0xff]
                  %311 = vst [vmem:[%s273 + $0x90] sm:$0xff] %v310
                  %v312 = vld [vmem:[%s272 + $0x260] sm:$0xff]
                  %313 = vst [vmem:[%s273 + $0x98] sm:$0xff] %v312
                  %v314 = vld [vmem:[%s272 + $0x280] sm:$0xff]
                  %315 = vst [vmem:[%s273 + $0xa0] sm:$0xff] %v314
                  %v316 = vld [vmem:[%s272 + $0x2a0] sm:$0xff]
                  %317 = vst [vmem:[%s273 + $0xa8] sm:$0xff] %v316
                  %v318 = vld [vmem:[%s272 + $0x2c0] sm:$0xff]
                  %319 = vst [vmem:[%s273 + $0xb0] sm:$0xff] %v318
                  %v320 = vld [vmem:[%s272 + $0x2e0] sm:$0xff]
                  %321 = vst [vmem:[%s273 + $0xb8] sm:$0xff] %v320
                  %v322 = vld [vmem:[%s272 + $0x300] sm:$0xff]
                  %323 = vst [vmem:[%s273 + $0xc0] sm:$0xff] %v322
                  %v324 = vld [vmem:[%s272 + $0x320] sm:$0xff]
                  %325 = vst [vmem:[%s273 + $0xc8] sm:$0xff] %v324
                  %v326 = vld [vmem:[%s272 + $0x340] sm:$0xff]
                  %327 = vst [vmem:[%s273 + $0xd0] sm:$0xff] %v326
                  %v328 = vld [vmem:[%s272 + $0x360] sm:$0xff]
                  %329 = vst [vmem:[%s273 + $0xd8] sm:$0xff] %v328
                  %v330 = vld [vmem:[%s272 + $0x380] sm:$0xff]
                  %331 = vst [vmem:[%s273 + $0xe0] sm:$0xff] %v330
                  %v332 = vld [vmem:[%s272 + $0x3a0] sm:$0xff]
                  %333 = vst [vmem:[%s273 + $0xe8] sm:$0xff] %v332
                  %v334 = vld [vmem:[%s272 + $0x3c0] sm:$0xff]
                  %335 = vst [vmem:[%s273 + $0xf0] sm:$0xff] %v334
                  %v336 = vld [vmem:[%s272 + $0x3e0] sm:$0xff]
                  %337 = vst [vmem:[%s273 + $0xf8] sm:$0xff] %v336
                $region52: #{embedding_net_forward.17} parent=46 // loop_footer
                  %s271 = sadd.s32 1, %s267
                $region53: #{embedding_net_forward.17} parent=46 // loop_footer_branch
                  %266 = sbr.rel target = $region49
                $region54: #{embedding_net_forward.17} parent=46 // loop_exit
                  _
              $region47: #{embedding_net_forward.17} parent=31 // pred_fallthru
                _
              // Predicated region
              $region55: #{embedding_net_forward.17} parent=31 // pred_check
                _
              $region56: #{embedding_net_forward.17} parent=31 // pred_check_branch
                %339 = sbr.rel target = $region58
              $region57: #{embedding_net_forward.17} parent=31 // pred_region
                _
              $region58: #{embedding_net_forward.17} parent=31 // pred_fallthru
                _
            $region32: #{embedding_net_forward.17} parent=27 // pred_fallthru
              _
            // Predicated region
            $region33: #{embedding_net_forward.17} parent=27 // pred_check
              _
            $region34: #{embedding_net_forward.17} parent=27 // pred_check_branch
              %190 = sbr.rel target = $region36
            $region35: #{embedding_net_forward.17} parent=27 // pred_region
              loop: start=0, step=1, limit=1
              $region37: #{embedding_net_forward.17} parent=35 // loop_pre_header
                _
              $region38: #{embedding_net_forward.17} parent=35 // loop_header
                %s193 = sphi 0, %s197
                %p194 = scmp.ge.s32.totalorder %s193, 1
                %s198 = sphi %s184, %s184
                %s199 = sphi %s178, %s178
              $region39: #{embedding_net_forward.17} parent=35 // loop_header_branch
                %196 = sbr.rel (%p194) target = $region43
              $region40: #{embedding_net_forward.17} parent=35 // loop_body
                %v200 = vld [vmem:[%s198] sm:$0xff]
                %201 = vst [vmem:[%s199] sm:$0xff] %v200
                %v202 = vld [vmem:[%s198 + $0x20] sm:$0xff]
                %203 = vst [vmem:[%s199 + $0x8] sm:$0xff] %v202
                %v204 = vld [vmem:[%s198 + $0x40] sm:$0xff]
                %205 = vst [vmem:[%s199 + $0x10] sm:$0xff] %v204
                %v206 = vld [vmem:[%s198 + $0x60] sm:$0xff]
                %207 = vst [vmem:[%s199 + $0x18] sm:$0xff] %v206
                %v208 = vld [vmem:[%s198 + $0x80] sm:$0xff]
                %209 = vst [vmem:[%s199 + $0x20] sm:$0xff] %v208
                %v210 = vld [vmem:[%s198 + $0xa0] sm:$0xff]
                %211 = vst [vmem:[%s199 + $0x28] sm:$0xff] %v210
                %v212 = vld [vmem:[%s198 + $0xc0] sm:$0xff]
                %213 = vst [vmem:[%s199 + $0x30] sm:$0xff] %v212
                %v214 = vld [vmem:[%s198 + $0xe0] sm:$0xff]
                %215 = vst [vmem:[%s199 + $0x38] sm:$0xff] %v214
                %v216 = vld [vmem:[%s198 + $0x100] sm:$0xff]
                %217 = vst [vmem:[%s199 + $0x40] sm:$0xff] %v216
                %v218 = vld [vmem:[%s198 + $0x120] sm:$0xff]
                %219 = vst [vmem:[%s199 + $0x48] sm:$0xff] %v218
                %v220 = vld [vmem:[%s198 + $0x140] sm:$0xff]
                %221 = vst [vmem:[%s199 + $0x50] sm:$0xff] %v220
                %v222 = vld [vmem:[%s198 + $0x160] sm:$0xff]
                %223 = vst [vmem:[%s199 + $0x58] sm:$0xff] %v222
                %v224 = vld [vmem:[%s198 + $0x180] sm:$0xff]
                %225 = vst [vmem:[%s199 + $0x60] sm:$0xff] %v224
                %v226 = vld [vmem:[%s198 + $0x1a0] sm:$0xff]
                %227 = vst [vmem:[%s199 + $0x68] sm:$0xff] %v226
                %v228 = vld [vmem:[%s198 + $0x1c0] sm:$0xff]
                %229 = vst [vmem:[%s199 + $0x70] sm:$0xff] %v228
                %v230 = vld [vmem:[%s198 + $0x1e0] sm:$0xff]
                %231 = vst [vmem:[%s199 + $0x78] sm:$0xff] %v230
                %v232 = vld [vmem:[%s198 + $0x200] sm:$0xff]
                %233 = vst [vmem:[%s199 + $0x80] sm:$0xff] %v232
                %v234 = vld [vmem:[%s198 + $0x220] sm:$0xff]
                %235 = vst [vmem:[%s199 + $0x88] sm:$0xff] %v234
                %v236 = vld [vmem:[%s198 + $0x240] sm:$0xff]
                %237 = vst [vmem:[%s199 + $0x90] sm:$0xff] %v236
                %v238 = vld [vmem:[%s198 + $0x260] sm:$0xff]
                %239 = vst [vmem:[%s199 + $0x98] sm:$0xff] %v238
                %v240 = vld [vmem:[%s198 + $0x280] sm:$0xff]
                %241 = vst [vmem:[%s199 + $0xa0] sm:$0xff] %v240
                %v242 = vld [vmem:[%s198 + $0x2a0] sm:$0xff]
                %243 = vst [vmem:[%s199 + $0xa8] sm:$0xff] %v242
                %v244 = vld [vmem:[%s198 + $0x2c0] sm:$0xff]
                %245 = vst [vmem:[%s199 + $0xb0] sm:$0xff] %v244
                %v246 = vld [vmem:[%s198 + $0x2e0] sm:$0xff]
                %247 = vst [vmem:[%s199 + $0xb8] sm:$0xff] %v246
                %v248 = vld [vmem:[%s198 + $0x300] sm:$0xff]
                %249 = vst [vmem:[%s199 + $0xc0] sm:$0xff] %v248
                %v250 = vld [vmem:[%s198 + $0x320] sm:$0xff]
                %251 = vst [vmem:[%s199 + $0xc8] sm:$0xff] %v250
                %v252 = vld [vmem:[%s198 + $0x340] sm:$0xff]
                %253 = vst [vmem:[%s199 + $0xd0] sm:$0xff] %v252
                %v254 = vld [vmem:[%s198 + $0x360] sm:$0xff]
                %255 = vst [vmem:[%s199 + $0xd8] sm:$0xff] %v254
                %v256 = vld [vmem:[%s198 + $0x380] sm:$0xff]
                %257 = vst [vmem:[%s199 + $0xe0] sm:$0xff] %v256
                %v258 = vld [vmem:[%s198 + $0x3a0] sm:$0xff]
                %259 = vst [vmem:[%s199 + $0xe8] sm:$0xff] %v258
                %v260 = vld [vmem:[%s198 + $0x3c0] sm:$0xff]
                %261 = vst [vmem:[%s199 + $0xf0] sm:$0xff] %v260
                %v262 = vld [vmem:[%s198 + $0x3e0] sm:$0xff]
                %263 = vst [vmem:[%s199 + $0xf8] sm:$0xff] %v262
              $region41: #{embedding_net_forward.17} parent=35 // loop_footer
                %s197 = sadd.s32 1, %s193
              $region42: #{embedding_net_forward.17} parent=35 // loop_footer_branch
                %192 = sbr.rel target = $region38
              $region43: #{embedding_net_forward.17} parent=35 // loop_exit
                _
            $region36: #{embedding_net_forward.17} parent=27 // pred_fallthru
              _
          $region28: #{embedding_net_forward.17} parent=23 // pred_fallthru
            _
          %340 = vnop
        $region24: #{embedding_net_forward.17} parent=19 // pred_fallthru
          _
        // Predicated region
        $region59: #{embedding_net_forward.17} parent=19 // pred_check
          %p341 = pneg %p104
        $region60: #{embedding_net_forward.17} parent=19 // pred_check_branch
          %343 = sbr.rel (%p341) target = $region62
        $region61: #{embedding_net_forward.17} parent=19 // pred_region
          %s344 = smul.u32 2, %s17
          %p345 = scmp.lt.s32.totalorder %s344, 7
          %s346 = scalar_select %p345, %s344, 7
          %s347 = scalar_lea.vmem %s2, %s346
          %s348 = smul.u32 2, %s17
        $region62: #{embedding_net_forward.17} parent=19 // pred_fallthru
          _
      $region20: #{embedding_net_forward.17} parent=5 // pred_fallthru
        _
      %p349 = scmp.le.s32.totalorder 1, %s9
      %p350 = scmp.lt.s32.totalorder %s9, 5
      %p351 = pnand %p349, %p350
      %p352 = pneg %p351
      // Predicated region
      $region63: #{embedding_net_forward.17} parent=5 // pred_check
        _
      $region64: #{embedding_net_forward.17} parent=5 // pred_check_branch
        %354 = sbr.rel (%p351) target = $region66
      $region65: #{embedding_net_forward.17} parent=5 // pred_region
        %s355 = ssub.s32 %s9, 1
        %s356 = sand.u32 %s71, 1
        %s357 = sand.u32 %s71, 1
        %s358 = smul.addr %s357, 256
        %s359 = scalar_lea.vmem [#allocation3], %s358
        // Predicated region
        $region67: #{embedding_net_forward.17} parent=65 // pred_check
          %p360 = pneg %p84
        $region68: #{embedding_net_forward.17} parent=65 // pred_check_branch
          %362 = sbr.rel (%p360) target = $region70
        $region69: #{embedding_net_forward.17} parent=65 // pred_region
          _
        $region70: #{embedding_net_forward.17} parent=65 // pred_fallthru
          _
        %s363 = smul.u32 2, %s19
        %s364 = smul.u32 2, %s21
        %p365 = scmp.lt.s32.totalorder %s363, 1
        %s366 = scalar_select %p365, %s363, 1
        %p367 = scmp.lt.s32.totalorder %s364, 1
        %s368 = scalar_select %p367, %s364, 1
        %s369 = smul.addr %s366, 2
        %s370 = sadd.s32 %s368, %s369
        %s371 = smul.addr %s370, 4
        %s372 = scalar_lea.vmem %s0, %s371
        %p373 = pneg %p56
        %p374 = pneg %p53
        %s375 = sand.u32 %s71, 1
        %s376 = sand.u32 %s71, 1
        %s377 = smul.addr %s376, 256
        %s378 = scalar_lea.vmem [#allocation3], %s377
        %p379 = pneg %p84
        %p380 = pneg %p81
        %s381 = smul.u32 2, %s20
        %p382 = scmp.lt.s32.totalorder %s381, 7
        %s383 = scalar_select %p382, %s381, 7
        %s384 = scalar_lea.vmem %s2, %s383
        %p385 = pneg %p110
        %p386 = pneg %p107
        %p387 = pneg %p138
        %p388 = pneg %p135
        %s389 = sand.u32 %s125, 1
        %s390 = sand.u32 %s125, 1
        %s391 = smul.addr %s390, 32
        %s392 = scalar_lea.vmem [#allocation4], %s391
        %s393 = smul.u32 2, %s19
        %s394 = smul.u32 2, %s21
        %p395 = scmp.lt.s32.totalorder %s393, 1
        %s396 = scalar_select %p395, %s393, 1
        %p397 = scmp.lt.s32.totalorder %s394, 1
        %s398 = scalar_select %p397, %s394, 1
        %s399 = smul.addr %s396, 2
        %s400 = sadd.s32 %s398, %s399
        %s401 = smul.addr %s400, 4
        %s402 = scalar_lea.vmem %s0, %s401
        %s403 = smul.u32 2, %s19
        %s404 = smul.u32 2, %s21
        %s405 = smul.u32 32, %s21
        %s406 = smul.u32 2, %s20
        %s407 = smul.u32 2, %s20
        %p408 = scmp.lt.s32.totalorder %s407, 7
        %s409 = scalar_select %p408, %s407, 7
        %s410 = scalar_lea.vmem %s2, %s409
        %s411 = smul.u32 2, %s20
        %s412 = smul.u32 2, %s19
        %s413 = smul.u32 2, %s20
        %p414 = scmp.eq.s32.totalorder %s21, 0
        // Predicated region
        $region71: #{embedding_net_forward.17} parent=65 // pred_check
          %p415 = pneg %p414
        $region72: #{embedding_net_forward.17} parent=65 // pred_check_branch
          %417 = sbr.rel (%p415) target = $region74
        $region73: #{embedding_net_forward.17} parent=65 // pred_region
          %418 = vst [vmem:[#allocation2] sm:$0xff] 0.0
          %419 = vst [vmem:[#allocation2 + $0x8] sm:$0xff] 0.0
          %420 = vst [vmem:[#allocation2 + $0x10] sm:$0xff] 0.0
          %421 = vst [vmem:[#allocation2 + $0x18] sm:$0xff] 0.0
        $region74: #{embedding_net_forward.17} parent=65 // pred_fallthru
          _
        %v422 = vld [vmem:[#allocation2] sm:$0xff]
        %v423 = vld [vmem:[#allocation2 + $0x8] sm:$0xff]
        %v424 = vld [vmem:[#allocation2 + $0x10] sm:$0xff]
        %v425 = vld [vmem:[#allocation2 + $0x18] sm:$0xff]
        %v426 = vld [vmem:[%s402] sm:$0xff]
        %v427 = vld [vmem:[%s402 + $0x8] sm:$0xff]
        %v428 = vld [vmem:[%s359] sm:$0xff]
        %v429 = vld [vmem:[%s359 + $0x8] sm:$0xff]
        %v430 = vld [vmem:[%s359 + $0x10] sm:$0xff]
        %v431 = vld [vmem:[%s359 + $0x18] sm:$0xff]
        %v432 = vld [vmem:[%s359 + $0x20] sm:$0xff]
        %v433 = vld [vmem:[%s359 + $0x28] sm:$0xff]
        %v434 = vld [vmem:[%s359 + $0x30] sm:$0xff]
        %v435 = vld [vmem:[%s359 + $0x38] sm:$0xff]
        %v436 = vld [vmem:[%s359 + $0x40] sm:$0xff]
        %v437 = vld [vmem:[%s359 + $0x48] sm:$0xff]
        %v438 = vld [vmem:[%s359 + $0x50] sm:$0xff]
        %v439 = vld [vmem:[%s359 + $0x58] sm:$0xff]
        %v440 = vld [vmem:[%s359 + $0x60] sm:$0xff]
        %v441 = vld [vmem:[%s359 + $0x68] sm:$0xff]
        %v442 = vld [vmem:[%s359 + $0x70] sm:$0xff]
        %v443 = vld [vmem:[%s359 + $0x78] sm:$0xff]
        %v444 = vld [vmem:[%s359 + $0x80] sm:$0xff]
        %v445 = vld [vmem:[%s359 + $0x88] sm:$0xff]
        %v446 = vld [vmem:[%s359 + $0x90] sm:$0xff]
        %v447 = vld [vmem:[%s359 + $0x98] sm:$0xff]
        %v448 = vld [vmem:[%s359 + $0xa0] sm:$0xff]
        %v449 = vld [vmem:[%s359 + $0xa8] sm:$0xff]
        %v450 = vld [vmem:[%s359 + $0xb0] sm:$0xff]
        %v451 = vld [vmem:[%s359 + $0xb8] sm:$0xff]
        %v452 = vld [vmem:[%s359 + $0xc0] sm:$0xff]
        %v453 = vld [vmem:[%s359 + $0xc8] sm:$0xff]
        %v454 = vld [vmem:[%s359 + $0xd0] sm:$0xff]
        %v455 = vld [vmem:[%s359 + $0xd8] sm:$0xff]
        %v456 = vld [vmem:[%s359 + $0xe0] sm:$0xff]
        %v457 = vld [vmem:[%s359 + $0xe8] sm:$0xff]
        %v458 = vld [vmem:[%s359 + $0xf0] sm:$0xff]
        %v459 = vld [vmem:[%s359 + $0xf8] sm:$0xff]
        %v462 = vunpack.c.l.b16 %v426
        %v463 = vunpack.c.h.b16 %v426
        %v464 = vunpack.c.l.b16 %v427
        %v465 = vunpack.c.h.b16 %v427
        %v466 = vpack.c.b16 %v464, %v462
        %v467 = vpack.c.b16 %v465, %v463
        %v502 = vunpack.c.l.b16 %v428
        %v503 = vunpack.c.h.b16 %v428
        %v504 = vunpack.c.l.b16 %v429
        %v505 = vunpack.c.h.b16 %v429
        %v506 = vunpack.c.l.b16 %v430
        %v507 = vunpack.c.h.b16 %v430
        %v508 = vunpack.c.l.b16 %v431
        %v509 = vunpack.c.h.b16 %v431
        %v510 = vunpack.c.l.b16 %v432
        %v511 = vunpack.c.h.b16 %v432
        %v512 = vunpack.c.l.b16 %v433
        %v513 = vunpack.c.h.b16 %v433
        %v514 = vunpack.c.l.b16 %v434
        %v515 = vunpack.c.h.b16 %v434
        %v516 = vunpack.c.l.b16 %v435
        %v517 = vunpack.c.h.b16 %v435
        %v518 = vunpack.c.l.b16 %v436
        %v519 = vunpack.c.h.b16 %v436
        %v520 = vunpack.c.l.b16 %v437
        %v521 = vunpack.c.h.b16 %v437
        %v522 = vunpack.c.l.b16 %v438
        %v523 = vunpack.c.h.b16 %v438
        %v524 = vunpack.c.l.b16 %v439
        %v525 = vunpack.c.h.b16 %v439
        %v526 = vunpack.c.l.b16 %v440
        %v527 = vunpack.c.h.b16 %v440
        %v528 = vunpack.c.l.b16 %v441
        %v529 = vunpack.c.h.b16 %v441
        %v530 = vunpack.c.l.b16 %v442
        %v531 = vunpack.c.h.b16 %v442
        %v532 = vunpack.c.l.b16 %v443
        %v533 = vunpack.c.h.b16 %v443
        %v534 = vunpack.c.l.b16 %v444
        %v535 = vunpack.c.h.b16 %v444
        %v536 = vunpack.c.l.b16 %v445
        %v537 = vunpack.c.h.b16 %v445
        %v538 = vunpack.c.l.b16 %v446
        %v539 = vunpack.c.h.b16 %v446
        %v540 = vunpack.c.l.b16 %v447
        %v541 = vunpack.c.h.b16 %v447
        %v542 = vunpack.c.l.b16 %v448
        %v543 = vunpack.c.h.b16 %v448
        %v544 = vunpack.c.l.b16 %v449
        %v545 = vunpack.c.h.b16 %v449
        %v546 = vunpack.c.l.b16 %v450
        %v547 = vunpack.c.h.b16 %v450
        %v548 = vunpack.c.l.b16 %v451
        %v549 = vunpack.c.h.b16 %v451
        %v550 = vunpack.c.l.b16 %v452
        %v551 = vunpack.c.h.b16 %v452
        %v552 = vunpack.c.l.b16 %v453
        %v553 = vunpack.c.h.b16 %v453
        %v554 = vunpack.c.l.b16 %v454
        %v555 = vunpack.c.h.b16 %v454
        %v556 = vunpack.c.l.b16 %v455
        %v557 = vunpack.c.h.b16 %v455
        %v558 = vunpack.c.l.b16 %v456
        %v559 = vunpack.c.h.b16 %v456
        %v560 = vunpack.c.l.b16 %v457
        %v561 = vunpack.c.h.b16 %v457
        %v562 = vunpack.c.l.b16 %v458
        %v563 = vunpack.c.h.b16 %v458
        %v564 = vunpack.c.l.b16 %v459
        %v565 = vunpack.c.h.b16 %v459
        %v566 = vpack.c.b16 %v504, %v502
        %v567 = vpack.c.b16 %v505, %v503
        %v568 = vpack.c.b16 %v508, %v506
        %v569 = vpack.c.b16 %v509, %v507
        %v570 = vpack.c.b16 %v512, %v510
        %v571 = vpack.c.b16 %v513, %v511
        %v572 = vpack.c.b16 %v516, %v514
        %v573 = vpack.c.b16 %v517, %v515
        %v574 = vpack.c.b16 %v520, %v518
        %v575 = vpack.c.b16 %v521, %v519
        %v576 = vpack.c.b16 %v524, %v522
        %v577 = vpack.c.b16 %v525, %v523
        %v578 = vpack.c.b16 %v528, %v526
        %v579 = vpack.c.b16 %v529, %v527
        %v580 = vpack.c.b16 %v532, %v530
        %v581 = vpack.c.b16 %v533, %v531
        %v582 = vpack.c.b16 %v536, %v534
        %v583 = vpack.c.b16 %v537, %v535
        %v584 = vpack.c.b16 %v540, %v538
        %v585 = vpack.c.b16 %v541, %v539
        %v586 = vpack.c.b16 %v544, %v542
        %v587 = vpack.c.b16 %v545, %v543
        %v588 = vpack.c.b16 %v548, %v546
        %v589 = vpack.c.b16 %v549, %v547
        %v590 = vpack.c.b16 %v552, %v550
        %v591 = vpack.c.b16 %v553, %v551
        %v592 = vpack.c.b16 %v556, %v554
        %v593 = vpack.c.b16 %v557, %v555
        %v594 = vpack.c.b16 %v560, %v558
        %v595 = vpack.c.b16 %v561, %v559
        %v596 = vpack.c.b16 %v564, %v562
        %v597 = vpack.c.b16 %v565, %v563
        %630 = vmatprep.subr.bf16.mxu0 %v567
        %631 = vmatpush1.bf16.msra.mxu0 %v566
        %632 = vmatprep.subr.bf16.mxu0 %v569
        %633 = vmatpush1.bf16.msra.mxu0 %v568
        %634 = vmatprep.subr.bf16.mxu0 %v571
        %635 = vmatpush1.bf16.msra.mxu0 %v570
        %636 = vmatprep.subr.bf16.mxu0 %v573
        %637 = vmatpush1.bf16.msra.mxu0 %v572
        %638 = vmatprep.subr.bf16.mxu0 %v575
        %639 = vmatpush1.bf16.msra.mxu0 %v574
        %640 = vmatprep.subr.bf16.mxu0 %v577
        %641 = vmatpush1.bf16.msra.mxu0 %v576
        %642 = vmatprep.subr.bf16.mxu0 %v579
        %643 = vmatpush1.bf16.msra.mxu0 %v578
        %644 = vmatprep.subr.bf16.mxu0 %v581
        %645 = vmatpush1.bf16.msra.mxu0 %v580
        %646 = vmatprep.subr.bf16.mxu0 %v583
        %647 = vmatpush1.bf16.msra.mxu0 %v582
        %648 = vmatprep.subr.bf16.mxu0 %v585
        %649 = vmatpush1.bf16.msra.mxu0 %v584
        %650 = vmatprep.subr.bf16.mxu0 %v587
        %651 = vmatpush1.bf16.msra.mxu0 %v586
        %652 = vmatprep.subr.bf16.mxu0 %v589
        %653 = vmatpush1.bf16.msra.mxu0 %v588
        %654 = vmatprep.subr.bf16.mxu0 %v591
        %655 = vmatpush1.bf16.msra.mxu0 %v590
        %656 = vmatprep.subr.bf16.mxu0 %v593
        %657 = vmatpush1.bf16.msra.mxu0 %v592
        %658 = vmatprep.subr.bf16.mxu0 %v595
        %659 = vmatpush1.bf16.msra.mxu0 %v594
        %660 = vmatprep.subr.bf16.mxu0 %v597
        %661 = vmatpush1.bf16.msra.mxu0 %v596
        %662 = vmatprep.mubr.bf16.mxu0 %v467
        %663 = vmatmul.mubr.bf16.gmra.mrb[0].mxu0 %v466
        %v664 = vpop.f32.mrb[0].mxu0
        %v665 = vadd.f32 0.0, %v664
        %v666 = vpop.f32.mrb[0].mxu0
        %v667 = vadd.f32 0.0, %v666
        %v668 = vpop.f32.mrb[0].mxu0
        %v669 = vadd.f32 0.0, %v668
        %v670 = vpop.f32.mrb[0].mxu0
        %v671 = vadd.f32 0.0, %v670
        %672 = vdwg.mxu0
        %v673 = vadd.f32 %v422, %v665
        %v674 = vadd.f32 %v423, %v667
        %v675 = vadd.f32 %v424, %v669
        %v676 = vadd.f32 %v425, %v671
        %677 = vst [vmem:[#allocation2] sm:$0xff] %v673
        %678 = vst [vmem:[#allocation2 + $0x8] sm:$0xff] %v674
        %679 = vst [vmem:[#allocation2 + $0x10] sm:$0xff] %v675
        %680 = vst [vmem:[#allocation2 + $0x18] sm:$0xff] %v676
        // Predicated region
        $region75: #{embedding_net_forward.17} parent=65 // pred_check
          %p681 = pneg %p414
        $region76: #{embedding_net_forward.17} parent=65 // pred_check_branch
          %683 = sbr.rel (%p681) target = $region78
        $region77: #{embedding_net_forward.17} parent=65 // pred_region
          %v684 = vld [vmem:[#allocation2] sm:$0xff]
          %v685 = vld [vmem:[#allocation2 + $0x8] sm:$0xff]
          %v686 = vld [vmem:[#allocation2 + $0x10] sm:$0xff]
          %v687 = vld [vmem:[#allocation2 + $0x18] sm:$0xff]
          %v688 = vld [vmem:[%s410] sm:$0x3]
          %v690 = vlaneseq
          %v691 = vshrl.u32 %v690, 7
          %v692 = vsub.s32 0, %v691
          %v693 = vrot.slane %v688, %v692
          %v694 = vlaneseq
          %v695 = vshrl.u32 %v694, 7
          %v696 = vsub.s32 1, %v695
          %v697 = vrot.slane %v688, %v696
          %v700 = vadd.f32 %v684, %v693
          %v701 = vadd.f32 %v685, %v697
          %v702 = vadd.f32 %v686, %v693
          %v703 = vadd.f32 %v687, %v697
          %704 = vst [vmem:[%s392] sm:$0xff] %v700
          %705 = vst [vmem:[%s392 + $0x8] sm:$0xff] %v701
          %706 = vst [vmem:[%s392 + $0x10] sm:$0xff] %v702
          %707 = vst [vmem:[%s392 + $0x18] sm:$0xff] %v703
        $region78: #{embedding_net_forward.17} parent=65 // pred_fallthru
          _
        %s708 = sand.u32 %s125, 1
        %s709 = sand.u32 %s125, 1
        %s710 = smul.addr %s709, 32
        %s711 = scalar_lea.vmem [#allocation4], %s710
        // Predicated region
        $region79: #{embedding_net_forward.17} parent=65 // pred_check
          %p712 = pneg %p135
        $region80: #{embedding_net_forward.17} parent=65 // pred_check_branch
          %714 = sbr.rel (%p712) target = $region82
        $region81: #{embedding_net_forward.17} parent=65 // pred_region
          %s715 = smul.u32 2, %s19
          %s716 = smul.u32 2, %s20
          %s717 = smul.addr %s715, 8
          %s718 = sadd.s32 %s716, %s717
          %s719 = smul.addr %s718, 8
          %s720 = scalar_lea.vmem %s3, %s719
          // Predicated region
          $region83: #{embedding_net_forward.17} parent=81 // pred_check
            _
          $region84: #{embedding_net_forward.17} parent=81 // pred_check_branch
            %722 = sbr.rel (0) target = $region86
          $region85: #{embedding_net_forward.17} parent=81 // pred_region
            // Predicated region
            $region87: #{embedding_net_forward.17} parent=85 // pred_check
              _
            $region88: #{embedding_net_forward.17} parent=85 // pred_check_branch
              %724 = sbr.rel (0) target = $region90
            $region89: #{embedding_net_forward.17} parent=85 // pred_region
              loop: start=0, step=1, limit=1
              $region91: #{embedding_net_forward.17} parent=89 // loop_pre_header
                _
              $region92: #{embedding_net_forward.17} parent=89 // loop_header
                %s726 = sphi 0, %s730
                %p727 = scmp.ge.s32.totalorder %s726, 1
                %s731 = sphi %s711, %s711
                %s732 = sphi %s720, %s720
              $region93: #{embedding_net_forward.17} parent=89 // loop_header_branch
                %729 = sbr.rel (%p727) target = $region97
              $region94: #{embedding_net_forward.17} parent=89 // loop_body
                %v733 = vld [vmem:[%s731] sm:$0xff]
                %734 = vst [vmem:[%s732] sm:$0xff] %v733
                %v735 = vld [vmem:[%s731 + $0x8] sm:$0xff]
                %736 = vst [vmem:[%s732 + $0x8] sm:$0xff] %v735
                %v737 = vld [vmem:[%s731 + $0x10] sm:$0xff]
                %738 = vst [vmem:[%s732 + $0x40] sm:$0xff] %v737
                %v739 = vld [vmem:[%s731 + $0x18] sm:$0xff]
                %740 = vst [vmem:[%s732 + $0x48] sm:$0xff] %v739
              $region95: #{embedding_net_forward.17} parent=89 // loop_footer
                %s730 = sadd.s32 1, %s726
              $region96: #{embedding_net_forward.17} parent=89 // loop_footer_branch
                %725 = sbr.rel target = $region92
              $region97: #{embedding_net_forward.17} parent=89 // loop_exit
                _
            $region90: #{embedding_net_forward.17} parent=85 // pred_fallthru
              _
            // Predicated region
            $region98: #{embedding_net_forward.17} parent=85 // pred_check
              _
            $region99: #{embedding_net_forward.17} parent=85 // pred_check_branch
              %742 = sbr.rel target = $region101
            $region100: #{embedding_net_forward.17} parent=85 // pred_region
              _
            $region101: #{embedding_net_forward.17} parent=85 // pred_fallthru
              _
          $region86: #{embedding_net_forward.17} parent=81 // pred_fallthru
            _
          %743 = vnop
        $region82: #{embedding_net_forward.17} parent=65 // pred_fallthru
          _
      $region66: #{embedding_net_forward.17} parent=5 // pred_fallthru
        _
      %p744 = scmp.le.s32.totalorder 2, %s9
      // Predicated region
      $region102: #{embedding_net_forward.17} parent=5 // pred_check
        %p745 = pneg %p744
      $region103: #{embedding_net_forward.17} parent=5 // pred_check_branch
        %747 = sbr.rel (%p745) target = $region105
      $region104: #{embedding_net_forward.17} parent=5 // pred_region
        %s748 = ssub.s32 %s9, 2
        // Predicated region
        $region106: #{embedding_net_forward.17} parent=104 // pred_check
          %p749 = pneg %p141
        $region107: #{embedding_net_forward.17} parent=104 // pred_check_branch
          %751 = sbr.rel (%p749) target = $region109
        $region108: #{embedding_net_forward.17} parent=104 // pred_region
          %s752 = sand.u32 %s126, 1
          %s753 = sand.u32 %s126, 1
          %s754 = smul.addr %s753, 32
          %s755 = scalar_lea.vmem [#allocation4], %s754
        $region109: #{embedding_net_forward.17} parent=104 // pred_fallthru
          _
      $region105: #{embedding_net_forward.17} parent=5 // pred_fallthru
        _
    $region6: #{embedding_net_forward.17} parent=1 // loop_footer
      %s13 = sadd.s32 1, %s9
    $region7: #{embedding_net_forward.17} parent=1 // loop_footer_branch
      %8 = sbr.rel target = $region3
    $region8: #{embedding_net_forward.17} parent=1 // loop_exit
      _

// kernel: embedding_net_forward.19
$region0: #{embedding_net_forward.19}
  #allocation0 [shape = 'u32[]', space=smem, size = 0x4, offset = 0x4, fixed_abs, tag = 'smem constant byte address 0x4 - core index']
  #allocation1 [shape = 'u32[144,128]{1,0:T(1,128)}', space=vmem, size = 0x12000, scoped, tag = 'internal scratch']
  #allocation2 [shape = 'f32[1,1]{1,0:T(1,128)S(1)}', space=vmem, size = 0x200, scoped, tag = 'scoped memory for embedding_net_forward.19']
  %s0 = inlined_call_operand.vmem [shape: f32[2,256], index: 0, kind: input, shape index: {}]
  %s1 = inlined_call_operand.vmem [shape: f32[2,256], index: 1, kind: input, shape index: {}]
  %s2 = inlined_call_operand.vmem [shape: bf16[256,256], index: 2, kind: input, shape index: {}]
  %s3 = inlined_call_operand.vmem [shape: f32[1,256], index: 3, kind: input, shape index: {}]
  %s4 = inlined_call_operand.vmem [shape: bf16[256,256], index: 4, kind: input, shape index: {}]
  %s5 = inlined_call_operand.vmem [shape: f32[1,256], index: 5, kind: input, shape index: {}]
  %s6 = inlined_call_operand.vmem [shape: f32[256,7], index: 6, kind: input, shape index: {}]
  %s7 = inlined_call_operand.vmem [shape: f32[1,7], index: 7, kind: input, shape index: {}]
  %s8 = inlined_call_operand.vmem [shape: f32[1,7], index: 8, kind: input, shape index: {}]
  %s9 = inlined_call_operand.<no memory space> [shape: f32[1,1], index: 9, kind: input, shape index: {}]
  %s10 = inlined_call_operand.hbm [shape: f32[2,7], index: 10, kind: output, shape index: {0}]
  %s11 = inlined_call_operand.vmem [shape: f32[2,1], index: 11, kind: output, shape index: {1}]
  %12 = xla_tuple %s10, %s11
  %s13 = sld [smem:[#allocation0]]
  $region58: #{embedding_net_forward.19} parent=0
    _
  %s15 = ssub.s32 1, %s13
  %s16 = scalar_select 0, %s15, %s13
  %v17 = vstv %s9
  %18 = vst [vmem:[#allocation2] sm:$0x1] %v17
  $region1: #{embedding_net_forward.19} parent=0
    #allocation3 [shape = 'u8[1024]{0}', space=vmem, size = 0x400, scoped, tag = 'output window, operand 0, single buffered']
    #allocation4 [shape = 's32[1]{0}', space=sflag, size = 0x4, scoped, tag = 'scoped memory for embedding_net_forward.19']
    %19 = vsyncpa [#allocation4], 0
    // Predicated region
    $region2: #{embedding_net_forward.19} parent=1 // pred_check
      _
    $region3: #{embedding_net_forward.19} parent=1 // pred_check_branch
      %21 = sbr.rel (0) target = $region5
    $region4: #{embedding_net_forward.19} parent=1 // pred_region
      _
    $region5: #{embedding_net_forward.19} parent=1 // pred_fallthru
      _
    // Predicated region
    $region6: #{embedding_net_forward.19} parent=1 // pred_check
      _
    $region7: #{embedding_net_forward.19} parent=1 // pred_check_branch
      %23 = sbr.rel (0) target = $region9
    $region8: #{embedding_net_forward.19} parent=1 // pred_region
      _
    $region9: #{embedding_net_forward.19} parent=1 // pred_fallthru
      _
    // Predicated region
    $region10: #{embedding_net_forward.19} parent=1 // pred_check
      _
    $region11: #{embedding_net_forward.19} parent=1 // pred_check_branch
      %25 = sbr.rel (0) target = $region13
    $region12: #{embedding_net_forward.19} parent=1 // pred_region
      _
    $region13: #{embedding_net_forward.19} parent=1 // pred_fallthru
      _
    // Predicated region
    $region14: #{embedding_net_forward.19} parent=1 // pred_check
      _
    $region15: #{embedding_net_forward.19} parent=1 // pred_check_branch
      %27 = sbr.rel (0) target = $region17
    $region16: #{embedding_net_forward.19} parent=1 // pred_region
      _
    $region17: #{embedding_net_forward.19} parent=1 // pred_fallthru
      _
    // Predicated region
    $region18: #{embedding_net_forward.19} parent=1 // pred_check
      _
    $region19: #{embedding_net_forward.19} parent=1 // pred_check_branch
      %29 = sbr.rel (0) target = $region21
    $region20: #{embedding_net_forward.19} parent=1 // pred_region
      _
    $region21: #{embedding_net_forward.19} parent=1 // pred_fallthru
      _
    // Predicated region
    $region22: #{embedding_net_forward.19} parent=1 // pred_check
      _
    $region23: #{embedding_net_forward.19} parent=1 // pred_check_branch
      %31 = sbr.rel (0) target = $region25
    $region24: #{embedding_net_forward.19} parent=1 // pred_region
      _
    $region25: #{embedding_net_forward.19} parent=1 // pred_fallthru
      _
    // Predicated region
    $region26: #{embedding_net_forward.19} parent=1 // pred_check
      _
    $region27: #{embedding_net_forward.19} parent=1 // pred_check_branch
      %33 = sbr.rel (0) target = $region29
    $region28: #{embedding_net_forward.19} parent=1 // pred_region
      _
    $region29: #{embedding_net_forward.19} parent=1 // pred_fallthru
      _
    // Predicated region
    $region30: #{embedding_net_forward.19} parent=1 // pred_check
      _
    $region31: #{embedding_net_forward.19} parent=1 // pred_check_branch
      %35 = sbr.rel (0) target = $region33
    $region32: #{embedding_net_forward.19} parent=1 // pred_region
      _
    $region33: #{embedding_net_forward.19} parent=1 // pred_fallthru
      _
    // Predicated region
    $region34: #{embedding_net_forward.19} parent=1 // pred_check
      _
    $region35: #{embedding_net_forward.19} parent=1 // pred_check_branch
      %37 = sbr.rel (0) target = $region37
    $region36: #{embedding_net_forward.19} parent=1 // pred_region
      _
    $region37: #{embedding_net_forward.19} parent=1 // pred_fallthru
      _
    // Predicated region
    $region38: #{embedding_net_forward.19} parent=1 // pred_check
      _
    $region39: #{embedding_net_forward.19} parent=1 // pred_check_branch
      %39 = sbr.rel (0) target = $region41
    $region40: #{embedding_net_forward.19} parent=1 // pred_region
      _
    $region41: #{embedding_net_forward.19} parent=1 // pred_fallthru
      _
    %v40 = vld [vmem:[%s0] sm:$0xf]
    %v41 = vld [vmem:[%s1] sm:$0xf]
    %v44 = vunpack.c.l.s4 1983009808
    %v45 = vunpack.c.0.s8 %v44
    %v46 = vlaneseq
    %v47 = vshrl.u32 %v46, 7
    %v48 = vsub.s32 %v45, %v47
    %v49 = vrot.slane %v40, %v48
    %v50 = vcombine.high %v49, %v49
    %v53 = vpack.c.bf16 %v49, %v49
    %v54 = vpack.c.bf16 %v50, %v50
    %v55 = vld [vmem:[%s2] sm:$0xff]
    %v56 = vld [vmem:[%s2 + $0x8] sm:$0xff]
    %v57 = vld [vmem:[%s2 + $0x10] sm:$0xff]
    %v58 = vld [vmem:[%s2 + $0x18] sm:$0xff]
    %v59 = vld [vmem:[%s2 + $0x20] sm:$0xff]
    %v60 = vld [vmem:[%s2 + $0x28] sm:$0xff]
    %v61 = vld [vmem:[%s2 + $0x30] sm:$0xff]
    %v62 = vld [vmem:[%s2 + $0x38] sm:$0xff]
    %v63 = vld [vmem:[%s2 + $0x40] sm:$0xff]
    %v64 = vld [vmem:[%s2 + $0x48] sm:$0xff]
    %v65 = vld [vmem:[%s2 + $0x50] sm:$0xff]
    %v66 = vld [vmem:[%s2 + $0x58] sm:$0xff]
    %v67 = vld [vmem:[%s2 + $0x60] sm:$0xff]
    %v68 = vld [vmem:[%s2 + $0x68] sm:$0xff]
    %v69 = vld [vmem:[%s2 + $0x70] sm:$0xff]
    %v70 = vld [vmem:[%s2 + $0x78] sm:$0xff]
    %v71 = vld [vmem:[%s2 + $0x80] sm:$0xff]
    %v72 = vld [vmem:[%s2 + $0x88] sm:$0xff]
    %v73 = vld [vmem:[%s2 + $0x90] sm:$0xff]
    %v74 = vld [vmem:[%s2 + $0x98] sm:$0xff]
    %v75 = vld [vmem:[%s2 + $0xa0] sm:$0xff]
    %v76 = vld [vmem:[%s2 + $0xa8] sm:$0xff]
    %v77 = vld [vmem:[%s2 + $0xb0] sm:$0xff]
    %v78 = vld [vmem:[%s2 + $0xb8] sm:$0xff]
    %v79 = vld [vmem:[%s2 + $0xc0] sm:$0xff]
    %v80 = vld [vmem:[%s2 + $0xc8] sm:$0xff]
    %v81 = vld [vmem:[%s2 + $0xd0] sm:$0xff]
    %v82 = vld [vmem:[%s2 + $0xd8] sm:$0xff]
    %v83 = vld [vmem:[%s2 + $0xe0] sm:$0xff]
    %v84 = vld [vmem:[%s2 + $0xe8] sm:$0xff]
    %v85 = vld [vmem:[%s2 + $0xf0] sm:$0xff]
    %v86 = vld [vmem:[%s2 + $0xf8] sm:$0xff]
    %v87 = vld [vmem:[%s3] sm:$0x3]
    %v89 = vlaneseq
    %v90 = vshrl.u32 %v89, 7
    %v91 = vsub.s32 0, %v90
    %v92 = vrot.slane %v87, %v91
    %v93 = vlaneseq
    %v94 = vshrl.u32 %v93, 7
    %v95 = vsub.s32 1, %v94
    %v96 = vrot.slane %v87, %v95
    %v131 = vunpack.c.l.b16 %v55
    %v132 = vunpack.c.h.b16 %v55
    %v133 = vunpack.c.l.b16 %v56
    %v134 = vunpack.c.h.b16 %v56
    %v135 = vunpack.c.l.b16 %v57
    %v136 = vunpack.c.h.b16 %v57
    %v137 = vunpack.c.l.b16 %v58
    %v138 = vunpack.c.h.b16 %v58
    %v139 = vunpack.c.l.b16 %v59
    %v140 = vunpack.c.h.b16 %v59
    %v141 = vunpack.c.l.b16 %v60
    %v142 = vunpack.c.h.b16 %v60
    %v143 = vunpack.c.l.b16 %v61
    %v144 = vunpack.c.h.b16 %v61
    %v145 = vunpack.c.l.b16 %v62
    %v146 = vunpack.c.h.b16 %v62
    %v147 = vunpack.c.l.b16 %v63
    %v148 = vunpack.c.h.b16 %v63
    %v149 = vunpack.c.l.b16 %v64
    %v150 = vunpack.c.h.b16 %v64
    %v151 = vunpack.c.l.b16 %v65
    %v152 = vunpack.c.h.b16 %v65
    %v153 = vunpack.c.l.b16 %v66
    %v154 = vunpack.c.h.b16 %v66
    %v155 = vunpack.c.l.b16 %v67
    %v156 = vunpack.c.h.b16 %v67
    %v157 = vunpack.c.l.b16 %v68
    %v158 = vunpack.c.h.b16 %v68
    %v159 = vunpack.c.l.b16 %v69
    %v160 = vunpack.c.h.b16 %v69
    %v161 = vunpack.c.l.b16 %v70
    %v162 = vunpack.c.h.b16 %v70
    %v163 = vunpack.c.l.b16 %v71
    %v164 = vunpack.c.h.b16 %v71
    %v165 = vunpack.c.l.b16 %v72
    %v166 = vunpack.c.h.b16 %v72
    %v167 = vunpack.c.l.b16 %v73
    %v168 = vunpack.c.h.b16 %v73
    %v169 = vunpack.c.l.b16 %v74
    %v170 = vunpack.c.h.b16 %v74
    %v171 = vunpack.c.l.b16 %v75
    %v172 = vunpack.c.h.b16 %v75
    %v173 = vunpack.c.l.b16 %v76
    %v174 = vunpack.c.h.b16 %v76
    %v175 = vunpack.c.l.b16 %v77
    %v176 = vunpack.c.h.b16 %v77
    %v177 = vunpack.c.l.b16 %v78
    %v178 = vunpack.c.h.b16 %v78
    %v179 = vunpack.c.l.b16 %v79
    %v180 = vunpack.c.h.b16 %v79
    %v181 = vunpack.c.l.b16 %v80
    %v182 = vunpack.c.h.b16 %v80
    %v183 = vunpack.c.l.b16 %v81
    %v184 = vunpack.c.h.b16 %v81
    %v185 = vunpack.c.l.b16 %v82
    %v186 = vunpack.c.h.b16 %v82
    %v187 = vunpack.c.l.b16 %v83
    %v188 = vunpack.c.h.b16 %v83
    %v189 = vunpack.c.l.b16 %v84
    %v190 = vunpack.c.h.b16 %v84
    %v191 = vunpack.c.l.b16 %v85
    %v192 = vunpack.c.h.b16 %v85
    %v193 = vunpack.c.l.b16 %v86
    %v194 = vunpack.c.h.b16 %v86
    %v195 = vpack.c.b16 %v133, %v131
    %v196 = vpack.c.b16 %v134, %v132
    %v197 = vpack.c.b16 %v137, %v135
    %v198 = vpack.c.b16 %v138, %v136
    %v199 = vpack.c.b16 %v141, %v139
    %v200 = vpack.c.b16 %v142, %v140
    %v201 = vpack.c.b16 %v145, %v143
    %v202 = vpack.c.b16 %v146, %v144
    %v203 = vpack.c.b16 %v149, %v147
    %v204 = vpack.c.b16 %v150, %v148
    %v205 = vpack.c.b16 %v153, %v151
    %v206 = vpack.c.b16 %v154, %v152
    %v207 = vpack.c.b16 %v157, %v155
    %v208 = vpack.c.b16 %v158, %v156
    %v209 = vpack.c.b16 %v161, %v159
    %v210 = vpack.c.b16 %v162, %v160
    %v211 = vpack.c.b16 %v165, %v163
    %v212 = vpack.c.b16 %v166, %v164
    %v213 = vpack.c.b16 %v169, %v167
    %v214 = vpack.c.b16 %v170, %v168
    %v215 = vpack.c.b16 %v173, %v171
    %v216 = vpack.c.b16 %v174, %v172
    %v217 = vpack.c.b16 %v177, %v175
    %v218 = vpack.c.b16 %v178, %v176
    %v219 = vpack.c.b16 %v181, %v179
    %v220 = vpack.c.b16 %v182, %v180
    %v221 = vpack.c.b16 %v185, %v183
    %v222 = vpack.c.b16 %v186, %v184
    %v223 = vpack.c.b16 %v189, %v187
    %v224 = vpack.c.b16 %v190, %v188
    %v225 = vpack.c.b16 %v193, %v191
    %v226 = vpack.c.b16 %v194, %v192
    %259 = vmatprep.subr.bf16.mxu0 %v196
    %260 = vmatpush1.bf16.msra.mxu0 %v195
    %261 = vmatprep.subr.bf16.mxu0 %v198
    %262 = vmatpush1.bf16.msra.mxu0 %v197
    %263 = vmatprep.subr.bf16.mxu0 %v200
    %264 = vmatpush1.bf16.msra.mxu0 %v199
    %265 = vmatprep.subr.bf16.mxu0 %v202
    %266 = vmatpush1.bf16.msra.mxu0 %v201
    %267 = vmatprep.subr.bf16.mxu0 %v204
    %268 = vmatpush1.bf16.msra.mxu0 %v203
    %269 = vmatprep.subr.bf16.mxu0 %v206
    %270 = vmatpush1.bf16.msra.mxu0 %v205
    %271 = vmatprep.subr.bf16.mxu0 %v208
    %272 = vmatpush1.bf16.msra.mxu0 %v207
    %273 = vmatprep.subr.bf16.mxu0 %v210
    %274 = vmatpush1.bf16.msra.mxu0 %v209
    %275 = vmatprep.subr.bf16.mxu0 %v212
    %276 = vmatpush1.bf16.msra.mxu0 %v211
    %277 = vmatprep.subr.bf16.mxu0 %v214
    %278 = vmatpush1.bf16.msra.mxu0 %v213
    %279 = vmatprep.subr.bf16.mxu0 %v216
    %280 = vmatpush1.bf16.msra.mxu0 %v215
    %281 = vmatprep.subr.bf16.mxu0 %v218
    %282 = vmatpush1.bf16.msra.mxu0 %v217
    %283 = vmatprep.subr.bf16.mxu0 %v220
    %284 = vmatpush1.bf16.msra.mxu0 %v219
    %285 = vmatprep.subr.bf16.mxu0 %v222
    %286 = vmatpush1.bf16.msra.mxu0 %v221
    %287 = vmatprep.subr.bf16.mxu0 %v224
    %288 = vmatpush1.bf16.msra.mxu0 %v223
    %289 = vmatprep.subr.bf16.mxu0 %v226
    %290 = vmatpush1.bf16.msra.mxu0 %v225
    %291 = vmatprep.mubr.bf16.mxu0 %v54
    %292 = vmatmul.mubr.bf16.gmra.mrb[0].mxu0 %v53
    %v293 = vpop.f32.mrb[0].mxu0
    %v294 = vadd.f32 %v92, %v293
    %v295 = vpop.f32.mrb[0].mxu0
    %v296 = vadd.f32 %v96, %v295
    %v297 = vpop.f32.mrb[0].mxu0
    %v298 = vpop.f32.mrb[0].mxu0
    %299 = vdwg.mxu0
    %v302 = vunpack.c.l.s4 1983009808
    %v303 = vunpack.c.0.s8 %v302
    %v304 = vlaneseq
    %v305 = vshrl.u32 %v304, 7
    %v306 = vsub.s32 %v303, %v305
    %v307 = vrot.slane %v41, %v306
    %v308 = vcombine.high %v307, %v307
    %v311 = vpack.c.bf16 %v307, %v307
    %v312 = vpack.c.bf16 %v308, %v308
    %v313 = vld [vmem:[%s4] sm:$0xff]
    %v314 = vld [vmem:[%s4 + $0x8] sm:$0xff]
    %v315 = vld [vmem:[%s4 + $0x10] sm:$0xff]
    %v316 = vld [vmem:[%s4 + $0x18] sm:$0xff]
    %v317 = vld [vmem:[%s4 + $0x20] sm:$0xff]
    %v318 = vld [vmem:[%s4 + $0x28] sm:$0xff]
    %v319 = vld [vmem:[%s4 + $0x30] sm:$0xff]
    %v320 = vld [vmem:[%s4 + $0x38] sm:$0xff]
    %v321 = vld [vmem:[%s4 + $0x40] sm:$0xff]
    %v322 = vld [vmem:[%s4 + $0x48] sm:$0xff]
    %v323 = vld [vmem:[%s4 + $0x50] sm:$0xff]
    %v324 = vld [vmem:[%s4 + $0x58] sm:$0xff]
    %v325 = vld [vmem:[%s4 + $0x60] sm:$0xff]
    %v326 = vld [vmem:[%s4 + $0x68] sm:$0xff]
    %v327 = vld [vmem:[%s4 + $0x70] sm:$0xff]
    %v328 = vld [vmem:[%s4 + $0x78] sm:$0xff]
    %v329 = vld [vmem:[%s4 + $0x80] sm:$0xff]
    %v330 = vld [vmem:[%s4 + $0x88] sm:$0xff]
    %v331 = vld [vmem:[%s4 + $0x90] sm:$0xff]
    %v332 = vld [vmem:[%s4 + $0x98] sm:$0xff]
    %v333 = vld [vmem:[%s4 + $0xa0] sm:$0xff]
    %v334 = vld [vmem:[%s4 + $0xa8] sm:$0xff]
    %v335 = vld [vmem:[%s4 + $0xb0] sm:$0xff]
    %v336 = vld [vmem:[%s4 + $0xb8] sm:$0xff]
    %v337 = vld [vmem:[%s4 + $0xc0] sm:$0xff]
    %v338 = vld [vmem:[%s4 + $0xc8] sm:$0xff]
    %v339 = vld [vmem:[%s4 + $0xd0] sm:$0xff]
    %v340 = vld [vmem:[%s4 + $0xd8] sm:$0xff]
    %v341 = vld [vmem:[%s4 + $0xe0] sm:$0xff]
    %v342 = vld [vmem:[%s4 + $0xe8] sm:$0xff]
    %v343 = vld [vmem:[%s4 + $0xf0] sm:$0xff]
    %v344 = vld [vmem:[%s4 + $0xf8] sm:$0xff]
    %v345 = vld [vmem:[%s5] sm:$0x3]
    %v347 = vlaneseq
    %v348 = vshrl.u32 %v347, 7
    %v349 = vsub.s32 0, %v348
    %v350 = vrot.slane %v345, %v349
    %v351 = vlaneseq
    %v352 = vshrl.u32 %v351, 7
    %v353 = vsub.s32 1, %v352
    %v354 = vrot.slane %v345, %v353
    %v389 = vunpack.c.l.b16 %v313
    %v390 = vunpack.c.h.b16 %v313
    %v391 = vunpack.c.l.b16 %v314
    %v392 = vunpack.c.h.b16 %v314
    %v393 = vunpack.c.l.b16 %v315
    %v394 = vunpack.c.h.b16 %v315
    %v395 = vunpack.c.l.b16 %v316
    %v396 = vunpack.c.h.b16 %v316
    %v397 = vunpack.c.l.b16 %v317
    %v398 = vunpack.c.h.b16 %v317
    %v399 = vunpack.c.l.b16 %v318
    %v400 = vunpack.c.h.b16 %v318
    %v401 = vunpack.c.l.b16 %v319
    %v402 = vunpack.c.h.b16 %v319
    %v403 = vunpack.c.l.b16 %v320
    %v404 = vunpack.c.h.b16 %v320
    %v405 = vunpack.c.l.b16 %v321
    %v406 = vunpack.c.h.b16 %v321
    %v407 = vunpack.c.l.b16 %v322
    %v408 = vunpack.c.h.b16 %v322
    %v409 = vunpack.c.l.b16 %v323
    %v410 = vunpack.c.h.b16 %v323
    %v411 = vunpack.c.l.b16 %v324
    %v412 = vunpack.c.h.b16 %v324
    %v413 = vunpack.c.l.b16 %v325
    %v414 = vunpack.c.h.b16 %v325
    %v415 = vunpack.c.l.b16 %v326
    %v416 = vunpack.c.h.b16 %v326
    %v417 = vunpack.c.l.b16 %v327
    %v418 = vunpack.c.h.b16 %v327
    %v419 = vunpack.c.l.b16 %v328
    %v420 = vunpack.c.h.b16 %v328
    %v421 = vunpack.c.l.b16 %v329
    %v422 = vunpack.c.h.b16 %v329
    %v423 = vunpack.c.l.b16 %v330
    %v424 = vunpack.c.h.b16 %v330
    %v425 = vunpack.c.l.b16 %v331
    %v426 = vunpack.c.h.b16 %v331
    %v427 = vunpack.c.l.b16 %v332
    %v428 = vunpack.c.h.b16 %v332
    %v429 = vunpack.c.l.b16 %v333
    %v430 = vunpack.c.h.b16 %v333
    %v431 = vunpack.c.l.b16 %v334
    %v432 = vunpack.c.h.b16 %v334
    %v433 = vunpack.c.l.b16 %v335
    %v434 = vunpack.c.h.b16 %v335
    %v435 = vunpack.c.l.b16 %v336
    %v436 = vunpack.c.h.b16 %v336
    %v437 = vunpack.c.l.b16 %v337
    %v438 = vunpack.c.h.b16 %v337
    %v439 = vunpack.c.l.b16 %v338
    %v440 = vunpack.c.h.b16 %v338
    %v441 = vunpack.c.l.b16 %v339
    %v442 = vunpack.c.h.b16 %v339
    %v443 = vunpack.c.l.b16 %v340
    %v444 = vunpack.c.h.b16 %v340
    %v445 = vunpack.c.l.b16 %v341
    %v446 = vunpack.c.h.b16 %v341
    %v447 = vunpack.c.l.b16 %v342
    %v448 = vunpack.c.h.b16 %v342
    %v449 = vunpack.c.l.b16 %v343
    %v450 = vunpack.c.h.b16 %v343
    %v451 = vunpack.c.l.b16 %v344
    %v452 = vunpack.c.h.b16 %v344
    %v453 = vpack.c.b16 %v391, %v389
    %v454 = vpack.c.b16 %v392, %v390
    %v455 = vpack.c.b16 %v395, %v393
    %v456 = vpack.c.b16 %v396, %v394
    %v457 = vpack.c.b16 %v399, %v397
    %v458 = vpack.c.b16 %v400, %v398
    %v459 = vpack.c.b16 %v403, %v401
    %v460 = vpack.c.b16 %v404, %v402
    %v461 = vpack.c.b16 %v407, %v405
    %v462 = vpack.c.b16 %v408, %v406
    %v463 = vpack.c.b16 %v411, %v409
    %v464 = vpack.c.b16 %v412, %v410
    %v465 = vpack.c.b16 %v415, %v413
    %v466 = vpack.c.b16 %v416, %v414
    %v467 = vpack.c.b16 %v419, %v417
    %v468 = vpack.c.b16 %v420, %v418
    %v469 = vpack.c.b16 %v423, %v421
    %v470 = vpack.c.b16 %v424, %v422
    %v471 = vpack.c.b16 %v427, %v425
    %v472 = vpack.c.b16 %v428, %v426
    %v473 = vpack.c.b16 %v431, %v429
    %v474 = vpack.c.b16 %v432, %v430
    %v475 = vpack.c.b16 %v435, %v433
    %v476 = vpack.c.b16 %v436, %v434
    %v477 = vpack.c.b16 %v439, %v437
    %v478 = vpack.c.b16 %v440, %v438
    %v479 = vpack.c.b16 %v443, %v441
    %v480 = vpack.c.b16 %v444, %v442
    %v481 = vpack.c.b16 %v447, %v445
    %v482 = vpack.c.b16 %v448, %v446
    %v483 = vpack.c.b16 %v451, %v449
    %v484 = vpack.c.b16 %v452, %v450
    %517 = vmatprep.subr.bf16.mxu0 %v454
    %518 = vmatpush1.bf16.msra.mxu0 %v453
    %519 = vmatprep.subr.bf16.mxu0 %v456
    %520 = vmatpush1.bf16.msra.mxu0 %v455
    %521 = vmatprep.subr.bf16.mxu0 %v458
    %522 = vmatpush1.bf16.msra.mxu0 %v457
    %523 = vmatprep.subr.bf16.mxu0 %v460
    %524 = vmatpush1.bf16.msra.mxu0 %v459
    %525 = vmatprep.subr.bf16.mxu0 %v462
    %526 = vmatpush1.bf16.msra.mxu0 %v461
    %527 = vmatprep.subr.bf16.mxu0 %v464
    %528 = vmatpush1.bf16.msra.mxu0 %v463
    %529 = vmatprep.subr.bf16.mxu0 %v466
    %530 = vmatpush1.bf16.msra.mxu0 %v465
    %531 = vmatprep.subr.bf16.mxu0 %v468
    %532 = vmatpush1.bf16.msra.mxu0 %v467
    %533 = vmatprep.subr.bf16.mxu0 %v470
    %534 = vmatpush1.bf16.msra.mxu0 %v469
    %535 = vmatprep.subr.bf16.mxu0 %v472
    %536 = vmatpush1.bf16.msra.mxu0 %v471
    %537 = vmatprep.subr.bf16.mxu0 %v474
    %538 = vmatpush1.bf16.msra.mxu0 %v473
    %539 = vmatprep.subr.bf16.mxu0 %v476
    %540 = vmatpush1.bf16.msra.mxu0 %v475
    %541 = vmatprep.subr.bf16.mxu0 %v478
    %542 = vmatpush1.bf16.msra.mxu0 %v477
    %543 = vmatprep.subr.bf16.mxu0 %v480
    %544 = vmatpush1.bf16.msra.mxu0 %v479
    %545 = vmatprep.subr.bf16.mxu0 %v482
    %546 = vmatpush1.bf16.msra.mxu0 %v481
    %547 = vmatprep.subr.bf16.mxu0 %v484
    %548 = vmatpush1.bf16.msra.mxu0 %v483
    %549 = vmatprep.mubr.bf16.mxu0 %v312
    %550 = vmatmul.mubr.bf16.gmra.mrb[0].mxu0 %v311
    %v551 = vpop.f32.mrb[0].mxu0
    %v552 = vadd.f32 %v350, %v551
    %v553 = vpop.f32.mrb[0].mxu0
    %v554 = vadd.f32 %v354, %v553
    %v555 = vpop.f32.mrb[0].mxu0
    %v556 = vpop.f32.mrb[0].mxu0
    %557 = vdwg.mxu0
    %v558 = vadd.f32 %v40, %v41
    %v559 = vmax.f32 %v294, 0.0
    %v560 = vmax.f32 %v296, 0.0
    %v563 = vcombine.low %v559, %v560
    %v565 = vunpack.c.l.s4 1983009808
    %v566 = vunpack.c.0.s8 %v565
    %v567 = vlaneseq
    %v568 = vshrl.u32 %v567, 7
    %v569 = vsub.s32 %v566, %v568
    %v570 = vrot.slane %v563, %v569
    %v572 = vadd.f32 %v558, %v570
    %v573 = vmax.f32 %v552, 0.0
    %v574 = vmax.f32 %v554, 0.0
    %v577 = vcombine.low %v573, %v574
    %v579 = vunpack.c.l.s4 1983009808
    %v580 = vunpack.c.0.s8 %v579
    %v581 = vlaneseq
    %v582 = vshrl.u32 %v581, 7
    %v583 = vsub.s32 %v580, %v582
    %v584 = vrot.slane %v577, %v583
    %v586 = vadd.f32 %v572, %v584
    %v587 = vld [vmem:[%s6] sm:$0xff]
    %v588 = vld [vmem:[%s6 + $0x8] sm:$0xff]
    %v589 = vld [vmem:[%s6 + $0x10] sm:$0xff]
    %v590 = vld [vmem:[%s6 + $0x18] sm:$0xff]
    %v591 = vld [vmem:[%s6 + $0x20] sm:$0xff]
    %v592 = vld [vmem:[%s6 + $0x28] sm:$0xff]
    %v593 = vld [vmem:[%s6 + $0x30] sm:$0xff]
    %v594 = vld [vmem:[%s6 + $0x38] sm:$0xff]
    %v595 = vld [vmem:[%s6 + $0x40] sm:$0xff]
    %v596 = vld [vmem:[%s6 + $0x48] sm:$0xff]
    %v597 = vld [vmem:[%s6 + $0x50] sm:$0xff]
    %v598 = vld [vmem:[%s6 + $0x58] sm:$0xff]
    %v599 = vld [vmem:[%s6 + $0x60] sm:$0xff]
    %v600 = vld [vmem:[%s6 + $0x68] sm:$0xff]
    %v601 = vld [vmem:[%s6 + $0x70] sm:$0xff]
    %v602 = vld [vmem:[%s6 + $0x78] sm:$0xff]
    %v603 = vld [vmem:[%s6 + $0x80] sm:$0xff]
    %v604 = vld [vmem:[%s6 + $0x88] sm:$0xff]
    %v605 = vld [vmem:[%s6 + $0x90] sm:$0xff]
    %v606 = vld [vmem:[%s6 + $0x98] sm:$0xff]
    %v607 = vld [vmem:[%s6 + $0xa0] sm:$0xff]
    %v608 = vld [vmem:[%s6 + $0xa8] sm:$0xff]
    %v609 = vld [vmem:[%s6 + $0xb0] sm:$0xff]
    %v610 = vld [vmem:[%s6 + $0xb8] sm:$0xff]
    %v611 = vld [vmem:[%s6 + $0xc0] sm:$0xff]
    %v612 = vld [vmem:[%s6 + $0xc8] sm:$0xff]
    %v613 = vld [vmem:[%s6 + $0xd0] sm:$0xff]
    %v614 = vld [vmem:[%s6 + $0xd8] sm:$0xff]
    %v615 = vld [vmem:[%s6 + $0xe0] sm:$0xff]
    %v616 = vld [vmem:[%s6 + $0xe8] sm:$0xff]
    %v617 = vld [vmem:[%s6 + $0xf0] sm:$0xff]
    %v618 = vld [vmem:[%s6 + $0xf8] sm:$0xff]
    %v619 = vld [vmem:[%s7] sm:$0x1]
    %v621 = vlaneseq
    %v622 = vshrl.u32 %v621, 7
    %v623 = vsub.s32 0, %v622
    %v624 = vrot.slane %v619, %v623
    %v628 = vunpack.c.l.s4 1983009808
    %v629 = vunpack.c.0.s8 %v628
    %v630 = vlaneseq
    %v631 = vshrl.u32 %v630, 7
    %v632 = vsub.s32 %v629, %v631
    %v633 = vrot.slane %v586, %v632
    %v634 = vcombine.high %v633, %v633
    %637 = vmatprep.subr.mxu0 0.0
    %638 = vmatpush1.msra.mxu0 %v587
    %639 = vmatprep.subr.mxu0 0.0
    %640 = vmatpush1.msra.mxu0 %v588
    %641 = vmatprep.subr.mxu0 0.0
    %642 = vmatpush1.msra.mxu0 %v589
    %643 = vmatprep.subr.mxu0 0.0
    %644 = vmatpush1.msra.mxu0 %v590
    %645 = vmatprep.subr.mxu0 0.0
    %646 = vmatpush1.msra.mxu0 %v591
    %647 = vmatprep.subr.mxu0 0.0
    %648 = vmatpush1.msra.mxu0 %v592
    %649 = vmatprep.subr.mxu0 0.0
    %650 = vmatpush1.msra.mxu0 %v593
    %651 = vmatprep.subr.mxu0 0.0
    %652 = vmatpush1.msra.mxu0 %v594
    %653 = vmatprep.subr.mxu0 0.0
    %654 = vmatpush1.msra.mxu0 %v595
    %655 = vmatprep.subr.mxu0 0.0
    %656 = vmatpush1.msra.mxu0 %v596
    %657 = vmatprep.subr.mxu0 0.0
    %658 = vmatpush1.msra.mxu0 %v597
    %659 = vmatprep.subr.mxu0 0.0
    %660 = vmatpush1.msra.mxu0 %v598
    %661 = vmatprep.subr.mxu0 0.0
    %662 = vmatpush1.msra.mxu0 %v599
    %663 = vmatprep.subr.mxu0 0.0
    %664 = vmatpush1.msra.mxu0 %v600
    %665 = vmatprep.subr.mxu0 0.0
    %666 = vmatpush1.msra.mxu0 %v601
    %667 = vmatprep.subr.mxu0 0.0
    %668 = vmatpush1.msra.mxu0 %v602
    %669 = vmatprep.subr.mxu0 0.0
    %670 = vmatpush1.msra.mxu0 %v603
    %671 = vmatprep.subr.mxu0 0.0
    %672 = vmatpush1.msra.mxu0 %v604
    %673 = vmatprep.subr.mxu0 0.0
    %674 = vmatpush1.msra.mxu0 %v605
    %675 = vmatprep.subr.mxu0 0.0
    %676 = vmatpush1.msra.mxu0 %v606
    %677 = vmatprep.subr.mxu0 0.0
    %678 = vmatpush1.msra.mxu0 %v607
    %679 = vmatprep.subr.mxu0 0.0
    %680 = vmatpush1.msra.mxu0 %v608
    %681 = vmatprep.subr.mxu0 0.0
    %682 = vmatpush1.msra.mxu0 %v609
    %683 = vmatprep.subr.mxu0 0.0
    %684 = vmatpush1.msra.mxu0 %v610
    %685 = vmatprep.subr.mxu0 0.0
    %686 = vmatpush1.msra.mxu0 %v611
    %687 = vmatprep.subr.mxu0 0.0
    %688 = vmatpush1.msra.mxu0 %v612
    %689 = vmatprep.subr.mxu0 0.0
    %690 = vmatpush1.msra.mxu0 %v613
    %691 = vmatprep.subr.mxu0 0.0
    %692 = vmatpush1.msra.mxu0 %v614
    %693 = vmatprep.subr.mxu0 0.0
    %694 = vmatpush1.msra.mxu0 %v615
    %695 = vmatprep.subr.mxu0 0.0
    %696 = vmatpush1.msra.mxu0 %v616
    %697 = vmatprep.subr.mxu0 0.0
    %698 = vmatpush1.msra.mxu0 %v617
    %699 = vmatprep.subr.mxu0 0.0
    %700 = vmatpush1.msra.mxu0 %v618
    %701 = vmatprep.mubr.f32.mxu0 %v634
    %702 = vmatmul.mubr.f32.gmra.mrb[0].mxu0 %v633
    %v703 = vpop.f32.mrb[0].mxu0
    %v704 = vadd.f32 %v624, %v703
    %v705 = vpop.f32.mrb[0].mxu0
    %706 = vdwg.mxu0
    %vm707 = vcmask 50176
    %708 = vst.msk [vmem:[#allocation3] sm:$0x3] %vm707, %v704
    %v709 = vld [vmem:[%s8] sm:$0x1]
    %v711 = vlaneseq
    %v712 = vshrl.u32 %v711, 7
    %v713 = vsub.s32 0, %v712
    %v714 = vrot.slane %v709, %v713
    %v716 = vmul.f32 %v704, %v714
    %v717 = vsel %vm707, %v716, 0.0
    %718 = vadd.xlane.f32.xlu0 %v717
    %v719 = vpop.xlane.xlu0 %718
    %v720 = vld [vmem:[#allocation2] sm:$0x1]
    %v722 = vlaneseq
    %v723 = vshrl.u32 %v722, 7
    %v724 = vsub.s32 0, %v723
    %v725 = vrot.slane %v720, %v724
    %v727 = vadd.f32 %v719, %v725
    %vm728 = vcmask 1024
    %729 = vst.msk [vmem:[%s11] sm:$0x3] %vm728, %v727
    // Predicated region
    $region42: #{embedding_net_forward.19} parent=1 // pred_check
      _
    $region43: #{embedding_net_forward.19} parent=1 // pred_check_branch
      %731 = sbr.rel (0) target = $region45
    $region44: #{embedding_net_forward.19} parent=1 // pred_region
      %s733 = ssub.s32 32, 32
      %734 = vsyncadd [#allocation4], %s733
      %s736 = sshll.u32 [#allocation3], 4
      %s737 = int_to_ptr.vmem [resolvable:$true] %s736
      %739 = dma.vmem_to_hbm [thread:$0]  %s737, 32, %s10, [#allocation4]
    $region45: #{embedding_net_forward.19} parent=1 // pred_fallthru
      _
    // Predicated region
    $region46: #{embedding_net_forward.19} parent=1 // pred_check
      _
    $region47: #{embedding_net_forward.19} parent=1 // pred_check_branch
      %741 = sbr.rel (0) target = $region49
    $region48: #{embedding_net_forward.19} parent=1 // pred_region
      _
    $region49: #{embedding_net_forward.19} parent=1 // pred_fallthru
      _
    // Predicated region
    $region50: #{embedding_net_forward.19} parent=1 // pred_check
      _
    $region51: #{embedding_net_forward.19} parent=1 // pred_check_branch
      %743 = sbr.rel (0) target = $region53
    $region52: #{embedding_net_forward.19} parent=1 // pred_region
      %744 = dma.done [#allocation4], 32
    $region53: #{embedding_net_forward.19} parent=1 // pred_fallthru
      _
    // Predicated region
    $region54: #{embedding_net_forward.19} parent=1 // pred_check
      _
    $region55: #{embedding_net_forward.19} parent=1 // pred_check_branch
      %746 = sbr.rel (0) target = $region57
    $region56: #{embedding_net_forward.19} parent=1 // pred_region
      _
    $region57: #{embedding_net_forward.19} parent=1 // pred_fallthru
      _
    %747 = vsyncpa [#allocation4], 1

// kernel: embedding_net_forward.16
$region0: #{embedding_net_forward.16}
  #allocation0 [shape = 'u32[]', space=smem, size = 0x4, offset = 0x4, fixed_abs, tag = 'smem constant byte address 0x4 - core index']
  #allocation1 [shape = 'u32[144,128]{1,0:T(1,128)}', space=vmem, size = 0x12000, scoped, tag = 'internal scratch']
  %s0 = inlined_call_operand.vmem [shape: f32[8,8,1024], index: 0, kind: input, shape index: {}]
  %s1 = inlined_call_operand.vmem [shape: bf16[2,128,512], index: 1, kind: input, shape index: {}]
  %s2 = inlined_call_operand.vmem [shape: f32[8,8,256], index: 2, kind: output, shape index: {}]
  %s3 = sld [smem:[#allocation0]]
  $region18: #{embedding_net_forward.16} parent=0
    _
  %s5 = ssub.s32 1, %s3
  %s6 = scalar_select 0, %s5, %s3
  // Predicated region
  $region2: #{embedding_net_forward.16} parent=0 // pred_check
    _
  $region3: #{embedding_net_forward.16} parent=0 // pred_check_branch
    %8 = sbr.rel (0) target = $region5
  $region4: #{embedding_net_forward.16} parent=0 // pred_region
    _
  $region5: #{embedding_net_forward.16} parent=0 // pred_fallthru
    _
  // Predicated region
  $region6: #{embedding_net_forward.16} parent=0 // pred_check
    _
  $region7: #{embedding_net_forward.16} parent=0 // pred_check_branch
    %10 = sbr.rel (0) target = $region9
  $region8: #{embedding_net_forward.16} parent=0 // pred_region
    _
  $region9: #{embedding_net_forward.16} parent=0 // pred_fallthru
    _
  %v12 = vld [vmem:[%s1] sm:$0xff]
  %v13 = vld [vmem:[%s1 + $0x8] sm:$0xff]
  %v14 = vld [vmem:[%s1 + $0x10] sm:$0xff]
  %v15 = vld [vmem:[%s1 + $0x18] sm:$0xff]
  %v16 = vld [vmem:[%s1 + $0x20] sm:$0xff]
  %v17 = vld [vmem:[%s1 + $0x28] sm:$0xff]
  %v18 = vld [vmem:[%s1 + $0x30] sm:$0xff]
  %v19 = vld [vmem:[%s1 + $0x38] sm:$0xff]
  %v20 = vld [vmem:[%s1 + $0x40] sm:$0xff]
  %v21 = vld [vmem:[%s1 + $0x48] sm:$0xff]
  %v22 = vld [vmem:[%s1 + $0x50] sm:$0xff]
  %v23 = vld [vmem:[%s1 + $0x58] sm:$0xff]
  %v24 = vld [vmem:[%s1 + $0x60] sm:$0xff]
  %v25 = vld [vmem:[%s1 + $0x68] sm:$0xff]
  %v26 = vld [vmem:[%s1 + $0x70] sm:$0xff]
  %v27 = vld [vmem:[%s1 + $0x78] sm:$0xff]
  %v28 = vld [vmem:[%s1 + $0x80] sm:$0xff]
  %v29 = vld [vmem:[%s1 + $0x88] sm:$0xff]
  %v30 = vld [vmem:[%s1 + $0x90] sm:$0xff]
  %v31 = vld [vmem:[%s1 + $0x98] sm:$0xff]
  %v32 = vld [vmem:[%s1 + $0xa0] sm:$0xff]
  %v33 = vld [vmem:[%s1 + $0xa8] sm:$0xff]
  %v34 = vld [vmem:[%s1 + $0xb0] sm:$0xff]
  %v35 = vld [vmem:[%s1 + $0xb8] sm:$0xff]
  %v36 = vld [vmem:[%s1 + $0xc0] sm:$0xff]
  %v37 = vld [vmem:[%s1 + $0xc8] sm:$0xff]
  %v38 = vld [vmem:[%s1 + $0xd0] sm:$0xff]
  %v39 = vld [vmem:[%s1 + $0xd8] sm:$0xff]
  %v40 = vld [vmem:[%s1 + $0xe0] sm:$0xff]
  %v41 = vld [vmem:[%s1 + $0xe8] sm:$0xff]
  %v42 = vld [vmem:[%s1 + $0xf0] sm:$0xff]
  %v43 = vld [vmem:[%s1 + $0xf8] sm:$0xff]
  %s44 = scalar_lea.vmem %s1, 256
  %v45 = vld [vmem:[%s44] sm:$0xff]
  %v46 = vld [vmem:[%s44 + $0x8] sm:$0xff]
  %v47 = vld [vmem:[%s44 + $0x10] sm:$0xff]
  %v48 = vld [vmem:[%s44 + $0x18] sm:$0xff]
  %v49 = vld [vmem:[%s44 + $0x20] sm:$0xff]
  %v50 = vld [vmem:[%s44 + $0x28] sm:$0xff]
  %v51 = vld [vmem:[%s44 + $0x30] sm:$0xff]
  %v52 = vld [vmem:[%s44 + $0x38] sm:$0xff]
  %v53 = vld [vmem:[%s44 + $0x40] sm:$0xff]
  %v54 = vld [vmem:[%s44 + $0x48] sm:$0xff]
  %v55 = vld [vmem:[%s44 + $0x50] sm:$0xff]
  %v56 = vld [vmem:[%s44 + $0x58] sm:$0xff]
  %v57 = vld [vmem:[%s44 + $0x60] sm:$0xff]
  %v58 = vld [vmem:[%s44 + $0x68] sm:$0xff]
  %v59 = vld [vmem:[%s44 + $0x70] sm:$0xff]
  %v60 = vld [vmem:[%s44 + $0x78] sm:$0xff]
  %v61 = vld [vmem:[%s44 + $0x80] sm:$0xff]
  %v62 = vld [vmem:[%s44 + $0x88] sm:$0xff]
  %v63 = vld [vmem:[%s44 + $0x90] sm:$0xff]
  %v64 = vld [vmem:[%s44 + $0x98] sm:$0xff]
  %v65 = vld [vmem:[%s44 + $0xa0] sm:$0xff]
  %v66 = vld [vmem:[%s44 + $0xa8] sm:$0xff]
  %v67 = vld [vmem:[%s44 + $0xb0] sm:$0xff]
  %v68 = vld [vmem:[%s44 + $0xb8] sm:$0xff]
  %v69 = vld [vmem:[%s44 + $0xc0] sm:$0xff]
  %v70 = vld [vmem:[%s44 + $0xc8] sm:$0xff]
  %v71 = vld [vmem:[%s44 + $0xd0] sm:$0xff]
  %v72 = vld [vmem:[%s44 + $0xd8] sm:$0xff]
  %v73 = vld [vmem:[%s44 + $0xe0] sm:$0xff]
  %v74 = vld [vmem:[%s44 + $0xe8] sm:$0xff]
  %v75 = vld [vmem:[%s44 + $0xf0] sm:$0xff]
  %v76 = vld [vmem:[%s44 + $0xf8] sm:$0xff]
  %v77 = vld [vmem:[%s0] sm:$0xff]
  %v78 = vld [vmem:[%s0 + $0x8] sm:$0xff]
  %v79 = vld [vmem:[%s0 + $0x10] sm:$0xff]
  %v80 = vld [vmem:[%s0 + $0x18] sm:$0xff]
  %s81 = scalar_lea.vmem %s0, 448
  %v82 = vld [vmem:[%s81 + $0x20] sm:$0xff]
  %v83 = vld [vmem:[%s81 + $0x28] sm:$0xff]
  %v84 = vld [vmem:[%s81 + $0x30] sm:$0xff]
  %v85 = vld [vmem:[%s81 + $0x38] sm:$0xff]
  %v118 = vunpack.c.l.b16 %v12
  %v119 = vunpack.c.h.b16 %v12
  %v120 = vunpack.c.l.b16 %v13
  %v121 = vunpack.c.h.b16 %v13
  %v122 = vunpack.c.l.b16 %v14
  %v123 = vunpack.c.h.b16 %v14
  %v124 = vunpack.c.l.b16 %v15
  %v125 = vunpack.c.h.b16 %v15
  %v126 = vunpack.c.l.b16 %v16
  %v127 = vunpack.c.h.b16 %v16
  %v128 = vunpack.c.l.b16 %v17
  %v129 = vunpack.c.h.b16 %v17
  %v130 = vunpack.c.l.b16 %v18
  %v131 = vunpack.c.h.b16 %v18
  %v132 = vunpack.c.l.b16 %v19
  %v133 = vunpack.c.h.b16 %v19
  %v134 = vunpack.c.l.b16 %v20
  %v135 = vunpack.c.h.b16 %v20
  %v136 = vunpack.c.l.b16 %v21
  %v137 = vunpack.c.h.b16 %v21
  %v138 = vunpack.c.l.b16 %v22
  %v139 = vunpack.c.h.b16 %v22
  %v140 = vunpack.c.l.b16 %v23
  %v141 = vunpack.c.h.b16 %v23
  %v142 = vunpack.c.l.b16 %v24
  %v143 = vunpack.c.h.b16 %v24
  %v144 = vunpack.c.l.b16 %v25
  %v145 = vunpack.c.h.b16 %v25
  %v146 = vunpack.c.l.b16 %v26
  %v147 = vunpack.c.h.b16 %v26
  %v148 = vunpack.c.l.b16 %v27
  %v149 = vunpack.c.h.b16 %v27
  %v150 = vunpack.c.l.b16 %v28
  %v151 = vunpack.c.h.b16 %v28
  %v152 = vunpack.c.l.b16 %v29
  %v153 = vunpack.c.h.b16 %v29
  %v154 = vunpack.c.l.b16 %v30
  %v155 = vunpack.c.h.b16 %v30
  %v156 = vunpack.c.l.b16 %v31
  %v157 = vunpack.c.h.b16 %v31
  %v158 = vunpack.c.l.b16 %v32
  %v159 = vunpack.c.h.b16 %v32
  %v160 = vunpack.c.l.b16 %v33
  %v161 = vunpack.c.h.b16 %v33
  %v162 = vunpack.c.l.b16 %v34
  %v163 = vunpack.c.h.b16 %v34
  %v164 = vunpack.c.l.b16 %v35
  %v165 = vunpack.c.h.b16 %v35
  %v166 = vunpack.c.l.b16 %v36
  %v167 = vunpack.c.h.b16 %v36
  %v168 = vunpack.c.l.b16 %v37
  %v169 = vunpack.c.h.b16 %v37
  %v170 = vunpack.c.l.b16 %v38
  %v171 = vunpack.c.h.b16 %v38
  %v172 = vunpack.c.l.b16 %v39
  %v173 = vunpack.c.h.b16 %v39
  %v174 = vunpack.c.l.b16 %v40
  %v175 = vunpack.c.h.b16 %v40
  %v176 = vunpack.c.l.b16 %v41
  %v177 = vunpack.c.h.b16 %v41
  %v178 = vunpack.c.l.b16 %v42
  %v179 = vunpack.c.h.b16 %v42
  %v180 = vunpack.c.l.b16 %v43
  %v181 = vunpack.c.h.b16 %v43
  %v182 = vpack.c.b16 %v122, %v118
  %v183 = vpack.c.b16 %v123, %v119
  %v184 = vpack.c.b16 %v124, %v120
  %v185 = vpack.c.b16 %v125, %v121
  %v186 = vpack.c.b16 %v130, %v126
  %v187 = vpack.c.b16 %v131, %v127
  %v188 = vpack.c.b16 %v132, %v128
  %v189 = vpack.c.b16 %v133, %v129
  %v190 = vpack.c.b16 %v138, %v134
  %v191 = vpack.c.b16 %v139, %v135
  %v192 = vpack.c.b16 %v140, %v136
  %v193 = vpack.c.b16 %v141, %v137
  %v194 = vpack.c.b16 %v146, %v142
  %v195 = vpack.c.b16 %v147, %v143
  %v196 = vpack.c.b16 %v148, %v144
  %v197 = vpack.c.b16 %v149, %v145
  %v198 = vpack.c.b16 %v154, %v150
  %v199 = vpack.c.b16 %v155, %v151
  %v200 = vpack.c.b16 %v156, %v152
  %v201 = vpack.c.b16 %v157, %v153
  %v202 = vpack.c.b16 %v162, %v158
  %v203 = vpack.c.b16 %v163, %v159
  %v204 = vpack.c.b16 %v164, %v160
  %v205 = vpack.c.b16 %v165, %v161
  %v206 = vpack.c.b16 %v170, %v166
  %v207 = vpack.c.b16 %v171, %v167
  %v208 = vpack.c.b16 %v172, %v168
  %v209 = vpack.c.b16 %v173, %v169
  %v210 = vpack.c.b16 %v178, %v174
  %v211 = vpack.c.b16 %v179, %v175
  %v212 = vpack.c.b16 %v180, %v176
  %v213 = vpack.c.b16 %v181, %v177
  %246 = vmatprep.subr.bf16.mxu0 %v183
  %247 = vmatpush1.bf16.msra.mxu0 %v182
  %248 = vmatprep.subr.bf16.mxu0 %v187
  %249 = vmatpush1.bf16.msra.mxu0 %v186
  %250 = vmatprep.subr.bf16.mxu0 %v191
  %251 = vmatpush1.bf16.msra.mxu0 %v190
  %252 = vmatprep.subr.bf16.mxu0 %v195
  %253 = vmatpush1.bf16.msra.mxu0 %v194
  %254 = vmatprep.subr.bf16.mxu0 %v199
  %255 = vmatpush1.bf16.msra.mxu0 %v198
  %256 = vmatprep.subr.bf16.mxu0 %v203
  %257 = vmatpush1.bf16.msra.mxu0 %v202
  %258 = vmatprep.subr.bf16.mxu0 %v207
  %259 = vmatpush1.bf16.msra.mxu0 %v206
  %260 = vmatprep.subr.bf16.mxu0 %v211
  %261 = vmatpush1.bf16.msra.mxu0 %v210
  %262 = vmatprep.subr.bf16.mxu0 0
  %263 = vmatpush1.bf16.msra.mxu0 0
  %264 = vmatprep.subr.bf16.mxu0 0
  %265 = vmatpush1.bf16.msra.mxu0 0
  %266 = vmatprep.subr.bf16.mxu0 0
  %267 = vmatpush1.bf16.msra.mxu0 0
  %268 = vmatprep.subr.bf16.mxu0 0
  %269 = vmatpush1.bf16.msra.mxu0 0
  %270 = vmatprep.subr.bf16.mxu0 0
  %271 = vmatpush1.bf16.msra.mxu0 0
  %272 = vmatprep.subr.bf16.mxu0 0
  %273 = vmatpush1.bf16.msra.mxu0 0
  %274 = vmatprep.subr.bf16.mxu0 0
  %275 = vmatpush1.bf16.msra.mxu0 0
  %276 = vmatprep.subr.bf16.mxu0 0
  %277 = vmatpush1.bf16.msra.mxu0 0
  %278 = vmatprep.mubr.bf16.mxu0 0
  %279 = vmatmul.mubr.bf16.gmra.mrb[0].mxu0 0
  %v280 = vpop.f32.mrb[0].mxu0
  %v281 = vadd.f32 0.0, %v280
  %v282 = vpop.f32.mrb[0].mxu0
  %v283 = vadd.f32 0.0, %v282
  %v284 = vpop.f32.mrb[0].mxu0
  %v285 = vpop.f32.mrb[0].mxu0
  %286 = vdwg.mxu0
  %287 = vmatprep.subr.bf16.mxu0 %v185
  %288 = vmatpush1.bf16.msra.mxu0 %v184
  %289 = vmatprep.subr.bf16.mxu0 %v189
  %290 = vmatpush1.bf16.msra.mxu0 %v188
  %291 = vmatprep.subr.bf16.mxu0 %v193
  %292 = vmatpush1.bf16.msra.mxu0 %v192
  %293 = vmatprep.subr.bf16.mxu0 %v197
  %294 = vmatpush1.bf16.msra.mxu0 %v196
  %295 = vmatprep.subr.bf16.mxu0 %v201
  %296 = vmatpush1.bf16.msra.mxu0 %v200
  %297 = vmatprep.subr.bf16.mxu0 %v205
  %298 = vmatpush1.bf16.msra.mxu0 %v204
  %299 = vmatprep.subr.bf16.mxu0 %v209
  %300 = vmatpush1.bf16.msra.mxu0 %v208
  %301 = vmatprep.subr.bf16.mxu0 %v213
  %302 = vmatpush1.bf16.msra.mxu0 %v212
  %303 = vmatprep.subr.bf16.mxu0 0
  %304 = vmatpush1.bf16.msra.mxu0 0
  %305 = vmatprep.subr.bf16.mxu0 0
  %306 = vmatpush1.bf16.msra.mxu0 0
  %307 = vmatprep.subr.bf16.mxu0 0
  %308 = vmatpush1.bf16.msra.mxu0 0
  %309 = vmatprep.subr.bf16.mxu0 0
  %310 = vmatpush1.bf16.msra.mxu0 0
  %311 = vmatprep.subr.bf16.mxu0 0
  %312 = vmatpush1.bf16.msra.mxu0 0
  %313 = vmatprep.subr.bf16.mxu0 0
  %314 = vmatpush1.bf16.msra.mxu0 0
  %315 = vmatprep.subr.bf16.mxu0 0
  %316 = vmatpush1.bf16.msra.mxu0 0
  %317 = vmatprep.subr.bf16.mxu0 0
  %318 = vmatpush1.bf16.msra.mxu0 0
  %319 = vmatprep.mubr.bf16.mxu0 0
  %320 = vmatmul.mubr.bf16.gmra.mrb[0].mxu0 0
  %v321 = vpop.f32.mrb[0].mxu0
  %v322 = vadd.f32 0.0, %v321
  %v323 = vpop.f32.mrb[0].mxu0
  %v324 = vadd.f32 0.0, %v323
  %v325 = vpop.f32.mrb[0].mxu0
  %v326 = vpop.f32.mrb[0].mxu0
  %327 = vdwg.mxu0
  %v328 = vadd.f32 %v77, %v281
  %v329 = vadd.f32 %v78, %v283
  %v330 = vadd.f32 %v79, %v322
  %v331 = vadd.f32 %v80, %v324
  %v364 = vunpack.c.l.b16 %v45
  %v365 = vunpack.c.h.b16 %v45
  %v366 = vunpack.c.l.b16 %v46
  %v367 = vunpack.c.h.b16 %v46
  %v368 = vunpack.c.l.b16 %v47
  %v369 = vunpack.c.h.b16 %v47
  %v370 = vunpack.c.l.b16 %v48
  %v371 = vunpack.c.h.b16 %v48
  %v372 = vunpack.c.l.b16 %v49
  %v373 = vunpack.c.h.b16 %v49
  %v374 = vunpack.c.l.b16 %v50
  %v375 = vunpack.c.h.b16 %v50
  %v376 = vunpack.c.l.b16 %v51
  %v377 = vunpack.c.h.b16 %v51
  %v378 = vunpack.c.l.b16 %v52
  %v379 = vunpack.c.h.b16 %v52
  %v380 = vunpack.c.l.b16 %v53
  %v381 = vunpack.c.h.b16 %v53
  %v382 = vunpack.c.l.b16 %v54
  %v383 = vunpack.c.h.b16 %v54
  %v384 = vunpack.c.l.b16 %v55
  %v385 = vunpack.c.h.b16 %v55
  %v386 = vunpack.c.l.b16 %v56
  %v387 = vunpack.c.h.b16 %v56
  %v388 = vunpack.c.l.b16 %v57
  %v389 = vunpack.c.h.b16 %v57
  %v390 = vunpack.c.l.b16 %v58
  %v391 = vunpack.c.h.b16 %v58
  %v392 = vunpack.c.l.b16 %v59
  %v393 = vunpack.c.h.b16 %v59
  %v394 = vunpack.c.l.b16 %v60
  %v395 = vunpack.c.h.b16 %v60
  %v396 = vunpack.c.l.b16 %v61
  %v397 = vunpack.c.h.b16 %v61
  %v398 = vunpack.c.l.b16 %v62
  %v399 = vunpack.c.h.b16 %v62
  %v400 = vunpack.c.l.b16 %v63
  %v401 = vunpack.c.h.b16 %v63
  %v402 = vunpack.c.l.b16 %v64
  %v403 = vunpack.c.h.b16 %v64
  %v404 = vunpack.c.l.b16 %v65
  %v405 = vunpack.c.h.b16 %v65
  %v406 = vunpack.c.l.b16 %v66
  %v407 = vunpack.c.h.b16 %v66
  %v408 = vunpack.c.l.b16 %v67
  %v409 = vunpack.c.h.b16 %v67
  %v410 = vunpack.c.l.b16 %v68
  %v411 = vunpack.c.h.b16 %v68
  %v412 = vunpack.c.l.b16 %v69
  %v413 = vunpack.c.h.b16 %v69
  %v414 = vunpack.c.l.b16 %v70
  %v415 = vunpack.c.h.b16 %v70
  %v416 = vunpack.c.l.b16 %v71
  %v417 = vunpack.c.h.b16 %v71
  %v418 = vunpack.c.l.b16 %v72
  %v419 = vunpack.c.h.b16 %v72
  %v420 = vunpack.c.l.b16 %v73
  %v421 = vunpack.c.h.b16 %v73
  %v422 = vunpack.c.l.b16 %v74
  %v423 = vunpack.c.h.b16 %v74
  %v424 = vunpack.c.l.b16 %v75
  %v425 = vunpack.c.h.b16 %v75
  %v426 = vunpack.c.l.b16 %v76
  %v427 = vunpack.c.h.b16 %v76
  %v428 = vpack.c.b16 %v368, %v364
  %v429 = vpack.c.b16 %v369, %v365
  %v430 = vpack.c.b16 %v370, %v366
  %v431 = vpack.c.b16 %v371, %v367
  %v432 = vpack.c.b16 %v376, %v372
  %v433 = vpack.c.b16 %v377, %v373
  %v434 = vpack.c.b16 %v378, %v374
  %v435 = vpack.c.b16 %v379, %v375
  %v436 = vpack.c.b16 %v384, %v380
  %v437 = vpack.c.b16 %v385, %v381
  %v438 = vpack.c.b16 %v386, %v382
  %v439 = vpack.c.b16 %v387, %v383
  %v440 = vpack.c.b16 %v392, %v388
  %v441 = vpack.c.b16 %v393, %v389
  %v442 = vpack.c.b16 %v394, %v390
  %v443 = vpack.c.b16 %v395, %v391
  %v444 = vpack.c.b16 %v400, %v396
  %v445 = vpack.c.b16 %v401, %v397
  %v446 = vpack.c.b16 %v402, %v398
  %v447 = vpack.c.b16 %v403, %v399
  %v448 = vpack.c.b16 %v408, %v404
  %v449 = vpack.c.b16 %v409, %v405
  %v450 = vpack.c.b16 %v410, %v406
  %v451 = vpack.c.b16 %v411, %v407
  %v452 = vpack.c.b16 %v416, %v412
  %v453 = vpack.c.b16 %v417, %v413
  %v454 = vpack.c.b16 %v418, %v414
  %v455 = vpack.c.b16 %v419, %v415
  %v456 = vpack.c.b16 %v424, %v420
  %v457 = vpack.c.b16 %v425, %v421
  %v458 = vpack.c.b16 %v426, %v422
  %v459 = vpack.c.b16 %v427, %v423
  %492 = vmatprep.subr.bf16.mxu0 %v429
  %493 = vmatpush1.bf16.msra.mxu0 %v428
  %494 = vmatprep.subr.bf16.mxu0 %v433
  %495 = vmatpush1.bf16.msra.mxu0 %v432
  %496 = vmatprep.subr.bf16.mxu0 %v437
  %497 = vmatpush1.bf16.msra.mxu0 %v436
  %498 = vmatprep.subr.bf16.mxu0 %v441
  %499 = vmatpush1.bf16.msra.mxu0 %v440
  %500 = vmatprep.subr.bf16.mxu0 %v445
  %501 = vmatpush1.bf16.msra.mxu0 %v444
  %502 = vmatprep.subr.bf16.mxu0 %v449
  %503 = vmatpush1.bf16.msra.mxu0 %v448
  %504 = vmatprep.subr.bf16.mxu0 %v453
  %505 = vmatpush1.bf16.msra.mxu0 %v452
  %506 = vmatprep.subr.bf16.mxu0 %v457
  %507 = vmatpush1.bf16.msra.mxu0 %v456
  %508 = vmatprep.subr.bf16.mxu0 0
  %509 = vmatpush1.bf16.msra.mxu0 0
  %510 = vmatprep.subr.bf16.mxu0 0
  %511 = vmatpush1.bf16.msra.mxu0 0
  %512 = vmatprep.subr.bf16.mxu0 0
  %513 = vmatpush1.bf16.msra.mxu0 0
  %514 = vmatprep.subr.bf16.mxu0 0
  %515 = vmatpush1.bf16.msra.mxu0 0
  %516 = vmatprep.subr.bf16.mxu0 0
  %517 = vmatpush1.bf16.msra.mxu0 0
  %518 = vmatprep.subr.bf16.mxu0 0
  %519 = vmatpush1.bf16.msra.mxu0 0
  %520 = vmatprep.subr.bf16.mxu0 0
  %521 = vmatpush1.bf16.msra.mxu0 0
  %522 = vmatprep.subr.bf16.mxu0 0
  %523 = vmatpush1.bf16.msra.mxu0 0
  %524 = vmatprep.mubr.bf16.mxu0 0
  %525 = vmatmul.mubr.bf16.gmra.mrb[0].mxu0 0
  %v526 = vpop.f32.mrb[0].mxu0
  %v527 = vadd.f32 0.0, %v526
  %v528 = vpop.f32.mrb[0].mxu0
  %v529 = vadd.f32 0.0, %v528
  %v530 = vpop.f32.mrb[0].mxu0
  %v531 = vpop.f32.mrb[0].mxu0
  %532 = vdwg.mxu0
  %533 = vmatprep.subr.bf16.mxu0 %v431
  %534 = vmatpush1.bf16.msra.mxu0 %v430
  %535 = vmatprep.subr.bf16.mxu0 %v435
  %536 = vmatpush1.bf16.msra.mxu0 %v434
  %537 = vmatprep.subr.bf16.mxu0 %v439
  %538 = vmatpush1.bf16.msra.mxu0 %v438
  %539 = vmatprep.subr.bf16.mxu0 %v443
  %540 = vmatpush1.bf16.msra.mxu0 %v442
  %541 = vmatprep.subr.bf16.mxu0 %v447
  %542 = vmatpush1.bf16.msra.mxu0 %v446
  %543 = vmatprep.subr.bf16.mxu0 %v451
  %544 = vmatpush1.bf16.msra.mxu0 %v450
  %545 = vmatprep.subr.bf16.mxu0 %v455
  %546 = vmatpush1.bf16.msra.mxu0 %v454
  %547 = vmatprep.subr.bf16.mxu0 %v459
  %548 = vmatpush1.bf16.msra.mxu0 %v458
  %549 = vmatprep.subr.bf16.mxu0 0
  %550 = vmatpush1.bf16.msra.mxu0 0
  %551 = vmatprep.subr.bf16.mxu0 0
  %552 = vmatpush1.bf16.msra.mxu0 0
  %553 = vmatprep.subr.bf16.mxu0 0
  %554 = vmatpush1.bf16.msra.mxu0 0
  %555 = vmatprep.subr.bf16.mxu0 0
  %556 = vmatpush1.bf16.msra.mxu0 0
  %557 = vmatprep.subr.bf16.mxu0 0
  %558 = vmatpush1.bf16.msra.mxu0 0
  %559 = vmatprep.subr.bf16.mxu0 0
  %560 = vmatpush1.bf16.msra.mxu0 0
  %561 = vmatprep.subr.bf16.mxu0 0
  %562 = vmatpush1.bf16.msra.mxu0 0
  %563 = vmatprep.subr.bf16.mxu0 0
  %564 = vmatpush1.bf16.msra.mxu0 0
  %565 = vmatprep.mubr.bf16.mxu0 0
  %566 = vmatmul.mubr.bf16.gmra.mrb[0].mxu0 0
  %v567 = vpop.f32.mrb[0].mxu0
  %v568 = vadd.f32 0.0, %v567
  %v569 = vpop.f32.mrb[0].mxu0
  %v570 = vadd.f32 0.0, %v569
  %v571 = vpop.f32.mrb[0].mxu0
  %v572 = vpop.f32.mrb[0].mxu0
  %573 = vdwg.mxu0
  %v574 = vadd.f32 %v82, %v527
  %v575 = vadd.f32 %v83, %v529
  %v576 = vadd.f32 %v84, %v568
  %v577 = vadd.f32 %v85, %v570
  %v578 = vxor.u32 %v328, 2147483648
  %v579 = vxor.u32 %v329, 2147483648
  %v580 = vxor.u32 %v330, 2147483648
  %v581 = vxor.u32 %v574, 2147483648
  %v582 = vxor.u32 %v575, 2147483648
  %v583 = vxor.u32 %v576, 2147483648
  %v584 = vmul.f32 %v578, 1.442695
  %v585 = vpow.pop %v584
  %v586 = vmul.f32 %v579, 1.442695
  %v587 = vpow.pop %v586
  %v588 = vmul.f32 %v580, 1.442695
  %v589 = vpow.pop %v588
  %v590 = vmul.f32 %v581, 1.442695
  %v591 = vpow.pop %v590
  %v592 = vmul.f32 %v582, 1.442695
  %v593 = vpow.pop %v592
  %v594 = vmul.f32 %v583, 1.442695
  %v595 = vpow.pop %v594
  %v596 = vadd.f32 %v585, 1.0
  %v597 = vadd.f32 %v587, 1.0
  %v598 = vadd.f32 %v589, 1.0
  %v599 = vadd.f32 %v591, 1.0
  %v600 = vadd.f32 %v593, 1.0
  %v601 = vadd.f32 %v595, 1.0
  %v602 = vrcp.pop %v596
  %v603 = vmul.f32 1.0, %v602
  %v604 = vrcp.pop %v597
  %v605 = vmul.f32 1.0, %v604
  %v606 = vrcp.pop %v598
  %v607 = vmul.f32 1.0, %v606
  %v608 = vrcp.pop %v599
  %v609 = vmul.f32 1.0, %v608
  %v610 = vrcp.pop %v600
  %v611 = vmul.f32 1.0, %v610
  %v612 = vrcp.pop %v601
  %v613 = vmul.f32 1.0, %v612
  %v614 = vtanh.pop %v331
  %v615 = vtanh.pop %v577
  %v616 = vmul.f32 %v605, 0.0
  %v617 = vmul.f32 %v611, 0.0
  %v618 = vmul.f32 %v603, %v614
  %v619 = vmul.f32 %v609, %v615
  %v620 = vadd.f32 %v616, %v618
  %v621 = vadd.f32 %v617, %v619
  %v622 = vtanh.pop %v620
  %v623 = vtanh.pop %v621
  %v624 = vmul.f32 %v607, %v622
  %v625 = vmul.f32 %v613, %v623
  %626 = vst [vmem:[%s2] sm:$0xff] %v624
  %s627 = scalar_lea.vmem %s2, 112
  %628 = vst [vmem:[%s627 + $0x8] sm:$0xff] %v625
  %s629 = scalar_lea.vmem %s0, 64
  %v630 = vld [vmem:[%s629] sm:$0xff]
  %v631 = vld [vmem:[%s629 + $0x8] sm:$0xff]
  %v632 = vld [vmem:[%s629 + $0x10] sm:$0xff]
  %v633 = vld [vmem:[%s629 + $0x18] sm:$0xff]
  %s634 = scalar_lea.vmem %s0, 384
  %v635 = vld [vmem:[%s634 + $0x20] sm:$0xff]
  %v636 = vld [vmem:[%s634 + $0x28] sm:$0xff]
  %v637 = vld [vmem:[%s634 + $0x30] sm:$0xff]
  %v638 = vld [vmem:[%s634 + $0x38] sm:$0xff]
  %v639 = vpack.c.bf16 %v624, %v624
  %640 = vmatprep.subr.bf16.mxu0 %v183
  %641 = vmatpush1.bf16.msra.mxu0 %v182
  %642 = vmatprep.subr.bf16.mxu0 %v187
  %643 = vmatpush1.bf16.msra.mxu0 %v186
  %644 = vmatprep.subr.bf16.mxu0 %v191
  %645 = vmatpush1.bf16.msra.mxu0 %v190
  %646 = vmatprep.subr.bf16.mxu0 %v195
  %647 = vmatpush1.bf16.msra.mxu0 %v194
  %648 = vmatprep.subr.bf16.mxu0 %v199
  %649 = vmatpush1.bf16.msra.mxu0 %v198
  %650 = vmatprep.subr.bf16.mxu0 %v203
  %651 = vmatpush1.bf16.msra.mxu0 %v202
  %652 = vmatprep.subr.bf16.mxu0 %v207
  %653 = vmatpush1.bf16.msra.mxu0 %v206
  %654 = vmatprep.subr.bf16.mxu0 %v211
  %655 = vmatpush1.bf16.msra.mxu0 %v210
  %656 = vmatprep.subr.bf16.mxu0 0
  %657 = vmatpush1.bf16.msra.mxu0 0
  %658 = vmatprep.subr.bf16.mxu0 0
  %659 = vmatpush1.bf16.msra.mxu0 0
  %660 = vmatprep.subr.bf16.mxu0 0
  %661 = vmatpush1.bf16.msra.mxu0 0
  %662 = vmatprep.subr.bf16.mxu0 0
  %663 = vmatpush1.bf16.msra.mxu0 0
  %664 = vmatprep.subr.bf16.mxu0 0
  %665 = vmatpush1.bf16.msra.mxu0 0
  %666 = vmatprep.subr.bf16.mxu0 0
  %667 = vmatpush1.bf16.msra.mxu0 0
  %668 = vmatprep.subr.bf16.mxu0 0
  %669 = vmatpush1.bf16.msra.mxu0 0
  %670 = vmatprep.subr.bf16.mxu0 0
  %671 = vmatpush1.bf16.msra.mxu0 0
  %672 = vmatprep.mubr.bf16.mxu0 0
  %673 = vmatmul.mubr.bf16.gmra.mrb[0].mxu0 %v639
  %v674 = vpop.f32.mrb[0].mxu0
  %v675 = vadd.f32 0.0, %v674
  %v676 = vpop.f32.mrb[0].mxu0
  %v677 = vadd.f32 0.0, %v676
  %v678 = vpop.f32.mrb[0].mxu0
  %v679 = vpop.f32.mrb[0].mxu0
  %680 = vdwg.mxu0
  %681 = vmatprep.subr.bf16.mxu0 %v185
  %682 = vmatpush1.bf16.msra.mxu0 %v184
  %683 = vmatprep.subr.bf16.mxu0 %v189
  %684 = vmatpush1.bf16.msra.mxu0 %v188
  %685 = vmatprep.subr.bf16.mxu0 %v193
  %686 = vmatpush1.bf16.msra.mxu0 %v192
  %687 = vmatprep.subr.bf16.mxu0 %v197
  %688 = vmatpush1.bf16.msra.mxu0 %v196
  %689 = vmatprep.subr.bf16.mxu0 %v201
  %690 = vmatpush1.bf16.msra.mxu0 %v200
  %691 = vmatprep.subr.bf16.mxu0 %v205
  %692 = vmatpush1.bf16.msra.mxu0 %v204
  %693 = vmatprep.subr.bf16.mxu0 %v209
  %694 = vmatpush1.bf16.msra.mxu0 %v208
  %695 = vmatprep.subr.bf16.mxu0 %v213
  %696 = vmatpush1.bf16.msra.mxu0 %v212
  %697 = vmatprep.subr.bf16.mxu0 0
  %698 = vmatpush1.bf16.msra.mxu0 0
  %699 = vmatprep.subr.bf16.mxu0 0
  %700 = vmatpush1.bf16.msra.mxu0 0
  %701 = vmatprep.subr.bf16.mxu0 0
  %702 = vmatpush1.bf16.msra.mxu0 0
  %703 = vmatprep.subr.bf16.mxu0 0
  %704 = vmatpush1.bf16.msra.mxu0 0
  %705 = vmatprep.subr.bf16.mxu0 0
  %706 = vmatpush1.bf16.msra.mxu0 0
  %707 = vmatprep.subr.bf16.mxu0 0
  %708 = vmatpush1.bf16.msra.mxu0 0
  %709 = vmatprep.subr.bf16.mxu0 0
  %710 = vmatpush1.bf16.msra.mxu0 0
  %711 = vmatprep.subr.bf16.mxu0 0
  %712 = vmatpush1.bf16.msra.mxu0 0
  %713 = vmatprep.mubr.bf16.mxu0 0
  %714 = vmatmul.mubr.bf16.gmra.mrb[0].mxu0 %v639
  %v715 = vpop.f32.mrb[0].mxu0
  %v716 = vadd.f32 0.0, %v715
  %v717 = vpop.f32.mrb[0].mxu0
  %v718 = vadd.f32 0.0, %v717
  %v719 = vpop.f32.mrb[0].mxu0
  %v720 = vpop.f32.mrb[0].mxu0
  %721 = vdwg.mxu0
  %v722 = vadd.f32 %v630, %v675
  %v723 = vadd.f32 %v631, %v677
  %v724 = vadd.f32 %v632, %v716
  %v725 = vadd.f32 %v633, %v718
  %v726 = vpack.c.bf16 %v625, %v625
  %727 = vmatprep.subr.bf16.mxu0 %v429
  %728 = vmatpush1.bf16.msra.mxu0 %v428
  %729 = vmatprep.subr.bf16.mxu0 %v433
  %730 = vmatpush1.bf16.msra.mxu0 %v432
  %731 = vmatprep.subr.bf16.mxu0 %v437
  %732 = vmatpush1.bf16.msra.mxu0 %v436
  %733 = vmatprep.subr.bf16.mxu0 %v441
  %734 = vmatpush1.bf16.msra.mxu0 %v440
  %735 = vmatprep.subr.bf16.mxu0 %v445
  %736 = vmatpush1.bf16.msra.mxu0 %v444
  %737 = vmatprep.subr.bf16.mxu0 %v449
  %738 = vmatpush1.bf16.msra.mxu0 %v448
  %739 = vmatprep.subr.bf16.mxu0 %v453
  %740 = vmatpush1.bf16.msra.mxu0 %v452
  %741 = vmatprep.subr.bf16.mxu0 %v457
  %742 = vmatpush1.bf16.msra.mxu0 %v456
  %743 = vmatprep.subr.bf16.mxu0 0
  %744 = vmatpush1.bf16.msra.mxu0 0
  %745 = vmatprep.subr.bf16.mxu0 0
  %746 = vmatpush1.bf16.msra.mxu0 0
  %747 = vmatprep.subr.bf16.mxu0 0
  %748 = vmatpush1.bf16.msra.mxu0 0
  %749 = vmatprep.subr.bf16.mxu0 0
  %750 = vmatpush1.bf16.msra.mxu0 0
  %751 = vmatprep.subr.bf16.mxu0 0
  %752 = vmatpush1.bf16.msra.mxu0 0
  %753 = vmatprep.subr.bf16.mxu0 0
  %754 = vmatpush1.bf16.msra.mxu0 0
  %755 = vmatprep.subr.bf16.mxu0 0
  %756 = vmatpush1.bf16.msra.mxu0 0
  %757 = vmatprep.subr.bf16.mxu0 0
  %758 = vmatpush1.bf16.msra.mxu0 0
  %759 = vmatprep.mubr.bf16.mxu0 0
  %760 = vmatmul.mubr.bf16.gmra.mrb[0].mxu0 %v726
  %v761 = vpop.f32.mrb[0].mxu0
  %v762 = vadd.f32 0.0, %v761
  %v763 = vpop.f32.mrb[0].mxu0
  %v764 = vadd.f32 0.0, %v763
  %v765 = vpop.f32.mrb[0].mxu0
  %v766 = vpop.f32.mrb[0].mxu0
  %767 = vdwg.mxu0
  %768 = vmatprep.subr.bf16.mxu0 %v431
  %769 = vmatpush1.bf16.msra.mxu0 %v430
  %770 = vmatprep.subr.bf16.mxu0 %v435
  %771 = vmatpush1.bf16.msra.mxu0 %v434
  %772 = vmatprep.subr.bf16.mxu0 %v439
  %773 = vmatpush1.bf16.msra.mxu0 %v438
  %774 = vmatprep.subr.bf16.mxu0 %v443
  %775 = vmatpush1.bf16.msra.mxu0 %v442
  %776 = vmatprep.subr.bf16.mxu0 %v447
  %777 = vmatpush1.bf16.msra.mxu0 %v446
  %778 = vmatprep.subr.bf16.mxu0 %v451
  %779 = vmatpush1.bf16.msra.mxu0 %v450
  %780 = vmatprep.subr.bf16.mxu0 %v455
  %781 = vmatpush1.bf16.msra.mxu0 %v454
  %782 = vmatprep.subr.bf16.mxu0 %v459
  %783 = vmatpush1.bf16.msra.mxu0 %v458
  %784 = vmatprep.subr.bf16.mxu0 0
  %785 = vmatpush1.bf16.msra.mxu0 0
  %786 = vmatprep.subr.bf16.mxu0 0
  %787 = vmatpush1.bf16.msra.mxu0 0
  %788 = vmatprep.subr.bf16.mxu0 0
  %789 = vmatpush1.bf16.msra.mxu0 0
  %790 = vmatprep.subr.bf16.mxu0 0
  %791 = vmatpush1.bf16.msra.mxu0 0
  %792 = vmatprep.subr.bf16.mxu0 0
  %793 = vmatpush1.bf16.msra.mxu0 0
  %794 = vmatprep.subr.bf16.mxu0 0
  %795 = vmatpush1.bf16.msra.mxu0 0
  %796 = vmatprep.subr.bf16.mxu0 0
  %797 = vmatpush1.bf16.msra.mxu0 0
  %798 = vmatprep.subr.bf16.mxu0 0
  %799 = vmatpush1.bf16.msra.mxu0 0
  %800 = vmatprep.mubr.bf16.mxu0 0
  %801 = vmatmul.mubr.bf16.gmra.mrb[0].mxu0 %v726
  %v802 = vpop.f32.mrb[0].mxu0
  %v803 = vadd.f32 0.0, %v802
  %v804 = vpop.f32.mrb[0].mxu0
  %v805 = vadd.f32 0.0, %v804
  %v806 = vpop.f32.mrb[0].mxu0
  %v807 = vpop.f32.mrb[0].mxu0
  %808 = vdwg.mxu0
  %v809 = vadd.f32 %v635, %v762
  %v810 = vadd.f32 %v636, %v764
  %v811 = vadd.f32 %v637, %v803
  %v812 = vadd.f32 %v638, %v805
  %v813 = vxor.u32 %v722, 2147483648
  %v814 = vxor.u32 %v723, 2147483648
  %v815 = vxor.u32 %v724, 2147483648
  %v816 = vxor.u32 %v809, 2147483648
  %v817 = vxor.u32 %v810, 2147483648
  %v818 = vxor.u32 %v811, 2147483648
  %v819 = vmul.f32 %v813, 1.442695
  %v820 = vpow.pop %v819
  %v821 = vmul.f32 %v814, 1.442695
  %v822 = vpow.pop %v821
  %v823 = vmul.f32 %v815, 1.442695
  %v824 = vpow.pop %v823
  %v825 = vmul.f32 %v816, 1.442695
  %v826 = vpow.pop %v825
  %v827 = vmul.f32 %v817, 1.442695
  %v828 = vpow.pop %v827
  %v829 = vmul.f32 %v818, 1.442695
  %v830 = vpow.pop %v829
  %v831 = vadd.f32 %v820, 1.0
  %v832 = vadd.f32 %v822, 1.0
  %v833 = vadd.f32 %v824, 1.0
  %v834 = vadd.f32 %v826, 1.0
  %v835 = vadd.f32 %v828, 1.0
  %v836 = vadd.f32 %v830, 1.0
  %v837 = vrcp.pop %v831
  %v838 = vmul.f32 1.0, %v837
  %v839 = vrcp.pop %v832
  %v840 = vmul.f32 1.0, %v839
  %v841 = vrcp.pop %v833
  %v842 = vmul.f32 1.0, %v841
  %v843 = vrcp.pop %v834
  %v844 = vmul.f32 1.0, %v843
  %v845 = vrcp.pop %v835
  %v846 = vmul.f32 1.0, %v845
  %v847 = vrcp.pop %v836
  %v848 = vmul.f32 1.0, %v847
  %v849 = vtanh.pop %v725
  %v850 = vtanh.pop %v812
  %v851 = vmul.f32 %v840, %v620
  %v852 = vmul.f32 %v846, %v621
  %v853 = vmul.f32 %v838, %v849
  %v854 = vmul.f32 %v844, %v850
  %v855 = vadd.f32 %v851, %v853
  %v856 = vadd.f32 %v852, %v854
  %v857 = vtanh.pop %v855
  %v858 = vtanh.pop %v856
  %v859 = vmul.f32 %v842, %v857
  %v860 = vmul.f32 %v848, %v858
  %s861 = scalar_lea.vmem %s2, 16
  %862 = vst [vmem:[%s861] sm:$0xff] %v859
  %s863 = scalar_lea.vmem %s2, 96
  %864 = vst [vmem:[%s863 + $0x8] sm:$0xff] %v860
  %s865 = scalar_lea.vmem %s0, 128
  %v866 = vld [vmem:[%s865] sm:$0xff]
  %v867 = vld [vmem:[%s865 + $0x8] sm:$0xff]
  %v868 = vld [vmem:[%s865 + $0x10] sm:$0xff]
  %v869 = vld [vmem:[%s865 + $0x18] sm:$0xff]
  %s870 = scalar_lea.vmem %s0, 320
  %v871 = vld [vmem:[%s870 + $0x20] sm:$0xff]
  %v872 = vld [vmem:[%s870 + $0x28] sm:$0xff]
  %v873 = vld [vmem:[%s870 + $0x30] sm:$0xff]
  %v874 = vld [vmem:[%s870 + $0x38] sm:$0xff]
  %v875 = vpack.c.bf16 %v859, %v859
  %876 = vmatprep.subr.bf16.mxu0 %v183
  %877 = vmatpush1.bf16.msra.mxu0 %v182
  %878 = vmatprep.subr.bf16.mxu0 %v187
  %879 = vmatpush1.bf16.msra.mxu0 %v186
  %880 = vmatprep.subr.bf16.mxu0 %v191
  %881 = vmatpush1.bf16.msra.mxu0 %v190
  %882 = vmatprep.subr.bf16.mxu0 %v195
  %883 = vmatpush1.bf16.msra.mxu0 %v194
  %884 = vmatprep.subr.bf16.mxu0 %v199
  %885 = vmatpush1.bf16.msra.mxu0 %v198
  %886 = vmatprep.subr.bf16.mxu0 %v203
  %887 = vmatpush1.bf16.msra.mxu0 %v202
  %888 = vmatprep.subr.bf16.mxu0 %v207
  %889 = vmatpush1.bf16.msra.mxu0 %v206
  %890 = vmatprep.subr.bf16.mxu0 %v211
  %891 = vmatpush1.bf16.msra.mxu0 %v210
  %892 = vmatprep.subr.bf16.mxu0 0
  %893 = vmatpush1.bf16.msra.mxu0 0
  %894 = vmatprep.subr.bf16.mxu0 0
  %895 = vmatpush1.bf16.msra.mxu0 0
  %896 = vmatprep.subr.bf16.mxu0 0
  %897 = vmatpush1.bf16.msra.mxu0 0
  %898 = vmatprep.subr.bf16.mxu0 0
  %899 = vmatpush1.bf16.msra.mxu0 0
  %900 = vmatprep.subr.bf16.mxu0 0
  %901 = vmatpush1.bf16.msra.mxu0 0
  %902 = vmatprep.subr.bf16.mxu0 0
  %903 = vmatpush1.bf16.msra.mxu0 0
  %904 = vmatprep.subr.bf16.mxu0 0
  %905 = vmatpush1.bf16.msra.mxu0 0
  %906 = vmatprep.subr.bf16.mxu0 0
  %907 = vmatpush1.bf16.msra.mxu0 0
  %908 = vmatprep.mubr.bf16.mxu0 0
  %909 = vmatmul.mubr.bf16.gmra.mrb[0].mxu0 %v875
  %v910 = vpop.f32.mrb[0].mxu0
  %v911 = vadd.f32 0.0, %v910
  %v912 = vpop.f32.mrb[0].mxu0
  %v913 = vadd.f32 0.0, %v912
  %v914 = vpop.f32.mrb[0].mxu0
  %v915 = vpop.f32.mrb[0].mxu0
  %916 = vdwg.mxu0
  %917 = vmatprep.subr.bf16.mxu0 %v185
  %918 = vmatpush1.bf16.msra.mxu0 %v184
  %919 = vmatprep.subr.bf16.mxu0 %v189
  %920 = vmatpush1.bf16.msra.mxu0 %v188
  %921 = vmatprep.subr.bf16.mxu0 %v193
  %922 = vmatpush1.bf16.msra.mxu0 %v192
  %923 = vmatprep.subr.bf16.mxu0 %v197
  %924 = vmatpush1.bf16.msra.mxu0 %v196
  %925 = vmatprep.subr.bf16.mxu0 %v201
  %926 = vmatpush1.bf16.msra.mxu0 %v200
  %927 = vmatprep.subr.bf16.mxu0 %v205
  %928 = vmatpush1.bf16.msra.mxu0 %v204
  %929 = vmatprep.subr.bf16.mxu0 %v209
  %930 = vmatpush1.bf16.msra.mxu0 %v208
  %931 = vmatprep.subr.bf16.mxu0 %v213
  %932 = vmatpush1.bf16.msra.mxu0 %v212
  %933 = vmatprep.subr.bf16.mxu0 0
  %934 = vmatpush1.bf16.msra.mxu0 0
  %935 = vmatprep.subr.bf16.mxu0 0
  %936 = vmatpush1.bf16.msra.mxu0 0
  %937 = vmatprep.subr.bf16.mxu0 0
  %938 = vmatpush1.bf16.msra.mxu0 0
  %939 = vmatprep.subr.bf16.mxu0 0
  %940 = vmatpush1.bf16.msra.mxu0 0
  %941 = vmatprep.subr.bf16.mxu0 0
  %942 = vmatpush1.bf16.msra.mxu0 0
  %943 = vmatprep.subr.bf16.mxu0 0
  %944 = vmatpush1.bf16.msra.mxu0 0
  %945 = vmatprep.subr.bf16.mxu0 0
  %946 = vmatpush1.bf16.msra.mxu0 0
  %947 = vmatprep.subr.bf16.mxu0 0
  %948 = vmatpush1.bf16.msra.mxu0 0
  %949 = vmatprep.mubr.bf16.mxu0 0
  %950 = vmatmul.mubr.bf16.gmra.mrb[0].mxu0 %v875
  %v951 = vpop.f32.mrb[0].mxu0
  %v952 = vadd.f32 0.0, %v951
  %v953 = vpop.f32.mrb[0].mxu0
  %v954 = vadd.f32 0.0, %v953
  %v955 = vpop.f32.mrb[0].mxu0
  %v956 = vpop.f32.mrb[0].mxu0
  %957 = vdwg.mxu0
  %v958 = vadd.f32 %v866, %v911
  %v959 = vadd.f32 %v867, %v913
  %v960 = vadd.f32 %v868, %v952
  %v961 = vadd.f32 %v869, %v954
  %v962 = vpack.c.bf16 %v860, %v860
  %963 = vmatprep.subr.bf16.mxu0 %v429
  %964 = vmatpush1.bf16.msra.mxu0 %v428
  %965 = vmatprep.subr.bf16.mxu0 %v433
  %966 = vmatpush1.bf16.msra.mxu0 %v432
  %967 = vmatprep.subr.bf16.mxu0 %v437
  %968 = vmatpush1.bf16.msra.mxu0 %v436
  %969 = vmatprep.subr.bf16.mxu0 %v441
  %970 = vmatpush1.bf16.msra.mxu0 %v440
  %971 = vmatprep.subr.bf16.mxu0 %v445
  %972 = vmatpush1.bf16.msra.mxu0 %v444
  %973 = vmatprep.subr.bf16.mxu0 %v449
  %974 = vmatpush1.bf16.msra.mxu0 %v448
  %975 = vmatprep.subr.bf16.mxu0 %v453
  %976 = vmatpush1.bf16.msra.mxu0 %v452
  %977 = vmatprep.subr.bf16.mxu0 %v457
  %978 = vmatpush1.bf16.msra.mxu0 %v456
  %979 = vmatprep.subr.bf16.mxu0 0
  %980 = vmatpush1.bf16.msra.mxu0 0
  %981 = vmatprep.subr.bf16.mxu0 0
  %982 = vmatpush1.bf16.msra.mxu0 0
  %983 = vmatprep.subr.bf16.mxu0 0
  %984 = vmatpush1.bf16.msra.mxu0 0
  %985 = vmatprep.subr.bf16.mxu0 0
  %986 = vmatpush1.bf16.msra.mxu0 0
  %987 = vmatprep.subr.bf16.mxu0 0
  %988 = vmatpush1.bf16.msra.mxu0 0
  %989 = vmatprep.subr.bf16.mxu0 0
  %990 = vmatpush1.bf16.msra.mxu0 0
  %991 = vmatprep.subr.bf16.mxu0 0
  %992 = vmatpush1.bf16.msra.mxu0 0
  %993 = vmatprep.subr.bf16.mxu0 0
  %994 = vmatpush1.bf16.msra.mxu0 0
  %995 = vmatprep.mubr.bf16.mxu0 0
  %996 = vmatmul.mubr.bf16.gmra.mrb[0].mxu0 %v962
  %v997 = vpop.f32.mrb[0].mxu0
  %v998 = vadd.f32 0.0, %v997
  %v999 = vpop.f32.mrb[0].mxu0
  %v1000 = vadd.f32 0.0, %v999
  %v1001 = vpop.f32.mrb[0].mxu0
  %v1002 = vpop.f32.mrb[0].mxu0
  %1003 = vdwg.mxu0
  %1004 = vmatprep.subr.bf16.mxu0 %v431
  %1005 = vmatpush1.bf16.msra.mxu0 %v430
  %1006 = vmatprep.subr.bf16.mxu0 %v435
  %1007 = vmatpush1.bf16.msra.mxu0 %v434
  %1008 = vmatprep.subr.bf16.mxu0 %v439
  %1009 = vmatpush1.bf16.msra.mxu0 %v438
  %1010 = vmatprep.subr.bf16.mxu0 %v443
  %1011 = vmatpush1.bf16.msra.mxu0 %v442
  %1012 = vmatprep.subr.bf16.mxu0 %v447
  %1013 = vmatpush1.bf16.msra.mxu0 %v446
  %1014 = vmatprep.subr.bf16.mxu0 %v451
  %1015 = vmatpush1.bf16.msra.mxu0 %v450
  %1016 = vmatprep.subr.bf16.mxu0 %v455
  %1017 = vmatpush1.bf16.msra.mxu0 %v454
  %1018 = vmatprep.subr.bf16.mxu0 %v459
  %1019 = vmatpush1.bf16.msra.mxu0 %v458
  %1020 = vmatprep.subr.bf16.mxu0 0
  %1021 = vmatpush1.bf16.msra.mxu0 0
  %1022 = vmatprep.subr.bf16.mxu0 0
  %1023 = vmatpush1.bf16.msra.mxu0 0
  %1024 = vmatprep.subr.bf16.mxu0 0
  %1025 = vmatpush1.bf16.msra.mxu0 0
  %1026 = vmatprep.subr.bf16.mxu0 0
  %1027 = vmatpush1.bf16.msra.mxu0 0
  %1028 = vmatprep.subr.bf16.mxu0 0
  %1029 = vmatpush1.bf16.msra.mxu0 0
  %1030 = vmatprep.subr.bf16.mxu0 0
  %1031 = vmatpush1.bf16.msra.mxu0 0
  %1032 = vmatprep.subr.bf16.mxu0 0
  %1033 = vmatpush1.bf16.msra.mxu0 0
  %1034 = vmatprep.subr.bf16.mxu0 0
  %1035 = vmatpush1.bf16.msra.mxu0 0
  %1036 = vmatprep.mubr.bf16.mxu0 0
  %1037 = vmatmul.mubr.bf16.gmra.mrb[0].mxu0 %v962
  %v1038 = vpop.f32.mrb[0].mxu0
  %v1039 = vadd.f32 0.0, %v1038
  %v1040 = vpop.f32.mrb[0].mxu0
  %v1041 = vadd.f32 0.0, %v1040
  %v1042 = vpop.f32.mrb[0].mxu0
  %v1043 = vpop.f32.mrb[0].mxu0
  %1044 = vdwg.mxu0
  %v1045 = vadd.f32 %v871, %v998
  %v1046 = vadd.f32 %v872, %v1000
  %v1047 = vadd.f32 %v873, %v1039
  %v1048 = vadd.f32 %v874, %v1041
  %v1049 = vxor.u32 %v958, 2147483648
  %v1050 = vxor.u32 %v959, 2147483648
  %v1051 = vxor.u32 %v960, 2147483648
  %v1052 = vxor.u32 %v1045, 2147483648
  %v1053 = vxor.u32 %v1046, 2147483648
  %v1054 = vxor.u32 %v1047, 2147483648
  %v1055 = vmul.f32 %v1049, 1.442695
  %v1056 = vpow.pop %v1055
  %v1057 = vmul.f32 %v1050, 1.442695
  %v1058 = vpow.pop %v1057
  %v1059 = vmul.f32 %v1051, 1.442695
  %v1060 = vpow.pop %v1059
  %v1061 = vmul.f32 %v1052, 1.442695
  %v1062 = vpow.pop %v1061
  %v1063 = vmul.f32 %v1053, 1.442695
  %v1064 = vpow.pop %v1063
  %v1065 = vmul.f32 %v1054, 1.442695
  %v1066 = vpow.pop %v1065
  %v1067 = vadd.f32 %v1056, 1.0
  %v1068 = vadd.f32 %v1058, 1.0
  %v1069 = vadd.f32 %v1060, 1.0
  %v1070 = vadd.f32 %v1062, 1.0
  %v1071 = vadd.f32 %v1064, 1.0
  %v1072 = vadd.f32 %v1066, 1.0
  %v1073 = vrcp.pop %v1067
  %v1074 = vmul.f32 1.0, %v1073
  %v1075 = vrcp.pop %v1068
  %v1076 = vmul.f32 1.0, %v1075
  %v1077 = vrcp.pop %v1069
  %v1078 = vmul.f32 1.0, %v1077
  %v1079 = vrcp.pop %v1070
  %v1080 = vmul.f32 1.0, %v1079
  %v1081 = vrcp.pop %v1071
  %v1082 = vmul.f32 1.0, %v1081
  %v1083 = vrcp.pop %v1072
  %v1084 = vmul.f32 1.0, %v1083
  %v1085 = vtanh.pop %v961
  %v1086 = vtanh.pop %v1048
  %v1087 = vmul.f32 %v1076, %v855
  %v1088 = vmul.f32 %v1082, %v856
  %v1089 = vmul.f32 %v1074, %v1085
  %v1090 = vmul.f32 %v1080, %v1086
  %v1091 = vadd.f32 %v1087, %v1089
  %v1092 = vadd.f32 %v1088, %v1090
  %v1093 = vtanh.pop %v1091
  %v1094 = vtanh.pop %v1092
  %v1095 = vmul.f32 %v1078, %v1093
  %v1096 = vmul.f32 %v1084, %v1094
  %s1097 = scalar_lea.vmem %s2, 32
  %1098 = vst [vmem:[%s1097] sm:$0xff] %v1095
  %s1099 = scalar_lea.vmem %s2, 80
  %1100 = vst [vmem:[%s1099 + $0x8] sm:$0xff] %v1096
  %s1101 = scalar_lea.vmem %s0, 192
  %v1102 = vld [vmem:[%s1101] sm:$0xff]
  %v1103 = vld [vmem:[%s1101 + $0x8] sm:$0xff]
  %v1104 = vld [vmem:[%s1101 + $0x10] sm:$0xff]
  %v1105 = vld [vmem:[%s1101 + $0x18] sm:$0xff]
  %s1106 = scalar_lea.vmem %s0, 256
  %v1107 = vld [vmem:[%s1106 + $0x20] sm:$0xff]
  %v1108 = vld [vmem:[%s1106 + $0x28] sm:$0xff]
  %v1109 = vld [vmem:[%s1106 + $0x30] sm:$0xff]
  %v1110 = vld [vmem:[%s1106 + $0x38] sm:$0xff]
  %v1111 = vpack.c.bf16 %v1095, %v1095
  %1112 = vmatprep.subr.bf16.mxu0 %v183
  %1113 = vmatpush1.bf16.msra.mxu0 %v182
  %1114 = vmatprep.subr.bf16.mxu0 %v187
  %1115 = vmatpush1.bf16.msra.mxu0 %v186
  %1116 = vmatprep.subr.bf16.mxu0 %v191
  %1117 = vmatpush1.bf16.msra.mxu0 %v190
  %1118 = vmatprep.subr.bf16.mxu0 %v195
  %1119 = vmatpush1.bf16.msra.mxu0 %v194
  %1120 = vmatprep.subr.bf16.mxu0 %v199
  %1121 = vmatpush1.bf16.msra.mxu0 %v198
  %1122 = vmatprep.subr.bf16.mxu0 %v203
  %1123 = vmatpush1.bf16.msra.mxu0 %v202
  %1124 = vmatprep.subr.bf16.mxu0 %v207
  %1125 = vmatpush1.bf16.msra.mxu0 %v206
  %1126 = vmatprep.subr.bf16.mxu0 %v211
  %1127 = vmatpush1.bf16.msra.mxu0 %v210
  %1128 = vmatprep.subr.bf16.mxu0 0
  %1129 = vmatpush1.bf16.msra.mxu0 0
  %1130 = vmatprep.subr.bf16.mxu0 0
  %1131 = vmatpush1.bf16.msra.mxu0 0
  %1132 = vmatprep.subr.bf16.mxu0 0
  %1133 = vmatpush1.bf16.msra.mxu0 0
  %1134 = vmatprep.subr.bf16.mxu0 0
  %1135 = vmatpush1.bf16.msra.mxu0 0
  %1136 = vmatprep.subr.bf16.mxu0 0
  %1137 = vmatpush1.bf16.msra.mxu0 0
  %1138 = vmatprep.subr.bf16.mxu0 0
  %1139 = vmatpush1.bf16.msra.mxu0 0
  %1140 = vmatprep.subr.bf16.mxu0 0
  %1141 = vmatpush1.bf16.msra.mxu0 0
  %1142 = vmatprep.subr.bf16.mxu0 0
  %1143 = vmatpush1.bf16.msra.mxu0 0
  %1144 = vmatprep.mubr.bf16.mxu0 0
  %1145 = vmatmul.mubr.bf16.gmra.mrb[0].mxu0 %v1111
  %v1146 = vpop.f32.mrb[0].mxu0
  %v1147 = vadd.f32 0.0, %v1146
  %v1148 = vpop.f32.mrb[0].mxu0
  %v1149 = vadd.f32 0.0, %v1148
  %v1150 = vpop.f32.mrb[0].mxu0
  %v1151 = vpop.f32.mrb[0].mxu0
  %1152 = vdwg.mxu0
  %1153 = vmatprep.subr.bf16.mxu0 %v185
  %1154 = vmatpush1.bf16.msra.mxu0 %v184
  %1155 = vmatprep.subr.bf16.mxu0 %v189
  %1156 = vmatpush1.bf16.msra.mxu0 %v188
  %1157 = vmatprep.subr.bf16.mxu0 %v193
  %1158 = vmatpush1.bf16.msra.mxu0 %v192
  %1159 = vmatprep.subr.bf16.mxu0 %v197
  %1160 = vmatpush1.bf16.msra.mxu0 %v196
  %1161 = vmatprep.subr.bf16.mxu0 %v201
  %1162 = vmatpush1.bf16.msra.mxu0 %v200
  %1163 = vmatprep.subr.bf16.mxu0 %v205
  %1164 = vmatpush1.bf16.msra.mxu0 %v204
  %1165 = vmatprep.subr.bf16.mxu0 %v209
  %1166 = vmatpush1.bf16.msra.mxu0 %v208
  %1167 = vmatprep.subr.bf16.mxu0 %v213
  %1168 = vmatpush1.bf16.msra.mxu0 %v212
  %1169 = vmatprep.subr.bf16.mxu0 0
  %1170 = vmatpush1.bf16.msra.mxu0 0
  %1171 = vmatprep.subr.bf16.mxu0 0
  %1172 = vmatpush1.bf16.msra.mxu0 0
  %1173 = vmatprep.subr.bf16.mxu0 0
  %1174 = vmatpush1.bf16.msra.mxu0 0
  %1175 = vmatprep.subr.bf16.mxu0 0
  %1176 = vmatpush1.bf16.msra.mxu0 0
  %1177 = vmatprep.subr.bf16.mxu0 0
  %1178 = vmatpush1.bf16.msra.mxu0 0
  %1179 = vmatprep.subr.bf16.mxu0 0
  %1180 = vmatpush1.bf16.msra.mxu0 0
  %1181 = vmatprep.subr.bf16.mxu0 0
  %1182 = vmatpush1.bf16.msra.mxu0 0
  %1183 = vmatprep.subr.bf16.mxu0 0
  %1184 = vmatpush1.bf16.msra.mxu0 0
  %1185 = vmatprep.mubr.bf16.mxu0 0
  %1186 = vmatmul.mubr.bf16.gmra.mrb[0].mxu0 %v1111
  %v1187 = vpop.f32.mrb[0].mxu0
  %v1188 = vadd.f32 0.0, %v1187
  %v1189 = vpop.f32.mrb[0].mxu0
  %v1190 = vadd.f32 0.0, %v1189
  %v1191 = vpop.f32.mrb[0].mxu0
  %v1192 = vpop.f32.mrb[0].mxu0
  %1193 = vdwg.mxu0
  %v1194 = vadd.f32 %v1102, %v1147
  %v1195 = vadd.f32 %v1103, %v1149
  %v1196 = vadd.f32 %v1104, %v1188
  %v1197 = vadd.f32 %v1105, %v1190
  %v1198 = vpack.c.bf16 %v1096, %v1096
  %1199 = vmatprep.subr.bf16.mxu0 %v429
  %1200 = vmatpush1.bf16.msra.mxu0 %v428
  %1201 = vmatprep.subr.bf16.mxu0 %v433
  %1202 = vmatpush1.bf16.msra.mxu0 %v432
  %1203 = vmatprep.subr.bf16.mxu0 %v437
  %1204 = vmatpush1.bf16.msra.mxu0 %v436
  %1205 = vmatprep.subr.bf16.mxu0 %v441
  %1206 = vmatpush1.bf16.msra.mxu0 %v440
  %1207 = vmatprep.subr.bf16.mxu0 %v445
  %1208 = vmatpush1.bf16.msra.mxu0 %v444
  %1209 = vmatprep.subr.bf16.mxu0 %v449
  %1210 = vmatpush1.bf16.msra.mxu0 %v448
  %1211 = vmatprep.subr.bf16.mxu0 %v453
  %1212 = vmatpush1.bf16.msra.mxu0 %v452
  %1213 = vmatprep.subr.bf16.mxu0 %v457
  %1214 = vmatpush1.bf16.msra.mxu0 %v456
  %1215 = vmatprep.subr.bf16.mxu0 0
  %1216 = vmatpush1.bf16.msra.mxu0 0
  %1217 = vmatprep.subr.bf16.mxu0 0
  %1218 = vmatpush1.bf16.msra.mxu0 0
  %1219 = vmatprep.subr.bf16.mxu0 0
  %1220 = vmatpush1.bf16.msra.mxu0 0
  %1221 = vmatprep.subr.bf16.mxu0 0
  %1222 = vmatpush1.bf16.msra.mxu0 0
  %1223 = vmatprep.subr.bf16.mxu0 0
  %1224 = vmatpush1.bf16.msra.mxu0 0
  %1225 = vmatprep.subr.bf16.mxu0 0
  %1226 = vmatpush1.bf16.msra.mxu0 0
  %1227 = vmatprep.subr.bf16.mxu0 0
  %1228 = vmatpush1.bf16.msra.mxu0 0
  %1229 = vmatprep.subr.bf16.mxu0 0
  %1230 = vmatpush1.bf16.msra.mxu0 0
  %1231 = vmatprep.mubr.bf16.mxu0 0
  %1232 = vmatmul.mubr.bf16.gmra.mrb[0].mxu0 %v1198
  %v1233 = vpop.f32.mrb[0].mxu0
  %v1234 = vadd.f32 0.0, %v1233
  %v1235 = vpop.f32.mrb[0].mxu0
  %v1236 = vadd.f32 0.0, %v1235
  %v1237 = vpop.f32.mrb[0].mxu0
  %v1238 = vpop.f32.mrb[0].mxu0
  %1239 = vdwg.mxu0
  %1240 = vmatprep.subr.bf16.mxu0 %v431
  %1241 = vmatpush1.bf16.msra.mxu0 %v430
  %1242 = vmatprep.subr.bf16.mxu0 %v435
  %1243 = vmatpush1.bf16.msra.mxu0 %v434
  %1244 = vmatprep.subr.bf16.mxu0 %v439
  %1245 = vmatpush1.bf16.msra.mxu0 %v438
  %1246 = vmatprep.subr.bf16.mxu0 %v443
  %1247 = vmatpush1.bf16.msra.mxu0 %v442
  %1248 = vmatprep.subr.bf16.mxu0 %v447
  %1249 = vmatpush1.bf16.msra.mxu0 %v446
  %1250 = vmatprep.subr.bf16.mxu0 %v451
  %1251 = vmatpush1.bf16.msra.mxu0 %v450
  %1252 = vmatprep.subr.bf16.mxu0 %v455
  %1253 = vmatpush1.bf16.msra.mxu0 %v454
  %1254 = vmatprep.subr.bf16.mxu0 %v459
  %1255 = vmatpush1.bf16.msra.mxu0 %v458
  %1256 = vmatprep.subr.bf16.mxu0 0
  %1257 = vmatpush1.bf16.msra.mxu0 0
  %1258 = vmatprep.subr.bf16.mxu0 0
  %1259 = vmatpush1.bf16.msra.mxu0 0
  %1260 = vmatprep.subr.bf16.mxu0 0
  %1261 = vmatpush1.bf16.msra.mxu0 0
  %1262 = vmatprep.subr.bf16.mxu0 0
  %1263 = vmatpush1.bf16.msra.mxu0 0
  %1264 = vmatprep.subr.bf16.mxu0 0
  %1265 = vmatpush1.bf16.msra.mxu0 0
  %1266 = vmatprep.subr.bf16.mxu0 0
  %1267 = vmatpush1.bf16.msra.mxu0 0
  %1268 = vmatprep.subr.bf16.mxu0 0
  %1269 = vmatpush1.bf16.msra.mxu0 0
  %1270 = vmatprep.subr.bf16.mxu0 0
  %1271 = vmatpush1.bf16.msra.mxu0 0
  %1272 = vmatprep.mubr.bf16.mxu0 0
  %1273 = vmatmul.mubr.bf16.gmra.mrb[0].mxu0 %v1198
  %v1274 = vpop.f32.mrb[0].mxu0
  %v1275 = vadd.f32 0.0, %v1274
  %v1276 = vpop.f32.mrb[0].mxu0
  %v1277 = vadd.f32 0.0, %v1276
  %v1278 = vpop.f32.mrb[0].mxu0
  %v1279 = vpop.f32.mrb[0].mxu0
  %1280 = vdwg.mxu0
  %v1281 = vadd.f32 %v1107, %v1234
  %v1282 = vadd.f32 %v1108, %v1236
  %v1283 = vadd.f32 %v1109, %v1275
  %v1284 = vadd.f32 %v1110, %v1277
  %v1285 = vxor.u32 %v1194, 2147483648
  %v1286 = vxor.u32 %v1195, 2147483648
  %v1287 = vxor.u32 %v1196, 2147483648
  %v1288 = vxor.u32 %v1281, 2147483648
  %v1289 = vxor.u32 %v1282, 2147483648
  %v1290 = vxor.u32 %v1283, 2147483648
  %v1291 = vmul.f32 %v1285, 1.442695
  %v1292 = vpow.pop %v1291
  %v1293 = vmul.f32 %v1286, 1.442695
  %v1294 = vpow.pop %v1293
  %v1295 = vmul.f32 %v1287, 1.442695
  %v1296 = vpow.pop %v1295
  %v1297 = vmul.f32 %v1288, 1.442695
  %v1298 = vpow.pop %v1297
  %v1299 = vmul.f32 %v1289, 1.442695
  %v1300 = vpow.pop %v1299
  %v1301 = vmul.f32 %v1290, 1.442695
  %v1302 = vpow.pop %v1301
  %v1303 = vadd.f32 %v1292, 1.0
  %v1304 = vadd.f32 %v1294, 1.0
  %v1305 = vadd.f32 %v1296, 1.0
  %v1306 = vadd.f32 %v1298, 1.0
  %v1307 = vadd.f32 %v1300, 1.0
  %v1308 = vadd.f32 %v1302, 1.0
  %v1309 = vrcp.pop %v1303
  %v1310 = vmul.f32 1.0, %v1309
  %v1311 = vrcp.pop %v1304
  %v1312 = vmul.f32 1.0, %v1311
  %v1313 = vrcp.pop %v1305
  %v1314 = vmul.f32 1.0, %v1313
  %v1315 = vrcp.pop %v1306
  %v1316 = vmul.f32 1.0, %v1315
  %v1317 = vrcp.pop %v1307
  %v1318 = vmul.f32 1.0, %v1317
  %v1319 = vrcp.pop %v1308
  %v1320 = vmul.f32 1.0, %v1319
  %v1321 = vtanh.pop %v1197
  %v1322 = vtanh.pop %v1284
  %v1323 = vmul.f32 %v1312, %v1091
  %v1324 = vmul.f32 %v1318, %v1092
  %v1325 = vmul.f32 %v1310, %v1321
  %v1326 = vmul.f32 %v1316, %v1322
  %v1327 = vadd.f32 %v1323, %v1325
  %v1328 = vadd.f32 %v1324, %v1326
  %v1329 = vtanh.pop %v1327
  %v1330 = vtanh.pop %v1328
  %v1331 = vmul.f32 %v1314, %v1329
  %v1332 = vmul.f32 %v1320, %v1330
  %s1333 = scalar_lea.vmem %s2, 48
  %1334 = vst [vmem:[%s1333] sm:$0xff] %v1331
  %s1335 = scalar_lea.vmem %s2, 64
  %1336 = vst [vmem:[%s1335 + $0x8] sm:$0xff] %v1332
  %v1337 = vld [vmem:[%s1106] sm:$0xff]
  %v1338 = vld [vmem:[%s1106 + $0x8] sm:$0xff]
  %v1339 = vld [vmem:[%s1106 + $0x10] sm:$0xff]
  %v1340 = vld [vmem:[%s1106 + $0x18] sm:$0xff]
  %v1341 = vld [vmem:[%s1101 + $0x20] sm:$0xff]
  %v1342 = vld [vmem:[%s1101 + $0x28] sm:$0xff]
  %v1343 = vld [vmem:[%s1101 + $0x30] sm:$0xff]
  %v1344 = vld [vmem:[%s1101 + $0x38] sm:$0xff]
  %v1345 = vpack.c.bf16 %v1331, %v1331
  %1346 = vmatprep.subr.bf16.mxu0 %v183
  %1347 = vmatpush1.bf16.msra.mxu0 %v182
  %1348 = vmatprep.subr.bf16.mxu0 %v187
  %1349 = vmatpush1.bf16.msra.mxu0 %v186
  %1350 = vmatprep.subr.bf16.mxu0 %v191
  %1351 = vmatpush1.bf16.msra.mxu0 %v190
  %1352 = vmatprep.subr.bf16.mxu0 %v195
  %1353 = vmatpush1.bf16.msra.mxu0 %v194
  %1354 = vmatprep.subr.bf16.mxu0 %v199
  %1355 = vmatpush1.bf16.msra.mxu0 %v198
  %1356 = vmatprep.subr.bf16.mxu0 %v203
  %1357 = vmatpush1.bf16.msra.mxu0 %v202
  %1358 = vmatprep.subr.bf16.mxu0 %v207
  %1359 = vmatpush1.bf16.msra.mxu0 %v206
  %1360 = vmatprep.subr.bf16.mxu0 %v211
  %1361 = vmatpush1.bf16.msra.mxu0 %v210
  %1362 = vmatprep.subr.bf16.mxu0 0
  %1363 = vmatpush1.bf16.msra.mxu0 0
  %1364 = vmatprep.subr.bf16.mxu0 0
  %1365 = vmatpush1.bf16.msra.mxu0 0
  %1366 = vmatprep.subr.bf16.mxu0 0
  %1367 = vmatpush1.bf16.msra.mxu0 0
  %1368 = vmatprep.subr.bf16.mxu0 0
  %1369 = vmatpush1.bf16.msra.mxu0 0
  %1370 = vmatprep.subr.bf16.mxu0 0
  %1371 = vmatpush1.bf16.msra.mxu0 0
  %1372 = vmatprep.subr.bf16.mxu0 0
  %1373 = vmatpush1.bf16.msra.mxu0 0
  %1374 = vmatprep.subr.bf16.mxu0 0
  %1375 = vmatpush1.bf16.msra.mxu0 0
  %1376 = vmatprep.subr.bf16.mxu0 0
  %1377 = vmatpush1.bf16.msra.mxu0 0
  %1378 = vmatprep.mubr.bf16.mxu0 0
  %1379 = vmatmul.mubr.bf16.gmra.mrb[0].mxu0 %v1345
  %v1380 = vpop.f32.mrb[0].mxu0
  %v1381 = vadd.f32 0.0, %v1380
  %v1382 = vpop.f32.mrb[0].mxu0
  %v1383 = vadd.f32 0.0, %v1382
  %v1384 = vpop.f32.mrb[0].mxu0
  %v1385 = vpop.f32.mrb[0].mxu0
  %1386 = vdwg.mxu0
  %1387 = vmatprep.subr.bf16.mxu0 %v185
  %1388 = vmatpush1.bf16.msra.mxu0 %v184
  %1389 = vmatprep.subr.bf16.mxu0 %v189
  %1390 = vmatpush1.bf16.msra.mxu0 %v188
  %1391 = vmatprep.subr.bf16.mxu0 %v193
  %1392 = vmatpush1.bf16.msra.mxu0 %v192
  %1393 = vmatprep.subr.bf16.mxu0 %v197
  %1394 = vmatpush1.bf16.msra.mxu0 %v196
  %1395 = vmatprep.subr.bf16.mxu0 %v201
  %1396 = vmatpush1.bf16.msra.mxu0 %v200
  %1397 = vmatprep.subr.bf16.mxu0 %v205
  %1398 = vmatpush1.bf16.msra.mxu0 %v204
  %1399 = vmatprep.subr.bf16.mxu0 %v209
  %1400 = vmatpush1.bf16.msra.mxu0 %v208
  %1401 = vmatprep.subr.bf16.mxu0 %v213
  %1402 = vmatpush1.bf16.msra.mxu0 %v212
  %1403 = vmatprep.subr.bf16.mxu0 0
  %1404 = vmatpush1.bf16.msra.mxu0 0
  %1405 = vmatprep.subr.bf16.mxu0 0
  %1406 = vmatpush1.bf16.msra.mxu0 0
  %1407 = vmatprep.subr.bf16.mxu0 0
  %1408 = vmatpush1.bf16.msra.mxu0 0
  %1409 = vmatprep.subr.bf16.mxu0 0
  %1410 = vmatpush1.bf16.msra.mxu0 0
  %1411 = vmatprep.subr.bf16.mxu0 0
  %1412 = vmatpush1.bf16.msra.mxu0 0
  %1413 = vmatprep.subr.bf16.mxu0 0
  %1414 = vmatpush1.bf16.msra.mxu0 0
  %1415 = vmatprep.subr.bf16.mxu0 0
  %1416 = vmatpush1.bf16.msra.mxu0 0
  %1417 = vmatprep.subr.bf16.mxu0 0
  %1418 = vmatpush1.bf16.msra.mxu0 0
  %1419 = vmatprep.mubr.bf16.mxu0 0
  %1420 = vmatmul.mubr.bf16.gmra.mrb[0].mxu0 %v1345
  %v1421 = vpop.f32.mrb[0].mxu0
  %v1422 = vadd.f32 0.0, %v1421
  %v1423 = vpop.f32.mrb[0].mxu0
  %v1424 = vadd.f32 0.0, %v1423
  %v1425 = vpop.f32.mrb[0].mxu0
  %v1426 = vpop.f32.mrb[0].mxu0
  %1427 = vdwg.mxu0
  %v1428 = vadd.f32 %v1337, %v1381
  %v1429 = vadd.f32 %v1338, %v1383
  %v1430 = vadd.f32 %v1339, %v1422
  %v1431 = vadd.f32 %v1340, %v1424
  %v1432 = vpack.c.bf16 %v1332, %v1332
  %1433 = vmatprep.subr.bf16.mxu0 %v429
  %1434 = vmatpush1.bf16.msra.mxu0 %v428
  %1435 = vmatprep.subr.bf16.mxu0 %v433
  %1436 = vmatpush1.bf16.msra.mxu0 %v432
  %1437 = vmatprep.subr.bf16.mxu0 %v437
  %1438 = vmatpush1.bf16.msra.mxu0 %v436
  %1439 = vmatprep.subr.bf16.mxu0 %v441
  %1440 = vmatpush1.bf16.msra.mxu0 %v440
  %1441 = vmatprep.subr.bf16.mxu0 %v445
  %1442 = vmatpush1.bf16.msra.mxu0 %v444
  %1443 = vmatprep.subr.bf16.mxu0 %v449
  %1444 = vmatpush1.bf16.msra.mxu0 %v448
  %1445 = vmatprep.subr.bf16.mxu0 %v453
  %1446 = vmatpush1.bf16.msra.mxu0 %v452
  %1447 = vmatprep.subr.bf16.mxu0 %v457
  %1448 = vmatpush1.bf16.msra.mxu0 %v456
  %1449 = vmatprep.subr.bf16.mxu0 0
  %1450 = vmatpush1.bf16.msra.mxu0 0
  %1451 = vmatprep.subr.bf16.mxu0 0
  %1452 = vmatpush1.bf16.msra.mxu0 0
  %1453 = vmatprep.subr.bf16.mxu0 0
  %1454 = vmatpush1.bf16.msra.mxu0 0
  %1455 = vmatprep.subr.bf16.mxu0 0
  %1456 = vmatpush1.bf16.msra.mxu0 0
  %1457 = vmatprep.subr.bf16.mxu0 0
  %1458 = vmatpush1.bf16.msra.mxu0 0
  %1459 = vmatprep.subr.bf16.mxu0 0
  %1460 = vmatpush1.bf16.msra.mxu0 0
  %1461 = vmatprep.subr.bf16.mxu0 0
  %1462 = vmatpush1.bf16.msra.mxu0 0
  %1463 = vmatprep.subr.bf16.mxu0 0
  %1464 = vmatpush1.bf16.msra.mxu0 0
  %1465 = vmatprep.mubr.bf16.mxu0 0
  %1466 = vmatmul.mubr.bf16.gmra.mrb[0].mxu0 %v1432
  %v1467 = vpop.f32.mrb[0].mxu0
  %v1468 = vadd.f32 0.0, %v1467
  %v1469 = vpop.f32.mrb[0].mxu0
  %v1470 = vadd.f32 0.0, %v1469
  %v1471 = vpop.f32.mrb[0].mxu0
  %v1472 = vpop.f32.mrb[0].mxu0
  %1473 = vdwg.mxu0
  %1474 = vmatprep.subr.bf16.mxu0 %v431
  %1475 = vmatpush1.bf16.msra.mxu0 %v430
  %1476 = vmatprep.subr.bf16.mxu0 %v435
  %1477 = vmatpush1.bf16.msra.mxu0 %v434
  %1478 = vmatprep.subr.bf16.mxu0 %v439
  %1479 = vmatpush1.bf16.msra.mxu0 %v438
  %1480 = vmatprep.subr.bf16.mxu0 %v443
  %1481 = vmatpush1.bf16.msra.mxu0 %v442
  %1482 = vmatprep.subr.bf16.mxu0 %v447
  %1483 = vmatpush1.bf16.msra.mxu0 %v446
  %1484 = vmatprep.subr.bf16.mxu0 %v451
  %1485 = vmatpush1.bf16.msra.mxu0 %v450
  %1486 = vmatprep.subr.bf16.mxu0 %v455
  %1487 = vmatpush1.bf16.msra.mxu0 %v454
  %1488 = vmatprep.subr.bf16.mxu0 %v459
  %1489 = vmatpush1.bf16.msra.mxu0 %v458
  %1490 = vmatprep.subr.bf16.mxu0 0
  %1491 = vmatpush1.bf16.msra.mxu0 0
  %1492 = vmatprep.subr.bf16.mxu0 0
  %1493 = vmatpush1.bf16.msra.mxu0 0
  %1494 = vmatprep.subr.bf16.mxu0 0
  %1495 = vmatpush1.bf16.msra.mxu0 0
  %1496 = vmatprep.subr.bf16.mxu0 0
  %1497 = vmatpush1.bf16.msra.mxu0 0
  %1498 = vmatprep.subr.bf16.mxu0 0
  %1499 = vmatpush1.bf16.msra.mxu0 0
  %1500 = vmatprep.subr.bf16.mxu0 0
  %1501 = vmatpush1.bf16.msra.mxu0 0
  %1502 = vmatprep.subr.bf16.mxu0 0
  %1503 = vmatpush1.bf16.msra.mxu0 0
  %1504 = vmatprep.subr.bf16.mxu0 0
  %1505 = vmatpush1.bf16.msra.mxu0 0
  %1506 = vmatprep.mubr.bf16.mxu0 0
  %1507 = vmatmul.mubr.bf16.gmra.mrb[0].mxu0 %v1432
  %v1508 = vpop.f32.mrb[0].mxu0
  %v1509 = vadd.f32 0.0, %v1508
  %v1510 = vpop.f32.mrb[0].mxu0
  %v1511 = vadd.f32 0.0, %v1510
  %v1512 = vpop.f32.mrb[0].mxu0
  %v1513 = vpop.f32.mrb[0].mxu0
  %1514 = vdwg.mxu0
  %v1515 = vadd.f32 %v1341, %v1468
  %v1516 = vadd.f32 %v1342, %v1470
  %v1517 = vadd.f32 %v1343, %v1509
  %v1518 = vadd.f32 %v1344, %v1511
  %v1519 = vxor.u32 %v1428, 2147483648
  %v1520 = vxor.u32 %v1429, 2147483648
  %v1521 = vxor.u32 %v1430, 2147483648
  %v1522 = vxor.u32 %v1515, 2147483648
  %v1523 = vxor.u32 %v1516, 2147483648
  %v1524 = vxor.u32 %v1517, 2147483648
  %v1525 = vmul.f32 %v1519, 1.442695
  %v1526 = vpow.pop %v1525
  %v1527 = vmul.f32 %v1520, 1.442695
  %v1528 = vpow.pop %v1527
  %v1529 = vmul.f32 %v1521, 1.442695
  %v1530 = vpow.pop %v1529
  %v1531 = vmul.f32 %v1522, 1.442695
  %v1532 = vpow.pop %v1531
  %v1533 = vmul.f32 %v1523, 1.442695
  %v1534 = vpow.pop %v1533
  %v1535 = vmul.f32 %v1524, 1.442695
  %v1536 = vpow.pop %v1535
  %v1537 = vadd.f32 %v1526, 1.0
  %v1538 = vadd.f32 %v1528, 1.0
  %v1539 = vadd.f32 %v1530, 1.0
  %v1540 = vadd.f32 %v1532, 1.0
  %v1541 = vadd.f32 %v1534, 1.0
  %v1542 = vadd.f32 %v1536, 1.0
  %v1543 = vrcp.pop %v1537
  %v1544 = vmul.f32 1.0, %v1543
  %v1545 = vrcp.pop %v1538
  %v1546 = vmul.f32 1.0, %v1545
  %v1547 = vrcp.pop %v1539
  %v1548 = vmul.f32 1.0, %v1547
  %v1549 = vrcp.pop %v1540
  %v1550 = vmul.f32 1.0, %v1549
  %v1551 = vrcp.pop %v1541
  %v1552 = vmul.f32 1.0, %v1551
  %v1553 = vrcp.pop %v1542
  %v1554 = vmul.f32 1.0, %v1553
  %v1555 = vtanh.pop %v1431
  %v1556 = vtanh.pop %v1518
  %v1557 = vmul.f32 %v1546, %v1327
  %v1558 = vmul.f32 %v1552, %v1328
  %v1559 = vmul.f32 %v1544, %v1555
  %v1560 = vmul.f32 %v1550, %v1556
  %v1561 = vadd.f32 %v1557, %v1559
  %v1562 = vadd.f32 %v1558, %v1560
  %v1563 = vtanh.pop %v1561
  %v1564 = vtanh.pop %v1562
  %v1565 = vmul.f32 %v1548, %v1563
  %v1566 = vmul.f32 %v1554, %v1564
  %1567 = vst [vmem:[%s1335] sm:$0xff] %v1565
  %1568 = vst [vmem:[%s1333 + $0x8] sm:$0xff] %v1566
  %v1569 = vld [vmem:[%s870] sm:$0xff]
  %v1570 = vld [vmem:[%s870 + $0x8] sm:$0xff]
  %v1571 = vld [vmem:[%s870 + $0x10] sm:$0xff]
  %v1572 = vld [vmem:[%s870 + $0x18] sm:$0xff]
  %v1573 = vld [vmem:[%s865 + $0x20] sm:$0xff]
  %v1574 = vld [vmem:[%s865 + $0x28] sm:$0xff]
  %v1575 = vld [vmem:[%s865 + $0x30] sm:$0xff]
  %v1576 = vld [vmem:[%s865 + $0x38] sm:$0xff]
  %v1577 = vpack.c.bf16 %v1565, %v1565
  %1578 = vmatprep.subr.bf16.mxu0 %v183
  %1579 = vmatpush1.bf16.msra.mxu0 %v182
  %1580 = vmatprep.subr.bf16.mxu0 %v187
  %1581 = vmatpush1.bf16.msra.mxu0 %v186
  %1582 = vmatprep.subr.bf16.mxu0 %v191
  %1583 = vmatpush1.bf16.msra.mxu0 %v190
  %1584 = vmatprep.subr.bf16.mxu0 %v195
  %1585 = vmatpush1.bf16.msra.mxu0 %v194
  %1586 = vmatprep.subr.bf16.mxu0 %v199
  %1587 = vmatpush1.bf16.msra.mxu0 %v198
  %1588 = vmatprep.subr.bf16.mxu0 %v203
  %1589 = vmatpush1.bf16.msra.mxu0 %v202
  %1590 = vmatprep.subr.bf16.mxu0 %v207
  %1591 = vmatpush1.bf16.msra.mxu0 %v206
  %1592 = vmatprep.subr.bf16.mxu0 %v211
  %1593 = vmatpush1.bf16.msra.mxu0 %v210
  %1594 = vmatprep.subr.bf16.mxu0 0
  %1595 = vmatpush1.bf16.msra.mxu0 0
  %1596 = vmatprep.subr.bf16.mxu0 0
  %1597 = vmatpush1.bf16.msra.mxu0 0
  %1598 = vmatprep.subr.bf16.mxu0 0
  %1599 = vmatpush1.bf16.msra.mxu0 0
  %1600 = vmatprep.subr.bf16.mxu0 0
  %1601 = vmatpush1.bf16.msra.mxu0 0
  %1602 = vmatprep.subr.bf16.mxu0 0
  %1603 = vmatpush1.bf16.msra.mxu0 0
  %1604 = vmatprep.subr.bf16.mxu0 0
  %1605 = vmatpush1.bf16.msra.mxu0 0
  %1606 = vmatprep.subr.bf16.mxu0 0
  %1607 = vmatpush1.bf16.msra.mxu0 0
  %1608 = vmatprep.subr.bf16.mxu0 0
  %1609 = vmatpush1.bf16.msra.mxu0 0
  %1610 = vmatprep.mubr.bf16.mxu0 0
  %1611 = vmatmul.mubr.bf16.gmra.mrb[0].mxu0 %v1577
  %v1612 = vpop.f32.mrb[0].mxu0
  %v1613 = vadd.f32 0.0, %v1612
  %v1614 = vpop.f32.mrb[0].mxu0
  %v1615 = vadd.f32 0.0, %v1614
  %v1616 = vpop.f32.mrb[0].mxu0
  %v1617 = vpop.f32.mrb[0].mxu0
  %1618 = vdwg.mxu0
  %1619 = vmatprep.subr.bf16.mxu0 %v185
  %1620 = vmatpush1.bf16.msra.mxu0 %v184
  %1621 = vmatprep.subr.bf16.mxu0 %v189
  %1622 = vmatpush1.bf16.msra.mxu0 %v188
  %1623 = vmatprep.subr.bf16.mxu0 %v193
  %1624 = vmatpush1.bf16.msra.mxu0 %v192
  %1625 = vmatprep.subr.bf16.mxu0 %v197
  %1626 = vmatpush1.bf16.msra.mxu0 %v196
  %1627 = vmatprep.subr.bf16.mxu0 %v201
  %1628 = vmatpush1.bf16.msra.mxu0 %v200
  %1629 = vmatprep.subr.bf16.mxu0 %v205
  %1630 = vmatpush1.bf16.msra.mxu0 %v204
  %1631 = vmatprep.subr.bf16.mxu0 %v209
  %1632 = vmatpush1.bf16.msra.mxu0 %v208
  %1633 = vmatprep.subr.bf16.mxu0 %v213
  %1634 = vmatpush1.bf16.msra.mxu0 %v212
  %1635 = vmatprep.subr.bf16.mxu0 0
  %1636 = vmatpush1.bf16.msra.mxu0 0
  %1637 = vmatprep.subr.bf16.mxu0 0
  %1638 = vmatpush1.bf16.msra.mxu0 0
  %1639 = vmatprep.subr.bf16.mxu0 0
  %1640 = vmatpush1.bf16.msra.mxu0 0
  %1641 = vmatprep.subr.bf16.mxu0 0
  %1642 = vmatpush1.bf16.msra.mxu0 0
  %1643 = vmatprep.subr.bf16.mxu0 0
  %1644 = vmatpush1.bf16.msra.mxu0 0
  %1645 = vmatprep.subr.bf16.mxu0 0
  %1646 = vmatpush1.bf16.msra.mxu0 0
  %1647 = vmatprep.subr.bf16.mxu0 0
  %1648 = vmatpush1.bf16.msra.mxu0 0
  %1649 = vmatprep.subr.bf16.mxu0 0
  %1650 = vmatpush1.bf16.msra.mxu0 0
  %1651 = vmatprep.mubr.bf16.mxu0 0
  %1652 = vmatmul.mubr.bf16.gmra.mrb[0].mxu0 %v1577
  %v1653 = vpop.f32.mrb[0].mxu0
  %v1654 = vadd.f32 0.0, %v1653
  %v1655 = vpop.f32.mrb[0].mxu0
  %v1656 = vadd.f32 0.0, %v1655
  %v1657 = vpop.f32.mrb[0].mxu0
  %v1658 = vpop.f32.mrb[0].mxu0
  %1659 = vdwg.mxu0
  %v1660 = vadd.f32 %v1569, %v1613
  %v1661 = vadd.f32 %v1570, %v1615
  %v1662 = vadd.f32 %v1571, %v1654
  %v1663 = vadd.f32 %v1572, %v1656
  %v1664 = vpack.c.bf16 %v1566, %v1566
  %1665 = vmatprep.subr.bf16.mxu0 %v429
  %1666 = vmatpush1.bf16.msra.mxu0 %v428
  %1667 = vmatprep.subr.bf16.mxu0 %v433
  %1668 = vmatpush1.bf16.msra.mxu0 %v432
  %1669 = vmatprep.subr.bf16.mxu0 %v437
  %1670 = vmatpush1.bf16.msra.mxu0 %v436
  %1671 = vmatprep.subr.bf16.mxu0 %v441
  %1672 = vmatpush1.bf16.msra.mxu0 %v440
  %1673 = vmatprep.subr.bf16.mxu0 %v445
  %1674 = vmatpush1.bf16.msra.mxu0 %v444
  %1675 = vmatprep.subr.bf16.mxu0 %v449
  %1676 = vmatpush1.bf16.msra.mxu0 %v448
  %1677 = vmatprep.subr.bf16.mxu0 %v453
  %1678 = vmatpush1.bf16.msra.mxu0 %v452
  %1679 = vmatprep.subr.bf16.mxu0 %v457
  %1680 = vmatpush1.bf16.msra.mxu0 %v456
  %1681 = vmatprep.subr.bf16.mxu0 0
  %1682 = vmatpush1.bf16.msra.mxu0 0
  %1683 = vmatprep.subr.bf16.mxu0 0
  %1684 = vmatpush1.bf16.msra.mxu0 0
  %1685 = vmatprep.subr.bf16.mxu0 0
  %1686 = vmatpush1.bf16.msra.mxu0 0
  %1687 = vmatprep.subr.bf16.mxu0 0
  %1688 = vmatpush1.bf16.msra.mxu0 0
  %1689 = vmatprep.subr.bf16.mxu0 0
  %1690 = vmatpush1.bf16.msra.mxu0 0
  %1691 = vmatprep.subr.bf16.mxu0 0
  %1692 = vmatpush1.bf16.msra.mxu0 0
  %1693 = vmatprep.subr.bf16.mxu0 0
  %1694 = vmatpush1.bf16.msra.mxu0 0
  %1695 = vmatprep.subr.bf16.mxu0 0
  %1696 = vmatpush1.bf16.msra.mxu0 0
  %1697 = vmatprep.mubr.bf16.mxu0 0
  %1698 = vmatmul.mubr.bf16.gmra.mrb[0].mxu0 %v1664
  %v1699 = vpop.f32.mrb[0].mxu0
  %v1700 = vadd.f32 0.0, %v1699
  %v1701 = vpop.f32.mrb[0].mxu0
  %v1702 = vadd.f32 0.0, %v1701
  %v1703 = vpop.f32.mrb[0].mxu0
  %v1704 = vpop.f32.mrb[0].mxu0
  %1705 = vdwg.mxu0
  %1706 = vmatprep.subr.bf16.mxu0 %v431
  %1707 = vmatpush1.bf16.msra.mxu0 %v430
  %1708 = vmatprep.subr.bf16.mxu0 %v435
  %1709 = vmatpush1.bf16.msra.mxu0 %v434
  %1710 = vmatprep.subr.bf16.mxu0 %v439
  %1711 = vmatpush1.bf16.msra.mxu0 %v438
  %1712 = vmatprep.subr.bf16.mxu0 %v443
  %1713 = vmatpush1.bf16.msra.mxu0 %v442
  %1714 = vmatprep.subr.bf16.mxu0 %v447
  %1715 = vmatpush1.bf16.msra.mxu0 %v446
  %1716 = vmatprep.subr.bf16.mxu0 %v451
  %1717 = vmatpush1.bf16.msra.mxu0 %v450
  %1718 = vmatprep.subr.bf16.mxu0 %v455
  %1719 = vmatpush1.bf16.msra.mxu0 %v454
  %1720 = vmatprep.subr.bf16.mxu0 %v459
  %1721 = vmatpush1.bf16.msra.mxu0 %v458
  %1722 = vmatprep.subr.bf16.mxu0 0
  %1723 = vmatpush1.bf16.msra.mxu0 0
  %1724 = vmatprep.subr.bf16.mxu0 0
  %1725 = vmatpush1.bf16.msra.mxu0 0
  %1726 = vmatprep.subr.bf16.mxu0 0
  %1727 = vmatpush1.bf16.msra.mxu0 0
  %1728 = vmatprep.subr.bf16.mxu0 0
  %1729 = vmatpush1.bf16.msra.mxu0 0
  %1730 = vmatprep.subr.bf16.mxu0 0
  %1731 = vmatpush1.bf16.msra.mxu0 0
  %1732 = vmatprep.subr.bf16.mxu0 0
  %1733 = vmatpush1.bf16.msra.mxu0 0
  %1734 = vmatprep.subr.bf16.mxu0 0
  %1735 = vmatpush1.bf16.msra.mxu0 0
  %1736 = vmatprep.subr.bf16.mxu0 0
  %1737 = vmatpush1.bf16.msra.mxu0 0
  %1738 = vmatprep.mubr.bf16.mxu0 0
  %1739 = vmatmul.mubr.bf16.gmra.mrb[0].mxu0 %v1664
  %v1740 = vpop.f32.mrb[0].mxu0
  %v1741 = vadd.f32 0.0, %v1740
  %v1742 = vpop.f32.mrb[0].mxu0
  %v1743 = vadd.f32 0.0, %v1742
  %v1744 = vpop.f32.mrb[0].mxu0
  %v1745 = vpop.f32.mrb[0].mxu0
  %1746 = vdwg.mxu0
  %v1747 = vadd.f32 %v1573, %v1700
  %v1748 = vadd.f32 %v1574, %v1702
  %v1749 = vadd.f32 %v1575, %v1741
  %v1750 = vadd.f32 %v1576, %v1743
  %v1751 = vxor.u32 %v1660, 2147483648
  %v1752 = vxor.u32 %v1661, 2147483648
  %v1753 = vxor.u32 %v1662, 2147483648
  %v1754 = vxor.u32 %v1747, 2147483648
  %v1755 = vxor.u32 %v1748, 2147483648
  %v1756 = vxor.u32 %v1749, 2147483648
  %v1757 = vmul.f32 %v1751, 1.442695
  %v1758 = vpow.pop %v1757
  %v1759 = vmul.f32 %v1752, 1.442695
  %v1760 = vpow.pop %v1759
  %v1761 = vmul.f32 %v1753, 1.442695
  %v1762 = vpow.pop %v1761
  %v1763 = vmul.f32 %v1754, 1.442695
  %v1764 = vpow.pop %v1763
  %v1765 = vmul.f32 %v1755, 1.442695
  %v1766 = vpow.pop %v1765
  %v1767 = vmul.f32 %v1756, 1.442695
  %v1768 = vpow.pop %v1767
  %v1769 = vadd.f32 %v1758, 1.0
  %v1770 = vadd.f32 %v1760, 1.0
  %v1771 = vadd.f32 %v1762, 1.0
  %v1772 = vadd.f32 %v1764, 1.0
  %v1773 = vadd.f32 %v1766, 1.0
  %v1774 = vadd.f32 %v1768, 1.0
  %v1775 = vrcp.pop %v1769
  %v1776 = vmul.f32 1.0, %v1775
  %v1777 = vrcp.pop %v1770
  %v1778 = vmul.f32 1.0, %v1777
  %v1779 = vrcp.pop %v1771
  %v1780 = vmul.f32 1.0, %v1779
  %v1781 = vrcp.pop %v1772
  %v1782 = vmul.f32 1.0, %v1781
  %v1783 = vrcp.pop %v1773
  %v1784 = vmul.f32 1.0, %v1783
  %v1785 = vrcp.pop %v1774
  %v1786 = vmul.f32 1.0, %v1785
  %v1787 = vtanh.pop %v1663
  %v1788 = vtanh.pop %v1750
  %v1789 = vmul.f32 %v1778, %v1561
  %v1790 = vmul.f32 %v1784, %v1562
  %v1791 = vmul.f32 %v1776, %v1787
  %v1792 = vmul.f32 %v1782, %v1788
  %v1793 = vadd.f32 %v1789, %v1791
  %v1794 = vadd.f32 %v1790, %v1792
  %v1795 = vtanh.pop %v1793
  %v1796 = vtanh.pop %v1794
  %v1797 = vmul.f32 %v1780, %v1795
  %v1798 = vmul.f32 %v1786, %v1796
  %1799 = vst [vmem:[%s1099] sm:$0xff] %v1797
  %1800 = vst [vmem:[%s1097 + $0x8] sm:$0xff] %v1798
  %v1801 = vld [vmem:[%s634] sm:$0xff]
  %v1802 = vld [vmem:[%s634 + $0x8] sm:$0xff]
  %v1803 = vld [vmem:[%s634 + $0x10] sm:$0xff]
  %v1804 = vld [vmem:[%s634 + $0x18] sm:$0xff]
  %v1805 = vld [vmem:[%s629 + $0x20] sm:$0xff]
  %v1806 = vld [vmem:[%s629 + $0x28] sm:$0xff]
  %v1807 = vld [vmem:[%s629 + $0x30] sm:$0xff]
  %v1808 = vld [vmem:[%s629 + $0x38] sm:$0xff]
  %v1809 = vpack.c.bf16 %v1797, %v1797
  %1810 = vmatprep.subr.bf16.mxu0 %v183
  %1811 = vmatpush1.bf16.msra.mxu0 %v182
  %1812 = vmatprep.subr.bf16.mxu0 %v187
  %1813 = vmatpush1.bf16.msra.mxu0 %v186
  %1814 = vmatprep.subr.bf16.mxu0 %v191
  %1815 = vmatpush1.bf16.msra.mxu0 %v190
  %1816 = vmatprep.subr.bf16.mxu0 %v195
  %1817 = vmatpush1.bf16.msra.mxu0 %v194
  %1818 = vmatprep.subr.bf16.mxu0 %v199
  %1819 = vmatpush1.bf16.msra.mxu0 %v198
  %1820 = vmatprep.subr.bf16.mxu0 %v203
  %1821 = vmatpush1.bf16.msra.mxu0 %v202
  %1822 = vmatprep.subr.bf16.mxu0 %v207
  %1823 = vmatpush1.bf16.msra.mxu0 %v206
  %1824 = vmatprep.subr.bf16.mxu0 %v211
  %1825 = vmatpush1.bf16.msra.mxu0 %v210
  %1826 = vmatprep.subr.bf16.mxu0 0
  %1827 = vmatpush1.bf16.msra.mxu0 0
  %1828 = vmatprep.subr.bf16.mxu0 0
  %1829 = vmatpush1.bf16.msra.mxu0 0
  %1830 = vmatprep.subr.bf16.mxu0 0
  %1831 = vmatpush1.bf16.msra.mxu0 0
  %1832 = vmatprep.subr.bf16.mxu0 0
  %1833 = vmatpush1.bf16.msra.mxu0 0
  %1834 = vmatprep.subr.bf16.mxu0 0
  %1835 = vmatpush1.bf16.msra.mxu0 0
  %1836 = vmatprep.subr.bf16.mxu0 0
  %1837 = vmatpush1.bf16.msra.mxu0 0
  %1838 = vmatprep.subr.bf16.mxu0 0
  %1839 = vmatpush1.bf16.msra.mxu0 0
  %1840 = vmatprep.subr.bf16.mxu0 0
  %1841 = vmatpush1.bf16.msra.mxu0 0
  %1842 = vmatprep.mubr.bf16.mxu0 0
  %1843 = vmatmul.mubr.bf16.gmra.mrb[0].mxu0 %v1809
  %v1844 = vpop.f32.mrb[0].mxu0
  %v1845 = vadd.f32 0.0, %v1844
  %v1846 = vpop.f32.mrb[0].mxu0
  %v1847 = vadd.f32 0.0, %v1846
  %v1848 = vpop.f32.mrb[0].mxu0
  %v1849 = vpop.f32.mrb[0].mxu0
  %1850 = vdwg.mxu0
  %1851 = vmatprep.subr.bf16.mxu0 %v185
  %1852 = vmatpush1.bf16.msra.mxu0 %v184
  %1853 = vmatprep.subr.bf16.mxu0 %v189
  %1854 = vmatpush1.bf16.msra.mxu0 %v188
  %1855 = vmatprep.subr.bf16.mxu0 %v193
  %1856 = vmatpush1.bf16.msra.mxu0 %v192
  %1857 = vmatprep.subr.bf16.mxu0 %v197
  %1858 = vmatpush1.bf16.msra.mxu0 %v196
  %1859 = vmatprep.subr.bf16.mxu0 %v201
  %1860 = vmatpush1.bf16.msra.mxu0 %v200
  %1861 = vmatprep.subr.bf16.mxu0 %v205
  %1862 = vmatpush1.bf16.msra.mxu0 %v204
  %1863 = vmatprep.subr.bf16.mxu0 %v209
  %1864 = vmatpush1.bf16.msra.mxu0 %v208
  %1865 = vmatprep.subr.bf16.mxu0 %v213
  %1866 = vmatpush1.bf16.msra.mxu0 %v212
  %1867 = vmatprep.subr.bf16.mxu0 0
  %1868 = vmatpush1.bf16.msra.mxu0 0
  %1869 = vmatprep.subr.bf16.mxu0 0
  %1870 = vmatpush1.bf16.msra.mxu0 0
  %1871 = vmatprep.subr.bf16.mxu0 0
  %1872 = vmatpush1.bf16.msra.mxu0 0
  %1873 = vmatprep.subr.bf16.mxu0 0
  %1874 = vmatpush1.bf16.msra.mxu0 0
  %1875 = vmatprep.subr.bf16.mxu0 0
  %1876 = vmatpush1.bf16.msra.mxu0 0
  %1877 = vmatprep.subr.bf16.mxu0 0
  %1878 = vmatpush1.bf16.msra.mxu0 0
  %1879 = vmatprep.subr.bf16.mxu0 0
  %1880 = vmatpush1.bf16.msra.mxu0 0
  %1881 = vmatprep.subr.bf16.mxu0 0
  %1882 = vmatpush1.bf16.msra.mxu0 0
  %1883 = vmatprep.mubr.bf16.mxu0 0
  %1884 = vmatmul.mubr.bf16.gmra.mrb[0].mxu0 %v1809
  %v1885 = vpop.f32.mrb[0].mxu0
  %v1886 = vadd.f32 0.0, %v1885
  %v1887 = vpop.f32.mrb[0].mxu0
  %v1888 = vadd.f32 0.0, %v1887
  %v1889 = vpop.f32.mrb[0].mxu0
  %v1890 = vpop.f32.mrb[0].mxu0
  %1891 = vdwg.mxu0
  %v1892 = vadd.f32 %v1801, %v1845
  %v1893 = vadd.f32 %v1802, %v1847
  %v1894 = vadd.f32 %v1803, %v1886
  %v1895 = vadd.f32 %v1804, %v1888
  %v1896 = vpack.c.bf16 %v1798, %v1798
  %1897 = vmatprep.subr.bf16.mxu0 %v429
  %1898 = vmatpush1.bf16.msra.mxu0 %v428
  %1899 = vmatprep.subr.bf16.mxu0 %v433
  %1900 = vmatpush1.bf16.msra.mxu0 %v432
  %1901 = vmatprep.subr.bf16.mxu0 %v437
  %1902 = vmatpush1.bf16.msra.mxu0 %v436
  %1903 = vmatprep.subr.bf16.mxu0 %v441
  %1904 = vmatpush1.bf16.msra.mxu0 %v440
  %1905 = vmatprep.subr.bf16.mxu0 %v445
  %1906 = vmatpush1.bf16.msra.mxu0 %v444
  %1907 = vmatprep.subr.bf16.mxu0 %v449
  %1908 = vmatpush1.bf16.msra.mxu0 %v448
  %1909 = vmatprep.subr.bf16.mxu0 %v453
  %1910 = vmatpush1.bf16.msra.mxu0 %v452
  %1911 = vmatprep.subr.bf16.mxu0 %v457
  %1912 = vmatpush1.bf16.msra.mxu0 %v456
  %1913 = vmatprep.subr.bf16.mxu0 0
  %1914 = vmatpush1.bf16.msra.mxu0 0
  %1915 = vmatprep.subr.bf16.mxu0 0
  %1916 = vmatpush1.bf16.msra.mxu0 0
  %1917 = vmatprep.subr.bf16.mxu0 0
  %1918 = vmatpush1.bf16.msra.mxu0 0
  %1919 = vmatprep.subr.bf16.mxu0 0
  %1920 = vmatpush1.bf16.msra.mxu0 0
  %1921 = vmatprep.subr.bf16.mxu0 0
  %1922 = vmatpush1.bf16.msra.mxu0 0
  %1923 = vmatprep.subr.bf16.mxu0 0
  %1924 = vmatpush1.bf16.msra.mxu0 0
  %1925 = vmatprep.subr.bf16.mxu0 0
  %1926 = vmatpush1.bf16.msra.mxu0 0
  %1927 = vmatprep.subr.bf16.mxu0 0
  %1928 = vmatpush1.bf16.msra.mxu0 0
  %1929 = vmatprep.mubr.bf16.mxu0 0
  %1930 = vmatmul.mubr.bf16.gmra.mrb[0].mxu0 %v1896
  %v1931 = vpop.f32.mrb[0].mxu0
  %v1932 = vadd.f32 0.0, %v1931
  %v1933 = vpop.f32.mrb[0].mxu0
  %v1934 = vadd.f32 0.0, %v1933
  %v1935 = vpop.f32.mrb[0].mxu0
  %v1936 = vpop.f32.mrb[0].mxu0
  %1937 = vdwg.mxu0
  %1938 = vmatprep.subr.bf16.mxu0 %v431
  %1939 = vmatpush1.bf16.msra.mxu0 %v430
  %1940 = vmatprep.subr.bf16.mxu0 %v435
  %1941 = vmatpush1.bf16.msra.mxu0 %v434
  %1942 = vmatprep.subr.bf16.mxu0 %v439
  %1943 = vmatpush1.bf16.msra.mxu0 %v438
  %1944 = vmatprep.subr.bf16.mxu0 %v443
  %1945 = vmatpush1.bf16.msra.mxu0 %v442
  %1946 = vmatprep.subr.bf16.mxu0 %v447
  %1947 = vmatpush1.bf16.msra.mxu0 %v446
  %1948 = vmatprep.subr.bf16.mxu0 %v451
  %1949 = vmatpush1.bf16.msra.mxu0 %v450
  %1950 = vmatprep.subr.bf16.mxu0 %v455
  %1951 = vmatpush1.bf16.msra.mxu0 %v454
  %1952 = vmatprep.subr.bf16.mxu0 %v459
  %1953 = vmatpush1.bf16.msra.mxu0 %v458
  %1954 = vmatprep.subr.bf16.mxu0 0
  %1955 = vmatpush1.bf16.msra.mxu0 0
  %1956 = vmatprep.subr.bf16.mxu0 0
  %1957 = vmatpush1.bf16.msra.mxu0 0
  %1958 = vmatprep.subr.bf16.mxu0 0
  %1959 = vmatpush1.bf16.msra.mxu0 0
  %1960 = vmatprep.subr.bf16.mxu0 0
  %1961 = vmatpush1.bf16.msra.mxu0 0
  %1962 = vmatprep.subr.bf16.mxu0 0
  %1963 = vmatpush1.bf16.msra.mxu0 0
  %1964 = vmatprep.subr.bf16.mxu0 0
  %1965 = vmatpush1.bf16.msra.mxu0 0
  %1966 = vmatprep.subr.bf16.mxu0 0
  %1967 = vmatpush1.bf16.msra.mxu0 0
  %1968 = vmatprep.subr.bf16.mxu0 0
  %1969 = vmatpush1.bf16.msra.mxu0 0
  %1970 = vmatprep.mubr.bf16.mxu0 0
  %1971 = vmatmul.mubr.bf16.gmra.mrb[0].mxu0 %v1896
  %v1972 = vpop.f32.mrb[0].mxu0
  %v1973 = vadd.f32 0.0, %v1972
  %v1974 = vpop.f32.mrb[0].mxu0
  %v1975 = vadd.f32 0.0, %v1974
  %v1976 = vpop.f32.mrb[0].mxu0
  %v1977 = vpop.f32.mrb[0].mxu0
  %1978 = vdwg.mxu0
  %v1979 = vadd.f32 %v1805, %v1932
  %v1980 = vadd.f32 %v1806, %v1934
  %v1981 = vadd.f32 %v1807, %v1973
  %v1982 = vadd.f32 %v1808, %v1975
  %v1983 = vxor.u32 %v1892, 2147483648
  %v1984 = vxor.u32 %v1893, 2147483648
  %v1985 = vxor.u32 %v1894, 2147483648
  %v1986 = vxor.u32 %v1979, 2147483648
  %v1987 = vxor.u32 %v1980, 2147483648
  %v1988 = vxor.u32 %v1981, 2147483648
  %v1989 = vmul.f32 %v1983, 1.442695
  %v1990 = vpow.pop %v1989
  %v1991 = vmul.f32 %v1984, 1.442695
  %v1992 = vpow.pop %v1991
  %v1993 = vmul.f32 %v1985, 1.442695
  %v1994 = vpow.pop %v1993
  %v1995 = vmul.f32 %v1986, 1.442695
  %v1996 = vpow.pop %v1995
  %v1997 = vmul.f32 %v1987, 1.442695
  %v1998 = vpow.pop %v1997
  %v1999 = vmul.f32 %v1988, 1.442695
  %v2000 = vpow.pop %v1999
  %v2001 = vadd.f32 %v1990, 1.0
  %v2002 = vadd.f32 %v1992, 1.0
  %v2003 = vadd.f32 %v1994, 1.0
  %v2004 = vadd.f32 %v1996, 1.0
  %v2005 = vadd.f32 %v1998, 1.0
  %v2006 = vadd.f32 %v2000, 1.0
  %v2007 = vrcp.pop %v2001
  %v2008 = vmul.f32 1.0, %v2007
  %v2009 = vrcp.pop %v2002
  %v2010 = vmul.f32 1.0, %v2009
  %v2011 = vrcp.pop %v2003
  %v2012 = vmul.f32 1.0, %v2011
  %v2013 = vrcp.pop %v2004
  %v2014 = vmul.f32 1.0, %v2013
  %v2015 = vrcp.pop %v2005
  %v2016 = vmul.f32 1.0, %v2015
  %v2017 = vrcp.pop %v2006
  %v2018 = vmul.f32 1.0, %v2017
  %v2019 = vtanh.pop %v1895
  %v2020 = vtanh.pop %v1982
  %v2021 = vmul.f32 %v2010, %v1793
  %v2022 = vmul.f32 %v2016, %v1794
  %v2023 = vmul.f32 %v2008, %v2019
  %v2024 = vmul.f32 %v2014, %v2020
  %v2025 = vadd.f32 %v2021, %v2023
  %v2026 = vadd.f32 %v2022, %v2024
  %v2027 = vtanh.pop %v2025
  %v2028 = vtanh.pop %v2026
  %v2029 = vmul.f32 %v2012, %v2027
  %v2030 = vmul.f32 %v2018, %v2028
  %2031 = vst [vmem:[%s863] sm:$0xff] %v2029
  %2032 = vst [vmem:[%s861 + $0x8] sm:$0xff] %v2030
  %v2033 = vld [vmem:[%s81] sm:$0xff]
  %v2034 = vld [vmem:[%s81 + $0x8] sm:$0xff]
  %v2035 = vld [vmem:[%s81 + $0x10] sm:$0xff]
  %v2036 = vld [vmem:[%s81 + $0x18] sm:$0xff]
  %v2037 = vld [vmem:[%s0 + $0x20] sm:$0xff]
  %v2038 = vld [vmem:[%s0 + $0x28] sm:$0xff]
  %v2039 = vld [vmem:[%s0 + $0x30] sm:$0xff]
  %v2040 = vld [vmem:[%s0 + $0x38] sm:$0xff]
  %v2041 = vpack.c.bf16 %v2029, %v2029
  %2042 = vmatprep.subr.bf16.mxu0 %v183
  %2043 = vmatpush1.bf16.msra.mxu0 %v182
  %2044 = vmatprep.subr.bf16.mxu0 %v187
  %2045 = vmatpush1.bf16.msra.mxu0 %v186
  %2046 = vmatprep.subr.bf16.mxu0 %v191
  %2047 = vmatpush1.bf16.msra.mxu0 %v190
  %2048 = vmatprep.subr.bf16.mxu0 %v195
  %2049 = vmatpush1.bf16.msra.mxu0 %v194
  %2050 = vmatprep.subr.bf16.mxu0 %v199
  %2051 = vmatpush1.bf16.msra.mxu0 %v198
  %2052 = vmatprep.subr.bf16.mxu0 %v203
  %2053 = vmatpush1.bf16.msra.mxu0 %v202
  %2054 = vmatprep.subr.bf16.mxu0 %v207
  %2055 = vmatpush1.bf16.msra.mxu0 %v206
  %2056 = vmatprep.subr.bf16.mxu0 %v211
  %2057 = vmatpush1.bf16.msra.mxu0 %v210
  %2058 = vmatprep.subr.bf16.mxu0 0
  %2059 = vmatpush1.bf16.msra.mxu0 0
  %2060 = vmatprep.subr.bf16.mxu0 0
  %2061 = vmatpush1.bf16.msra.mxu0 0
  %2062 = vmatprep.subr.bf16.mxu0 0
  %2063 = vmatpush1.bf16.msra.mxu0 0
  %2064 = vmatprep.subr.bf16.mxu0 0
  %2065 = vmatpush1.bf16.msra.mxu0 0
  %2066 = vmatprep.subr.bf16.mxu0 0
  %2067 = vmatpush1.bf16.msra.mxu0 0
  %2068 = vmatprep.subr.bf16.mxu0 0
  %2069 = vmatpush1.bf16.msra.mxu0 0
  %2070 = vmatprep.subr.bf16.mxu0 0
  %2071 = vmatpush1.bf16.msra.mxu0 0
  %2072 = vmatprep.subr.bf16.mxu0 0
  %2073 = vmatpush1.bf16.msra.mxu0 0
  %2074 = vmatprep.mubr.bf16.mxu0 0
  %2075 = vmatmul.mubr.bf16.gmra.mrb[0].mxu0 %v2041
  %v2076 = vpop.f32.mrb[0].mxu0
  %v2077 = vadd.f32 0.0, %v2076
  %v2078 = vpop.f32.mrb[0].mxu0
  %v2079 = vadd.f32 0.0, %v2078
  %v2080 = vpop.f32.mrb[0].mxu0
  %v2081 = vpop.f32.mrb[0].mxu0
  %2082 = vdwg.mxu0
  %2083 = vmatprep.subr.bf16.mxu0 %v185
  %2084 = vmatpush1.bf16.msra.mxu0 %v184
  %2085 = vmatprep.subr.bf16.mxu0 %v189
  %2086 = vmatpush1.bf16.msra.mxu0 %v188
  %2087 = vmatprep.subr.bf16.mxu0 %v193
  %2088 = vmatpush1.bf16.msra.mxu0 %v192
  %2089 = vmatprep.subr.bf16.mxu0 %v197
  %2090 = vmatpush1.bf16.msra.mxu0 %v196
  %2091 = vmatprep.subr.bf16.mxu0 %v201
  %2092 = vmatpush1.bf16.msra.mxu0 %v200
  %2093 = vmatprep.subr.bf16.mxu0 %v205
  %2094 = vmatpush1.bf16.msra.mxu0 %v204
  %2095 = vmatprep.subr.bf16.mxu0 %v209
  %2096 = vmatpush1.bf16.msra.mxu0 %v208
  %2097 = vmatprep.subr.bf16.mxu0 %v213
  %2098 = vmatpush1.bf16.msra.mxu0 %v212
  %2099 = vmatprep.subr.bf16.mxu0 0
  %2100 = vmatpush1.bf16.msra.mxu0 0
  %2101 = vmatprep.subr.bf16.mxu0 0
  %2102 = vmatpush1.bf16.msra.mxu0 0
  %2103 = vmatprep.subr.bf16.mxu0 0
  %2104 = vmatpush1.bf16.msra.mxu0 0
  %2105 = vmatprep.subr.bf16.mxu0 0
  %2106 = vmatpush1.bf16.msra.mxu0 0
  %2107 = vmatprep.subr.bf16.mxu0 0
  %2108 = vmatpush1.bf16.msra.mxu0 0
  %2109 = vmatprep.subr.bf16.mxu0 0
  %2110 = vmatpush1.bf16.msra.mxu0 0
  %2111 = vmatprep.subr.bf16.mxu0 0
  %2112 = vmatpush1.bf16.msra.mxu0 0
  %2113 = vmatprep.subr.bf16.mxu0 0
  %2114 = vmatpush1.bf16.msra.mxu0 0
  %2115 = vmatprep.mubr.bf16.mxu0 0
  %2116 = vmatmul.mubr.bf16.gmra.mrb[0].mxu0 %v2041
  %v2117 = vpop.f32.mrb[0].mxu0
  %v2118 = vadd.f32 0.0, %v2117
  %v2119 = vpop.f32.mrb[0].mxu0
  %v2120 = vadd.f32 0.0, %v2119
  %v2121 = vpop.f32.mrb[0].mxu0
  %v2122 = vpop.f32.mrb[0].mxu0
  %2123 = vdwg.mxu0
  %v2124 = vadd.f32 %v2033, %v2077
  %v2125 = vadd.f32 %v2034, %v2079
  %v2126 = vadd.f32 %v2035, %v2118
  %v2127 = vadd.f32 %v2036, %v2120
  %v2128 = vpack.c.bf16 %v2030, %v2030
  %2129 = vmatprep.subr.bf16.mxu0 %v429
  %2130 = vmatpush1.bf16.msra.mxu0 %v428
  %2131 = vmatprep.subr.bf16.mxu0 %v433
  %2132 = vmatpush1.bf16.msra.mxu0 %v432
  %2133 = vmatprep.subr.bf16.mxu0 %v437
  %2134 = vmatpush1.bf16.msra.mxu0 %v436
  %2135 = vmatprep.subr.bf16.mxu0 %v441
  %2136 = vmatpush1.bf16.msra.mxu0 %v440
  %2137 = vmatprep.subr.bf16.mxu0 %v445
  %2138 = vmatpush1.bf16.msra.mxu0 %v444
  %2139 = vmatprep.subr.bf16.mxu0 %v449
  %2140 = vmatpush1.bf16.msra.mxu0 %v448
  %2141 = vmatprep.subr.bf16.mxu0 %v453
  %2142 = vmatpush1.bf16.msra.mxu0 %v452
  %2143 = vmatprep.subr.bf16.mxu0 %v457
  %2144 = vmatpush1.bf16.msra.mxu0 %v456
  %2145 = vmatprep.subr.bf16.mxu0 0
  %2146 = vmatpush1.bf16.msra.mxu0 0
  %2147 = vmatprep.subr.bf16.mxu0 0
  %2148 = vmatpush1.bf16.msra.mxu0 0
  %2149 = vmatprep.subr.bf16.mxu0 0
  %2150 = vmatpush1.bf16.msra.mxu0 0
  %2151 = vmatprep.subr.bf16.mxu0 0
  %2152 = vmatpush1.bf16.msra.mxu0 0
  %2153 = vmatprep.subr.bf16.mxu0 0
  %2154 = vmatpush1.bf16.msra.mxu0 0
  %2155 = vmatprep.subr.bf16.mxu0 0
  %2156 = vmatpush1.bf16.msra.mxu0 0
  %2157 = vmatprep.subr.bf16.mxu0 0
  %2158 = vmatpush1.bf16.msra.mxu0 0
  %2159 = vmatprep.subr.bf16.mxu0 0
  %2160 = vmatpush1.bf16.msra.mxu0 0
  %2161 = vmatprep.mubr.bf16.mxu0 0
  %2162 = vmatmul.mubr.bf16.gmra.mrb[0].mxu0 %v2128
  %v2163 = vpop.f32.mrb[0].mxu0
  %v2164 = vadd.f32 0.0, %v2163
  %v2165 = vpop.f32.mrb[0].mxu0
  %v2166 = vadd.f32 0.0, %v2165
  %v2167 = vpop.f32.mrb[0].mxu0
  %v2168 = vpop.f32.mrb[0].mxu0
  %2169 = vdwg.mxu0
  %2170 = vmatprep.subr.bf16.mxu0 %v431
  %2171 = vmatpush1.bf16.msra.mxu0 %v430
  %2172 = vmatprep.subr.bf16.mxu0 %v435
  %2173 = vmatpush1.bf16.msra.mxu0 %v434
  %2174 = vmatprep.subr.bf16.mxu0 %v439
  %2175 = vmatpush1.bf16.msra.mxu0 %v438
  %2176 = vmatprep.subr.bf16.mxu0 %v443
  %2177 = vmatpush1.bf16.msra.mxu0 %v442
  %2178 = vmatprep.subr.bf16.mxu0 %v447
  %2179 = vmatpush1.bf16.msra.mxu0 %v446
  %2180 = vmatprep.subr.bf16.mxu0 %v451
  %2181 = vmatpush1.bf16.msra.mxu0 %v450
  %2182 = vmatprep.subr.bf16.mxu0 %v455
  %2183 = vmatpush1.bf16.msra.mxu0 %v454
  %2184 = vmatprep.subr.bf16.mxu0 %v459
  %2185 = vmatpush1.bf16.msra.mxu0 %v458
  %2186 = vmatprep.subr.bf16.mxu0 0
  %2187 = vmatpush1.bf16.msra.mxu0 0
  %2188 = vmatprep.subr.bf16.mxu0 0
  %2189 = vmatpush1.bf16.msra.mxu0 0
  %2190 = vmatprep.subr.bf16.mxu0 0
  %2191 = vmatpush1.bf16.msra.mxu0 0
  %2192 = vmatprep.subr.bf16.mxu0 0
  %2193 = vmatpush1.bf16.msra.mxu0 0
  %2194 = vmatprep.subr.bf16.mxu0 0
  %2195 = vmatpush1.bf16.msra.mxu0 0
  %2196 = vmatprep.subr.bf16.mxu0 0
  %2197 = vmatpush1.bf16.msra.mxu0 0
  %2198 = vmatprep.subr.bf16.mxu0 0
  %2199 = vmatpush1.bf16.msra.mxu0 0
  %2200 = vmatprep.subr.bf16.mxu0 0
  %2201 = vmatpush1.bf16.msra.mxu0 0
  %2202 = vmatprep.mubr.bf16.mxu0 0
  %2203 = vmatmul.mubr.bf16.gmra.mrb[0].mxu0 %v2128
  %v2204 = vpop.f32.mrb[0].mxu0
  %v2205 = vadd.f32 0.0, %v2204
  %v2206 = vpop.f32.mrb[0].mxu0
  %v2207 = vadd.f32 0.0, %v2206
  %v2208 = vpop.f32.mrb[0].mxu0
  %v2209 = vpop.f32.mrb[0].mxu0
  %2210 = vdwg.mxu0
  %v2211 = vadd.f32 %v2037, %v2164
  %v2212 = vadd.f32 %v2038, %v2166
  %v2213 = vadd.f32 %v2039, %v2205
  %v2214 = vadd.f32 %v2040, %v2207
  %v2215 = vxor.u32 %v2124, 2147483648
  %v2216 = vxor.u32 %v2125, 2147483648
  %v2217 = vxor.u32 %v2126, 2147483648
  %v2218 = vxor.u32 %v2211, 2147483648
  %v2219 = vxor.u32 %v2212, 2147483648
  %v2220 = vxor.u32 %v2213, 2147483648
  %v2221 = vmul.f32 %v2215, 1.442695
  %v2222 = vpow.pop %v2221
  %v2223 = vmul.f32 %v2216, 1.442695
  %v2224 = vpow.pop %v2223
  %v2225 = vmul.f32 %v2217, 1.442695
  %v2226 = vpow.pop %v2225
  %v2227 = vmul.f32 %v2218, 1.442695
  %v2228 = vpow.pop %v2227
  %v2229 = vmul.f32 %v2219, 1.442695
  %v2230 = vpow.pop %v2229
  %v2231 = vmul.f32 %v2220, 1.442695
  %v2232 = vpow.pop %v2231
  %v2233 = vadd.f32 %v2222, 1.0
  %v2234 = vadd.f32 %v2224, 1.0
  %v2235 = vadd.f32 %v2226, 1.0
  %v2236 = vadd.f32 %v2228, 1.0
  %v2237 = vadd.f32 %v2230, 1.0
  %v2238 = vadd.f32 %v2232, 1.0
  %v2239 = vrcp.pop %v2233
  %v2240 = vmul.f32 1.0, %v2239
  %v2241 = vrcp.pop %v2234
  %v2242 = vmul.f32 1.0, %v2241
  %v2243 = vrcp.pop %v2235
  %v2244 = vmul.f32 1.0, %v2243
  %v2245 = vrcp.pop %v2236
  %v2246 = vmul.f32 1.0, %v2245
  %v2247 = vrcp.pop %v2237
  %v2248 = vmul.f32 1.0, %v2247
  %v2249 = vrcp.pop %v2238
  %v2250 = vmul.f32 1.0, %v2249
  %v2251 = vtanh.pop %v2127
  %v2252 = vtanh.pop %v2214
  %v2253 = vmul.f32 %v2242, %v2025
  %v2254 = vmul.f32 %v2248, %v2026
  %v2255 = vmul.f32 %v2240, %v2251
  %v2256 = vmul.f32 %v2246, %v2252
  %v2257 = vadd.f32 %v2253, %v2255
  %v2258 = vadd.f32 %v2254, %v2256
  %v2259 = vtanh.pop %v2257
  %v2260 = vtanh.pop %v2258
  %v2261 = vmul.f32 %v2244, %v2259
  %v2262 = vmul.f32 %v2250, %v2260
  %2263 = vst [vmem:[%s627] sm:$0xff] %v2261
  %2264 = vst [vmem:[%s2 + $0x8] sm:$0xff] %v2262
  // Predicated region
  $region10: #{embedding_net_forward.16} parent=0 // pred_check
    _
  $region11: #{embedding_net_forward.16} parent=0 // pred_check_branch
    %2266 = sbr.rel (0) target = $region13
  $region12: #{embedding_net_forward.16} parent=0 // pred_region
    _
  $region13: #{embedding_net_forward.16} parent=0 // pred_fallthru
    _
  // Predicated region
  $region14: #{embedding_net_forward.16} parent=0 // pred_check
    _
  $region15: #{embedding_net_forward.16} parent=0 // pred_check_branch
    %2268 = sbr.rel (0) target = $region17
  $region16: #{embedding_net_forward.16} parent=0 // pred_region
    _
  $region17: #{embedding_net_forward.16} parent=0 // pred_fallthru
    _

</llo_original>
